<compile_context>
chip_gen: v7x
topology: tpu7x:2x2x1
jax: 0.10.0
libtpu: 0.0.40
codegen_flags: <defaults>
</compile_context>

<pallas_src>
import functools

import jax
import jax.numpy as jnp
from jax import lax
from jax.experimental import pallas as pl
from jax.experimental.pallas import tpu as pltpu


def _round_up(a, b):
    return (a + b - 1) // b * b


def _basic_block_kernel(x_ref, w1_ref, w2_ref, sb_ref, mask_ref, out_ref,
                        pad2_ref, *, Wp, M, body_start):
    # x_ref    : (1, FLAT_IN, C) bf16  row-flattened zero-padded input
    # w1_ref   : (9, C, C) bf16        conv1 weights, tap-major (tap = dy*3+dx)
    # w2_ref   : (9, C, C) bf16        conv2 weights
    # sb_ref   : (8, C)    f32         rows 0..3 = s1, b1, s2, b2 (folded BN)
    # mask_ref : (M, 1)    f32         1.0 on real output columns, 0.0 on pad cols
    # out_ref  : (1, M, C)             wide output (compacted to (H, W) in wrapper)
    # pad2_ref : VMEM (PAD2_ROWS, C) bf16  flat-padded conv1 activation
    C = out_ref.shape[2]

    sb = sb_ref[...]
    s1, b1, s2, b2 = sb[0:1, :], sb[1:2, :], sb[2:3, :], sb[3:4, :]

    def conv3x3(load, w_ref, base):
        # 9 accumulating K=C matmuls straight off a flat padded activation.
        acc = None
        for tap in range(9):
            off = base + (tap // 3) * Wp + (tap % 3)
            d = jnp.dot(load(off), w_ref[tap], preferred_element_type=jnp.float32)
            acc = d if acc is None else acc + d
        return acc

    # ---- conv1: taps read directly from the bf16 input block (no staging) ----
    acc1 = conv3x3(lambda off: x_ref[0, off:off + M, :], w1_ref, 0)

    # ---- bn1 + relu; zero the pad columns so they become conv2's padding ----
    out1 = jnp.maximum(acc1 * s1 + b1, 0.0) * mask_ref[...]

    # ---- assemble conv2's flat-padded activation:
    #      two small aligned zero stores + one aligned bf16 slab store ----
    pad2_rows = pad2_ref.shape[0]
    pad2_ref[0:body_start, :] = jnp.zeros((body_start, C), pad2_ref.dtype)
    pad2_ref[body_start + M:pad2_rows, :] = jnp.zeros(
        (pad2_rows - body_start - M, C), pad2_ref.dtype)
    pad2_ref[body_start:body_start + M, :] = out1.astype(pad2_ref.dtype)

    # ---- conv2: taps read directly from the flat-padded bf16 activation ----
    acc2 = conv3x3(lambda off: pad2_ref[off:off + M, :], w2_ref,
                   body_start - (Wp + 1))

    # ---- bn2 + residual + relu; identity cast once from the bf16 input ----
    identity = x_ref[0, Wp + 1:Wp + 1 + M, :].astype(jnp.float32)
    out_ref[0] = jnp.maximum(acc2 * s2 + b2 + identity, 0.0).astype(out_ref.dtype)


def fold_bn(gamma, beta, mean, var, eps=1e-5):
    scale = gamma / jnp.sqrt(var + eps)
    bias = beta - mean * scale
    return scale.astype(jnp.float32), bias.astype(jnp.float32)


def basic_block_forward(x_nchw, params, *, compute_dtype=jnp.bfloat16,
                        out_dtype=jnp.float32):
    """BasicBlock forward; x_nchw is (N, C, H, W) like PyTorch (eval-mode BN)."""
    N, Cin, H, W = x_nchw.shape
    Cout = params["w1"].shape[0]
    assert Cin == Cout, "stride=1 / downsample=None requires inplanes == planes"
    Hp, Wp = H + 2, W + 2
    M = H * Wp                                   # "wide" output rows per image
    flat_in = _round_up(Hp * Wp + 2, 8)          # tap (2,2) reads up to Hp*Wp+1
    body_start = _round_up(Wp + 1, 8)            # aligned conv1->conv2 slab store
    pad2_rows = _round_up(body_start + Wp + 1 + M, 8)

    # NCHW -> padded, row-flattened NHWC (bf16 halves HBM/VMEM traffic).
    x_nhwc = jnp.transpose(x_nchw, (0, 2, 3, 1)).astype(compute_dtype)
    x_pad = jnp.pad(x_nhwc, ((0, 0), (1, 1), (1, 1), (0, 0)))
    x_flat = jnp.pad(x_pad.reshape(N, Hp * Wp, Cin),
                     ((0, 0), (0, flat_in - Hp * Wp), (0, 0)))

    # torch conv weight (Cout, Cin, 3, 3) -> (9, Cin, Cout), tap-major (dy*3+dx)
    w1t = (jnp.transpose(params["w1"], (2, 3, 1, 0))
           .reshape(9, Cin, Cout).astype(compute_dtype))
    w2t = (jnp.transpose(params["w2"], (2, 3, 1, 0))
           .reshape(9, Cout, Cout).astype(compute_dtype))

    # Folded BN scale/bias packed into a single (8, C) f32 input.
    s1, b1 = fold_bn(params["g1"], params["be1"], params["m1"], params["v1"])
    s2, b2 = fold_bn(params["g2"], params["be2"], params["m2"], params["v2"])
    sb = jnp.zeros((8, Cout), jnp.float32)
    sb = sb.at[0].set(s1).at[1].set(b1).at[2].set(s2).at[3].set(b2)

    # 1.0 on real output columns of the wide row grid, 0.0 on the pad columns.
    mask = (jnp.arange(M) % Wp < W).astype(jnp.float32).reshape(M, 1)

    itemsize = jnp.dtype(compute_dtype).itemsize
    cost = pl.CostEstimate(
        flops=4 * N * M * (9 * Cin) * Cout,      # two convs x 2 flops/MAC
        transcendentals=0,
        bytes_accessed=(x_flat.size * itemsize
                        + (w1t.size + w2t.size) * itemsize
                        + N * M * Cout * jnp.dtype(out_dtype).itemsize
                        + sb.size * 4 + mask.size * 4))

    kernel = functools.partial(_basic_block_kernel, Wp=Wp, M=M,
                               body_start=body_start)
    out_wide = pl.pallas_call(
        kernel,
        out_shape=jax.ShapeDtypeStruct((N, M, Cout), out_dtype),
        grid=(N,),
        in_specs=[
            pl.BlockSpec((1, flat_in, Cin), lambda n: (n, 0, 0)),
            pl.BlockSpec((9, Cin, Cout), lambda n: (0, 0, 0)),
            pl.BlockSpec((9, Cout, Cout), lambda n: (0, 0, 0)),
            pl.BlockSpec((8, Cout), lambda n: (0, 0)),
            pl.BlockSpec((M, 1), lambda n: (0, 0)),
        ],
        out_specs=pl.BlockSpec((1, M, Cout), lambda n: (n, 0, 0)),
        scratch_shapes=[pltpu.VMEM((pad2_rows, Cout), compute_dtype)],
        compiler_params=pltpu.CompilerParams(
            dimension_semantics=("parallel",)),  # v7x: 2 TCs split the batch
        cost_estimate=cost,
    )(x_flat, w1t, w2t, sb, mask)

    # Compact wide rows (H, Wp) -> (H, W) and return NCHW like PyTorch.
    out = out_wide.reshape(N, H, Wp, Cout)[:, :, :W, :]
    return jnp.transpose(out, (0, 3, 1, 2))


# --------------- pure-JAX reference (eval-mode BN, bf16 matmul inputs) ---------------
def _conv3x3_ref(x_nhwc, w_oihw):
    w_hwio = jnp.transpose(w_oihw, (2, 3, 1, 0))
    return lax.conv_general_dilated(
        x_nhwc, w_hwio, window_strides=(1, 1), padding=((1, 1), (1, 1)),
        dimension_numbers=("NHWC", "HWIO", "NHWC"),
        preferred_element_type=jnp.float32)


def basic_block_ref(x_nchw, p, eps=1e-5, compute_dtype=jnp.bfloat16):
    # Mirrors the kernel's precision: conv inputs/weights rounded to bf16,
    # f32 accumulation, f32 BN / residual / ReLU epilogue.
    x = jnp.transpose(x_nchw, (0, 2, 3, 1)).astype(compute_dtype)
    out = _conv3x3_ref(x, p["w1"].astype(compute_dtype))
    out = (out - p["m1"]) / jnp.sqrt(p["v1"] + eps) * p["g1"] + p["be1"]
    out = jnp.maximum(out, 0.0)
    out = _conv3x3_ref(out.astype(compute_dtype), p["w2"].astype(compute_dtype))
    out = (out - p["m2"]) / jnp.sqrt(p["v2"] + eps) * p["g2"] + p["be2"]
    out = jnp.maximum(out + x.astype(jnp.float32), 0.0)
    return jnp.transpose(out, (0, 3, 1, 2))


if __name__ == "__main__":
    key = jax.random.PRNGKey(0)
    ks = jax.random.split(key, 12)

    # ResNet "layer2"-like BasicBlock: inplanes = planes = 128, stride = 1.
    # C=128 keeps the lane (last) dim fully dense on the MXU / vector units.
    N, C, H, W = 2, 128, 16, 16
    x = jax.random.normal(ks[0], (N, C, H, W), jnp.float32)
    wscale = 0.05  # ~Kaiming scale for fan_in = 9*C

    params = {
        "w1": jax.random.normal(ks[1], (C, C, 3, 3), jnp.float32) * wscale,
        "w2": jax.random.normal(ks[2], (C, C, 3, 3), jnp.float32) * wscale,
        "g1": jax.random.uniform(ks[3], (C,), jnp.float32, 0.5, 1.5),
        "be1": jax.random.normal(ks[4], (C,), jnp.float32) * 0.1,
        "m1": jax.random.normal(ks[5], (C,), jnp.float32) * 0.1,
        "v1": jax.random.uniform(ks[6], (C,), jnp.float32, 0.5, 1.5),
        "g2": jax.random.uniform(ks[7], (C,), jnp.float32, 0.5, 1.5),
        "be2": jax.random.normal(ks[8], (C,), jnp.float32) * 0.1,
        "m2": jax.random.normal(ks[9], (C,), jnp.float32) * 0.1,
        "v2": jax.random.uniform(ks[10], (C,), jnp.float32, 0.5, 1.5),
    }

    out = jax.block_until_ready(jax.jit(basic_block_forward)(x, params))
    ref = jax.block_until_ready(basic_block_ref(x, params))

    assert out.shape == (N, C, H, W), out.shape
    max_err = float(jnp.max(jnp.abs(out - ref)))
    # bf16 matmul inputs -> compare against the bf16-matched reference.
    assert jnp.allclose(out, ref, rtol=1e-2, atol=1e-2), max_err
    print("KERNEL_OK")
</pallas_src>

<mosaic_0001>
module attributes {stable_mosaic.version = 11 : i64} {
  func.func @_basic_block_kernel(%arg0: i32, %arg1: memref<1x328x128xbf16, #tpu.memory_space<vmem>>, %arg2: memref<9x128x128xbf16, #tpu.memory_space<vmem>>, %arg3: memref<9x128x128xbf16, #tpu.memory_space<vmem>>, %arg4: memref<8x128xf32, #tpu.memory_space<vmem>>, %arg5: memref<288x1xf32, #tpu.memory_space<vmem>>, %arg6: memref<1x288x128xf32, #tpu.memory_space<vmem>>, %arg7: memref<336x128xbf16, #tpu.memory_space<vmem>>) attributes {dimension_semantics = [#tpu.dimension_semantics<parallel>], iteration_bounds = array<i64: 2>, scalar_prefetch = 0 : i64, scratch_operands = 1 : i64, tpu.core_type = #tpu.core_type<tc>, window_params = [{transform_indices = @transform_0, window_bounds = array<i64: 1, 328, 128>}, {pipeline_mode = #tpu.pipeline_mode<synchronous>, transform_indices = @transform_1, window_bounds = array<i64: 9, 128, 128>}, {pipeline_mode = #tpu.pipeline_mode<synchronous>, transform_indices = @transform_2, window_bounds = array<i64: 9, 128, 128>}, {pipeline_mode = #tpu.pipeline_mode<synchronous>, transform_indices = @transform_3, window_bounds = array<i64: 8, 128>}, {pipeline_mode = #tpu.pipeline_mode<synchronous>, transform_indices = @transform_4, window_bounds = array<i64: 288, 1>}, {transform_indices = @transform_5, window_bounds = array<i64: 1, 288, 128>}]} {
    %c0 = arith.constant 0 : index
    %c0_0 = arith.constant 0 : index
    %0 = vector.load %arg4[%c0, %c0_0] : memref<8x128xf32, #tpu.memory_space<vmem>>, vector<8x128xf32>
    %1 = vector.extract_strided_slice %0 {offsets = [0, 0], sizes = [1, 128], strides = [1, 1]} : vector<8x128xf32> to vector<1x128xf32>
    %2 = vector.extract_strided_slice %0 {offsets = [1, 0], sizes = [1, 128], strides = [1, 1]} : vector<8x128xf32> to vector<1x128xf32>
    %3 = vector.extract_strided_slice %0 {offsets = [2, 0], sizes = [1, 128], strides = [1, 1]} : vector<8x128xf32> to vector<1x128xf32>
    %4 = vector.extract_strided_slice %0 {offsets = [3, 0], sizes = [1, 128], strides = [1, 1]} : vector<8x128xf32> to vector<1x128xf32>
    %c0_1 = arith.constant 0 : index
    %c0_2 = arith.constant 0 : index
    %c0_3 = arith.constant 0 : index
    %5 = vector.load %arg1[%c0_1, %c0_2, %c0_3] : memref<1x328x128xbf16, #tpu.memory_space<vmem>>, vector<1x288x128xbf16>
    %6 = vector.shape_cast %5 : vector<1x288x128xbf16> to vector<288x128xbf16>
    %c0_4 = arith.constant 0 : index
    %c0_5 = arith.constant 0 : index
    %c0_6 = arith.constant 0 : index
    %7 = vector.load %arg2[%c0_4, %c0_5, %c0_6] : memref<9x128x128xbf16, #tpu.memory_space<vmem>>, vector<1x128x128xbf16>
    %8 = vector.shape_cast %7 : vector<1x128x128xbf16> to vector<128x128xbf16>
    %cst = arith.constant dense<0.000000e+00> : vector<288x128xf32>
    %9 = tpu.matmul %6, %8, %cst {dimension_numbers = #tpu.dot_dimension_numbers<[1], [0], [0], [1], [0, 0, 1, 1], [], []>} : vector<288x128xbf16>, vector<128x128xbf16>, vector<288x128xf32> -> vector<288x128xf32>
    %c0_7 = arith.constant 0 : index
    %c1 = arith.constant 1 : index
    %c0_8 = arith.constant 0 : index
    %10 = vector.load %arg1[%c0_7, %c1, %c0_8] : memref<1x328x128xbf16, #tpu.memory_space<vmem>>, vector<1x288x128xbf16>
    %11 = vector.shape_cast %10 : vector<1x288x128xbf16> to vector<288x128xbf16>
    %c1_9 = arith.constant 1 : index
    %c0_10 = arith.constant 0 : index
    %c0_11 = arith.constant 0 : index
    %12 = vector.load %arg2[%c1_9, %c0_10, %c0_11] : memref<9x128x128xbf16, #tpu.memory_space<vmem>>, vector<1x128x128xbf16>
    %13 = vector.shape_cast %12 : vector<1x128x128xbf16> to vector<128x128xbf16>
    %cst_12 = arith.constant dense<0.000000e+00> : vector<288x128xf32>
    %14 = tpu.matmul %11, %13, %cst_12 {dimension_numbers = #tpu.dot_dimension_numbers<[1], [0], [0], [1], [0, 0, 1, 1], [], []>} : vector<288x128xbf16>, vector<128x128xbf16>, vector<288x128xf32> -> vector<288x128xf32>
    %15 = arith.addf %9, %14 : vector<288x128xf32>
    %c0_13 = arith.constant 0 : index
    %c2 = arith.constant 2 : index
    %c0_14 = arith.constant 0 : index
    %16 = vector.load %arg1[%c0_13, %c2, %c0_14] : memref<1x328x128xbf16, #tpu.memory_space<vmem>>, vector<1x288x128xbf16>
    %17 = vector.shape_cast %16 : vector<1x288x128xbf16> to vector<288x128xbf16>
    %c2_15 = arith.constant 2 : index
    %c0_16 = arith.constant 0 : index
    %c0_17 = arith.constant 0 : index
    %18 = vector.load %arg2[%c2_15, %c0_16, %c0_17] : memref<9x128x128xbf16, #tpu.memory_space<vmem>>, vector<1x128x128xbf16>
    %19 = vector.shape_cast %18 : vector<1x128x128xbf16> to vector<128x128xbf16>
    %cst_18 = arith.constant dense<0.000000e+00> : vector<288x128xf32>
    %20 = tpu.matmul %17, %19, %cst_18 {dimension_numbers = #tpu.dot_dimension_numbers<[1], [0], [0], [1], [0, 0, 1, 1], [], []>} : vector<288x128xbf16>, vector<128x128xbf16>, vector<288x128xf32> -> vector<288x128xf32>
    %21 = arith.addf %15, %20 : vector<288x128xf32>
    %c0_19 = arith.constant 0 : index
    %c18 = arith.constant 18 : index
    %c0_20 = arith.constant 0 : index
    %22 = vector.load %arg1[%c0_19, %c18, %c0_20] : memref<1x328x128xbf16, #tpu.memory_space<vmem>>, vector<1x288x128xbf16>
    %23 = vector.shape_cast %22 : vector<1x288x128xbf16> to vector<288x128xbf16>
    %c3 = arith.constant 3 : index
    %c0_21 = arith.constant 0 : index
    %c0_22 = arith.constant 0 : index
    %24 = vector.load %arg2[%c3, %c0_21, %c0_22] : memref<9x128x128xbf16, #tpu.memory_space<vmem>>, vector<1x128x128xbf16>
    %25 = vector.shape_cast %24 : vector<1x128x128xbf16> to vector<128x128xbf16>
    %cst_23 = arith.constant dense<0.000000e+00> : vector<288x128xf32>
    %26 = tpu.matmul %23, %25, %cst_23 {dimension_numbers = #tpu.dot_dimension_numbers<[1], [0], [0], [1], [0, 0, 1, 1], [], []>} : vector<288x128xbf16>, vector<128x128xbf16>, vector<288x128xf32> -> vector<288x128xf32>
    %27 = arith.addf %21, %26 : vector<288x128xf32>
    %c0_24 = arith.constant 0 : index
    %c19 = arith.constant 19 : index
    %c0_25 = arith.constant 0 : index
    %28 = vector.load %arg1[%c0_24, %c19, %c0_25] : memref<1x328x128xbf16, #tpu.memory_space<vmem>>, vector<1x288x128xbf16>
    %29 = vector.shape_cast %28 : vector<1x288x128xbf16> to vector<288x128xbf16>
    %c4 = arith.constant 4 : index
    %c0_26 = arith.constant 0 : index
    %c0_27 = arith.constant 0 : index
    %30 = vector.load %arg2[%c4, %c0_26, %c0_27] : memref<9x128x128xbf16, #tpu.memory_space<vmem>>, vector<1x128x128xbf16>
    %31 = vector.shape_cast %30 : vector<1x128x128xbf16> to vector<128x128xbf16>
    %cst_28 = arith.constant dense<0.000000e+00> : vector<288x128xf32>
    %32 = tpu.matmul %29, %31, %cst_28 {dimension_numbers = #tpu.dot_dimension_numbers<[1], [0], [0], [1], [0, 0, 1, 1], [], []>} : vector<288x128xbf16>, vector<128x128xbf16>, vector<288x128xf32> -> vector<288x128xf32>
    %33 = arith.addf %27, %32 : vector<288x128xf32>
    %c0_29 = arith.constant 0 : index
    %c20 = arith.constant 20 : index
    %c0_30 = arith.constant 0 : index
    %34 = vector.load %arg1[%c0_29, %c20, %c0_30] : memref<1x328x128xbf16, #tpu.memory_space<vmem>>, vector<1x288x128xbf16>
    %35 = vector.shape_cast %34 : vector<1x288x128xbf16> to vector<288x128xbf16>
    %c5 = arith.constant 5 : index
    %c0_31 = arith.constant 0 : index
    %c0_32 = arith.constant 0 : index
    %36 = vector.load %arg2[%c5, %c0_31, %c0_32] : memref<9x128x128xbf16, #tpu.memory_space<vmem>>, vector<1x128x128xbf16>
    %37 = vector.shape_cast %36 : vector<1x128x128xbf16> to vector<128x128xbf16>
    %cst_33 = arith.constant dense<0.000000e+00> : vector<288x128xf32>
    %38 = tpu.matmul %35, %37, %cst_33 {dimension_numbers = #tpu.dot_dimension_numbers<[1], [0], [0], [1], [0, 0, 1, 1], [], []>} : vector<288x128xbf16>, vector<128x128xbf16>, vector<288x128xf32> -> vector<288x128xf32>
    %39 = arith.addf %33, %38 : vector<288x128xf32>
    %c0_34 = arith.constant 0 : index
    %c36 = arith.constant 36 : index
    %c0_35 = arith.constant 0 : index
    %40 = vector.load %arg1[%c0_34, %c36, %c0_35] : memref<1x328x128xbf16, #tpu.memory_space<vmem>>, vector<1x288x128xbf16>
    %41 = vector.shape_cast %40 : vector<1x288x128xbf16> to vector<288x128xbf16>
    %c6 = arith.constant 6 : index
    %c0_36 = arith.constant 0 : index
    %c0_37 = arith.constant 0 : index
    %42 = vector.load %arg2[%c6, %c0_36, %c0_37] : memref<9x128x128xbf16, #tpu.memory_space<vmem>>, vector<1x128x128xbf16>
    %43 = vector.shape_cast %42 : vector<1x128x128xbf16> to vector<128x128xbf16>
    %cst_38 = arith.constant dense<0.000000e+00> : vector<288x128xf32>
    %44 = tpu.matmul %41, %43, %cst_38 {dimension_numbers = #tpu.dot_dimension_numbers<[1], [0], [0], [1], [0, 0, 1, 1], [], []>} : vector<288x128xbf16>, vector<128x128xbf16>, vector<288x128xf32> -> vector<288x128xf32>
    %45 = arith.addf %39, %44 : vector<288x128xf32>
    %c0_39 = arith.constant 0 : index
    %c37 = arith.constant 37 : index
    %c0_40 = arith.constant 0 : index
    %46 = vector.load %arg1[%c0_39, %c37, %c0_40] : memref<1x328x128xbf16, #tpu.memory_space<vmem>>, vector<1x288x128xbf16>
    %47 = vector.shape_cast %46 : vector<1x288x128xbf16> to vector<288x128xbf16>
    %c7 = arith.constant 7 : index
    %c0_41 = arith.constant 0 : index
    %c0_42 = arith.constant 0 : index
    %48 = vector.load %arg2[%c7, %c0_41, %c0_42] : memref<9x128x128xbf16, #tpu.memory_space<vmem>>, vector<1x128x128xbf16>
    %49 = vector.shape_cast %48 : vector<1x128x128xbf16> to vector<128x128xbf16>
    %cst_43 = arith.constant dense<0.000000e+00> : vector<288x128xf32>
    %50 = tpu.matmul %47, %49, %cst_43 {dimension_numbers = #tpu.dot_dimension_numbers<[1], [0], [0], [1], [0, 0, 1, 1], [], []>} : vector<288x128xbf16>, vector<128x128xbf16>, vector<288x128xf32> -> vector<288x128xf32>
    %51 = arith.addf %45, %50 : vector<288x128xf32>
    %c0_44 = arith.constant 0 : index
    %c38 = arith.constant 38 : index
    %c0_45 = arith.constant 0 : index
    %52 = vector.load %arg1[%c0_44, %c38, %c0_45] : memref<1x328x128xbf16, #tpu.memory_space<vmem>>, vector<1x288x128xbf16>
    %53 = vector.shape_cast %52 : vector<1x288x128xbf16> to vector<288x128xbf16>
    %c8 = arith.constant 8 : index
    %c0_46 = arith.constant 0 : index
    %c0_47 = arith.constant 0 : index
    %54 = vector.load %arg2[%c8, %c0_46, %c0_47] : memref<9x128x128xbf16, #tpu.memory_space<vmem>>, vector<1x128x128xbf16>
    %55 = vector.shape_cast %54 : vector<1x128x128xbf16> to vector<128x128xbf16>
    %cst_48 = arith.constant dense<0.000000e+00> : vector<288x128xf32>
    %56 = tpu.matmul %53, %55, %cst_48 {dimension_numbers = #tpu.dot_dimension_numbers<[1], [0], [0], [1], [0, 0, 1, 1], [], []>} : vector<288x128xbf16>, vector<128x128xbf16>, vector<288x128xf32> -> vector<288x128xf32>
    %57 = arith.addf %51, %56 : vector<288x128xf32>
    %58 = vector.broadcast %1 : vector<1x128xf32> to vector<288x128xf32>
    %59 = arith.mulf %57, %58 : vector<288x128xf32>
    %60 = vector.broadcast %2 : vector<1x128xf32> to vector<288x128xf32>
    %61 = arith.addf %59, %60 : vector<288x128xf32>
    %cst_49 = arith.constant 0.000000e+00 : f32
    %62 = vector.broadcast %cst_49 : f32 to vector<288x128xf32>
    %63 = arith.maximumf %61, %62 : vector<288x128xf32>
    %c0_50 = arith.constant 0 : index
    %c0_51 = arith.constant 0 : index
    %64 = vector.load %arg5[%c0_50, %c0_51] : memref<288x1xf32, #tpu.memory_space<vmem>>, vector<288x1xf32>
    %65 = vector.broadcast %64 : vector<288x1xf32> to vector<288x128xf32>
    %66 = arith.mulf %63, %65 : vector<288x128xf32>
    %cst_52 = arith.constant 0.000000e+00 : bf16
    %67 = vector.broadcast %cst_52 : bf16 to vector<24x128xbf16>
    %c0_53 = arith.constant 0 : index
    %c0_54 = arith.constant 0 : index
    %68 = vector.load %arg7[%c0_53, %c0_54] : memref<336x128xbf16, #tpu.memory_space<vmem>>, vector<24x128xbf16>
    tpu.vector_store %arg7[%c0_53, %c0_54], %67 {strides = array<i32>} : memref<336x128xbf16, #tpu.memory_space<vmem>>, vector<24x128xbf16>,
    %cst_55 = arith.constant 0.000000e+00 : bf16
    %69 = vector.broadcast %cst_55 : bf16 to vector<24x128xbf16>
    %c312 = arith.constant 312 : index
    %c0_56 = arith.constant 0 : index
    %70 = vector.load %arg7[%c312, %c0_56] : memref<336x128xbf16, #tpu.memory_space<vmem>>, vector<24x128xbf16>
    tpu.vector_store %arg7[%c312, %c0_56], %69 {strides = array<i32>} : memref<336x128xbf16, #tpu.memory_space<vmem>>, vector<24x128xbf16>,
    %71 = arith.truncf %66 : vector<288x128xf32> to vector<288x128xbf16>
    %c24 = arith.constant 24 : index
    %c0_57 = arith.constant 0 : index
    %72 = vector.load %arg7[%c24, %c0_57] : memref<336x128xbf16, #tpu.memory_space<vmem>>, vector<288x128xbf16>
    tpu.vector_store %arg7[%c24, %c0_57], %71 {strides = array<i32>} : memref<336x128xbf16, #tpu.memory_space<vmem>>, vector<288x128xbf16>,
    %c5_58 = arith.constant 5 : index
    %c0_59 = arith.constant 0 : index
    %73 = vector.load %arg7[%c5_58, %c0_59] : memref<336x128xbf16, #tpu.memory_space<vmem>>, vector<288x128xbf16>
    %c0_60 = arith.constant 0 : index
    %c0_61 = arith.constant 0 : index
    %c0_62 = arith.constant 0 : index
    %74 = vector.load %arg3[%c0_60, %c0_61, %c0_62] : memref<9x128x128xbf16, #tpu.memory_space<vmem>>, vector<1x128x128xbf16>
    %75 = vector.shape_cast %74 : vector<1x128x128xbf16> to vector<128x128xbf16>
    %cst_63 = arith.constant dense<0.000000e+00> : vector<288x128xf32>
    %76 = tpu.matmul %73, %75, %cst_63 {dimension_numbers = #tpu.dot_dimension_numbers<[1], [0], [0], [1], [0, 0, 1, 1], [], []>} : vector<288x128xbf16>, vector<128x128xbf16>, vector<288x128xf32> -> vector<288x128xf32>
    %c6_64 = arith.constant 6 : index
    %c0_65 = arith.constant 0 : index
    %77 = vector.load %arg7[%c6_64, %c0_65] : memref<336x128xbf16, #tpu.memory_space<vmem>>, vector<288x128xbf16>
    %c1_66 = arith.constant 1 : index
    %c0_67 = arith.constant 0 : index
    %c0_68 = arith.constant 0 : index
    %78 = vector.load %arg3[%c1_66, %c0_67, %c0_68] : memref<9x128x128xbf16, #tpu.memory_space<vmem>>, vector<1x128x128xbf16>
    %79 = vector.shape_cast %78 : vector<1x128x128xbf16> to vector<128x128xbf16>
    %cst_69 = arith.constant dense<0.000000e+00> : vector<288x128xf32>
    %80 = tpu.matmul %77, %79, %cst_69 {dimension_numbers = #tpu.dot_dimension_numbers<[1], [0], [0], [1], [0, 0, 1, 1], [], []>} : vector<288x128xbf16>, vector<128x128xbf16>, vector<288x128xf32> -> vector<288x128xf32>
    %81 = arith.addf %76, %80 : vector<288x128xf32>
    %c7_70 = arith.constant 7 : index
    %c0_71 = arith.constant 0 : index
    %82 = vector.load %arg7[%c7_70, %c0_71] : memref<336x128xbf16, #tpu.memory_space<vmem>>, vector<288x128xbf16>
    %c2_72 = arith.constant 2 : index
    %c0_73 = arith.constant 0 : index
    %c0_74 = arith.constant 0 : index
    %83 = vector.load %arg3[%c2_72, %c0_73, %c0_74] : memref<9x128x128xbf16, #tpu.memory_space<vmem>>, vector<1x128x128xbf16>
    %84 = vector.shape_cast %83 : vector<1x128x128xbf16> to vector<128x128xbf16>
    %cst_75 = arith.constant dense<0.000000e+00> : vector<288x128xf32>
    %85 = tpu.matmul %82, %84, %cst_75 {dimension_numbers = #tpu.dot_dimension_numbers<[1], [0], [0], [1], [0, 0, 1, 1], [], []>} : vector<288x128xbf16>, vector<128x128xbf16>, vector<288x128xf32> -> vector<288x128xf32>
    %86 = arith.addf %81, %85 : vector<288x128xf32>
    %c23 = arith.constant 23 : index
    %c0_76 = arith.constant 0 : index
    %87 = vector.load %arg7[%c23, %c0_76] : memref<336x128xbf16, #tpu.memory_space<vmem>>, vector<288x128xbf16>
    %c3_77 = arith.constant 3 : index
    %c0_78 = arith.constant 0 : index
    %c0_79 = arith.constant 0 : index
    %88 = vector.load %arg3[%c3_77, %c0_78, %c0_79] : memref<9x128x128xbf16, #tpu.memory_space<vmem>>, vector<1x128x128xbf16>
    %89 = vector.shape_cast %88 : vector<1x128x128xbf16> to vector<128x128xbf16>
    %cst_80 = arith.constant dense<0.000000e+00> : vector<288x128xf32>
    %90 = tpu.matmul %87, %89, %cst_80 {dimension_numbers = #tpu.dot_dimension_numbers<[1], [0], [0], [1], [0, 0, 1, 1], [], []>} : vector<288x128xbf16>, vector<128x128xbf16>, vector<288x128xf32> -> vector<288x128xf32>
    %91 = arith.addf %86, %90 : vector<288x128xf32>
    %c24_81 = arith.constant 24 : index
    %c0_82 = arith.constant 0 : index
    %92 = vector.load %arg7[%c24_81, %c0_82] : memref<336x128xbf16, #tpu.memory_space<vmem>>, vector<288x128xbf16>
    %c4_83 = arith.constant 4 : index
    %c0_84 = arith.constant 0 : index
    %c0_85 = arith.constant 0 : index
    %93 = vector.load %arg3[%c4_83, %c0_84, %c0_85] : memref<9x128x128xbf16, #tpu.memory_space<vmem>>, vector<1x128x128xbf16>
    %94 = vector.shape_cast %93 : vector<1x128x128xbf16> to vector<128x128xbf16>
    %cst_86 = arith.constant dense<0.000000e+00> : vector<288x128xf32>
    %95 = tpu.matmul %92, %94, %cst_86 {dimension_numbers = #tpu.dot_dimension_numbers<[1], [0], [0], [1], [0, 0, 1, 1], [], []>} : vector<288x128xbf16>, vector<128x128xbf16>, vector<288x128xf32> -> vector<288x128xf32>
    %96 = arith.addf %91, %95 : vector<288x128xf32>
    %c25 = arith.constant 25 : index
    %c0_87 = arith.constant 0 : index
    %97 = vector.load %arg7[%c25, %c0_87] : memref<336x128xbf16, #tpu.memory_space<vmem>>, vector<288x128xbf16>
    %c5_88 = arith.constant 5 : index
    %c0_89 = arith.constant 0 : index
    %c0_90 = arith.constant 0 : index
    %98 = vector.load %arg3[%c5_88, %c0_89, %c0_90] : memref<9x128x128xbf16, #tpu.memory_space<vmem>>, vector<1x128x128xbf16>
    %99 = vector.shape_cast %98 : vector<1x128x128xbf16> to vector<128x128xbf16>
    %cst_91 = arith.constant dense<0.000000e+00> : vector<288x128xf32>
    %100 = tpu.matmul %97, %99, %cst_91 {dimension_numbers = #tpu.dot_dimension_numbers<[1], [0], [0], [1], [0, 0, 1, 1], [], []>} : vector<288x128xbf16>, vector<128x128xbf16>, vector<288x128xf32> -> vector<288x128xf32>
    %101 = arith.addf %96, %100 : vector<288x128xf32>
    %c41 = arith.constant 41 : index
    %c0_92 = arith.constant 0 : index
    %102 = vector.load %arg7[%c41, %c0_92] : memref<336x128xbf16, #tpu.memory_space<vmem>>, vector<288x128xbf16>
    %c6_93 = arith.constant 6 : index
    %c0_94 = arith.constant 0 : index
    %c0_95 = arith.constant 0 : index
    %103 = vector.load %arg3[%c6_93, %c0_94, %c0_95] : memref<9x128x128xbf16, #tpu.memory_space<vmem>>, vector<1x128x128xbf16>
    %104 = vector.shape_cast %103 : vector<1x128x128xbf16> to vector<128x128xbf16>
    %cst_96 = arith.constant dense<0.000000e+00> : vector<288x128xf32>
    %105 = tpu.matmul %102, %104, %cst_96 {dimension_numbers = #tpu.dot_dimension_numbers<[1], [0], [0], [1], [0, 0, 1, 1], [], []>} : vector<288x128xbf16>, vector<128x128xbf16>, vector<288x128xf32> -> vector<288x128xf32>
    %106 = arith.addf %101, %105 : vector<288x128xf32>
    %c42 = arith.constant 42 : index
    %c0_97 = arith.constant 0 : index
    %107 = vector.load %arg7[%c42, %c0_97] : memref<336x128xbf16, #tpu.memory_space<vmem>>, vector<288x128xbf16>
    %c7_98 = arith.constant 7 : index
    %c0_99 = arith.constant 0 : index
    %c0_100 = arith.constant 0 : index
    %108 = vector.load %arg3[%c7_98, %c0_99, %c0_100] : memref<9x128x128xbf16, #tpu.memory_space<vmem>>, vector<1x128x128xbf16>
    %109 = vector.shape_cast %108 : vector<1x128x128xbf16> to vector<128x128xbf16>
    %cst_101 = arith.constant dense<0.000000e+00> : vector<288x128xf32>
    %110 = tpu.matmul %107, %109, %cst_101 {dimension_numbers = #tpu.dot_dimension_numbers<[1], [0], [0], [1], [0, 0, 1, 1], [], []>} : vector<288x128xbf16>, vector<128x128xbf16>, vector<288x128xf32> -> vector<288x128xf32>
    %111 = arith.addf %106, %110 : vector<288x128xf32>
    %c43 = arith.constant 43 : index
    %c0_102 = arith.constant 0 : index
    %112 = vector.load %arg7[%c43, %c0_102] : memref<336x128xbf16, #tpu.memory_space<vmem>>, vector<288x128xbf16>
    %c8_103 = arith.constant 8 : index
    %c0_104 = arith.constant 0 : index
    %c0_105 = arith.constant 0 : index
    %113 = vector.load %arg3[%c8_103, %c0_104, %c0_105] : memref<9x128x128xbf16, #tpu.memory_space<vmem>>, vector<1x128x128xbf16>
    %114 = vector.shape_cast %113 : vector<1x128x128xbf16> to vector<128x128xbf16>
    %cst_106 = arith.constant dense<0.000000e+00> : vector<288x128xf32>
    %115 = tpu.matmul %112, %114, %cst_106 {dimension_numbers = #tpu.dot_dimension_numbers<[1], [0], [0], [1], [0, 0, 1, 1], [], []>} : vector<288x128xbf16>, vector<128x128xbf16>, vector<288x128xf32> -> vector<288x128xf32>
    %116 = arith.addf %111, %115 : vector<288x128xf32>
    %c0_107 = arith.constant 0 : index
    %c19_108 = arith.constant 19 : index
    %c0_109 = arith.constant 0 : index
    %117 = vector.load %arg1[%c0_107, %c19_108, %c0_109] : memref<1x328x128xbf16, #tpu.memory_space<vmem>>, vector<1x288x128xbf16>
    %118 = vector.shape_cast %117 : vector<1x288x128xbf16> to vector<288x128xbf16>
    %119 = arith.extf %118 : vector<288x128xbf16> to vector<288x128xf32>
    %120 = vector.broadcast %3 : vector<1x128xf32> to vector<288x128xf32>
    %121 = arith.mulf %116, %120 : vector<288x128xf32>
    %122 = vector.broadcast %4 : vector<1x128xf32> to vector<288x128xf32>
    %123 = arith.addf %121, %122 : vector<288x128xf32>
    %124 = arith.addf %123, %119 : vector<288x128xf32>
    %cst_110 = arith.constant 0.000000e+00 : f32
    %125 = vector.broadcast %cst_110 : f32 to vector<288x128xf32>
    %126 = arith.maximumf %124, %125 : vector<288x128xf32>
    %c0_111 = arith.constant 0 : index
    %c0_112 = arith.constant 0 : index
    %c0_113 = arith.constant 0 : index
    %127 = vector.load %arg6[%c0_111, %c0_112, %c0_113] : memref<1x288x128xf32, #tpu.memory_space<vmem>>, vector<1x288x128xf32>
    %128 = vector.shape_cast %127 : vector<1x288x128xf32> to vector<288x128xf32>
    %129 = vector.shape_cast %126 : vector<288x128xf32> to vector<1x288x128xf32>
    tpu.vector_store %arg6[%c0_111, %c0_112, %c0_113], %129 {strides = array<i32>} : memref<1x288x128xf32, #tpu.memory_space<vmem>>, vector<1x288x128xf32>,
    return
  }
  func.func @transform_0(%arg0: i32) -> (i32, i32, i32) {
    %c0_i32 = arith.constant 0 : i32
    %c0_i32_0 = arith.constant 0 : i32
    %c0_i32_1 = arith.constant 0 : i32
    return %arg0, %c0_i32, %c0_i32_0 : i32, i32, i32
  }
  func.func @transform_1(%arg0: i32) -> (i32, i32, i32) {
    %c0_i32 = arith.constant 0 : i32
    %c0_i32_0 = arith.constant 0 : i32
    %c0_i32_1 = arith.constant 0 : i32
    %c0_i32_2 = arith.constant 0 : i32
    return %c0_i32, %c0_i32_0, %c0_i32_1 : i32, i32, i32
  }
  func.func @transform_2(%arg0: i32) -> (i32, i32, i32) {
    %c0_i32 = arith.constant 0 : i32
    %c0_i32_0 = arith.constant 0 : i32
    %c0_i32_1 = arith.constant 0 : i32
    %c0_i32_2 = arith.constant 0 : i32
    return %c0_i32, %c0_i32_0, %c0_i32_1 : i32, i32, i32
  }
  func.func @transform_3(%arg0: i32) -> (i32, i32) {
    %c0_i32 = arith.constant 0 : i32
    %c0_i32_0 = arith.constant 0 : i32
    %c0_i32_1 = arith.constant 0 : i32
    return %c0_i32, %c0_i32_0 : i32, i32
  }
  func.func @transform_4(%arg0: i32) -> (i32, i32) {
    %c0_i32 = arith.constant 0 : i32
    %c0_i32_0 = arith.constant 0 : i32
    %c0_i32_1 = arith.constant 0 : i32
    return %c0_i32, %c0_i32_0 : i32, i32
  }
  func.func @transform_5(%arg0: i32) -> (i32, i32, i32) {
    %c0_i32 = arith.constant 0 : i32
    %c0_i32_0 = arith.constant 0 : i32
    %c0_i32_1 = arith.constant 0 : i32
    return %arg0, %c0_i32, %c0_i32_0 : i32, i32, i32
  }
}

</mosaic_0001>

<llo_original>
// kernel: basic_block_forward.1
$region0: #{basic_block_forward.1}
  #allocation0 [shape = 'u32[]', space=smem, size = 0x4, offset = 0x4, fixed_abs, tag = 'smem constant byte address 0x4 - core index']
  #allocation1 [shape = 'u32[144,128]{1,0:T(1,128)}', space=vmem, size = 0x12000, scoped, tag = 'internal scratch']
  #allocation2 [shape = 'bf16[336,128]{1,0:T(16,128)(2,1)}', space=vmem, size = 0x15000, scoped, tag = 'scratch operand']
  %s0 = inlined_call_operand.vmem [shape: bf16[2,328,128], index: 0, kind: input, shape index: {}]
  %s1 = inlined_call_operand.vmem [shape: bf16[9,128,128], index: 1, kind: input, shape index: {}]
  %s2 = inlined_call_operand.vmem [shape: bf16[9,128,128], index: 2, kind: input, shape index: {}]
  %s3 = inlined_call_operand.vmem [shape: f32[8,128], index: 3, kind: input, shape index: {}]
  %s4 = inlined_call_operand.vmem [shape: f32[288,1], index: 4, kind: input, shape index: {}]
  %s5 = inlined_call_operand.vmem [shape: f32[2,288,128], index: 5, kind: output, shape index: {}]
  %s6 = sld [smem:[#allocation0]]
  $region53: #{basic_block_forward.1} parent=0
    _
  %s8 = ssub.s32 1, %s6
  %s9 = scalar_select 0, %s8, %s6
  loop: start=0, step=1, limit=4
  $region2: #{basic_block_forward.1} parent=0 // loop_pre_header
    _
  $region3: #{basic_block_forward.1} parent=0 // loop_header
    %s11 = sphi 0, %s15
    %p12 = scmp.ge.s32.totalorder %s11, 4
    %s21 = sphi 0, %s23
    %s24 = sphi 0, %s21
    %s25 = sphi 0, %s24
    %s41 = sphi 0, %s25
    %s45 = sphi 0, %s45
    %s47 = sphi 0, %s45
    %s48 = sphi 0, %s47
    %s62 = sphi 0, %s48
    %s66 = sphi 0, %s66
    %s68 = sphi 0, %s66
    %s69 = sphi 0, %s68
    %s83 = sphi 0, %s69
    %s87 = sphi 0, %s87
    %s89 = sphi 0, %s87
    %s90 = sphi 0, %s89
    %s104 = sphi 0, %s90
    %s108 = sphi 0, %s108
    %s110 = sphi 0, %s108
    %s111 = sphi 0, %s110
    %s125 = sphi 0, %s111
    %s131 = sphi 0, %s133
    %s134 = sphi 0, %s131
    %s135 = sphi 0, %s134
    %s151 = sphi 0, %s135
  $region4: #{basic_block_forward.1} parent=0 // loop_header_branch
    %14 = sbr.rel (%p12) target = $region8
  $region5: #{basic_block_forward.1} parent=0 // loop_body
    %s16 = ssub.s32 %s11, 1
    %s17 = ssub.s32 %s11, 2
    %s18 = sadd.s32 %s11, 1
    %s19 = ssub.s32 %s11, %s18
    %p20 = scmp.eq.s32.totalorder %s19, 0
    %s22 = sadd.s32 %s21, 1
    %s23 = scalar_select %p20, %s21, %s22
    %p26 = pneg %p20
    %p27 = scmp.eq.s32.totalorder %s11, 1
    %p28 = por %p26, %p27
    %p29 = scmp.ne.s32.totalorder %s21, %s24
    %p30 = scmp.eq.s32.totalorder %s11, 0
    %p31 = por %p29, %p30
    %p32 = scmp.ne.s32.totalorder %s21, %s24
    %p33 = scmp.eq.s32.totalorder %s16, 1
    %p34 = por %p32, %p33
    %p35 = scmp.ne.s32.totalorder %s24, %s25
    %p36 = scmp.eq.s32.totalorder %s16, 0
    %p37 = por %p35, %p36
    %p38 = scmp.ne.s32.totalorder %s24, %s25
    %p39 = scmp.eq.s32.totalorder %s17, 1
    %p40 = por %p38, %p39
    %p42 = scmp.ne.s32.totalorder %s25, %s41
    %p43 = scmp.eq.s32.totalorder %s17, 0
    %p44 = por %p42, %p43
    %s46 = sadd.s32 %s45, 1
    %p49 = scmp.eq.s32.totalorder %s11, 1
    %p50 = scmp.ne.s32.totalorder %s45, %s47
    %p51 = scmp.eq.s32.totalorder %s11, 0
    %p52 = por %p50, %p51
    %p53 = scmp.ne.s32.totalorder %s45, %s47
    %p54 = scmp.eq.s32.totalorder %s16, 1
    %p55 = por %p53, %p54
    %p56 = scmp.ne.s32.totalorder %s47, %s48
    %p57 = scmp.eq.s32.totalorder %s16, 0
    %p58 = por %p56, %p57
    %p59 = scmp.ne.s32.totalorder %s47, %s48
    %p60 = scmp.eq.s32.totalorder %s17, 1
    %p61 = por %p59, %p60
    %p63 = scmp.ne.s32.totalorder %s48, %s62
    %p64 = scmp.eq.s32.totalorder %s17, 0
    %p65 = por %p63, %p64
    %s67 = sadd.s32 %s66, 1
    %p70 = scmp.eq.s32.totalorder %s11, 1
    %p71 = scmp.ne.s32.totalorder %s66, %s68
    %p72 = scmp.eq.s32.totalorder %s11, 0
    %p73 = por %p71, %p72
    %p74 = scmp.ne.s32.totalorder %s66, %s68
    %p75 = scmp.eq.s32.totalorder %s16, 1
    %p76 = por %p74, %p75
    %p77 = scmp.ne.s32.totalorder %s68, %s69
    %p78 = scmp.eq.s32.totalorder %s16, 0
    %p79 = por %p77, %p78
    %p80 = scmp.ne.s32.totalorder %s68, %s69
    %p81 = scmp.eq.s32.totalorder %s17, 1
    %p82 = por %p80, %p81
    %p84 = scmp.ne.s32.totalorder %s69, %s83
    %p85 = scmp.eq.s32.totalorder %s17, 0
    %p86 = por %p84, %p85
    %s88 = sadd.s32 %s87, 1
    %p91 = scmp.eq.s32.totalorder %s11, 1
    %p92 = scmp.ne.s32.totalorder %s87, %s89
    %p93 = scmp.eq.s32.totalorder %s11, 0
    %p94 = por %p92, %p93
    %p95 = scmp.ne.s32.totalorder %s87, %s89
    %p96 = scmp.eq.s32.totalorder %s16, 1
    %p97 = por %p95, %p96
    %p98 = scmp.ne.s32.totalorder %s89, %s90
    %p99 = scmp.eq.s32.totalorder %s16, 0
    %p100 = por %p98, %p99
    %p101 = scmp.ne.s32.totalorder %s89, %s90
    %p102 = scmp.eq.s32.totalorder %s17, 1
    %p103 = por %p101, %p102
    %p105 = scmp.ne.s32.totalorder %s90, %s104
    %p106 = scmp.eq.s32.totalorder %s17, 0
    %p107 = por %p105, %p106
    %s109 = sadd.s32 %s108, 1
    %p112 = scmp.eq.s32.totalorder %s11, 1
    %p113 = scmp.ne.s32.totalorder %s108, %s110
    %p114 = scmp.eq.s32.totalorder %s11, 0
    %p115 = por %p113, %p114
    %p116 = scmp.ne.s32.totalorder %s108, %s110
    %p117 = scmp.eq.s32.totalorder %s16, 1
    %p118 = por %p116, %p117
    %p119 = scmp.ne.s32.totalorder %s110, %s111
    %p120 = scmp.eq.s32.totalorder %s16, 0
    %p121 = por %p119, %p120
    %p122 = scmp.ne.s32.totalorder %s110, %s111
    %p123 = scmp.eq.s32.totalorder %s17, 1
    %p124 = por %p122, %p123
    %p126 = scmp.ne.s32.totalorder %s111, %s125
    %p127 = scmp.eq.s32.totalorder %s17, 0
    %p128 = por %p126, %p127
    %s129 = ssub.s32 %s11, %s18
    %p130 = scmp.eq.s32.totalorder %s129, 0
    %s132 = sadd.s32 %s131, 1
    %s133 = scalar_select %p130, %s131, %s132
    %p136 = pneg %p130
    %p137 = scmp.eq.s32.totalorder %s11, 1
    %p138 = por %p136, %p137
    %p139 = scmp.ne.s32.totalorder %s131, %s134
    %p140 = scmp.eq.s32.totalorder %s11, 0
    %p141 = por %p139, %p140
    %p142 = scmp.ne.s32.totalorder %s131, %s134
    %p143 = scmp.eq.s32.totalorder %s16, 1
    %p144 = por %p142, %p143
    %p145 = scmp.ne.s32.totalorder %s134, %s135
    %p146 = scmp.eq.s32.totalorder %s16, 0
    %p147 = por %p145, %p146
    %p148 = scmp.ne.s32.totalorder %s134, %s135
    %p149 = scmp.eq.s32.totalorder %s17, 1
    %p150 = por %p148, %p149
    %p152 = scmp.ne.s32.totalorder %s135, %s151
    %p153 = scmp.eq.s32.totalorder %s17, 0
    %p154 = por %p152, %p153
    %p155 = scmp.le.s32.totalorder 1, %s11
    %p156 = scmp.lt.s32.totalorder %s11, 3
    %p157 = pnand %p155, %p156
    %p158 = pneg %p157
    // Predicated region
    $region9: #{basic_block_forward.1} parent=5 // pred_check
      _
    $region10: #{basic_block_forward.1} parent=5 // pred_check_branch
      %160 = sbr.rel (%p157) target = $region12
    $region11: #{basic_block_forward.1} parent=5 // pred_region
      %s161 = ssub.s32 %s11, 1
      // Predicated region
      $region13: #{basic_block_forward.1} parent=11 // pred_check
        %p162 = pneg %p58
      $region14: #{basic_block_forward.1} parent=11 // pred_check_branch
        %164 = sbr.rel (%p162) target = $region16
      $region15: #{basic_block_forward.1} parent=11 // pred_region
        _
      $region16: #{basic_block_forward.1} parent=11 // pred_fallthru
        _
      // Predicated region
      $region17: #{basic_block_forward.1} parent=11 // pred_check
        %p165 = pneg %p79
      $region18: #{basic_block_forward.1} parent=11 // pred_check_branch
        %167 = sbr.rel (%p165) target = $region20
      $region19: #{basic_block_forward.1} parent=11 // pred_region
        _
      $region20: #{basic_block_forward.1} parent=11 // pred_fallthru
        _
      // Predicated region
      $region21: #{basic_block_forward.1} parent=11 // pred_check
        %p168 = pneg %p100
      $region22: #{basic_block_forward.1} parent=11 // pred_check_branch
        %170 = sbr.rel (%p168) target = $region24
      $region23: #{basic_block_forward.1} parent=11 // pred_region
        _
      $region24: #{basic_block_forward.1} parent=11 // pred_fallthru
        _
      // Predicated region
      $region25: #{basic_block_forward.1} parent=11 // pred_check
        %p171 = pneg %p121
      $region26: #{basic_block_forward.1} parent=11 // pred_check_branch
        %173 = sbr.rel (%p171) target = $region28
      $region27: #{basic_block_forward.1} parent=11 // pred_region
        _
      $region28: #{basic_block_forward.1} parent=11 // pred_fallthru
        _
    $region12: #{basic_block_forward.1} parent=5 // pred_fallthru
      _
    %p174 = scmp.lt.s32.totalorder %s11, 2
    // Predicated region
    $region29: #{basic_block_forward.1} parent=5 // pred_check
      %p175 = pneg %p174
    $region30: #{basic_block_forward.1} parent=5 // pred_check_branch
      %177 = sbr.rel (%p175) target = $region32
    $region31: #{basic_block_forward.1} parent=5 // pred_region
      // Predicated region
      $region33: #{basic_block_forward.1} parent=31 // pred_check
        %p178 = pneg %p31
      $region34: #{basic_block_forward.1} parent=31 // pred_check_branch
        %180 = sbr.rel (%p178) target = $region36
      $region35: #{basic_block_forward.1} parent=31 // pred_region
        %p181 = scmp.lt.s32.totalorder %s11, 1
        %s182 = scalar_select %p181, %s11, 1
        %s183 = smul.addr %s182, 41
        %s184 = smul.addr %s183, 4
        %s185 = scalar_lea.vmem %s0, %s184
      $region36: #{basic_block_forward.1} parent=31 // pred_fallthru
        _
    $region32: #{basic_block_forward.1} parent=5 // pred_fallthru
      _
    %p186 = scmp.le.s32.totalorder 1, %s11
    %p187 = scmp.lt.s32.totalorder %s11, 3
    %p188 = pnand %p186, %p187
    %p189 = pneg %p188
    // Predicated region
    $region37: #{basic_block_forward.1} parent=5 // pred_check
      _
    $region38: #{basic_block_forward.1} parent=5 // pred_check_branch
      %191 = sbr.rel (%p188) target = $region40
    $region39: #{basic_block_forward.1} parent=5 // pred_region
      %s192 = ssub.s32 %s11, 1
      %p193 = scmp.lt.s32.totalorder %s16, 1
      %s194 = scalar_select %p193, %s16, 1
      %s195 = smul.addr %s194, 41
      %s196 = smul.addr %s195, 4
      %s197 = scalar_lea.vmem %s0, %s196
      %p198 = pneg %p37
      %p199 = pneg %p34
      %p200 = pneg %p58
      %p201 = pneg %p55
      %p202 = pneg %p79
      %p203 = pneg %p76
      %p204 = pneg %p100
      %p205 = pneg %p97
      %p206 = pneg %p121
      %p207 = pneg %p118
      %p208 = pneg %p147
      %p209 = pneg %p144
      %p210 = scmp.lt.s32.totalorder %s16, 1
      %s211 = scalar_select %p210, %s16, 1
      %s212 = smul.addr %s211, 36
      %s213 = smul.addr %s212, 8
      %s214 = scalar_lea.vmem %s5, %s213
      %p215 = scmp.lt.s32.totalorder %s16, 1
      %s216 = scalar_select %p215, %s16, 1
      %s217 = smul.addr %s216, 41
      %s218 = smul.addr %s217, 4
      %s219 = scalar_lea.vmem %s0, %s218
      %p220 = scmp.lt.s32.totalorder %s16, 1
      %s221 = scalar_select %p220, %s16, 1
      %s222 = smul.addr %s221, 36
      %s223 = smul.addr %s222, 8
      %s224 = scalar_lea.vmem %s5, %s223
      %v226 = vld [vmem:[%s3] sm:$0xff]
      %v227 = vld [vmem:[%s219] sm:$0xf]
      %v228 = vld [vmem:[%s219 + $0x4] sm:$0xf]
      %v229 = vld [vmem:[%s219 + $0x8] sm:$0xf]
      %v230 = vld [vmem:[%s219 + $0xc] sm:$0xf]
      %v231 = vld [vmem:[%s219 + $0x10] sm:$0xf]
      %v232 = vld [vmem:[%s219 + $0x14] sm:$0xf]
      %v233 = vld [vmem:[%s219 + $0x18] sm:$0xf]
      %v234 = vld [vmem:[%s219 + $0x1c] sm:$0xf]
      %v235 = vld [vmem:[%s219 + $0x20] sm:$0xf]
      %v236 = vld [vmem:[%s219 + $0x24] sm:$0xf]
      %v237 = vld [vmem:[%s219 + $0x28] sm:$0xf]
      %v238 = vld [vmem:[%s219 + $0x2c] sm:$0xf]
      %v239 = vld [vmem:[%s219 + $0x30] sm:$0xf]
      %v240 = vld [vmem:[%s219 + $0x34] sm:$0xf]
      %v241 = vld [vmem:[%s219 + $0x38] sm:$0xf]
      %v242 = vld [vmem:[%s219 + $0x3c] sm:$0xf]
      %v243 = vld [vmem:[%s219 + $0x40] sm:$0xf]
      %v244 = vld [vmem:[%s219 + $0x44] sm:$0xf]
      %v245 = vld [vmem:[%s219 + $0x48] sm:$0xf]
      %v246 = vld [vmem:[%s219 + $0x4c] sm:$0xf]
      %v247 = vld [vmem:[%s219 + $0x50] sm:$0xf]
      %v248 = vld [vmem:[%s219 + $0x54] sm:$0xf]
      %v249 = vld [vmem:[%s219 + $0x58] sm:$0xf]
      %v250 = vld [vmem:[%s219 + $0x5c] sm:$0xf]
      %v251 = vld [vmem:[%s219 + $0x60] sm:$0xf]
      %v252 = vld [vmem:[%s219 + $0x64] sm:$0xf]
      %v253 = vld [vmem:[%s219 + $0x68] sm:$0xf]
      %v254 = vld [vmem:[%s219 + $0x6c] sm:$0xf]
      %v255 = vld [vmem:[%s219 + $0x70] sm:$0xf]
      %v256 = vld [vmem:[%s219 + $0x74] sm:$0xf]
      %v257 = vld [vmem:[%s219 + $0x78] sm:$0xf]
      %v258 = vld [vmem:[%s219 + $0x7c] sm:$0xf]
      %v259 = vld [vmem:[%s219 + $0x80] sm:$0xf]
      %v260 = vld [vmem:[%s219 + $0x84] sm:$0xf]
      %v261 = vld [vmem:[%s219 + $0x88] sm:$0xf]
      %v262 = vld [vmem:[%s219 + $0x8c] sm:$0xf]
      %v263 = vld [vmem:[%s1] sm:$0xf]
      %v264 = vld [vmem:[%s1 + $0x4] sm:$0xf]
      %v265 = vld [vmem:[%s1 + $0x8] sm:$0xf]
      %v266 = vld [vmem:[%s1 + $0xc] sm:$0xf]
      %v267 = vld [vmem:[%s1 + $0x10] sm:$0xf]
      %v268 = vld [vmem:[%s1 + $0x14] sm:$0xf]
      %v269 = vld [vmem:[%s1 + $0x18] sm:$0xf]
      %v270 = vld [vmem:[%s1 + $0x1c] sm:$0xf]
      %v271 = vld [vmem:[%s1 + $0x20] sm:$0xf]
      %v272 = vld [vmem:[%s1 + $0x24] sm:$0xf]
      %v273 = vld [vmem:[%s1 + $0x28] sm:$0xf]
      %v274 = vld [vmem:[%s1 + $0x2c] sm:$0xf]
      %v275 = vld [vmem:[%s1 + $0x30] sm:$0xf]
      %v276 = vld [vmem:[%s1 + $0x34] sm:$0xf]
      %v277 = vld [vmem:[%s1 + $0x38] sm:$0xf]
      %v278 = vld [vmem:[%s1 + $0x3c] sm:$0xf]
      %v279 = vld [vmem:[%s219 + $0x90] sm:$0x1]
      %s280 = scalar_lea.vmem %s1, 64
      %v281 = vld [vmem:[%s280] sm:$0xf]
      %v282 = vld [vmem:[%s280 + $0x4] sm:$0xf]
      %v283 = vld [vmem:[%s280 + $0x8] sm:$0xf]
      %v284 = vld [vmem:[%s280 + $0xc] sm:$0xf]
      %v285 = vld [vmem:[%s280 + $0x10] sm:$0xf]
      %v286 = vld [vmem:[%s280 + $0x14] sm:$0xf]
      %v287 = vld [vmem:[%s280 + $0x18] sm:$0xf]
      %v288 = vld [vmem:[%s280 + $0x1c] sm:$0xf]
      %v289 = vld [vmem:[%s280 + $0x20] sm:$0xf]
      %v290 = vld [vmem:[%s280 + $0x24] sm:$0xf]
      %v291 = vld [vmem:[%s280 + $0x28] sm:$0xf]
      %v292 = vld [vmem:[%s280 + $0x2c] sm:$0xf]
      %v293 = vld [vmem:[%s280 + $0x30] sm:$0xf]
      %v294 = vld [vmem:[%s280 + $0x34] sm:$0xf]
      %v295 = vld [vmem:[%s280 + $0x38] sm:$0xf]
      %v296 = vld [vmem:[%s280 + $0x3c] sm:$0xf]
      %v334 = vunpack.c.l.b16 %v227
      %v335 = vunpack.c.l.b16 %v228
      %v336 = vunpack.c.l.b16 %v229
      %v337 = vunpack.c.l.b16 %v230
      %v338 = vunpack.c.l.b16 %v231
      %v339 = vunpack.c.l.b16 %v232
      %v340 = vunpack.c.l.b16 %v233
      %v341 = vunpack.c.l.b16 %v234
      %v342 = vunpack.c.l.b16 %v235
      %v343 = vunpack.c.l.b16 %v236
      %v344 = vunpack.c.l.b16 %v237
      %v345 = vunpack.c.l.b16 %v238
      %v346 = vunpack.c.l.b16 %v239
      %v347 = vunpack.c.l.b16 %v240
      %v348 = vunpack.c.l.b16 %v241
      %v349 = vunpack.c.l.b16 %v242
      %v350 = vunpack.c.l.b16 %v243
      %v351 = vunpack.c.l.b16 %v244
      %v352 = vunpack.c.l.b16 %v245
      %v353 = vunpack.c.l.b16 %v246
      %v354 = vunpack.c.l.b16 %v247
      %v355 = vunpack.c.l.b16 %v248
      %v356 = vunpack.c.l.b16 %v249
      %v357 = vunpack.c.l.b16 %v250
      %v358 = vunpack.c.l.b16 %v251
      %v359 = vunpack.c.l.b16 %v252
      %v360 = vunpack.c.l.b16 %v253
      %v361 = vunpack.c.l.b16 %v254
      %v362 = vunpack.c.l.b16 %v255
      %v363 = vunpack.c.l.b16 %v256
      %v364 = vunpack.c.l.b16 %v257
      %v365 = vunpack.c.l.b16 %v258
      %v366 = vunpack.c.l.b16 %v259
      %v367 = vunpack.c.l.b16 %v260
      %v368 = vunpack.c.l.b16 %v261
      %v369 = vunpack.c.l.b16 %v262
      %v370 = vunpack.c.l.b16 %v279
      %v371 = vpack.c.b16 %v335, %v334
      %v372 = vpack.c.b16 %v337, %v336
      %v373 = vpack.c.b16 %v339, %v338
      %v374 = vpack.c.b16 %v341, %v340
      %v375 = vpack.c.b16 %v343, %v342
      %v376 = vpack.c.b16 %v345, %v344
      %v377 = vpack.c.b16 %v347, %v346
      %v378 = vpack.c.b16 %v349, %v348
      %v379 = vpack.c.b16 %v351, %v350
      %v380 = vpack.c.b16 %v353, %v352
      %v381 = vpack.c.b16 %v355, %v354
      %v382 = vpack.c.b16 %v357, %v356
      %v383 = vpack.c.b16 %v359, %v358
      %v384 = vpack.c.b16 %v361, %v360
      %v385 = vpack.c.b16 %v363, %v362
      %v386 = vpack.c.b16 %v365, %v364
      %v387 = vpack.c.b16 %v367, %v366
      %v388 = vpack.c.b16 %v369, %v368
      %v389 = vpack.c.b16 %v370, %v370
      %vm390 = vsmask.f32 7424
      %v392 = vshrl.u32 %v371, 16
      %v394 = vshll.u32 %v371, 16
      %v396 = vrot.slane %v394, 1
      %v397 = vor.u32 %v392, %v396
      %v399 = vshll.u32 %v372, 16
      %v401 = vrot.slane %v399, 1
      %v402 = vsel %vm390, %v397, %v401
      %v403 = vshrl.u32 %v372, 16
      %v405 = vor.u32 %v403, %v401
      %v407 = vshll.u32 %v373, 16
      %v409 = vrot.slane %v407, 1
      %v410 = vsel %vm390, %v405, %v409
      %v411 = vshrl.u32 %v373, 16
      %v413 = vor.u32 %v411, %v409
      %v415 = vshll.u32 %v374, 16
      %v417 = vrot.slane %v415, 1
      %v418 = vsel %vm390, %v413, %v417
      %v419 = vshrl.u32 %v374, 16
      %v421 = vor.u32 %v419, %v417
      %v423 = vshll.u32 %v375, 16
      %v425 = vrot.slane %v423, 1
      %v426 = vsel %vm390, %v421, %v425
      %v427 = vshrl.u32 %v375, 16
      %v429 = vor.u32 %v427, %v425
      %v431 = vshll.u32 %v376, 16
      %v433 = vrot.slane %v431, 1
      %v434 = vsel %vm390, %v429, %v433
      %v435 = vshrl.u32 %v376, 16
      %v437 = vor.u32 %v435, %v433
      %v439 = vshll.u32 %v377, 16
      %v441 = vrot.slane %v439, 1
      %v442 = vsel %vm390, %v437, %v441
      %v443 = vshrl.u32 %v377, 16
      %v445 = vor.u32 %v443, %v441
      %v447 = vshll.u32 %v378, 16
      %v449 = vrot.slane %v447, 1
      %v450 = vsel %vm390, %v445, %v449
      %v451 = vshrl.u32 %v378, 16
      %v453 = vor.u32 %v451, %v449
      %v455 = vshll.u32 %v379, 16
      %v457 = vrot.slane %v455, 1
      %v458 = vsel %vm390, %v453, %v457
      %v459 = vshrl.u32 %v379, 16
      %v461 = vor.u32 %v459, %v457
      %v463 = vshll.u32 %v380, 16
      %v465 = vrot.slane %v463, 1
      %v466 = vsel %vm390, %v461, %v465
      %v467 = vshrl.u32 %v380, 16
      %v469 = vor.u32 %v467, %v465
      %v471 = vshll.u32 %v381, 16
      %v473 = vrot.slane %v471, 1
      %v474 = vsel %vm390, %v469, %v473
      %v475 = vshrl.u32 %v381, 16
      %v477 = vor.u32 %v475, %v473
      %v479 = vshll.u32 %v382, 16
      %v481 = vrot.slane %v479, 1
      %v482 = vsel %vm390, %v477, %v481
      %v483 = vshrl.u32 %v382, 16
      %v485 = vor.u32 %v483, %v481
      %v487 = vshll.u32 %v383, 16
      %v489 = vrot.slane %v487, 1
      %v490 = vsel %vm390, %v485, %v489
      %v491 = vshrl.u32 %v383, 16
      %v493 = vor.u32 %v491, %v489
      %v495 = vshll.u32 %v384, 16
      %v497 = vrot.slane %v495, 1
      %v498 = vsel %vm390, %v493, %v497
      %v499 = vshrl.u32 %v384, 16
      %v501 = vor.u32 %v499, %v497
      %v503 = vshll.u32 %v385, 16
      %v505 = vrot.slane %v503, 1
      %v506 = vsel %vm390, %v501, %v505
      %v507 = vshrl.u32 %v385, 16
      %v509 = vor.u32 %v507, %v505
      %v511 = vshll.u32 %v386, 16
      %v513 = vrot.slane %v511, 1
      %v514 = vsel %vm390, %v509, %v513
      %v515 = vshrl.u32 %v386, 16
      %v517 = vor.u32 %v515, %v513
      %v519 = vshll.u32 %v387, 16
      %v521 = vrot.slane %v519, 1
      %v522 = vsel %vm390, %v517, %v521
      %v523 = vshrl.u32 %v387, 16
      %v525 = vor.u32 %v523, %v521
      %v527 = vshll.u32 %v388, 16
      %v529 = vrot.slane %v527, 1
      %v530 = vsel %vm390, %v525, %v529
      %v531 = vshrl.u32 %v388, 16
      %v533 = vor.u32 %v531, %v529
      %v535 = vshll.u32 %v389, 16
      %v537 = vrot.slane %v535, 1
      %v538 = vsel %vm390, %v533, %v537
      %v573 = vunpack.c.l.b16 %v281
      %v574 = vunpack.c.l.b16 %v282
      %v575 = vunpack.c.l.b16 %v283
      %v576 = vunpack.c.l.b16 %v284
      %v577 = vunpack.c.l.b16 %v285
      %v578 = vunpack.c.l.b16 %v286
      %v579 = vunpack.c.l.b16 %v287
      %v580 = vunpack.c.l.b16 %v288
      %v581 = vunpack.c.l.b16 %v289
      %v582 = vunpack.c.l.b16 %v290
      %v583 = vunpack.c.l.b16 %v291
      %v584 = vunpack.c.l.b16 %v292
      %v585 = vunpack.c.l.b16 %v293
      %v586 = vunpack.c.l.b16 %v294
      %v587 = vunpack.c.l.b16 %v295
      %v588 = vunpack.c.l.b16 %v296
      %v589 = vpack.c.b16 %v574, %v573
      %v590 = vpack.c.b16 %v576, %v575
      %v591 = vpack.c.b16 %v578, %v577
      %v592 = vpack.c.b16 %v580, %v579
      %v593 = vpack.c.b16 %v582, %v581
      %v594 = vpack.c.b16 %v584, %v583
      %v595 = vpack.c.b16 %v586, %v585
      %v596 = vpack.c.b16 %v588, %v587
      %605 = vmatprep.subr.bf16.mxu0 0
      %606 = vmatpush1.bf16.msra.mxu0 %v589
      %607 = vmatprep.subr.bf16.mxu0 0
      %608 = vmatpush1.bf16.msra.mxu0 %v590
      %609 = vmatprep.subr.bf16.mxu0 0
      %610 = vmatpush1.bf16.msra.mxu0 %v591
      %611 = vmatprep.subr.bf16.mxu0 0
      %612 = vmatpush1.bf16.msra.mxu0 %v592
      %613 = vmatprep.subr.bf16.mxu0 0
      %614 = vmatpush1.bf16.msra.mxu0 %v593
      %615 = vmatprep.subr.bf16.mxu0 0
      %616 = vmatpush1.bf16.msra.mxu0 %v594
      %617 = vmatprep.subr.bf16.mxu0 0
      %618 = vmatpush1.bf16.msra.mxu0 %v595
      %619 = vmatprep.subr.bf16.mxu0 0
      %620 = vmatpush1.bf16.msra.mxu0 %v596
      %621 = vmatprep.subr.bf16.mxu0 0
      %622 = vmatpush1.bf16.msra.mxu0 0
      %623 = vmatprep.subr.bf16.mxu0 0
      %624 = vmatpush1.bf16.msra.mxu0 0
      %625 = vmatprep.subr.bf16.mxu0 0
      %626 = vmatpush1.bf16.msra.mxu0 0
      %627 = vmatprep.subr.bf16.mxu0 0
      %628 = vmatpush1.bf16.msra.mxu0 0
      %629 = vmatprep.subr.bf16.mxu0 0
      %630 = vmatpush1.bf16.msra.mxu0 0
      %631 = vmatprep.subr.bf16.mxu0 0
      %632 = vmatpush1.bf16.msra.mxu0 0
      %633 = vmatprep.subr.bf16.mxu0 0
      %634 = vmatpush1.bf16.msra.mxu0 0
      %635 = vmatprep.subr.bf16.mxu0 0
      %636 = vmatpush1.bf16.msra.mxu0 0
      %637 = vmatprep.mubr.bf16.mxu0 0
      %638 = vmatmul.mubr.bf16.gmra.mrb[0].mxu0 %v402
      %v639 = vpop.f32.mrb[0].mxu0
      %v640 = vadd.f32 0.0, %v639
      %v641 = vpop.f32.mrb[0].mxu0
      %v642 = vpop.f32.mrb[0].mxu0
      %v643 = vadd.f32 0.0, %v642
      %v644 = vpop.f32.mrb[0].mxu0
      %645 = vmatprep.mubr.bf16.mxu0 0
      %646 = vmatmul.mubr.bf16.gmra.mrb[0].mxu0 %v410
      %v647 = vpop.f32.mrb[0].mxu0
      %v648 = vadd.f32 0.0, %v647
      %v649 = vpop.f32.mrb[0].mxu0
      %v650 = vpop.f32.mrb[0].mxu0
      %v651 = vadd.f32 0.0, %v650
      %v652 = vpop.f32.mrb[0].mxu0
      %653 = vmatprep.mubr.bf16.mxu0 0
      %654 = vmatmul.mubr.bf16.gmra.mrb[0].mxu0 %v418
      %v655 = vpop.f32.mrb[0].mxu0
      %v656 = vadd.f32 0.0, %v655
      %v657 = vpop.f32.mrb[0].mxu0
      %v658 = vpop.f32.mrb[0].mxu0
      %v659 = vadd.f32 0.0, %v658
      %v660 = vpop.f32.mrb[0].mxu0
      %661 = vmatprep.mubr.bf16.mxu0 0
      %662 = vmatmul.mubr.bf16.gmra.mrb[0].mxu0 %v426
      %v663 = vpop.f32.mrb[0].mxu0
      %v664 = vadd.f32 0.0, %v663
      %v665 = vpop.f32.mrb[0].mxu0
      %v666 = vpop.f32.mrb[0].mxu0
      %v667 = vadd.f32 0.0, %v666
      %v668 = vpop.f32.mrb[0].mxu0
      %669 = vmatprep.mubr.bf16.mxu0 0
      %670 = vmatmul.mubr.bf16.gmra.mrb[0].mxu0 %v434
      %v671 = vpop.f32.mrb[0].mxu0
      %v672 = vadd.f32 0.0, %v671
      %v673 = vpop.f32.mrb[0].mxu0
      %v674 = vpop.f32.mrb[0].mxu0
      %v675 = vadd.f32 0.0, %v674
      %v676 = vpop.f32.mrb[0].mxu0
      %677 = vmatprep.mubr.bf16.mxu0 0
      %678 = vmatmul.mubr.bf16.gmra.mrb[0].mxu0 %v442
      %v679 = vpop.f32.mrb[0].mxu0
      %v680 = vadd.f32 0.0, %v679
      %v681 = vpop.f32.mrb[0].mxu0
      %v682 = vpop.f32.mrb[0].mxu0
      %v683 = vadd.f32 0.0, %v682
      %v684 = vpop.f32.mrb[0].mxu0
      %685 = vmatprep.mubr.bf16.mxu0 0
      %686 = vmatmul.mubr.bf16.gmra.mrb[0].mxu0 %v450
      %v687 = vpop.f32.mrb[0].mxu0
      %v688 = vadd.f32 0.0, %v687
      %v689 = vpop.f32.mrb[0].mxu0
      %v690 = vpop.f32.mrb[0].mxu0
      %v691 = vadd.f32 0.0, %v690
      %v692 = vpop.f32.mrb[0].mxu0
      %693 = vmatprep.mubr.bf16.mxu0 0
      %694 = vmatmul.mubr.bf16.gmra.mrb[0].mxu0 %v458
      %v695 = vpop.f32.mrb[0].mxu0
      %v696 = vadd.f32 0.0, %v695
      %v697 = vpop.f32.mrb[0].mxu0
      %v698 = vpop.f32.mrb[0].mxu0
      %v699 = vadd.f32 0.0, %v698
      %v700 = vpop.f32.mrb[0].mxu0
      %701 = vmatprep.mubr.bf16.mxu0 0
      %702 = vmatmul.mubr.bf16.gmra.mrb[0].mxu0 %v466
      %v703 = vpop.f32.mrb[0].mxu0
      %v704 = vadd.f32 0.0, %v703
      %v705 = vpop.f32.mrb[0].mxu0
      %v706 = vpop.f32.mrb[0].mxu0
      %v707 = vadd.f32 0.0, %v706
      %v708 = vpop.f32.mrb[0].mxu0
      %709 = vmatprep.mubr.bf16.mxu0 0
      %710 = vmatmul.mubr.bf16.gmra.mrb[0].mxu0 %v474
      %v711 = vpop.f32.mrb[0].mxu0
      %v712 = vadd.f32 0.0, %v711
      %v713 = vpop.f32.mrb[0].mxu0
      %v714 = vpop.f32.mrb[0].mxu0
      %v715 = vadd.f32 0.0, %v714
      %v716 = vpop.f32.mrb[0].mxu0
      %717 = vmatprep.mubr.bf16.mxu0 0
      %718 = vmatmul.mubr.bf16.gmra.mrb[0].mxu0 %v482
      %v719 = vpop.f32.mrb[0].mxu0
      %v720 = vadd.f32 0.0, %v719
      %v721 = vpop.f32.mrb[0].mxu0
      %v722 = vpop.f32.mrb[0].mxu0
      %v723 = vadd.f32 0.0, %v722
      %v724 = vpop.f32.mrb[0].mxu0
      %725 = vmatprep.mubr.bf16.mxu0 0
      %726 = vmatmul.mubr.bf16.gmra.mrb[0].mxu0 %v490
      %v727 = vpop.f32.mrb[0].mxu0
      %v728 = vadd.f32 0.0, %v727
      %v729 = vpop.f32.mrb[0].mxu0
      %v730 = vpop.f32.mrb[0].mxu0
      %v731 = vadd.f32 0.0, %v730
      %v732 = vpop.f32.mrb[0].mxu0
      %733 = vmatprep.mubr.bf16.mxu0 0
      %734 = vmatmul.mubr.bf16.gmra.mrb[0].mxu0 %v498
      %v735 = vpop.f32.mrb[0].mxu0
      %v736 = vadd.f32 0.0, %v735
      %v737 = vpop.f32.mrb[0].mxu0
      %v738 = vpop.f32.mrb[0].mxu0
      %v739 = vadd.f32 0.0, %v738
      %v740 = vpop.f32.mrb[0].mxu0
      %741 = vmatprep.mubr.bf16.mxu0 0
      %742 = vmatmul.mubr.bf16.gmra.mrb[0].mxu0 %v506
      %v743 = vpop.f32.mrb[0].mxu0
      %v744 = vadd.f32 0.0, %v743
      %v745 = vpop.f32.mrb[0].mxu0
      %v746 = vpop.f32.mrb[0].mxu0
      %v747 = vadd.f32 0.0, %v746
      %v748 = vpop.f32.mrb[0].mxu0
      %749 = vmatprep.mubr.bf16.mxu0 0
      %750 = vmatmul.mubr.bf16.gmra.mrb[0].mxu0 %v514
      %v751 = vpop.f32.mrb[0].mxu0
      %v752 = vadd.f32 0.0, %v751
      %v753 = vpop.f32.mrb[0].mxu0
      %v754 = vpop.f32.mrb[0].mxu0
      %v755 = vadd.f32 0.0, %v754
      %v756 = vpop.f32.mrb[0].mxu0
      %757 = vmatprep.mubr.bf16.mxu0 0
      %758 = vmatmul.mubr.bf16.gmra.mrb[0].mxu0 %v522
      %v759 = vpop.f32.mrb[0].mxu0
      %v760 = vadd.f32 0.0, %v759
      %v761 = vpop.f32.mrb[0].mxu0
      %v762 = vpop.f32.mrb[0].mxu0
      %v763 = vadd.f32 0.0, %v762
      %v764 = vpop.f32.mrb[0].mxu0
      %765 = vmatprep.mubr.bf16.mxu0 0
      %766 = vmatmul.mubr.bf16.gmra.mrb[0].mxu0 %v530
      %v767 = vpop.f32.mrb[0].mxu0
      %v768 = vadd.f32 0.0, %v767
      %v769 = vpop.f32.mrb[0].mxu0
      %v770 = vpop.f32.mrb[0].mxu0
      %v771 = vadd.f32 0.0, %v770
      %v772 = vpop.f32.mrb[0].mxu0
      %773 = vmatprep.mubr.bf16.mxu0 0
      %774 = vmatmul.mubr.bf16.gmra.mrb[0].mxu0 %v538
      %v775 = vpop.f32.mrb[0].mxu0
      %v776 = vadd.f32 0.0, %v775
      %v777 = vpop.f32.mrb[0].mxu0
      %v778 = vpop.f32.mrb[0].mxu0
      %v779 = vadd.f32 0.0, %v778
      %v780 = vpop.f32.mrb[0].mxu0
      %781 = vdwg.mxu0
      %v816 = vunpack.c.l.b16 %v263
      %v817 = vunpack.c.l.b16 %v264
      %v818 = vunpack.c.l.b16 %v265
      %v819 = vunpack.c.l.b16 %v266
      %v820 = vunpack.c.l.b16 %v267
      %v821 = vunpack.c.l.b16 %v268
      %v822 = vunpack.c.l.b16 %v269
      %v823 = vunpack.c.l.b16 %v270
      %v824 = vunpack.c.l.b16 %v271
      %v825 = vunpack.c.l.b16 %v272
      %v826 = vunpack.c.l.b16 %v273
      %v827 = vunpack.c.l.b16 %v274
      %v828 = vunpack.c.l.b16 %v275
      %v829 = vunpack.c.l.b16 %v276
      %v830 = vunpack.c.l.b16 %v277
      %v831 = vunpack.c.l.b16 %v278
      %v832 = vpack.c.b16 %v817, %v816
      %v833 = vpack.c.b16 %v819, %v818
      %v834 = vpack.c.b16 %v821, %v820
      %v835 = vpack.c.b16 %v823, %v822
      %v836 = vpack.c.b16 %v825, %v824
      %v837 = vpack.c.b16 %v827, %v826
      %v838 = vpack.c.b16 %v829, %v828
      %v839 = vpack.c.b16 %v831, %v830
      %848 = vmatprep.subr.bf16.mxu0 0
      %849 = vmatpush1.bf16.msra.mxu0 %v832
      %850 = vmatprep.subr.bf16.mxu0 0
      %851 = vmatpush1.bf16.msra.mxu0 %v833
      %852 = vmatprep.subr.bf16.mxu0 0
      %853 = vmatpush1.bf16.msra.mxu0 %v834
      %854 = vmatprep.subr.bf16.mxu0 0
      %855 = vmatpush1.bf16.msra.mxu0 %v835
      %856 = vmatprep.subr.bf16.mxu0 0
      %857 = vmatpush1.bf16.msra.mxu0 %v836
      %858 = vmatprep.subr.bf16.mxu0 0
      %859 = vmatpush1.bf16.msra.mxu0 %v837
      %860 = vmatprep.subr.bf16.mxu0 0
      %861 = vmatpush1.bf16.msra.mxu0 %v838
      %862 = vmatprep.subr.bf16.mxu0 0
      %863 = vmatpush1.bf16.msra.mxu0 %v839
      %864 = vmatprep.subr.bf16.mxu0 0
      %865 = vmatpush1.bf16.msra.mxu0 0
      %866 = vmatprep.subr.bf16.mxu0 0
      %867 = vmatpush1.bf16.msra.mxu0 0
      %868 = vmatprep.subr.bf16.mxu0 0
      %869 = vmatpush1.bf16.msra.mxu0 0
      %870 = vmatprep.subr.bf16.mxu0 0
      %871 = vmatpush1.bf16.msra.mxu0 0
      %872 = vmatprep.subr.bf16.mxu0 0
      %873 = vmatpush1.bf16.msra.mxu0 0
      %874 = vmatprep.subr.bf16.mxu0 0
      %875 = vmatpush1.bf16.msra.mxu0 0
      %876 = vmatprep.subr.bf16.mxu0 0
      %877 = vmatpush1.bf16.msra.mxu0 0
      %878 = vmatprep.subr.bf16.mxu0 0
      %879 = vmatpush1.bf16.msra.mxu0 0
      %880 = vmatprep.mubr.bf16.mxu0 0
      %881 = vmatmul.mubr.bf16.gmra.mrb[0].mxu0 %v371
      %v882 = vpop.f32.mrb[0].mxu0
      %v883 = vadd.f32 %v640, %v882
      %v884 = vpop.f32.mrb[0].mxu0
      %v885 = vpop.f32.mrb[0].mxu0
      %v886 = vadd.f32 %v643, %v885
      %v887 = vpop.f32.mrb[0].mxu0
      %888 = vmatprep.mubr.bf16.mxu0 0
      %889 = vmatmul.mubr.bf16.gmra.mrb[0].mxu0 %v372
      %v890 = vpop.f32.mrb[0].mxu0
      %v891 = vadd.f32 %v648, %v890
      %v892 = vpop.f32.mrb[0].mxu0
      %v893 = vpop.f32.mrb[0].mxu0
      %v894 = vadd.f32 %v651, %v893
      %v895 = vpop.f32.mrb[0].mxu0
      %896 = vmatprep.mubr.bf16.mxu0 0
      %897 = vmatmul.mubr.bf16.gmra.mrb[0].mxu0 %v373
      %v898 = vpop.f32.mrb[0].mxu0
      %v899 = vadd.f32 %v656, %v898
      %v900 = vpop.f32.mrb[0].mxu0
      %v901 = vpop.f32.mrb[0].mxu0
      %v902 = vadd.f32 %v659, %v901
      %v903 = vpop.f32.mrb[0].mxu0
      %904 = vmatprep.mubr.bf16.mxu0 0
      %905 = vmatmul.mubr.bf16.gmra.mrb[0].mxu0 %v374
      %v906 = vpop.f32.mrb[0].mxu0
      %v907 = vadd.f32 %v664, %v906
      %v908 = vpop.f32.mrb[0].mxu0
      %v909 = vpop.f32.mrb[0].mxu0
      %v910 = vadd.f32 %v667, %v909
      %v911 = vpop.f32.mrb[0].mxu0
      %912 = vmatprep.mubr.bf16.mxu0 0
      %913 = vmatmul.mubr.bf16.gmra.mrb[0].mxu0 %v375
      %v914 = vpop.f32.mrb[0].mxu0
      %v915 = vadd.f32 %v672, %v914
      %v916 = vpop.f32.mrb[0].mxu0
      %v917 = vpop.f32.mrb[0].mxu0
      %v918 = vadd.f32 %v675, %v917
      %v919 = vpop.f32.mrb[0].mxu0
      %920 = vmatprep.mubr.bf16.mxu0 0
      %921 = vmatmul.mubr.bf16.gmra.mrb[0].mxu0 %v376
      %v922 = vpop.f32.mrb[0].mxu0
      %v923 = vadd.f32 %v680, %v922
      %v924 = vpop.f32.mrb[0].mxu0
      %v925 = vpop.f32.mrb[0].mxu0
      %v926 = vadd.f32 %v683, %v925
      %v927 = vpop.f32.mrb[0].mxu0
      %928 = vmatprep.mubr.bf16.mxu0 0
      %929 = vmatmul.mubr.bf16.gmra.mrb[0].mxu0 %v377
      %v930 = vpop.f32.mrb[0].mxu0
      %v931 = vadd.f32 %v688, %v930
      %v932 = vpop.f32.mrb[0].mxu0
      %v933 = vpop.f32.mrb[0].mxu0
      %v934 = vadd.f32 %v691, %v933
      %v935 = vpop.f32.mrb[0].mxu0
      %936 = vmatprep.mubr.bf16.mxu0 0
      %937 = vmatmul.mubr.bf16.gmra.mrb[0].mxu0 %v378
      %v938 = vpop.f32.mrb[0].mxu0
      %v939 = vadd.f32 %v696, %v938
      %v940 = vpop.f32.mrb[0].mxu0
      %v941 = vpop.f32.mrb[0].mxu0
      %v942 = vadd.f32 %v699, %v941
      %v943 = vpop.f32.mrb[0].mxu0
      %944 = vmatprep.mubr.bf16.mxu0 0
      %945 = vmatmul.mubr.bf16.gmra.mrb[0].mxu0 %v379
      %v946 = vpop.f32.mrb[0].mxu0
      %v947 = vadd.f32 %v704, %v946
      %v948 = vpop.f32.mrb[0].mxu0
      %v949 = vpop.f32.mrb[0].mxu0
      %v950 = vadd.f32 %v707, %v949
      %v951 = vpop.f32.mrb[0].mxu0
      %952 = vmatprep.mubr.bf16.mxu0 0
      %953 = vmatmul.mubr.bf16.gmra.mrb[0].mxu0 %v380
      %v954 = vpop.f32.mrb[0].mxu0
      %v955 = vadd.f32 %v712, %v954
      %v956 = vpop.f32.mrb[0].mxu0
      %v957 = vpop.f32.mrb[0].mxu0
      %v958 = vadd.f32 %v715, %v957
      %v959 = vpop.f32.mrb[0].mxu0
      %960 = vmatprep.mubr.bf16.mxu0 0
      %961 = vmatmul.mubr.bf16.gmra.mrb[0].mxu0 %v381
      %v962 = vpop.f32.mrb[0].mxu0
      %v963 = vadd.f32 %v720, %v962
      %v964 = vpop.f32.mrb[0].mxu0
      %v965 = vpop.f32.mrb[0].mxu0
      %v966 = vadd.f32 %v723, %v965
      %v967 = vpop.f32.mrb[0].mxu0
      %968 = vmatprep.mubr.bf16.mxu0 0
      %969 = vmatmul.mubr.bf16.gmra.mrb[0].mxu0 %v382
      %v970 = vpop.f32.mrb[0].mxu0
      %v971 = vadd.f32 %v728, %v970
      %v972 = vpop.f32.mrb[0].mxu0
      %v973 = vpop.f32.mrb[0].mxu0
      %v974 = vadd.f32 %v731, %v973
      %v975 = vpop.f32.mrb[0].mxu0
      %976 = vmatprep.mubr.bf16.mxu0 0
      %977 = vmatmul.mubr.bf16.gmra.mrb[0].mxu0 %v383
      %v978 = vpop.f32.mrb[0].mxu0
      %v979 = vadd.f32 %v736, %v978
      %v980 = vpop.f32.mrb[0].mxu0
      %v981 = vpop.f32.mrb[0].mxu0
      %v982 = vadd.f32 %v739, %v981
      %v983 = vpop.f32.mrb[0].mxu0
      %984 = vmatprep.mubr.bf16.mxu0 0
      %985 = vmatmul.mubr.bf16.gmra.mrb[0].mxu0 %v384
      %v986 = vpop.f32.mrb[0].mxu0
      %v987 = vadd.f32 %v744, %v986
      %v988 = vpop.f32.mrb[0].mxu0
      %v989 = vpop.f32.mrb[0].mxu0
      %v990 = vadd.f32 %v747, %v989
      %v991 = vpop.f32.mrb[0].mxu0
      %992 = vmatprep.mubr.bf16.mxu0 0
      %993 = vmatmul.mubr.bf16.gmra.mrb[0].mxu0 %v385
      %v994 = vpop.f32.mrb[0].mxu0
      %v995 = vadd.f32 %v752, %v994
      %v996 = vpop.f32.mrb[0].mxu0
      %v997 = vpop.f32.mrb[0].mxu0
      %v998 = vadd.f32 %v755, %v997
      %v999 = vpop.f32.mrb[0].mxu0
      %1000 = vmatprep.mubr.bf16.mxu0 0
      %1001 = vmatmul.mubr.bf16.gmra.mrb[0].mxu0 %v386
      %v1002 = vpop.f32.mrb[0].mxu0
      %v1003 = vadd.f32 %v760, %v1002
      %v1004 = vpop.f32.mrb[0].mxu0
      %v1005 = vpop.f32.mrb[0].mxu0
      %v1006 = vadd.f32 %v763, %v1005
      %v1007 = vpop.f32.mrb[0].mxu0
      %1008 = vmatprep.mubr.bf16.mxu0 0
      %1009 = vmatmul.mubr.bf16.gmra.mrb[0].mxu0 %v387
      %v1010 = vpop.f32.mrb[0].mxu0
      %v1011 = vadd.f32 %v768, %v1010
      %v1012 = vpop.f32.mrb[0].mxu0
      %v1013 = vpop.f32.mrb[0].mxu0
      %v1014 = vadd.f32 %v771, %v1013
      %v1015 = vpop.f32.mrb[0].mxu0
      %1016 = vmatprep.mubr.bf16.mxu0 0
      %1017 = vmatmul.mubr.bf16.gmra.mrb[0].mxu0 %v388
      %v1018 = vpop.f32.mrb[0].mxu0
      %v1019 = vadd.f32 %v776, %v1018
      %v1020 = vpop.f32.mrb[0].mxu0
      %v1021 = vpop.f32.mrb[0].mxu0
      %v1022 = vadd.f32 %v779, %v1021
      %v1023 = vpop.f32.mrb[0].mxu0
      %1024 = vdwg.mxu0
      %v1025 = vld [vmem:[%s219] sm:$0xe]
      %s1026 = scalar_lea.vmem %s1, 128
      %v1027 = vld [vmem:[%s1026] sm:$0xf]
      %v1028 = vld [vmem:[%s1026 + $0x4] sm:$0xf]
      %v1029 = vld [vmem:[%s1026 + $0x8] sm:$0xf]
      %v1030 = vld [vmem:[%s1026 + $0xc] sm:$0xf]
      %v1031 = vld [vmem:[%s1026 + $0x10] sm:$0xf]
      %v1032 = vld [vmem:[%s1026 + $0x14] sm:$0xf]
      %v1033 = vld [vmem:[%s1026 + $0x18] sm:$0xf]
      %v1034 = vld [vmem:[%s1026 + $0x1c] sm:$0xf]
      %v1035 = vld [vmem:[%s1026 + $0x20] sm:$0xf]
      %v1036 = vld [vmem:[%s1026 + $0x24] sm:$0xf]
      %v1037 = vld [vmem:[%s1026 + $0x28] sm:$0xf]
      %v1038 = vld [vmem:[%s1026 + $0x2c] sm:$0xf]
      %v1039 = vld [vmem:[%s1026 + $0x30] sm:$0xf]
      %v1040 = vld [vmem:[%s1026 + $0x34] sm:$0xf]
      %v1041 = vld [vmem:[%s1026 + $0x38] sm:$0xf]
      %v1042 = vld [vmem:[%s1026 + $0x3c] sm:$0xf]
      %v1044 = vunpack.c.l.b16 %v1025
      %v1045 = vpack.c.b16 %v335, %v1044
      %vm1046 = vcmask 1046528
      %v1047 = vrot.slane %v1045, 1
      %v1048 = vrot.slane %v372, 1
      %v1049 = vsel %vm1046, %v1047, %v1048
      %v1050 = vrot.slane %v373, 1
      %v1051 = vsel %vm1046, %v1048, %v1050
      %v1052 = vrot.slane %v374, 1
      %v1053 = vsel %vm1046, %v1050, %v1052
      %v1054 = vrot.slane %v375, 1
      %v1055 = vsel %vm1046, %v1052, %v1054
      %v1056 = vrot.slane %v376, 1
      %v1057 = vsel %vm1046, %v1054, %v1056
      %v1058 = vrot.slane %v377, 1
      %v1059 = vsel %vm1046, %v1056, %v1058
      %v1060 = vrot.slane %v378, 1
      %v1061 = vsel %vm1046, %v1058, %v1060
      %v1062 = vrot.slane %v379, 1
      %v1063 = vsel %vm1046, %v1060, %v1062
      %v1064 = vrot.slane %v380, 1
      %v1065 = vsel %vm1046, %v1062, %v1064
      %v1066 = vrot.slane %v381, 1
      %v1067 = vsel %vm1046, %v1064, %v1066
      %v1068 = vrot.slane %v382, 1
      %v1069 = vsel %vm1046, %v1066, %v1068
      %v1070 = vrot.slane %v383, 1
      %v1071 = vsel %vm1046, %v1068, %v1070
      %v1072 = vrot.slane %v384, 1
      %v1073 = vsel %vm1046, %v1070, %v1072
      %v1074 = vrot.slane %v385, 1
      %v1075 = vsel %vm1046, %v1072, %v1074
      %v1076 = vrot.slane %v386, 1
      %v1077 = vsel %vm1046, %v1074, %v1076
      %v1078 = vrot.slane %v387, 1
      %v1079 = vsel %vm1046, %v1076, %v1078
      %v1080 = vrot.slane %v388, 1
      %v1081 = vsel %vm1046, %v1078, %v1080
      %v1082 = vrot.slane %v389, 1
      %v1083 = vsel %vm1046, %v1080, %v1082
      %v1118 = vunpack.c.l.b16 %v1027
      %v1119 = vunpack.c.l.b16 %v1028
      %v1120 = vunpack.c.l.b16 %v1029
      %v1121 = vunpack.c.l.b16 %v1030
      %v1122 = vunpack.c.l.b16 %v1031
      %v1123 = vunpack.c.l.b16 %v1032
      %v1124 = vunpack.c.l.b16 %v1033
      %v1125 = vunpack.c.l.b16 %v1034
      %v1126 = vunpack.c.l.b16 %v1035
      %v1127 = vunpack.c.l.b16 %v1036
      %v1128 = vunpack.c.l.b16 %v1037
      %v1129 = vunpack.c.l.b16 %v1038
      %v1130 = vunpack.c.l.b16 %v1039
      %v1131 = vunpack.c.l.b16 %v1040
      %v1132 = vunpack.c.l.b16 %v1041
      %v1133 = vunpack.c.l.b16 %v1042
      %v1134 = vpack.c.b16 %v1119, %v1118
      %v1135 = vpack.c.b16 %v1121, %v1120
      %v1136 = vpack.c.b16 %v1123, %v1122
      %v1137 = vpack.c.b16 %v1125, %v1124
      %v1138 = vpack.c.b16 %v1127, %v1126
      %v1139 = vpack.c.b16 %v1129, %v1128
      %v1140 = vpack.c.b16 %v1131, %v1130
      %v1141 = vpack.c.b16 %v1133, %v1132
      %1150 = vmatprep.subr.bf16.mxu0 0
      %1151 = vmatpush1.bf16.msra.mxu0 %v1134
      %1152 = vmatprep.subr.bf16.mxu0 0
      %1153 = vmatpush1.bf16.msra.mxu0 %v1135
      %1154 = vmatprep.subr.bf16.mxu0 0
      %1155 = vmatpush1.bf16.msra.mxu0 %v1136
      %1156 = vmatprep.subr.bf16.mxu0 0
      %1157 = vmatpush1.bf16.msra.mxu0 %v1137
      %1158 = vmatprep.subr.bf16.mxu0 0
      %1159 = vmatpush1.bf16.msra.mxu0 %v1138
      %1160 = vmatprep.subr.bf16.mxu0 0
      %1161 = vmatpush1.bf16.msra.mxu0 %v1139
      %1162 = vmatprep.subr.bf16.mxu0 0
      %1163 = vmatpush1.bf16.msra.mxu0 %v1140
      %1164 = vmatprep.subr.bf16.mxu0 0
      %1165 = vmatpush1.bf16.msra.mxu0 %v1141
      %1166 = vmatprep.subr.bf16.mxu0 0
      %1167 = vmatpush1.bf16.msra.mxu0 0
      %1168 = vmatprep.subr.bf16.mxu0 0
      %1169 = vmatpush1.bf16.msra.mxu0 0
      %1170 = vmatprep.subr.bf16.mxu0 0
      %1171 = vmatpush1.bf16.msra.mxu0 0
      %1172 = vmatprep.subr.bf16.mxu0 0
      %1173 = vmatpush1.bf16.msra.mxu0 0
      %1174 = vmatprep.subr.bf16.mxu0 0
      %1175 = vmatpush1.bf16.msra.mxu0 0
      %1176 = vmatprep.subr.bf16.mxu0 0
      %1177 = vmatpush1.bf16.msra.mxu0 0
      %1178 = vmatprep.subr.bf16.mxu0 0
      %1179 = vmatpush1.bf16.msra.mxu0 0
      %1180 = vmatprep.subr.bf16.mxu0 0
      %1181 = vmatpush1.bf16.msra.mxu0 0
      %1182 = vmatprep.mubr.bf16.mxu0 0
      %1183 = vmatmul.mubr.bf16.gmra.mrb[0].mxu0 %v1049
      %v1184 = vpop.f32.mrb[0].mxu0
      %v1185 = vadd.f32 0.0, %v1184
      %v1186 = vpop.f32.mrb[0].mxu0
      %v1187 = vpop.f32.mrb[0].mxu0
      %v1188 = vadd.f32 0.0, %v1187
      %v1189 = vpop.f32.mrb[0].mxu0
      %1190 = vmatprep.mubr.bf16.mxu0 0
      %1191 = vmatmul.mubr.bf16.gmra.mrb[0].mxu0 %v1051
      %v1192 = vpop.f32.mrb[0].mxu0
      %v1193 = vadd.f32 0.0, %v1192
      %v1194 = vpop.f32.mrb[0].mxu0
      %v1195 = vpop.f32.mrb[0].mxu0
      %v1196 = vadd.f32 0.0, %v1195
      %v1197 = vpop.f32.mrb[0].mxu0
      %1198 = vmatprep.mubr.bf16.mxu0 0
      %1199 = vmatmul.mubr.bf16.gmra.mrb[0].mxu0 %v1053
      %v1200 = vpop.f32.mrb[0].mxu0
      %v1201 = vadd.f32 0.0, %v1200
      %v1202 = vpop.f32.mrb[0].mxu0
      %v1203 = vpop.f32.mrb[0].mxu0
      %v1204 = vadd.f32 0.0, %v1203
      %v1205 = vpop.f32.mrb[0].mxu0
      %1206 = vmatprep.mubr.bf16.mxu0 0
      %1207 = vmatmul.mubr.bf16.gmra.mrb[0].mxu0 %v1055
      %v1208 = vpop.f32.mrb[0].mxu0
      %v1209 = vadd.f32 0.0, %v1208
      %v1210 = vpop.f32.mrb[0].mxu0
      %v1211 = vpop.f32.mrb[0].mxu0
      %v1212 = vadd.f32 0.0, %v1211
      %v1213 = vpop.f32.mrb[0].mxu0
      %1214 = vmatprep.mubr.bf16.mxu0 0
      %1215 = vmatmul.mubr.bf16.gmra.mrb[0].mxu0 %v1057
      %v1216 = vpop.f32.mrb[0].mxu0
      %v1217 = vadd.f32 0.0, %v1216
      %v1218 = vpop.f32.mrb[0].mxu0
      %v1219 = vpop.f32.mrb[0].mxu0
      %v1220 = vadd.f32 0.0, %v1219
      %v1221 = vpop.f32.mrb[0].mxu0
      %1222 = vmatprep.mubr.bf16.mxu0 0
      %1223 = vmatmul.mubr.bf16.gmra.mrb[0].mxu0 %v1059
      %v1224 = vpop.f32.mrb[0].mxu0
      %v1225 = vadd.f32 0.0, %v1224
      %v1226 = vpop.f32.mrb[0].mxu0
      %v1227 = vpop.f32.mrb[0].mxu0
      %v1228 = vadd.f32 0.0, %v1227
      %v1229 = vpop.f32.mrb[0].mxu0
      %1230 = vmatprep.mubr.bf16.mxu0 0
      %1231 = vmatmul.mubr.bf16.gmra.mrb[0].mxu0 %v1061
      %v1232 = vpop.f32.mrb[0].mxu0
      %v1233 = vadd.f32 0.0, %v1232
      %v1234 = vpop.f32.mrb[0].mxu0
      %v1235 = vpop.f32.mrb[0].mxu0
      %v1236 = vadd.f32 0.0, %v1235
      %v1237 = vpop.f32.mrb[0].mxu0
      %1238 = vmatprep.mubr.bf16.mxu0 0
      %1239 = vmatmul.mubr.bf16.gmra.mrb[0].mxu0 %v1063
      %v1240 = vpop.f32.mrb[0].mxu0
      %v1241 = vadd.f32 0.0, %v1240
      %v1242 = vpop.f32.mrb[0].mxu0
      %v1243 = vpop.f32.mrb[0].mxu0
      %v1244 = vadd.f32 0.0, %v1243
      %v1245 = vpop.f32.mrb[0].mxu0
      %1246 = vmatprep.mubr.bf16.mxu0 0
      %1247 = vmatmul.mubr.bf16.gmra.mrb[0].mxu0 %v1065
      %v1248 = vpop.f32.mrb[0].mxu0
      %v1249 = vadd.f32 0.0, %v1248
      %v1250 = vpop.f32.mrb[0].mxu0
      %v1251 = vpop.f32.mrb[0].mxu0
      %v1252 = vadd.f32 0.0, %v1251
      %v1253 = vpop.f32.mrb[0].mxu0
      %1254 = vmatprep.mubr.bf16.mxu0 0
      %1255 = vmatmul.mubr.bf16.gmra.mrb[0].mxu0 %v1067
      %v1256 = vpop.f32.mrb[0].mxu0
      %v1257 = vadd.f32 0.0, %v1256
      %v1258 = vpop.f32.mrb[0].mxu0
      %v1259 = vpop.f32.mrb[0].mxu0
      %v1260 = vadd.f32 0.0, %v1259
      %v1261 = vpop.f32.mrb[0].mxu0
      %1262 = vmatprep.mubr.bf16.mxu0 0
      %1263 = vmatmul.mubr.bf16.gmra.mrb[0].mxu0 %v1069
      %v1264 = vpop.f32.mrb[0].mxu0
      %v1265 = vadd.f32 0.0, %v1264
      %v1266 = vpop.f32.mrb[0].mxu0
      %v1267 = vpop.f32.mrb[0].mxu0
      %v1268 = vadd.f32 0.0, %v1267
      %v1269 = vpop.f32.mrb[0].mxu0
      %1270 = vmatprep.mubr.bf16.mxu0 0
      %1271 = vmatmul.mubr.bf16.gmra.mrb[0].mxu0 %v1071
      %v1272 = vpop.f32.mrb[0].mxu0
      %v1273 = vadd.f32 0.0, %v1272
      %v1274 = vpop.f32.mrb[0].mxu0
      %v1275 = vpop.f32.mrb[0].mxu0
      %v1276 = vadd.f32 0.0, %v1275
      %v1277 = vpop.f32.mrb[0].mxu0
      %1278 = vmatprep.mubr.bf16.mxu0 0
      %1279 = vmatmul.mubr.bf16.gmra.mrb[0].mxu0 %v1073
      %v1280 = vpop.f32.mrb[0].mxu0
      %v1281 = vadd.f32 0.0, %v1280
      %v1282 = vpop.f32.mrb[0].mxu0
      %v1283 = vpop.f32.mrb[0].mxu0
      %v1284 = vadd.f32 0.0, %v1283
      %v1285 = vpop.f32.mrb[0].mxu0
      %1286 = vmatprep.mubr.bf16.mxu0 0
      %1287 = vmatmul.mubr.bf16.gmra.mrb[0].mxu0 %v1075
      %v1288 = vpop.f32.mrb[0].mxu0
      %v1289 = vadd.f32 0.0, %v1288
      %v1290 = vpop.f32.mrb[0].mxu0
      %v1291 = vpop.f32.mrb[0].mxu0
      %v1292 = vadd.f32 0.0, %v1291
      %v1293 = vpop.f32.mrb[0].mxu0
      %1294 = vmatprep.mubr.bf16.mxu0 0
      %1295 = vmatmul.mubr.bf16.gmra.mrb[0].mxu0 %v1077
      %v1296 = vpop.f32.mrb[0].mxu0
      %v1297 = vadd.f32 0.0, %v1296
      %v1298 = vpop.f32.mrb[0].mxu0
      %v1299 = vpop.f32.mrb[0].mxu0
      %v1300 = vadd.f32 0.0, %v1299
      %v1301 = vpop.f32.mrb[0].mxu0
      %1302 = vmatprep.mubr.bf16.mxu0 0
      %1303 = vmatmul.mubr.bf16.gmra.mrb[0].mxu0 %v1079
      %v1304 = vpop.f32.mrb[0].mxu0
      %v1305 = vadd.f32 0.0, %v1304
      %v1306 = vpop.f32.mrb[0].mxu0
      %v1307 = vpop.f32.mrb[0].mxu0
      %v1308 = vadd.f32 0.0, %v1307
      %v1309 = vpop.f32.mrb[0].mxu0
      %1310 = vmatprep.mubr.bf16.mxu0 0
      %1311 = vmatmul.mubr.bf16.gmra.mrb[0].mxu0 %v1081
      %v1312 = vpop.f32.mrb[0].mxu0
      %v1313 = vadd.f32 0.0, %v1312
      %v1314 = vpop.f32.mrb[0].mxu0
      %v1315 = vpop.f32.mrb[0].mxu0
      %v1316 = vadd.f32 0.0, %v1315
      %v1317 = vpop.f32.mrb[0].mxu0
      %1318 = vmatprep.mubr.bf16.mxu0 0
      %1319 = vmatmul.mubr.bf16.gmra.mrb[0].mxu0 %v1083
      %v1320 = vpop.f32.mrb[0].mxu0
      %v1321 = vadd.f32 0.0, %v1320
      %v1322 = vpop.f32.mrb[0].mxu0
      %v1323 = vpop.f32.mrb[0].mxu0
      %v1324 = vadd.f32 0.0, %v1323
      %v1325 = vpop.f32.mrb[0].mxu0
      %1326 = vdwg.mxu0
      %v1327 = vadd.f32 %v883, %v1185
      %v1328 = vadd.f32 %v886, %v1188
      %v1329 = vadd.f32 %v891, %v1193
      %v1330 = vadd.f32 %v894, %v1196
      %v1331 = vadd.f32 %v899, %v1201
      %v1332 = vadd.f32 %v902, %v1204
      %v1333 = vadd.f32 %v907, %v1209
      %v1334 = vadd.f32 %v910, %v1212
      %v1335 = vadd.f32 %v915, %v1217
      %v1336 = vadd.f32 %v918, %v1220
      %v1337 = vadd.f32 %v923, %v1225
      %v1338 = vadd.f32 %v926, %v1228
      %v1339 = vadd.f32 %v931, %v1233
      %v1340 = vadd.f32 %v934, %v1236
      %v1341 = vadd.f32 %v939, %v1241
      %v1342 = vadd.f32 %v942, %v1244
      %v1343 = vadd.f32 %v947, %v1249
      %v1344 = vadd.f32 %v950, %v1252
      %v1345 = vadd.f32 %v955, %v1257
      %v1346 = vadd.f32 %v958, %v1260
      %v1347 = vadd.f32 %v963, %v1265
      %v1348 = vadd.f32 %v966, %v1268
      %v1349 = vadd.f32 %v971, %v1273
      %v1350 = vadd.f32 %v974, %v1276
      %v1351 = vadd.f32 %v979, %v1281
      %v1352 = vadd.f32 %v982, %v1284
      %v1353 = vadd.f32 %v987, %v1289
      %v1354 = vadd.f32 %v990, %v1292
      %v1355 = vadd.f32 %v995, %v1297
      %v1356 = vadd.f32 %v998, %v1300
      %v1357 = vadd.f32 %v1003, %v1305
      %v1358 = vadd.f32 %v1006, %v1308
      %v1359 = vadd.f32 %v1011, %v1313
      %v1360 = vadd.f32 %v1014, %v1316
      %v1361 = vadd.f32 %v1019, %v1321
      %v1362 = vadd.f32 %v1022, %v1324
      %v1363 = vld [vmem:[%s219 + $0x8] sm:$0xe]
      %v1364 = vld [vmem:[%s219 + $0xc] sm:$0xf]
      %v1365 = vld [vmem:[%s219 + $0x10] sm:$0xf]
      %v1366 = vld [vmem:[%s219 + $0x14] sm:$0xf]
      %v1367 = vld [vmem:[%s219 + $0x18] sm:$0xf]
      %v1368 = vld [vmem:[%s219 + $0x1c] sm:$0xf]
      %v1369 = vld [vmem:[%s219 + $0x20] sm:$0xf]
      %v1370 = vld [vmem:[%s219 + $0x24] sm:$0xf]
      %v1371 = vld [vmem:[%s219 + $0x28] sm:$0xf]
      %v1372 = vld [vmem:[%s219 + $0x2c] sm:$0xf]
      %v1373 = vld [vmem:[%s219 + $0x30] sm:$0xf]
      %v1374 = vld [vmem:[%s219 + $0x34] sm:$0xf]
      %v1375 = vld [vmem:[%s219 + $0x38] sm:$0xf]
      %v1376 = vld [vmem:[%s219 + $0x3c] sm:$0xf]
      %v1377 = vld [vmem:[%s219 + $0x40] sm:$0xf]
      %v1378 = vld [vmem:[%s219 + $0x44] sm:$0xf]
      %v1379 = vld [vmem:[%s219 + $0x48] sm:$0xf]
      %v1380 = vld [vmem:[%s219 + $0x4c] sm:$0xf]
      %v1381 = vld [vmem:[%s219 + $0x50] sm:$0xf]
      %v1382 = vld [vmem:[%s219 + $0x54] sm:$0xf]
      %v1383 = vld [vmem:[%s219 + $0x58] sm:$0xf]
      %v1384 = vld [vmem:[%s219 + $0x5c] sm:$0xf]
      %v1385 = vld [vmem:[%s219 + $0x60] sm:$0xf]
      %v1386 = vld [vmem:[%s219 + $0x64] sm:$0xf]
      %v1387 = vld [vmem:[%s219 + $0x68] sm:$0xf]
      %v1388 = vld [vmem:[%s219 + $0x6c] sm:$0xf]
      %v1389 = vld [vmem:[%s219 + $0x70] sm:$0xf]
      %v1390 = vld [vmem:[%s219 + $0x74] sm:$0xf]
      %v1391 = vld [vmem:[%s219 + $0x78] sm:$0xf]
      %v1392 = vld [vmem:[%s219 + $0x7c] sm:$0xf]
      %v1393 = vld [vmem:[%s219 + $0x80] sm:$0xf]
      %v1394 = vld [vmem:[%s219 + $0x84] sm:$0xf]
      %v1395 = vld [vmem:[%s219 + $0x88] sm:$0xf]
      %v1396 = vld [vmem:[%s219 + $0x8c] sm:$0xf]
      %v1397 = vld [vmem:[%s219 + $0x90] sm:$0xf]
      %v1398 = vld [vmem:[%s219 + $0x94] sm:$0xf]
      %v1399 = vld [vmem:[%s219 + $0x98] sm:$0x1]
      %s1400 = scalar_lea.vmem %s1, 192
      %v1401 = vld [vmem:[%s1400] sm:$0xf]
      %v1402 = vld [vmem:[%s1400 + $0x4] sm:$0xf]
      %v1403 = vld [vmem:[%s1400 + $0x8] sm:$0xf]
      %v1404 = vld [vmem:[%s1400 + $0xc] sm:$0xf]
      %v1405 = vld [vmem:[%s1400 + $0x10] sm:$0xf]
      %v1406 = vld [vmem:[%s1400 + $0x14] sm:$0xf]
      %v1407 = vld [vmem:[%s1400 + $0x18] sm:$0xf]
      %v1408 = vld [vmem:[%s1400 + $0x1c] sm:$0xf]
      %v1409 = vld [vmem:[%s1400 + $0x20] sm:$0xf]
      %v1410 = vld [vmem:[%s1400 + $0x24] sm:$0xf]
      %v1411 = vld [vmem:[%s1400 + $0x28] sm:$0xf]
      %v1412 = vld [vmem:[%s1400 + $0x2c] sm:$0xf]
      %v1413 = vld [vmem:[%s1400 + $0x30] sm:$0xf]
      %v1414 = vld [vmem:[%s1400 + $0x34] sm:$0xf]
      %v1415 = vld [vmem:[%s1400 + $0x38] sm:$0xf]
      %v1416 = vld [vmem:[%s1400 + $0x3c] sm:$0xf]
      %v1454 = vunpack.c.l.b16 %v1363
      %v1455 = vunpack.c.l.b16 %v1364
      %v1456 = vunpack.c.l.b16 %v1365
      %v1457 = vunpack.c.l.b16 %v1366
      %v1458 = vunpack.c.l.b16 %v1367
      %v1459 = vunpack.c.l.b16 %v1368
      %v1460 = vunpack.c.l.b16 %v1369
      %v1461 = vunpack.c.l.b16 %v1370
      %v1462 = vunpack.c.l.b16 %v1371
      %v1463 = vunpack.c.l.b16 %v1372
      %v1464 = vunpack.c.l.b16 %v1373
      %v1465 = vunpack.c.l.b16 %v1374
      %v1466 = vunpack.c.l.b16 %v1375
      %v1467 = vunpack.c.l.b16 %v1376
      %v1468 = vunpack.c.l.b16 %v1377
      %v1469 = vunpack.c.l.b16 %v1378
      %v1470 = vunpack.c.l.b16 %v1379
      %v1471 = vunpack.c.l.b16 %v1380
      %v1472 = vunpack.c.l.b16 %v1381
      %v1473 = vunpack.c.l.b16 %v1382
      %v1474 = vunpack.c.l.b16 %v1383
      %v1475 = vunpack.c.l.b16 %v1384
      %v1476 = vunpack.c.l.b16 %v1385
      %v1477 = vunpack.c.l.b16 %v1386
      %v1478 = vunpack.c.l.b16 %v1387
      %v1479 = vunpack.c.l.b16 %v1388
      %v1480 = vunpack.c.l.b16 %v1389
      %v1481 = vunpack.c.l.b16 %v1390
      %v1482 = vunpack.c.l.b16 %v1391
      %v1483 = vunpack.c.l.b16 %v1392
      %v1484 = vunpack.c.l.b16 %v1393
      %v1485 = vunpack.c.l.b16 %v1394
      %v1486 = vunpack.c.l.b16 %v1395
      %v1487 = vunpack.c.l.b16 %v1396
      %v1488 = vunpack.c.l.b16 %v1397
      %v1489 = vunpack.c.l.b16 %v1398
      %v1490 = vunpack.c.l.b16 %v1399
      %v1491 = vpack.c.b16 %v1455, %v1454
      %v1492 = vpack.c.b16 %v1457, %v1456
      %v1493 = vpack.c.b16 %v1459, %v1458
      %v1494 = vpack.c.b16 %v1461, %v1460
      %v1495 = vpack.c.b16 %v1463, %v1462
      %v1496 = vpack.c.b16 %v1465, %v1464
      %v1497 = vpack.c.b16 %v1467, %v1466
      %v1498 = vpack.c.b16 %v1469, %v1468
      %v1499 = vpack.c.b16 %v1471, %v1470
      %v1500 = vpack.c.b16 %v1473, %v1472
      %v1501 = vpack.c.b16 %v1475, %v1474
      %v1502 = vpack.c.b16 %v1477, %v1476
      %v1503 = vpack.c.b16 %v1479, %v1478
      %v1504 = vpack.c.b16 %v1481, %v1480
      %v1505 = vpack.c.b16 %v1483, %v1482
      %v1506 = vpack.c.b16 %v1485, %v1484
      %v1507 = vpack.c.b16 %v1487, %v1486
      %v1508 = vpack.c.b16 %v1489, %v1488
      %v1509 = vpack.c.b16 %v1490, %v1490
      %v1510 = vrot.slane %v1491, 1
      %v1511 = vrot.slane %v1492, 1
      %v1512 = vsel %vm1046, %v1510, %v1511
      %v1513 = vrot.slane %v1493, 1
      %v1514 = vsel %vm1046, %v1511, %v1513
      %v1515 = vrot.slane %v1494, 1
      %v1516 = vsel %vm1046, %v1513, %v1515
      %v1517 = vrot.slane %v1495, 1
      %v1518 = vsel %vm1046, %v1515, %v1517
      %v1519 = vrot.slane %v1496, 1
      %v1520 = vsel %vm1046, %v1517, %v1519
      %v1521 = vrot.slane %v1497, 1
      %v1522 = vsel %vm1046, %v1519, %v1521
      %v1523 = vrot.slane %v1498, 1
      %v1524 = vsel %vm1046, %v1521, %v1523
      %v1525 = vrot.slane %v1499, 1
      %v1526 = vsel %vm1046, %v1523, %v1525
      %v1527 = vrot.slane %v1500, 1
      %v1528 = vsel %vm1046, %v1525, %v1527
      %v1529 = vrot.slane %v1501, 1
      %v1530 = vsel %vm1046, %v1527, %v1529
      %v1531 = vrot.slane %v1502, 1
      %v1532 = vsel %vm1046, %v1529, %v1531
      %v1533 = vrot.slane %v1503, 1
      %v1534 = vsel %vm1046, %v1531, %v1533
      %v1535 = vrot.slane %v1504, 1
      %v1536 = vsel %vm1046, %v1533, %v1535
      %v1537 = vrot.slane %v1505, 1
      %v1538 = vsel %vm1046, %v1535, %v1537
      %v1539 = vrot.slane %v1506, 1
      %v1540 = vsel %vm1046, %v1537, %v1539
      %v1541 = vrot.slane %v1507, 1
      %v1542 = vsel %vm1046, %v1539, %v1541
      %v1543 = vrot.slane %v1508, 1
      %v1544 = vsel %vm1046, %v1541, %v1543
      %v1545 = vrot.slane %v1509, 1
      %v1546 = vsel %vm1046, %v1543, %v1545
      %v1581 = vunpack.c.l.b16 %v1401
      %v1582 = vunpack.c.l.b16 %v1402
      %v1583 = vunpack.c.l.b16 %v1403
      %v1584 = vunpack.c.l.b16 %v1404
      %v1585 = vunpack.c.l.b16 %v1405
      %v1586 = vunpack.c.l.b16 %v1406
      %v1587 = vunpack.c.l.b16 %v1407
      %v1588 = vunpack.c.l.b16 %v1408
      %v1589 = vunpack.c.l.b16 %v1409
      %v1590 = vunpack.c.l.b16 %v1410
      %v1591 = vunpack.c.l.b16 %v1411
      %v1592 = vunpack.c.l.b16 %v1412
      %v1593 = vunpack.c.l.b16 %v1413
      %v1594 = vunpack.c.l.b16 %v1414
      %v1595 = vunpack.c.l.b16 %v1415
      %v1596 = vunpack.c.l.b16 %v1416
      %v1597 = vpack.c.b16 %v1582, %v1581
      %v1598 = vpack.c.b16 %v1584, %v1583
      %v1599 = vpack.c.b16 %v1586, %v1585
      %v1600 = vpack.c.b16 %v1588, %v1587
      %v1601 = vpack.c.b16 %v1590, %v1589
      %v1602 = vpack.c.b16 %v1592, %v1591
      %v1603 = vpack.c.b16 %v1594, %v1593
      %v1604 = vpack.c.b16 %v1596, %v1595
      %1613 = vmatprep.subr.bf16.mxu0 0
      %1614 = vmatpush1.bf16.msra.mxu0 %v1597
      %1615 = vmatprep.subr.bf16.mxu0 0
      %1616 = vmatpush1.bf16.msra.mxu0 %v1598
      %1617 = vmatprep.subr.bf16.mxu0 0
      %1618 = vmatpush1.bf16.msra.mxu0 %v1599
      %1619 = vmatprep.subr.bf16.mxu0 0
      %1620 = vmatpush1.bf16.msra.mxu0 %v1600
      %1621 = vmatprep.subr.bf16.mxu0 0
      %1622 = vmatpush1.bf16.msra.mxu0 %v1601
      %1623 = vmatprep.subr.bf16.mxu0 0
      %1624 = vmatpush1.bf16.msra.mxu0 %v1602
      %1625 = vmatprep.subr.bf16.mxu0 0
      %1626 = vmatpush1.bf16.msra.mxu0 %v1603
      %1627 = vmatprep.subr.bf16.mxu0 0
      %1628 = vmatpush1.bf16.msra.mxu0 %v1604
      %1629 = vmatprep.subr.bf16.mxu0 0
      %1630 = vmatpush1.bf16.msra.mxu0 0
      %1631 = vmatprep.subr.bf16.mxu0 0
      %1632 = vmatpush1.bf16.msra.mxu0 0
      %1633 = vmatprep.subr.bf16.mxu0 0
      %1634 = vmatpush1.bf16.msra.mxu0 0
      %1635 = vmatprep.subr.bf16.mxu0 0
      %1636 = vmatpush1.bf16.msra.mxu0 0
      %1637 = vmatprep.subr.bf16.mxu0 0
      %1638 = vmatpush1.bf16.msra.mxu0 0
      %1639 = vmatprep.subr.bf16.mxu0 0
      %1640 = vmatpush1.bf16.msra.mxu0 0
      %1641 = vmatprep.subr.bf16.mxu0 0
      %1642 = vmatpush1.bf16.msra.mxu0 0
      %1643 = vmatprep.subr.bf16.mxu0 0
      %1644 = vmatpush1.bf16.msra.mxu0 0
      %1645 = vmatprep.mubr.bf16.mxu0 0
      %1646 = vmatmul.mubr.bf16.gmra.mrb[0].mxu0 %v1512
      %v1647 = vpop.f32.mrb[0].mxu0
      %v1648 = vadd.f32 0.0, %v1647
      %v1649 = vpop.f32.mrb[0].mxu0
      %v1650 = vpop.f32.mrb[0].mxu0
      %v1651 = vadd.f32 0.0, %v1650
      %v1652 = vpop.f32.mrb[0].mxu0
      %1653 = vmatprep.mubr.bf16.mxu0 0
      %1654 = vmatmul.mubr.bf16.gmra.mrb[0].mxu0 %v1514
      %v1655 = vpop.f32.mrb[0].mxu0
      %v1656 = vadd.f32 0.0, %v1655
      %v1657 = vpop.f32.mrb[0].mxu0
      %v1658 = vpop.f32.mrb[0].mxu0
      %v1659 = vadd.f32 0.0, %v1658
      %v1660 = vpop.f32.mrb[0].mxu0
      %1661 = vmatprep.mubr.bf16.mxu0 0
      %1662 = vmatmul.mubr.bf16.gmra.mrb[0].mxu0 %v1516
      %v1663 = vpop.f32.mrb[0].mxu0
      %v1664 = vadd.f32 0.0, %v1663
      %v1665 = vpop.f32.mrb[0].mxu0
      %v1666 = vpop.f32.mrb[0].mxu0
      %v1667 = vadd.f32 0.0, %v1666
      %v1668 = vpop.f32.mrb[0].mxu0
      %1669 = vmatprep.mubr.bf16.mxu0 0
      %1670 = vmatmul.mubr.bf16.gmra.mrb[0].mxu0 %v1518
      %v1671 = vpop.f32.mrb[0].mxu0
      %v1672 = vadd.f32 0.0, %v1671
      %v1673 = vpop.f32.mrb[0].mxu0
      %v1674 = vpop.f32.mrb[0].mxu0
      %v1675 = vadd.f32 0.0, %v1674
      %v1676 = vpop.f32.mrb[0].mxu0
      %1677 = vmatprep.mubr.bf16.mxu0 0
      %1678 = vmatmul.mubr.bf16.gmra.mrb[0].mxu0 %v1520
      %v1679 = vpop.f32.mrb[0].mxu0
      %v1680 = vadd.f32 0.0, %v1679
      %v1681 = vpop.f32.mrb[0].mxu0
      %v1682 = vpop.f32.mrb[0].mxu0
      %v1683 = vadd.f32 0.0, %v1682
      %v1684 = vpop.f32.mrb[0].mxu0
      %1685 = vmatprep.mubr.bf16.mxu0 0
      %1686 = vmatmul.mubr.bf16.gmra.mrb[0].mxu0 %v1522
      %v1687 = vpop.f32.mrb[0].mxu0
      %v1688 = vadd.f32 0.0, %v1687
      %v1689 = vpop.f32.mrb[0].mxu0
      %v1690 = vpop.f32.mrb[0].mxu0
      %v1691 = vadd.f32 0.0, %v1690
      %v1692 = vpop.f32.mrb[0].mxu0
      %1693 = vmatprep.mubr.bf16.mxu0 0
      %1694 = vmatmul.mubr.bf16.gmra.mrb[0].mxu0 %v1524
      %v1695 = vpop.f32.mrb[0].mxu0
      %v1696 = vadd.f32 0.0, %v1695
      %v1697 = vpop.f32.mrb[0].mxu0
      %v1698 = vpop.f32.mrb[0].mxu0
      %v1699 = vadd.f32 0.0, %v1698
      %v1700 = vpop.f32.mrb[0].mxu0
      %1701 = vmatprep.mubr.bf16.mxu0 0
      %1702 = vmatmul.mubr.bf16.gmra.mrb[0].mxu0 %v1526
      %v1703 = vpop.f32.mrb[0].mxu0
      %v1704 = vadd.f32 0.0, %v1703
      %v1705 = vpop.f32.mrb[0].mxu0
      %v1706 = vpop.f32.mrb[0].mxu0
      %v1707 = vadd.f32 0.0, %v1706
      %v1708 = vpop.f32.mrb[0].mxu0
      %1709 = vmatprep.mubr.bf16.mxu0 0
      %1710 = vmatmul.mubr.bf16.gmra.mrb[0].mxu0 %v1528
      %v1711 = vpop.f32.mrb[0].mxu0
      %v1712 = vadd.f32 0.0, %v1711
      %v1713 = vpop.f32.mrb[0].mxu0
      %v1714 = vpop.f32.mrb[0].mxu0
      %v1715 = vadd.f32 0.0, %v1714
      %v1716 = vpop.f32.mrb[0].mxu0
      %1717 = vmatprep.mubr.bf16.mxu0 0
      %1718 = vmatmul.mubr.bf16.gmra.mrb[0].mxu0 %v1530
      %v1719 = vpop.f32.mrb[0].mxu0
      %v1720 = vadd.f32 0.0, %v1719
      %v1721 = vpop.f32.mrb[0].mxu0
      %v1722 = vpop.f32.mrb[0].mxu0
      %v1723 = vadd.f32 0.0, %v1722
      %v1724 = vpop.f32.mrb[0].mxu0
      %1725 = vmatprep.mubr.bf16.mxu0 0
      %1726 = vmatmul.mubr.bf16.gmra.mrb[0].mxu0 %v1532
      %v1727 = vpop.f32.mrb[0].mxu0
      %v1728 = vadd.f32 0.0, %v1727
      %v1729 = vpop.f32.mrb[0].mxu0
      %v1730 = vpop.f32.mrb[0].mxu0
      %v1731 = vadd.f32 0.0, %v1730
      %v1732 = vpop.f32.mrb[0].mxu0
      %1733 = vmatprep.mubr.bf16.mxu0 0
      %1734 = vmatmul.mubr.bf16.gmra.mrb[0].mxu0 %v1534
      %v1735 = vpop.f32.mrb[0].mxu0
      %v1736 = vadd.f32 0.0, %v1735
      %v1737 = vpop.f32.mrb[0].mxu0
      %v1738 = vpop.f32.mrb[0].mxu0
      %v1739 = vadd.f32 0.0, %v1738
      %v1740 = vpop.f32.mrb[0].mxu0
      %1741 = vmatprep.mubr.bf16.mxu0 0
      %1742 = vmatmul.mubr.bf16.gmra.mrb[0].mxu0 %v1536
      %v1743 = vpop.f32.mrb[0].mxu0
      %v1744 = vadd.f32 0.0, %v1743
      %v1745 = vpop.f32.mrb[0].mxu0
      %v1746 = vpop.f32.mrb[0].mxu0
      %v1747 = vadd.f32 0.0, %v1746
      %v1748 = vpop.f32.mrb[0].mxu0
      %1749 = vmatprep.mubr.bf16.mxu0 0
      %1750 = vmatmul.mubr.bf16.gmra.mrb[0].mxu0 %v1538
      %v1751 = vpop.f32.mrb[0].mxu0
      %v1752 = vadd.f32 0.0, %v1751
      %v1753 = vpop.f32.mrb[0].mxu0
      %v1754 = vpop.f32.mrb[0].mxu0
      %v1755 = vadd.f32 0.0, %v1754
      %v1756 = vpop.f32.mrb[0].mxu0
      %1757 = vmatprep.mubr.bf16.mxu0 0
      %1758 = vmatmul.mubr.bf16.gmra.mrb[0].mxu0 %v1540
      %v1759 = vpop.f32.mrb[0].mxu0
      %v1760 = vadd.f32 0.0, %v1759
      %v1761 = vpop.f32.mrb[0].mxu0
      %v1762 = vpop.f32.mrb[0].mxu0
      %v1763 = vadd.f32 0.0, %v1762
      %v1764 = vpop.f32.mrb[0].mxu0
      %1765 = vmatprep.mubr.bf16.mxu0 0
      %1766 = vmatmul.mubr.bf16.gmra.mrb[0].mxu0 %v1542
      %v1767 = vpop.f32.mrb[0].mxu0
      %v1768 = vadd.f32 0.0, %v1767
      %v1769 = vpop.f32.mrb[0].mxu0
      %v1770 = vpop.f32.mrb[0].mxu0
      %v1771 = vadd.f32 0.0, %v1770
      %v1772 = vpop.f32.mrb[0].mxu0
      %1773 = vmatprep.mubr.bf16.mxu0 0
      %1774 = vmatmul.mubr.bf16.gmra.mrb[0].mxu0 %v1544
      %v1775 = vpop.f32.mrb[0].mxu0
      %v1776 = vadd.f32 0.0, %v1775
      %v1777 = vpop.f32.mrb[0].mxu0
      %v1778 = vpop.f32.mrb[0].mxu0
      %v1779 = vadd.f32 0.0, %v1778
      %v1780 = vpop.f32.mrb[0].mxu0
      %1781 = vmatprep.mubr.bf16.mxu0 0
      %1782 = vmatmul.mubr.bf16.gmra.mrb[0].mxu0 %v1546
      %v1783 = vpop.f32.mrb[0].mxu0
      %v1784 = vadd.f32 0.0, %v1783
      %v1785 = vpop.f32.mrb[0].mxu0
      %v1786 = vpop.f32.mrb[0].mxu0
      %v1787 = vadd.f32 0.0, %v1786
      %v1788 = vpop.f32.mrb[0].mxu0
      %1789 = vdwg.mxu0
      %v1790 = vadd.f32 %v1327, %v1648
      %v1791 = vadd.f32 %v1328, %v1651
      %v1792 = vadd.f32 %v1329, %v1656
      %v1793 = vadd.f32 %v1330, %v1659
      %v1794 = vadd.f32 %v1331, %v1664
      %v1795 = vadd.f32 %v1332, %v1667
      %v1796 = vadd.f32 %v1333, %v1672
      %v1797 = vadd.f32 %v1334, %v1675
      %v1798 = vadd.f32 %v1335, %v1680
      %v1799 = vadd.f32 %v1336, %v1683
      %v1800 = vadd.f32 %v1337, %v1688
      %v1801 = vadd.f32 %v1338, %v1691
      %v1802 = vadd.f32 %v1339, %v1696
      %v1803 = vadd.f32 %v1340, %v1699
      %v1804 = vadd.f32 %v1341, %v1704
      %v1805 = vadd.f32 %v1342, %v1707
      %v1806 = vadd.f32 %v1343, %v1712
      %v1807 = vadd.f32 %v1344, %v1715
      %v1808 = vadd.f32 %v1345, %v1720
      %v1809 = vadd.f32 %v1346, %v1723
      %v1810 = vadd.f32 %v1347, %v1728
      %v1811 = vadd.f32 %v1348, %v1731
      %v1812 = vadd.f32 %v1349, %v1736
      %v1813 = vadd.f32 %v1350, %v1739
      %v1814 = vadd.f32 %v1351, %v1744
      %v1815 = vadd.f32 %v1352, %v1747
      %v1816 = vadd.f32 %v1353, %v1752
      %v1817 = vadd.f32 %v1354, %v1755
      %v1818 = vadd.f32 %v1355, %v1760
      %v1819 = vadd.f32 %v1356, %v1763
      %v1820 = vadd.f32 %v1357, %v1768
      %v1821 = vadd.f32 %v1358, %v1771
      %v1822 = vadd.f32 %v1359, %v1776
      %v1823 = vadd.f32 %v1360, %v1779
      %v1824 = vadd.f32 %v1361, %v1784
      %v1825 = vadd.f32 %v1362, %v1787
      %v1826 = vld [vmem:[%s219 + $0x98] sm:$0x3]
      %s1827 = scalar_lea.vmem %s1, 256
      %v1828 = vld [vmem:[%s1827] sm:$0xf]
      %v1829 = vld [vmem:[%s1827 + $0x4] sm:$0xf]
      %v1830 = vld [vmem:[%s1827 + $0x8] sm:$0xf]
      %v1831 = vld [vmem:[%s1827 + $0xc] sm:$0xf]
      %v1832 = vld [vmem:[%s1827 + $0x10] sm:$0xf]
      %v1833 = vld [vmem:[%s1827 + $0x14] sm:$0xf]
      %v1834 = vld [vmem:[%s1827 + $0x18] sm:$0xf]
      %v1835 = vld [vmem:[%s1827 + $0x1c] sm:$0xf]
      %v1836 = vld [vmem:[%s1827 + $0x20] sm:$0xf]
      %v1837 = vld [vmem:[%s1827 + $0x24] sm:$0xf]
      %v1838 = vld [vmem:[%s1827 + $0x28] sm:$0xf]
      %v1839 = vld [vmem:[%s1827 + $0x2c] sm:$0xf]
      %v1840 = vld [vmem:[%s1827 + $0x30] sm:$0xf]
      %v1841 = vld [vmem:[%s1827 + $0x34] sm:$0xf]
      %v1842 = vld [vmem:[%s1827 + $0x38] sm:$0xf]
      %v1843 = vld [vmem:[%s1827 + $0x3c] sm:$0xf]
      %v1845 = vunpack.c.l.b16 %v1826
      %v1846 = vpack.c.b16 %v1845, %v1845
      %vm1847 = vsmask.f32 6400
      %v1849 = vshrl.u32 %v1491, 16
      %v1851 = vrot.slane %v1849, 1
      %v1852 = vshll.u32 %v1491, 16
      %v1854 = vrot.slane %v1852, 2
      %v1855 = vor.u32 %v1851, %v1854
      %v1857 = vshrl.u32 %v1492, 16
      %v1859 = vrot.slane %v1857, 1
      %v1860 = vshll.u32 %v1492, 16
      %v1862 = vrot.slane %v1860, 2
      %v1863 = vor.u32 %v1859, %v1862
      %v1864 = vsel %vm1847, %v1855, %v1863
      %v1866 = vshrl.u32 %v1493, 16
      %v1868 = vrot.slane %v1866, 1
      %v1869 = vshll.u32 %v1493, 16
      %v1871 = vrot.slane %v1869, 2
      %v1872 = vor.u32 %v1868, %v1871
      %v1873 = vsel %vm1847, %v1863, %v1872
      %v1875 = vshrl.u32 %v1494, 16
      %v1877 = vrot.slane %v1875, 1
      %v1878 = vshll.u32 %v1494, 16
      %v1880 = vrot.slane %v1878, 2
      %v1881 = vor.u32 %v1877, %v1880
      %v1882 = vsel %vm1847, %v1872, %v1881
      %v1884 = vshrl.u32 %v1495, 16
      %v1886 = vrot.slane %v1884, 1
      %v1887 = vshll.u32 %v1495, 16
      %v1889 = vrot.slane %v1887, 2
      %v1890 = vor.u32 %v1886, %v1889
      %v1891 = vsel %vm1847, %v1881, %v1890
      %v1893 = vshrl.u32 %v1496, 16
      %v1895 = vrot.slane %v1893, 1
      %v1896 = vshll.u32 %v1496, 16
      %v1898 = vrot.slane %v1896, 2
      %v1899 = vor.u32 %v1895, %v1898
      %v1900 = vsel %vm1847, %v1890, %v1899
      %v1902 = vshrl.u32 %v1497, 16
      %v1904 = vrot.slane %v1902, 1
      %v1905 = vshll.u32 %v1497, 16
      %v1907 = vrot.slane %v1905, 2
      %v1908 = vor.u32 %v1904, %v1907
      %v1909 = vsel %vm1847, %v1899, %v1908
      %v1911 = vshrl.u32 %v1498, 16
      %v1913 = vrot.slane %v1911, 1
      %v1914 = vshll.u32 %v1498, 16
      %v1916 = vrot.slane %v1914, 2
      %v1917 = vor.u32 %v1913, %v1916
      %v1918 = vsel %vm1847, %v1908, %v1917
      %v1920 = vshrl.u32 %v1499, 16
      %v1922 = vrot.slane %v1920, 1
      %v1923 = vshll.u32 %v1499, 16
      %v1925 = vrot.slane %v1923, 2
      %v1926 = vor.u32 %v1922, %v1925
      %v1927 = vsel %vm1847, %v1917, %v1926
      %v1929 = vshrl.u32 %v1500, 16
      %v1931 = vrot.slane %v1929, 1
      %v1932 = vshll.u32 %v1500, 16
      %v1934 = vrot.slane %v1932, 2
      %v1935 = vor.u32 %v1931, %v1934
      %v1936 = vsel %vm1847, %v1926, %v1935
      %v1938 = vshrl.u32 %v1501, 16
      %v1940 = vrot.slane %v1938, 1
      %v1941 = vshll.u32 %v1501, 16
      %v1943 = vrot.slane %v1941, 2
      %v1944 = vor.u32 %v1940, %v1943
      %v1945 = vsel %vm1847, %v1935, %v1944
      %v1947 = vshrl.u32 %v1502, 16
      %v1949 = vrot.slane %v1947, 1
      %v1950 = vshll.u32 %v1502, 16
      %v1952 = vrot.slane %v1950, 2
      %v1953 = vor.u32 %v1949, %v1952
      %v1954 = vsel %vm1847, %v1944, %v1953
      %v1956 = vshrl.u32 %v1503, 16
      %v1958 = vrot.slane %v1956, 1
      %v1959 = vshll.u32 %v1503, 16
      %v1961 = vrot.slane %v1959, 2
      %v1962 = vor.u32 %v1958, %v1961
      %v1963 = vsel %vm1847, %v1953, %v1962
      %v1965 = vshrl.u32 %v1504, 16
      %v1967 = vrot.slane %v1965, 1
      %v1968 = vshll.u32 %v1504, 16
      %v1970 = vrot.slane %v1968, 2
      %v1971 = vor.u32 %v1967, %v1970
      %v1972 = vsel %vm1847, %v1962, %v1971
      %v1974 = vshrl.u32 %v1505, 16
      %v1976 = vrot.slane %v1974, 1
      %v1977 = vshll.u32 %v1505, 16
      %v1979 = vrot.slane %v1977, 2
      %v1980 = vor.u32 %v1976, %v1979
      %v1981 = vsel %vm1847, %v1971, %v1980
      %v1983 = vshrl.u32 %v1506, 16
      %v1985 = vrot.slane %v1983, 1
      %v1986 = vshll.u32 %v1506, 16
      %v1988 = vrot.slane %v1986, 2
      %v1989 = vor.u32 %v1985, %v1988
      %v1990 = vsel %vm1847, %v1980, %v1989
      %v1992 = vshrl.u32 %v1507, 16
      %v1994 = vrot.slane %v1992, 1
      %v1995 = vshll.u32 %v1507, 16
      %v1997 = vrot.slane %v1995, 2
      %v1998 = vor.u32 %v1994, %v1997
      %v1999 = vsel %vm1847, %v1989, %v1998
      %v2001 = vshrl.u32 %v1508, 16
      %v2003 = vrot.slane %v2001, 1
      %v2004 = vshll.u32 %v1508, 16
      %v2006 = vrot.slane %v2004, 2
      %v2007 = vor.u32 %v2003, %v2006
      %v2008 = vsel %vm1847, %v1998, %v2007
      %v2010 = vshrl.u32 %v1846, 16
      %v2012 = vrot.slane %v2010, 1
      %v2013 = vshll.u32 %v1846, 16
      %v2015 = vrot.slane %v2013, 2
      %v2016 = vor.u32 %v2012, %v2015
      %v2017 = vsel %vm1847, %v2007, %v2016
      %v2052 = vunpack.c.l.b16 %v1828
      %v2053 = vunpack.c.l.b16 %v1829
      %v2054 = vunpack.c.l.b16 %v1830
      %v2055 = vunpack.c.l.b16 %v1831
      %v2056 = vunpack.c.l.b16 %v1832
      %v2057 = vunpack.c.l.b16 %v1833
      %v2058 = vunpack.c.l.b16 %v1834
      %v2059 = vunpack.c.l.b16 %v1835
      %v2060 = vunpack.c.l.b16 %v1836
      %v2061 = vunpack.c.l.b16 %v1837
      %v2062 = vunpack.c.l.b16 %v1838
      %v2063 = vunpack.c.l.b16 %v1839
      %v2064 = vunpack.c.l.b16 %v1840
      %v2065 = vunpack.c.l.b16 %v1841
      %v2066 = vunpack.c.l.b16 %v1842
      %v2067 = vunpack.c.l.b16 %v1843
      %v2068 = vpack.c.b16 %v2053, %v2052
      %v2069 = vpack.c.b16 %v2055, %v2054
      %v2070 = vpack.c.b16 %v2057, %v2056
      %v2071 = vpack.c.b16 %v2059, %v2058
      %v2072 = vpack.c.b16 %v2061, %v2060
      %v2073 = vpack.c.b16 %v2063, %v2062
      %v2074 = vpack.c.b16 %v2065, %v2064
      %v2075 = vpack.c.b16 %v2067, %v2066
      %2084 = vmatprep.subr.bf16.mxu0 0
      %2085 = vmatpush1.bf16.msra.mxu0 %v2068
      %2086 = vmatprep.subr.bf16.mxu0 0
      %2087 = vmatpush1.bf16.msra.mxu0 %v2069
      %2088 = vmatprep.subr.bf16.mxu0 0
      %2089 = vmatpush1.bf16.msra.mxu0 %v2070
      %2090 = vmatprep.subr.bf16.mxu0 0
      %2091 = vmatpush1.bf16.msra.mxu0 %v2071
      %2092 = vmatprep.subr.bf16.mxu0 0
      %2093 = vmatpush1.bf16.msra.mxu0 %v2072
      %2094 = vmatprep.subr.bf16.mxu0 0
      %2095 = vmatpush1.bf16.msra.mxu0 %v2073
      %2096 = vmatprep.subr.bf16.mxu0 0
      %2097 = vmatpush1.bf16.msra.mxu0 %v2074
      %2098 = vmatprep.subr.bf16.mxu0 0
      %2099 = vmatpush1.bf16.msra.mxu0 %v2075
      %2100 = vmatprep.subr.bf16.mxu0 0
      %2101 = vmatpush1.bf16.msra.mxu0 0
      %2102 = vmatprep.subr.bf16.mxu0 0
      %2103 = vmatpush1.bf16.msra.mxu0 0
      %2104 = vmatprep.subr.bf16.mxu0 0
      %2105 = vmatpush1.bf16.msra.mxu0 0
      %2106 = vmatprep.subr.bf16.mxu0 0
      %2107 = vmatpush1.bf16.msra.mxu0 0
      %2108 = vmatprep.subr.bf16.mxu0 0
      %2109 = vmatpush1.bf16.msra.mxu0 0
      %2110 = vmatprep.subr.bf16.mxu0 0
      %2111 = vmatpush1.bf16.msra.mxu0 0
      %2112 = vmatprep.subr.bf16.mxu0 0
      %2113 = vmatpush1.bf16.msra.mxu0 0
      %2114 = vmatprep.subr.bf16.mxu0 0
      %2115 = vmatpush1.bf16.msra.mxu0 0
      %2116 = vmatprep.mubr.bf16.mxu0 0
      %2117 = vmatmul.mubr.bf16.gmra.mrb[0].mxu0 %v1864
      %v2118 = vpop.f32.mrb[0].mxu0
      %v2119 = vadd.f32 0.0, %v2118
      %v2120 = vpop.f32.mrb[0].mxu0
      %v2121 = vpop.f32.mrb[0].mxu0
      %v2122 = vadd.f32 0.0, %v2121
      %v2123 = vpop.f32.mrb[0].mxu0
      %2124 = vmatprep.mubr.bf16.mxu0 0
      %2125 = vmatmul.mubr.bf16.gmra.mrb[0].mxu0 %v1873
      %v2126 = vpop.f32.mrb[0].mxu0
      %v2127 = vadd.f32 0.0, %v2126
      %v2128 = vpop.f32.mrb[0].mxu0
      %v2129 = vpop.f32.mrb[0].mxu0
      %v2130 = vadd.f32 0.0, %v2129
      %v2131 = vpop.f32.mrb[0].mxu0
      %2132 = vmatprep.mubr.bf16.mxu0 0
      %2133 = vmatmul.mubr.bf16.gmra.mrb[0].mxu0 %v1882
      %v2134 = vpop.f32.mrb[0].mxu0
      %v2135 = vadd.f32 0.0, %v2134
      %v2136 = vpop.f32.mrb[0].mxu0
      %v2137 = vpop.f32.mrb[0].mxu0
      %v2138 = vadd.f32 0.0, %v2137
      %v2139 = vpop.f32.mrb[0].mxu0
      %2140 = vmatprep.mubr.bf16.mxu0 0
      %2141 = vmatmul.mubr.bf16.gmra.mrb[0].mxu0 %v1891
      %v2142 = vpop.f32.mrb[0].mxu0
      %v2143 = vadd.f32 0.0, %v2142
      %v2144 = vpop.f32.mrb[0].mxu0
      %v2145 = vpop.f32.mrb[0].mxu0
      %v2146 = vadd.f32 0.0, %v2145
      %v2147 = vpop.f32.mrb[0].mxu0
      %2148 = vmatprep.mubr.bf16.mxu0 0
      %2149 = vmatmul.mubr.bf16.gmra.mrb[0].mxu0 %v1900
      %v2150 = vpop.f32.mrb[0].mxu0
      %v2151 = vadd.f32 0.0, %v2150
      %v2152 = vpop.f32.mrb[0].mxu0
      %v2153 = vpop.f32.mrb[0].mxu0
      %v2154 = vadd.f32 0.0, %v2153
      %v2155 = vpop.f32.mrb[0].mxu0
      %2156 = vmatprep.mubr.bf16.mxu0 0
      %2157 = vmatmul.mubr.bf16.gmra.mrb[0].mxu0 %v1909
      %v2158 = vpop.f32.mrb[0].mxu0
      %v2159 = vadd.f32 0.0, %v2158
      %v2160 = vpop.f32.mrb[0].mxu0
      %v2161 = vpop.f32.mrb[0].mxu0
      %v2162 = vadd.f32 0.0, %v2161
      %v2163 = vpop.f32.mrb[0].mxu0
      %2164 = vmatprep.mubr.bf16.mxu0 0
      %2165 = vmatmul.mubr.bf16.gmra.mrb[0].mxu0 %v1918
      %v2166 = vpop.f32.mrb[0].mxu0
      %v2167 = vadd.f32 0.0, %v2166
      %v2168 = vpop.f32.mrb[0].mxu0
      %v2169 = vpop.f32.mrb[0].mxu0
      %v2170 = vadd.f32 0.0, %v2169
      %v2171 = vpop.f32.mrb[0].mxu0
      %2172 = vmatprep.mubr.bf16.mxu0 0
      %2173 = vmatmul.mubr.bf16.gmra.mrb[0].mxu0 %v1927
      %v2174 = vpop.f32.mrb[0].mxu0
      %v2175 = vadd.f32 0.0, %v2174
      %v2176 = vpop.f32.mrb[0].mxu0
      %v2177 = vpop.f32.mrb[0].mxu0
      %v2178 = vadd.f32 0.0, %v2177
      %v2179 = vpop.f32.mrb[0].mxu0
      %2180 = vmatprep.mubr.bf16.mxu0 0
      %2181 = vmatmul.mubr.bf16.gmra.mrb[0].mxu0 %v1936
      %v2182 = vpop.f32.mrb[0].mxu0
      %v2183 = vadd.f32 0.0, %v2182
      %v2184 = vpop.f32.mrb[0].mxu0
      %v2185 = vpop.f32.mrb[0].mxu0
      %v2186 = vadd.f32 0.0, %v2185
      %v2187 = vpop.f32.mrb[0].mxu0
      %2188 = vmatprep.mubr.bf16.mxu0 0
      %2189 = vmatmul.mubr.bf16.gmra.mrb[0].mxu0 %v1945
      %v2190 = vpop.f32.mrb[0].mxu0
      %v2191 = vadd.f32 0.0, %v2190
      %v2192 = vpop.f32.mrb[0].mxu0
      %v2193 = vpop.f32.mrb[0].mxu0
      %v2194 = vadd.f32 0.0, %v2193
      %v2195 = vpop.f32.mrb[0].mxu0
      %2196 = vmatprep.mubr.bf16.mxu0 0
      %2197 = vmatmul.mubr.bf16.gmra.mrb[0].mxu0 %v1954
      %v2198 = vpop.f32.mrb[0].mxu0
      %v2199 = vadd.f32 0.0, %v2198
      %v2200 = vpop.f32.mrb[0].mxu0
      %v2201 = vpop.f32.mrb[0].mxu0
      %v2202 = vadd.f32 0.0, %v2201
      %v2203 = vpop.f32.mrb[0].mxu0
      %2204 = vmatprep.mubr.bf16.mxu0 0
      %2205 = vmatmul.mubr.bf16.gmra.mrb[0].mxu0 %v1963
      %v2206 = vpop.f32.mrb[0].mxu0
      %v2207 = vadd.f32 0.0, %v2206
      %v2208 = vpop.f32.mrb[0].mxu0
      %v2209 = vpop.f32.mrb[0].mxu0
      %v2210 = vadd.f32 0.0, %v2209
      %v2211 = vpop.f32.mrb[0].mxu0
      %2212 = vmatprep.mubr.bf16.mxu0 0
      %2213 = vmatmul.mubr.bf16.gmra.mrb[0].mxu0 %v1972
      %v2214 = vpop.f32.mrb[0].mxu0
      %v2215 = vadd.f32 0.0, %v2214
      %v2216 = vpop.f32.mrb[0].mxu0
      %v2217 = vpop.f32.mrb[0].mxu0
      %v2218 = vadd.f32 0.0, %v2217
      %v2219 = vpop.f32.mrb[0].mxu0
      %2220 = vmatprep.mubr.bf16.mxu0 0
      %2221 = vmatmul.mubr.bf16.gmra.mrb[0].mxu0 %v1981
      %v2222 = vpop.f32.mrb[0].mxu0
      %v2223 = vadd.f32 0.0, %v2222
      %v2224 = vpop.f32.mrb[0].mxu0
      %v2225 = vpop.f32.mrb[0].mxu0
      %v2226 = vadd.f32 0.0, %v2225
      %v2227 = vpop.f32.mrb[0].mxu0
      %2228 = vmatprep.mubr.bf16.mxu0 0
      %2229 = vmatmul.mubr.bf16.gmra.mrb[0].mxu0 %v1990
      %v2230 = vpop.f32.mrb[0].mxu0
      %v2231 = vadd.f32 0.0, %v2230
      %v2232 = vpop.f32.mrb[0].mxu0
      %v2233 = vpop.f32.mrb[0].mxu0
      %v2234 = vadd.f32 0.0, %v2233
      %v2235 = vpop.f32.mrb[0].mxu0
      %2236 = vmatprep.mubr.bf16.mxu0 0
      %2237 = vmatmul.mubr.bf16.gmra.mrb[0].mxu0 %v1999
      %v2238 = vpop.f32.mrb[0].mxu0
      %v2239 = vadd.f32 0.0, %v2238
      %v2240 = vpop.f32.mrb[0].mxu0
      %v2241 = vpop.f32.mrb[0].mxu0
      %v2242 = vadd.f32 0.0, %v2241
      %v2243 = vpop.f32.mrb[0].mxu0
      %2244 = vmatprep.mubr.bf16.mxu0 0
      %2245 = vmatmul.mubr.bf16.gmra.mrb[0].mxu0 %v2008
      %v2246 = vpop.f32.mrb[0].mxu0
      %v2247 = vadd.f32 0.0, %v2246
      %v2248 = vpop.f32.mrb[0].mxu0
      %v2249 = vpop.f32.mrb[0].mxu0
      %v2250 = vadd.f32 0.0, %v2249
      %v2251 = vpop.f32.mrb[0].mxu0
      %2252 = vmatprep.mubr.bf16.mxu0 0
      %2253 = vmatmul.mubr.bf16.gmra.mrb[0].mxu0 %v2017
      %v2254 = vpop.f32.mrb[0].mxu0
      %v2255 = vadd.f32 0.0, %v2254
      %v2256 = vpop.f32.mrb[0].mxu0
      %v2257 = vpop.f32.mrb[0].mxu0
      %v2258 = vadd.f32 0.0, %v2257
      %v2259 = vpop.f32.mrb[0].mxu0
      %2260 = vdwg.mxu0
      %v2261 = vadd.f32 %v1790, %v2119
      %v2262 = vadd.f32 %v1791, %v2122
      %v2263 = vadd.f32 %v1792, %v2127
      %v2264 = vadd.f32 %v1793, %v2130
      %v2265 = vadd.f32 %v1794, %v2135
      %v2266 = vadd.f32 %v1795, %v2138
      %v2267 = vadd.f32 %v1796, %v2143
      %v2268 = vadd.f32 %v1797, %v2146
      %v2269 = vadd.f32 %v1798, %v2151
      %v2270 = vadd.f32 %v1799, %v2154
      %v2271 = vadd.f32 %v1800, %v2159
      %v2272 = vadd.f32 %v1801, %v2162
      %v2273 = vadd.f32 %v1802, %v2167
      %v2274 = vadd.f32 %v1803, %v2170
      %v2275 = vadd.f32 %v1804, %v2175
      %v2276 = vadd.f32 %v1805, %v2178
      %v2277 = vadd.f32 %v1806, %v2183
      %v2278 = vadd.f32 %v1807, %v2186
      %v2279 = vadd.f32 %v1808, %v2191
      %v2280 = vadd.f32 %v1809, %v2194
      %v2281 = vadd.f32 %v1810, %v2199
      %v2282 = vadd.f32 %v1811, %v2202
      %v2283 = vadd.f32 %v1812, %v2207
      %v2284 = vadd.f32 %v1813, %v2210
      %v2285 = vadd.f32 %v1814, %v2215
      %v2286 = vadd.f32 %v1815, %v2218
      %v2287 = vadd.f32 %v1816, %v2223
      %v2288 = vadd.f32 %v1817, %v2226
      %v2289 = vadd.f32 %v1818, %v2231
      %v2290 = vadd.f32 %v1819, %v2234
      %v2291 = vadd.f32 %v1820, %v2239
      %v2292 = vadd.f32 %v1821, %v2242
      %v2293 = vadd.f32 %v1822, %v2247
      %v2294 = vadd.f32 %v1823, %v2250
      %v2295 = vadd.f32 %v1824, %v2255
      %v2296 = vadd.f32 %v1825, %v2258
      %v2297 = vld [vmem:[%s219 + $0x8] sm:$0xc]
      %s2298 = scalar_lea.vmem %s1, 320
      %v2299 = vld [vmem:[%s2298] sm:$0xf]
      %v2300 = vld [vmem:[%s2298 + $0x4] sm:$0xf]
      %v2301 = vld [vmem:[%s2298 + $0x8] sm:$0xf]
      %v2302 = vld [vmem:[%s2298 + $0xc] sm:$0xf]
      %v2303 = vld [vmem:[%s2298 + $0x10] sm:$0xf]
      %v2304 = vld [vmem:[%s2298 + $0x14] sm:$0xf]
      %v2305 = vld [vmem:[%s2298 + $0x18] sm:$0xf]
      %v2306 = vld [vmem:[%s2298 + $0x1c] sm:$0xf]
      %v2307 = vld [vmem:[%s2298 + $0x20] sm:$0xf]
      %v2308 = vld [vmem:[%s2298 + $0x24] sm:$0xf]
      %v2309 = vld [vmem:[%s2298 + $0x28] sm:$0xf]
      %v2310 = vld [vmem:[%s2298 + $0x2c] sm:$0xf]
      %v2311 = vld [vmem:[%s2298 + $0x30] sm:$0xf]
      %v2312 = vld [vmem:[%s2298 + $0x34] sm:$0xf]
      %v2313 = vld [vmem:[%s2298 + $0x38] sm:$0xf]
      %v2314 = vld [vmem:[%s2298 + $0x3c] sm:$0xf]
      %v2316 = vunpack.c.l.b16 %v2297
      %v2317 = vpack.c.b16 %v1455, %v2316
      %vm2318 = vcmask 1045504
      %v2319 = vrot.slane %v2317, 2
      %v2320 = vrot.slane %v1492, 2
      %v2321 = vsel %vm2318, %v2319, %v2320
      %v2322 = vrot.slane %v1493, 2
      %v2323 = vsel %vm2318, %v2320, %v2322
      %v2324 = vrot.slane %v1494, 2
      %v2325 = vsel %vm2318, %v2322, %v2324
      %v2326 = vrot.slane %v1495, 2
      %v2327 = vsel %vm2318, %v2324, %v2326
      %v2328 = vrot.slane %v1496, 2
      %v2329 = vsel %vm2318, %v2326, %v2328
      %v2330 = vrot.slane %v1497, 2
      %v2331 = vsel %vm2318, %v2328, %v2330
      %v2332 = vrot.slane %v1498, 2
      %v2333 = vsel %vm2318, %v2330, %v2332
      %v2334 = vrot.slane %v1499, 2
      %v2335 = vsel %vm2318, %v2332, %v2334
      %v2336 = vrot.slane %v1500, 2
      %v2337 = vsel %vm2318, %v2334, %v2336
      %v2338 = vrot.slane %v1501, 2
      %v2339 = vsel %vm2318, %v2336, %v2338
      %v2340 = vrot.slane %v1502, 2
      %v2341 = vsel %vm2318, %v2338, %v2340
      %v2342 = vrot.slane %v1503, 2
      %v2343 = vsel %vm2318, %v2340, %v2342
      %v2344 = vrot.slane %v1504, 2
      %v2345 = vsel %vm2318, %v2342, %v2344
      %v2346 = vrot.slane %v1505, 2
      %v2347 = vsel %vm2318, %v2344, %v2346
      %v2348 = vrot.slane %v1506, 2
      %v2349 = vsel %vm2318, %v2346, %v2348
      %v2350 = vrot.slane %v1507, 2
      %v2351 = vsel %vm2318, %v2348, %v2350
      %v2352 = vrot.slane %v1508, 2
      %v2353 = vsel %vm2318, %v2350, %v2352
      %v2354 = vrot.slane %v1846, 2
      %v2355 = vsel %vm2318, %v2352, %v2354
      %v2390 = vunpack.c.l.b16 %v2299
      %v2391 = vunpack.c.l.b16 %v2300
      %v2392 = vunpack.c.l.b16 %v2301
      %v2393 = vunpack.c.l.b16 %v2302
      %v2394 = vunpack.c.l.b16 %v2303
      %v2395 = vunpack.c.l.b16 %v2304
      %v2396 = vunpack.c.l.b16 %v2305
      %v2397 = vunpack.c.l.b16 %v2306
      %v2398 = vunpack.c.l.b16 %v2307
      %v2399 = vunpack.c.l.b16 %v2308
      %v2400 = vunpack.c.l.b16 %v2309
      %v2401 = vunpack.c.l.b16 %v2310
      %v2402 = vunpack.c.l.b16 %v2311
      %v2403 = vunpack.c.l.b16 %v2312
      %v2404 = vunpack.c.l.b16 %v2313
      %v2405 = vunpack.c.l.b16 %v2314
      %v2406 = vpack.c.b16 %v2391, %v2390
      %v2407 = vpack.c.b16 %v2393, %v2392
      %v2408 = vpack.c.b16 %v2395, %v2394
      %v2409 = vpack.c.b16 %v2397, %v2396
      %v2410 = vpack.c.b16 %v2399, %v2398
      %v2411 = vpack.c.b16 %v2401, %v2400
      %v2412 = vpack.c.b16 %v2403, %v2402
      %v2413 = vpack.c.b16 %v2405, %v2404
      %2422 = vmatprep.subr.bf16.mxu0 0
      %2423 = vmatpush1.bf16.msra.mxu0 %v2406
      %2424 = vmatprep.subr.bf16.mxu0 0
      %2425 = vmatpush1.bf16.msra.mxu0 %v2407
      %2426 = vmatprep.subr.bf16.mxu0 0
      %2427 = vmatpush1.bf16.msra.mxu0 %v2408
      %2428 = vmatprep.subr.bf16.mxu0 0
      %2429 = vmatpush1.bf16.msra.mxu0 %v2409
      %2430 = vmatprep.subr.bf16.mxu0 0
      %2431 = vmatpush1.bf16.msra.mxu0 %v2410
      %2432 = vmatprep.subr.bf16.mxu0 0
      %2433 = vmatpush1.bf16.msra.mxu0 %v2411
      %2434 = vmatprep.subr.bf16.mxu0 0
      %2435 = vmatpush1.bf16.msra.mxu0 %v2412
      %2436 = vmatprep.subr.bf16.mxu0 0
      %2437 = vmatpush1.bf16.msra.mxu0 %v2413
      %2438 = vmatprep.subr.bf16.mxu0 0
      %2439 = vmatpush1.bf16.msra.mxu0 0
      %2440 = vmatprep.subr.bf16.mxu0 0
      %2441 = vmatpush1.bf16.msra.mxu0 0
      %2442 = vmatprep.subr.bf16.mxu0 0
      %2443 = vmatpush1.bf16.msra.mxu0 0
      %2444 = vmatprep.subr.bf16.mxu0 0
      %2445 = vmatpush1.bf16.msra.mxu0 0
      %2446 = vmatprep.subr.bf16.mxu0 0
      %2447 = vmatpush1.bf16.msra.mxu0 0
      %2448 = vmatprep.subr.bf16.mxu0 0
      %2449 = vmatpush1.bf16.msra.mxu0 0
      %2450 = vmatprep.subr.bf16.mxu0 0
      %2451 = vmatpush1.bf16.msra.mxu0 0
      %2452 = vmatprep.subr.bf16.mxu0 0
      %2453 = vmatpush1.bf16.msra.mxu0 0
      %2454 = vmatprep.mubr.bf16.mxu0 0
      %2455 = vmatmul.mubr.bf16.gmra.mrb[0].mxu0 %v2321
      %v2456 = vpop.f32.mrb[0].mxu0
      %v2457 = vadd.f32 0.0, %v2456
      %v2458 = vpop.f32.mrb[0].mxu0
      %v2459 = vpop.f32.mrb[0].mxu0
      %v2460 = vadd.f32 0.0, %v2459
      %v2461 = vpop.f32.mrb[0].mxu0
      %2462 = vmatprep.mubr.bf16.mxu0 0
      %2463 = vmatmul.mubr.bf16.gmra.mrb[0].mxu0 %v2323
      %v2464 = vpop.f32.mrb[0].mxu0
      %v2465 = vadd.f32 0.0, %v2464
      %v2466 = vpop.f32.mrb[0].mxu0
      %v2467 = vpop.f32.mrb[0].mxu0
      %v2468 = vadd.f32 0.0, %v2467
      %v2469 = vpop.f32.mrb[0].mxu0
      %2470 = vmatprep.mubr.bf16.mxu0 0
      %2471 = vmatmul.mubr.bf16.gmra.mrb[0].mxu0 %v2325
      %v2472 = vpop.f32.mrb[0].mxu0
      %v2473 = vadd.f32 0.0, %v2472
      %v2474 = vpop.f32.mrb[0].mxu0
      %v2475 = vpop.f32.mrb[0].mxu0
      %v2476 = vadd.f32 0.0, %v2475
      %v2477 = vpop.f32.mrb[0].mxu0
      %2478 = vmatprep.mubr.bf16.mxu0 0
      %2479 = vmatmul.mubr.bf16.gmra.mrb[0].mxu0 %v2327
      %v2480 = vpop.f32.mrb[0].mxu0
      %v2481 = vadd.f32 0.0, %v2480
      %v2482 = vpop.f32.mrb[0].mxu0
      %v2483 = vpop.f32.mrb[0].mxu0
      %v2484 = vadd.f32 0.0, %v2483
      %v2485 = vpop.f32.mrb[0].mxu0
      %2486 = vmatprep.mubr.bf16.mxu0 0
      %2487 = vmatmul.mubr.bf16.gmra.mrb[0].mxu0 %v2329
      %v2488 = vpop.f32.mrb[0].mxu0
      %v2489 = vadd.f32 0.0, %v2488
      %v2490 = vpop.f32.mrb[0].mxu0
      %v2491 = vpop.f32.mrb[0].mxu0
      %v2492 = vadd.f32 0.0, %v2491
      %v2493 = vpop.f32.mrb[0].mxu0
      %2494 = vmatprep.mubr.bf16.mxu0 0
      %2495 = vmatmul.mubr.bf16.gmra.mrb[0].mxu0 %v2331
      %v2496 = vpop.f32.mrb[0].mxu0
      %v2497 = vadd.f32 0.0, %v2496
      %v2498 = vpop.f32.mrb[0].mxu0
      %v2499 = vpop.f32.mrb[0].mxu0
      %v2500 = vadd.f32 0.0, %v2499
      %v2501 = vpop.f32.mrb[0].mxu0
      %2502 = vmatprep.mubr.bf16.mxu0 0
      %2503 = vmatmul.mubr.bf16.gmra.mrb[0].mxu0 %v2333
      %v2504 = vpop.f32.mrb[0].mxu0
      %v2505 = vadd.f32 0.0, %v2504
      %v2506 = vpop.f32.mrb[0].mxu0
      %v2507 = vpop.f32.mrb[0].mxu0
      %v2508 = vadd.f32 0.0, %v2507
      %v2509 = vpop.f32.mrb[0].mxu0
      %2510 = vmatprep.mubr.bf16.mxu0 0
      %2511 = vmatmul.mubr.bf16.gmra.mrb[0].mxu0 %v2335
      %v2512 = vpop.f32.mrb[0].mxu0
      %v2513 = vadd.f32 0.0, %v2512
      %v2514 = vpop.f32.mrb[0].mxu0
      %v2515 = vpop.f32.mrb[0].mxu0
      %v2516 = vadd.f32 0.0, %v2515
      %v2517 = vpop.f32.mrb[0].mxu0
      %2518 = vmatprep.mubr.bf16.mxu0 0
      %2519 = vmatmul.mubr.bf16.gmra.mrb[0].mxu0 %v2337
      %v2520 = vpop.f32.mrb[0].mxu0
      %v2521 = vadd.f32 0.0, %v2520
      %v2522 = vpop.f32.mrb[0].mxu0
      %v2523 = vpop.f32.mrb[0].mxu0
      %v2524 = vadd.f32 0.0, %v2523
      %v2525 = vpop.f32.mrb[0].mxu0
      %2526 = vmatprep.mubr.bf16.mxu0 0
      %2527 = vmatmul.mubr.bf16.gmra.mrb[0].mxu0 %v2339
      %v2528 = vpop.f32.mrb[0].mxu0
      %v2529 = vadd.f32 0.0, %v2528
      %v2530 = vpop.f32.mrb[0].mxu0
      %v2531 = vpop.f32.mrb[0].mxu0
      %v2532 = vadd.f32 0.0, %v2531
      %v2533 = vpop.f32.mrb[0].mxu0
      %2534 = vmatprep.mubr.bf16.mxu0 0
      %2535 = vmatmul.mubr.bf16.gmra.mrb[0].mxu0 %v2341
      %v2536 = vpop.f32.mrb[0].mxu0
      %v2537 = vadd.f32 0.0, %v2536
      %v2538 = vpop.f32.mrb[0].mxu0
      %v2539 = vpop.f32.mrb[0].mxu0
      %v2540 = vadd.f32 0.0, %v2539
      %v2541 = vpop.f32.mrb[0].mxu0
      %2542 = vmatprep.mubr.bf16.mxu0 0
      %2543 = vmatmul.mubr.bf16.gmra.mrb[0].mxu0 %v2343
      %v2544 = vpop.f32.mrb[0].mxu0
      %v2545 = vadd.f32 0.0, %v2544
      %v2546 = vpop.f32.mrb[0].mxu0
      %v2547 = vpop.f32.mrb[0].mxu0
      %v2548 = vadd.f32 0.0, %v2547
      %v2549 = vpop.f32.mrb[0].mxu0
      %2550 = vmatprep.mubr.bf16.mxu0 0
      %2551 = vmatmul.mubr.bf16.gmra.mrb[0].mxu0 %v2345
      %v2552 = vpop.f32.mrb[0].mxu0
      %v2553 = vadd.f32 0.0, %v2552
      %v2554 = vpop.f32.mrb[0].mxu0
      %v2555 = vpop.f32.mrb[0].mxu0
      %v2556 = vadd.f32 0.0, %v2555
      %v2557 = vpop.f32.mrb[0].mxu0
      %2558 = vmatprep.mubr.bf16.mxu0 0
      %2559 = vmatmul.mubr.bf16.gmra.mrb[0].mxu0 %v2347
      %v2560 = vpop.f32.mrb[0].mxu0
      %v2561 = vadd.f32 0.0, %v2560
      %v2562 = vpop.f32.mrb[0].mxu0
      %v2563 = vpop.f32.mrb[0].mxu0
      %v2564 = vadd.f32 0.0, %v2563
      %v2565 = vpop.f32.mrb[0].mxu0
      %2566 = vmatprep.mubr.bf16.mxu0 0
      %2567 = vmatmul.mubr.bf16.gmra.mrb[0].mxu0 %v2349
      %v2568 = vpop.f32.mrb[0].mxu0
      %v2569 = vadd.f32 0.0, %v2568
      %v2570 = vpop.f32.mrb[0].mxu0
      %v2571 = vpop.f32.mrb[0].mxu0
      %v2572 = vadd.f32 0.0, %v2571
      %v2573 = vpop.f32.mrb[0].mxu0
      %2574 = vmatprep.mubr.bf16.mxu0 0
      %2575 = vmatmul.mubr.bf16.gmra.mrb[0].mxu0 %v2351
      %v2576 = vpop.f32.mrb[0].mxu0
      %v2577 = vadd.f32 0.0, %v2576
      %v2578 = vpop.f32.mrb[0].mxu0
      %v2579 = vpop.f32.mrb[0].mxu0
      %v2580 = vadd.f32 0.0, %v2579
      %v2581 = vpop.f32.mrb[0].mxu0
      %2582 = vmatprep.mubr.bf16.mxu0 0
      %2583 = vmatmul.mubr.bf16.gmra.mrb[0].mxu0 %v2353
      %v2584 = vpop.f32.mrb[0].mxu0
      %v2585 = vadd.f32 0.0, %v2584
      %v2586 = vpop.f32.mrb[0].mxu0
      %v2587 = vpop.f32.mrb[0].mxu0
      %v2588 = vadd.f32 0.0, %v2587
      %v2589 = vpop.f32.mrb[0].mxu0
      %2590 = vmatprep.mubr.bf16.mxu0 0
      %2591 = vmatmul.mubr.bf16.gmra.mrb[0].mxu0 %v2355
      %v2592 = vpop.f32.mrb[0].mxu0
      %v2593 = vadd.f32 0.0, %v2592
      %v2594 = vpop.f32.mrb[0].mxu0
      %v2595 = vpop.f32.mrb[0].mxu0
      %v2596 = vadd.f32 0.0, %v2595
      %v2597 = vpop.f32.mrb[0].mxu0
      %2598 = vdwg.mxu0
      %v2599 = vadd.f32 %v2261, %v2457
      %v2600 = vadd.f32 %v2262, %v2460
      %v2601 = vadd.f32 %v2263, %v2465
      %v2602 = vadd.f32 %v2264, %v2468
      %v2603 = vadd.f32 %v2265, %v2473
      %v2604 = vadd.f32 %v2266, %v2476
      %v2605 = vadd.f32 %v2267, %v2481
      %v2606 = vadd.f32 %v2268, %v2484
      %v2607 = vadd.f32 %v2269, %v2489
      %v2608 = vadd.f32 %v2270, %v2492
      %v2609 = vadd.f32 %v2271, %v2497
      %v2610 = vadd.f32 %v2272, %v2500
      %v2611 = vadd.f32 %v2273, %v2505
      %v2612 = vadd.f32 %v2274, %v2508
      %v2613 = vadd.f32 %v2275, %v2513
      %v2614 = vadd.f32 %v2276, %v2516
      %v2615 = vadd.f32 %v2277, %v2521
      %v2616 = vadd.f32 %v2278, %v2524
      %v2617 = vadd.f32 %v2279, %v2529
      %v2618 = vadd.f32 %v2280, %v2532
      %v2619 = vadd.f32 %v2281, %v2537
      %v2620 = vadd.f32 %v2282, %v2540
      %v2621 = vadd.f32 %v2283, %v2545
      %v2622 = vadd.f32 %v2284, %v2548
      %v2623 = vadd.f32 %v2285, %v2553
      %v2624 = vadd.f32 %v2286, %v2556
      %v2625 = vadd.f32 %v2287, %v2561
      %v2626 = vadd.f32 %v2288, %v2564
      %v2627 = vadd.f32 %v2289, %v2569
      %v2628 = vadd.f32 %v2290, %v2572
      %v2629 = vadd.f32 %v2291, %v2577
      %v2630 = vadd.f32 %v2292, %v2580
      %v2631 = vadd.f32 %v2293, %v2585
      %v2632 = vadd.f32 %v2294, %v2588
      %v2633 = vadd.f32 %v2295, %v2593
      %v2634 = vadd.f32 %v2296, %v2596
      %v2635 = vld [vmem:[%s219 + $0x10] sm:$0xc]
      %v2636 = vld [vmem:[%s219 + $0x14] sm:$0xf]
      %v2637 = vld [vmem:[%s219 + $0x18] sm:$0xf]
      %v2638 = vld [vmem:[%s219 + $0x1c] sm:$0xf]
      %v2639 = vld [vmem:[%s219 + $0x20] sm:$0xf]
      %v2640 = vld [vmem:[%s219 + $0x24] sm:$0xf]
      %v2641 = vld [vmem:[%s219 + $0x28] sm:$0xf]
      %v2642 = vld [vmem:[%s219 + $0x2c] sm:$0xf]
      %v2643 = vld [vmem:[%s219 + $0x30] sm:$0xf]
      %v2644 = vld [vmem:[%s219 + $0x34] sm:$0xf]
      %v2645 = vld [vmem:[%s219 + $0x38] sm:$0xf]
      %v2646 = vld [vmem:[%s219 + $0x3c] sm:$0xf]
      %v2647 = vld [vmem:[%s219 + $0x40] sm:$0xf]
      %v2648 = vld [vmem:[%s219 + $0x44] sm:$0xf]
      %v2649 = vld [vmem:[%s219 + $0x48] sm:$0xf]
      %v2650 = vld [vmem:[%s219 + $0x4c] sm:$0xf]
      %v2651 = vld [vmem:[%s219 + $0x50] sm:$0xf]
      %v2652 = vld [vmem:[%s219 + $0x54] sm:$0xf]
      %v2653 = vld [vmem:[%s219 + $0x58] sm:$0xf]
      %v2654 = vld [vmem:[%s219 + $0x5c] sm:$0xf]
      %v2655 = vld [vmem:[%s219 + $0x60] sm:$0xf]
      %v2656 = vld [vmem:[%s219 + $0x64] sm:$0xf]
      %v2657 = vld [vmem:[%s219 + $0x68] sm:$0xf]
      %v2658 = vld [vmem:[%s219 + $0x6c] sm:$0xf]
      %v2659 = vld [vmem:[%s219 + $0x70] sm:$0xf]
      %v2660 = vld [vmem:[%s219 + $0x74] sm:$0xf]
      %v2661 = vld [vmem:[%s219 + $0x78] sm:$0xf]
      %v2662 = vld [vmem:[%s219 + $0x7c] sm:$0xf]
      %v2663 = vld [vmem:[%s219 + $0x80] sm:$0xf]
      %v2664 = vld [vmem:[%s219 + $0x84] sm:$0xf]
      %v2665 = vld [vmem:[%s219 + $0x88] sm:$0xf]
      %v2666 = vld [vmem:[%s219 + $0x8c] sm:$0xf]
      %v2667 = vld [vmem:[%s219 + $0x90] sm:$0xf]
      %v2668 = vld [vmem:[%s219 + $0x94] sm:$0xf]
      %v2669 = vld [vmem:[%s219 + $0x98] sm:$0xf]
      %v2670 = vld [vmem:[%s219 + $0x9c] sm:$0xf]
      %v2671 = vld [vmem:[%s219 + $0xa0] sm:$0x3]
      %s2672 = scalar_lea.vmem %s1, 384
      %v2673 = vld [vmem:[%s2672] sm:$0xf]
      %v2674 = vld [vmem:[%s2672 + $0x4] sm:$0xf]
      %v2675 = vld [vmem:[%s2672 + $0x8] sm:$0xf]
      %v2676 = vld [vmem:[%s2672 + $0xc] sm:$0xf]
      %v2677 = vld [vmem:[%s2672 + $0x10] sm:$0xf]
      %v2678 = vld [vmem:[%s2672 + $0x14] sm:$0xf]
      %v2679 = vld [vmem:[%s2672 + $0x18] sm:$0xf]
      %v2680 = vld [vmem:[%s2672 + $0x1c] sm:$0xf]
      %v2681 = vld [vmem:[%s2672 + $0x20] sm:$0xf]
      %v2682 = vld [vmem:[%s2672 + $0x24] sm:$0xf]
      %v2683 = vld [vmem:[%s2672 + $0x28] sm:$0xf]
      %v2684 = vld [vmem:[%s2672 + $0x2c] sm:$0xf]
      %v2685 = vld [vmem:[%s2672 + $0x30] sm:$0xf]
      %v2686 = vld [vmem:[%s2672 + $0x34] sm:$0xf]
      %v2687 = vld [vmem:[%s2672 + $0x38] sm:$0xf]
      %v2688 = vld [vmem:[%s2672 + $0x3c] sm:$0xf]
      %v2726 = vunpack.c.l.b16 %v2635
      %v2727 = vunpack.c.l.b16 %v2636
      %v2728 = vunpack.c.l.b16 %v2637
      %v2729 = vunpack.c.l.b16 %v2638
      %v2730 = vunpack.c.l.b16 %v2639
      %v2731 = vunpack.c.l.b16 %v2640
      %v2732 = vunpack.c.l.b16 %v2641
      %v2733 = vunpack.c.l.b16 %v2642
      %v2734 = vunpack.c.l.b16 %v2643
      %v2735 = vunpack.c.l.b16 %v2644
      %v2736 = vunpack.c.l.b16 %v2645
      %v2737 = vunpack.c.l.b16 %v2646
      %v2738 = vunpack.c.l.b16 %v2647
      %v2739 = vunpack.c.l.b16 %v2648
      %v2740 = vunpack.c.l.b16 %v2649
      %v2741 = vunpack.c.l.b16 %v2650
      %v2742 = vunpack.c.l.b16 %v2651
      %v2743 = vunpack.c.l.b16 %v2652
      %v2744 = vunpack.c.l.b16 %v2653
      %v2745 = vunpack.c.l.b16 %v2654
      %v2746 = vunpack.c.l.b16 %v2655
      %v2747 = vunpack.c.l.b16 %v2656
      %v2748 = vunpack.c.l.b16 %v2657
      %v2749 = vunpack.c.l.b16 %v2658
      %v2750 = vunpack.c.l.b16 %v2659
      %v2751 = vunpack.c.l.b16 %v2660
      %v2752 = vunpack.c.l.b16 %v2661
      %v2753 = vunpack.c.l.b16 %v2662
      %v2754 = vunpack.c.l.b16 %v2663
      %v2755 = vunpack.c.l.b16 %v2664
      %v2756 = vunpack.c.l.b16 %v2665
      %v2757 = vunpack.c.l.b16 %v2666
      %v2758 = vunpack.c.l.b16 %v2667
      %v2759 = vunpack.c.l.b16 %v2668
      %v2760 = vunpack.c.l.b16 %v2669
      %v2761 = vunpack.c.l.b16 %v2670
      %v2762 = vunpack.c.l.b16 %v2671
      %v2763 = vpack.c.b16 %v2727, %v2726
      %v2764 = vpack.c.b16 %v2729, %v2728
      %v2765 = vpack.c.b16 %v2731, %v2730
      %v2766 = vpack.c.b16 %v2733, %v2732
      %v2767 = vpack.c.b16 %v2735, %v2734
      %v2768 = vpack.c.b16 %v2737, %v2736
      %v2769 = vpack.c.b16 %v2739, %v2738
      %v2770 = vpack.c.b16 %v2741, %v2740
      %v2771 = vpack.c.b16 %v2743, %v2742
      %v2772 = vpack.c.b16 %v2745, %v2744
      %v2773 = vpack.c.b16 %v2747, %v2746
      %v2774 = vpack.c.b16 %v2749, %v2748
      %v2775 = vpack.c.b16 %v2751, %v2750
      %v2776 = vpack.c.b16 %v2753, %v2752
      %v2777 = vpack.c.b16 %v2755, %v2754
      %v2778 = vpack.c.b16 %v2757, %v2756
      %v2779 = vpack.c.b16 %v2759, %v2758
      %v2780 = vpack.c.b16 %v2761, %v2760
      %v2781 = vpack.c.b16 %v2762, %v2762
      %v2782 = vrot.slane %v2763, 2
      %v2783 = vrot.slane %v2764, 2
      %v2784 = vsel %vm2318, %v2782, %v2783
      %v2785 = vrot.slane %v2765, 2
      %v2786 = vsel %vm2318, %v2783, %v2785
      %v2787 = vrot.slane %v2766, 2
      %v2788 = vsel %vm2318, %v2785, %v2787
      %v2789 = vrot.slane %v2767, 2
      %v2790 = vsel %vm2318, %v2787, %v2789
      %v2791 = vrot.slane %v2768, 2
      %v2792 = vsel %vm2318, %v2789, %v2791
      %v2793 = vrot.slane %v2769, 2
      %v2794 = vsel %vm2318, %v2791, %v2793
      %v2795 = vrot.slane %v2770, 2
      %v2796 = vsel %vm2318, %v2793, %v2795
      %v2797 = vrot.slane %v2771, 2
      %v2798 = vsel %vm2318, %v2795, %v2797
      %v2799 = vrot.slane %v2772, 2
      %v2800 = vsel %vm2318, %v2797, %v2799
      %v2801 = vrot.slane %v2773, 2
      %v2802 = vsel %vm2318, %v2799, %v2801
      %v2803 = vrot.slane %v2774, 2
      %v2804 = vsel %vm2318, %v2801, %v2803
      %v2805 = vrot.slane %v2775, 2
      %v2806 = vsel %vm2318, %v2803, %v2805
      %v2807 = vrot.slane %v2776, 2
      %v2808 = vsel %vm2318, %v2805, %v2807
      %v2809 = vrot.slane %v2777, 2
      %v2810 = vsel %vm2318, %v2807, %v2809
      %v2811 = vrot.slane %v2778, 2
      %v2812 = vsel %vm2318, %v2809, %v2811
      %v2813 = vrot.slane %v2779, 2
      %v2814 = vsel %vm2318, %v2811, %v2813
      %v2815 = vrot.slane %v2780, 2
      %v2816 = vsel %vm2318, %v2813, %v2815
      %v2817 = vrot.slane %v2781, 2
      %v2818 = vsel %vm2318, %v2815, %v2817
      %v2853 = vunpack.c.l.b16 %v2673
      %v2854 = vunpack.c.l.b16 %v2674
      %v2855 = vunpack.c.l.b16 %v2675
      %v2856 = vunpack.c.l.b16 %v2676
      %v2857 = vunpack.c.l.b16 %v2677
      %v2858 = vunpack.c.l.b16 %v2678
      %v2859 = vunpack.c.l.b16 %v2679
      %v2860 = vunpack.c.l.b16 %v2680
      %v2861 = vunpack.c.l.b16 %v2681
      %v2862 = vunpack.c.l.b16 %v2682
      %v2863 = vunpack.c.l.b16 %v2683
      %v2864 = vunpack.c.l.b16 %v2684
      %v2865 = vunpack.c.l.b16 %v2685
      %v2866 = vunpack.c.l.b16 %v2686
      %v2867 = vunpack.c.l.b16 %v2687
      %v2868 = vunpack.c.l.b16 %v2688
      %v2869 = vpack.c.b16 %v2854, %v2853
      %v2870 = vpack.c.b16 %v2856, %v2855
      %v2871 = vpack.c.b16 %v2858, %v2857
      %v2872 = vpack.c.b16 %v2860, %v2859
      %v2873 = vpack.c.b16 %v2862, %v2861
      %v2874 = vpack.c.b16 %v2864, %v2863
      %v2875 = vpack.c.b16 %v2866, %v2865
      %v2876 = vpack.c.b16 %v2868, %v2867
      %2885 = vmatprep.subr.bf16.mxu0 0
      %2886 = vmatpush1.bf16.msra.mxu0 %v2869
      %2887 = vmatprep.subr.bf16.mxu0 0
      %2888 = vmatpush1.bf16.msra.mxu0 %v2870
      %2889 = vmatprep.subr.bf16.mxu0 0
      %2890 = vmatpush1.bf16.msra.mxu0 %v2871
      %2891 = vmatprep.subr.bf16.mxu0 0
      %2892 = vmatpush1.bf16.msra.mxu0 %v2872
      %2893 = vmatprep.subr.bf16.mxu0 0
      %2894 = vmatpush1.bf16.msra.mxu0 %v2873
      %2895 = vmatprep.subr.bf16.mxu0 0
      %2896 = vmatpush1.bf16.msra.mxu0 %v2874
      %2897 = vmatprep.subr.bf16.mxu0 0
      %2898 = vmatpush1.bf16.msra.mxu0 %v2875
      %2899 = vmatprep.subr.bf16.mxu0 0
      %2900 = vmatpush1.bf16.msra.mxu0 %v2876
      %2901 = vmatprep.subr.bf16.mxu0 0
      %2902 = vmatpush1.bf16.msra.mxu0 0
      %2903 = vmatprep.subr.bf16.mxu0 0
      %2904 = vmatpush1.bf16.msra.mxu0 0
      %2905 = vmatprep.subr.bf16.mxu0 0
      %2906 = vmatpush1.bf16.msra.mxu0 0
      %2907 = vmatprep.subr.bf16.mxu0 0
      %2908 = vmatpush1.bf16.msra.mxu0 0
      %2909 = vmatprep.subr.bf16.mxu0 0
      %2910 = vmatpush1.bf16.msra.mxu0 0
      %2911 = vmatprep.subr.bf16.mxu0 0
      %2912 = vmatpush1.bf16.msra.mxu0 0
      %2913 = vmatprep.subr.bf16.mxu0 0
      %2914 = vmatpush1.bf16.msra.mxu0 0
      %2915 = vmatprep.subr.bf16.mxu0 0
      %2916 = vmatpush1.bf16.msra.mxu0 0
      %2917 = vmatprep.mubr.bf16.mxu0 0
      %2918 = vmatmul.mubr.bf16.gmra.mrb[0].mxu0 %v2784
      %v2919 = vpop.f32.mrb[0].mxu0
      %v2920 = vadd.f32 0.0, %v2919
      %v2921 = vpop.f32.mrb[0].mxu0
      %v2922 = vpop.f32.mrb[0].mxu0
      %v2923 = vadd.f32 0.0, %v2922
      %v2924 = vpop.f32.mrb[0].mxu0
      %2925 = vmatprep.mubr.bf16.mxu0 0
      %2926 = vmatmul.mubr.bf16.gmra.mrb[0].mxu0 %v2786
      %v2927 = vpop.f32.mrb[0].mxu0
      %v2928 = vadd.f32 0.0, %v2927
      %v2929 = vpop.f32.mrb[0].mxu0
      %v2930 = vpop.f32.mrb[0].mxu0
      %v2931 = vadd.f32 0.0, %v2930
      %v2932 = vpop.f32.mrb[0].mxu0
      %2933 = vmatprep.mubr.bf16.mxu0 0
      %2934 = vmatmul.mubr.bf16.gmra.mrb[0].mxu0 %v2788
      %v2935 = vpop.f32.mrb[0].mxu0
      %v2936 = vadd.f32 0.0, %v2935
      %v2937 = vpop.f32.mrb[0].mxu0
      %v2938 = vpop.f32.mrb[0].mxu0
      %v2939 = vadd.f32 0.0, %v2938
      %v2940 = vpop.f32.mrb[0].mxu0
      %2941 = vmatprep.mubr.bf16.mxu0 0
      %2942 = vmatmul.mubr.bf16.gmra.mrb[0].mxu0 %v2790
      %v2943 = vpop.f32.mrb[0].mxu0
      %v2944 = vadd.f32 0.0, %v2943
      %v2945 = vpop.f32.mrb[0].mxu0
      %v2946 = vpop.f32.mrb[0].mxu0
      %v2947 = vadd.f32 0.0, %v2946
      %v2948 = vpop.f32.mrb[0].mxu0
      %2949 = vmatprep.mubr.bf16.mxu0 0
      %2950 = vmatmul.mubr.bf16.gmra.mrb[0].mxu0 %v2792
      %v2951 = vpop.f32.mrb[0].mxu0
      %v2952 = vadd.f32 0.0, %v2951
      %v2953 = vpop.f32.mrb[0].mxu0
      %v2954 = vpop.f32.mrb[0].mxu0
      %v2955 = vadd.f32 0.0, %v2954
      %v2956 = vpop.f32.mrb[0].mxu0
      %2957 = vmatprep.mubr.bf16.mxu0 0
      %2958 = vmatmul.mubr.bf16.gmra.mrb[0].mxu0 %v2794
      %v2959 = vpop.f32.mrb[0].mxu0
      %v2960 = vadd.f32 0.0, %v2959
      %v2961 = vpop.f32.mrb[0].mxu0
      %v2962 = vpop.f32.mrb[0].mxu0
      %v2963 = vadd.f32 0.0, %v2962
      %v2964 = vpop.f32.mrb[0].mxu0
      %2965 = vmatprep.mubr.bf16.mxu0 0
      %2966 = vmatmul.mubr.bf16.gmra.mrb[0].mxu0 %v2796
      %v2967 = vpop.f32.mrb[0].mxu0
      %v2968 = vadd.f32 0.0, %v2967
      %v2969 = vpop.f32.mrb[0].mxu0
      %v2970 = vpop.f32.mrb[0].mxu0
      %v2971 = vadd.f32 0.0, %v2970
      %v2972 = vpop.f32.mrb[0].mxu0
      %2973 = vmatprep.mubr.bf16.mxu0 0
      %2974 = vmatmul.mubr.bf16.gmra.mrb[0].mxu0 %v2798
      %v2975 = vpop.f32.mrb[0].mxu0
      %v2976 = vadd.f32 0.0, %v2975
      %v2977 = vpop.f32.mrb[0].mxu0
      %v2978 = vpop.f32.mrb[0].mxu0
      %v2979 = vadd.f32 0.0, %v2978
      %v2980 = vpop.f32.mrb[0].mxu0
      %2981 = vmatprep.mubr.bf16.mxu0 0
      %2982 = vmatmul.mubr.bf16.gmra.mrb[0].mxu0 %v2800
      %v2983 = vpop.f32.mrb[0].mxu0
      %v2984 = vadd.f32 0.0, %v2983
      %v2985 = vpop.f32.mrb[0].mxu0
      %v2986 = vpop.f32.mrb[0].mxu0
      %v2987 = vadd.f32 0.0, %v2986
      %v2988 = vpop.f32.mrb[0].mxu0
      %2989 = vmatprep.mubr.bf16.mxu0 0
      %2990 = vmatmul.mubr.bf16.gmra.mrb[0].mxu0 %v2802
      %v2991 = vpop.f32.mrb[0].mxu0
      %v2992 = vadd.f32 0.0, %v2991
      %v2993 = vpop.f32.mrb[0].mxu0
      %v2994 = vpop.f32.mrb[0].mxu0
      %v2995 = vadd.f32 0.0, %v2994
      %v2996 = vpop.f32.mrb[0].mxu0
      %2997 = vmatprep.mubr.bf16.mxu0 0
      %2998 = vmatmul.mubr.bf16.gmra.mrb[0].mxu0 %v2804
      %v2999 = vpop.f32.mrb[0].mxu0
      %v3000 = vadd.f32 0.0, %v2999
      %v3001 = vpop.f32.mrb[0].mxu0
      %v3002 = vpop.f32.mrb[0].mxu0
      %v3003 = vadd.f32 0.0, %v3002
      %v3004 = vpop.f32.mrb[0].mxu0
      %3005 = vmatprep.mubr.bf16.mxu0 0
      %3006 = vmatmul.mubr.bf16.gmra.mrb[0].mxu0 %v2806
      %v3007 = vpop.f32.mrb[0].mxu0
      %v3008 = vadd.f32 0.0, %v3007
      %v3009 = vpop.f32.mrb[0].mxu0
      %v3010 = vpop.f32.mrb[0].mxu0
      %v3011 = vadd.f32 0.0, %v3010
      %v3012 = vpop.f32.mrb[0].mxu0
      %3013 = vmatprep.mubr.bf16.mxu0 0
      %3014 = vmatmul.mubr.bf16.gmra.mrb[0].mxu0 %v2808
      %v3015 = vpop.f32.mrb[0].mxu0
      %v3016 = vadd.f32 0.0, %v3015
      %v3017 = vpop.f32.mrb[0].mxu0
      %v3018 = vpop.f32.mrb[0].mxu0
      %v3019 = vadd.f32 0.0, %v3018
      %v3020 = vpop.f32.mrb[0].mxu0
      %3021 = vmatprep.mubr.bf16.mxu0 0
      %3022 = vmatmul.mubr.bf16.gmra.mrb[0].mxu0 %v2810
      %v3023 = vpop.f32.mrb[0].mxu0
      %v3024 = vadd.f32 0.0, %v3023
      %v3025 = vpop.f32.mrb[0].mxu0
      %v3026 = vpop.f32.mrb[0].mxu0
      %v3027 = vadd.f32 0.0, %v3026
      %v3028 = vpop.f32.mrb[0].mxu0
      %3029 = vmatprep.mubr.bf16.mxu0 0
      %3030 = vmatmul.mubr.bf16.gmra.mrb[0].mxu0 %v2812
      %v3031 = vpop.f32.mrb[0].mxu0
      %v3032 = vadd.f32 0.0, %v3031
      %v3033 = vpop.f32.mrb[0].mxu0
      %v3034 = vpop.f32.mrb[0].mxu0
      %v3035 = vadd.f32 0.0, %v3034
      %v3036 = vpop.f32.mrb[0].mxu0
      %3037 = vmatprep.mubr.bf16.mxu0 0
      %3038 = vmatmul.mubr.bf16.gmra.mrb[0].mxu0 %v2814
      %v3039 = vpop.f32.mrb[0].mxu0
      %v3040 = vadd.f32 0.0, %v3039
      %v3041 = vpop.f32.mrb[0].mxu0
      %v3042 = vpop.f32.mrb[0].mxu0
      %v3043 = vadd.f32 0.0, %v3042
      %v3044 = vpop.f32.mrb[0].mxu0
      %3045 = vmatprep.mubr.bf16.mxu0 0
      %3046 = vmatmul.mubr.bf16.gmra.mrb[0].mxu0 %v2816
      %v3047 = vpop.f32.mrb[0].mxu0
      %v3048 = vadd.f32 0.0, %v3047
      %v3049 = vpop.f32.mrb[0].mxu0
      %v3050 = vpop.f32.mrb[0].mxu0
      %v3051 = vadd.f32 0.0, %v3050
      %v3052 = vpop.f32.mrb[0].mxu0
      %3053 = vmatprep.mubr.bf16.mxu0 0
      %3054 = vmatmul.mubr.bf16.gmra.mrb[0].mxu0 %v2818
      %v3055 = vpop.f32.mrb[0].mxu0
      %v3056 = vadd.f32 0.0, %v3055
      %v3057 = vpop.f32.mrb[0].mxu0
      %v3058 = vpop.f32.mrb[0].mxu0
      %v3059 = vadd.f32 0.0, %v3058
      %v3060 = vpop.f32.mrb[0].mxu0
      %3061 = vdwg.mxu0
      %v3062 = vadd.f32 %v2599, %v2920
      %v3063 = vadd.f32 %v2600, %v2923
      %v3064 = vadd.f32 %v2601, %v2928
      %v3065 = vadd.f32 %v2602, %v2931
      %v3066 = vadd.f32 %v2603, %v2936
      %v3067 = vadd.f32 %v2604, %v2939
      %v3068 = vadd.f32 %v2605, %v2944
      %v3069 = vadd.f32 %v2606, %v2947
      %v3070 = vadd.f32 %v2607, %v2952
      %v3071 = vadd.f32 %v2608, %v2955
      %v3072 = vadd.f32 %v2609, %v2960
      %v3073 = vadd.f32 %v2610, %v2963
      %v3074 = vadd.f32 %v2611, %v2968
      %v3075 = vadd.f32 %v2612, %v2971
      %v3076 = vadd.f32 %v2613, %v2976
      %v3077 = vadd.f32 %v2614, %v2979
      %v3078 = vadd.f32 %v2615, %v2984
      %v3079 = vadd.f32 %v2616, %v2987
      %v3080 = vadd.f32 %v2617, %v2992
      %v3081 = vadd.f32 %v2618, %v2995
      %v3082 = vadd.f32 %v2619, %v3000
      %v3083 = vadd.f32 %v2620, %v3003
      %v3084 = vadd.f32 %v2621, %v3008
      %v3085 = vadd.f32 %v2622, %v3011
      %v3086 = vadd.f32 %v2623, %v3016
      %v3087 = vadd.f32 %v2624, %v3019
      %v3088 = vadd.f32 %v2625, %v3024
      %v3089 = vadd.f32 %v2626, %v3027
      %v3090 = vadd.f32 %v2627, %v3032
      %v3091 = vadd.f32 %v2628, %v3035
      %v3092 = vadd.f32 %v2629, %v3040
      %v3093 = vadd.f32 %v2630, %v3043
      %v3094 = vadd.f32 %v2631, %v3048
      %v3095 = vadd.f32 %v2632, %v3051
      %v3096 = vadd.f32 %v2633, %v3056
      %v3097 = vadd.f32 %v2634, %v3059
      %v3098 = vld [vmem:[%s219 + $0xa0] sm:$0x7]
      %s3099 = scalar_lea.vmem %s1, 448
      %v3100 = vld [vmem:[%s3099] sm:$0xf]
      %v3101 = vld [vmem:[%s3099 + $0x4] sm:$0xf]
      %v3102 = vld [vmem:[%s3099 + $0x8] sm:$0xf]
      %v3103 = vld [vmem:[%s3099 + $0xc] sm:$0xf]
      %v3104 = vld [vmem:[%s3099 + $0x10] sm:$0xf]
      %v3105 = vld [vmem:[%s3099 + $0x14] sm:$0xf]
      %v3106 = vld [vmem:[%s3099 + $0x18] sm:$0xf]
      %v3107 = vld [vmem:[%s3099 + $0x1c] sm:$0xf]
      %v3108 = vld [vmem:[%s3099 + $0x20] sm:$0xf]
      %v3109 = vld [vmem:[%s3099 + $0x24] sm:$0xf]
      %v3110 = vld [vmem:[%s3099 + $0x28] sm:$0xf]
      %v3111 = vld [vmem:[%s3099 + $0x2c] sm:$0xf]
      %v3112 = vld [vmem:[%s3099 + $0x30] sm:$0xf]
      %v3113 = vld [vmem:[%s3099 + $0x34] sm:$0xf]
      %v3114 = vld [vmem:[%s3099 + $0x38] sm:$0xf]
      %v3115 = vld [vmem:[%s3099 + $0x3c] sm:$0xf]
      %v3117 = vunpack.c.l.b16 %v3098
      %v3118 = vpack.c.b16 %v3117, %v3117
      %vm3119 = vsmask.f32 5376
      %v3121 = vshrl.u32 %v2763, 16
      %v3123 = vrot.slane %v3121, 2
      %v3124 = vshll.u32 %v2763, 16
      %v3126 = vrot.slane %v3124, 3
      %v3127 = vor.u32 %v3123, %v3126
      %v3129 = vshrl.u32 %v2764, 16
      %v3131 = vrot.slane %v3129, 2
      %v3132 = vshll.u32 %v2764, 16
      %v3134 = vrot.slane %v3132, 3
      %v3135 = vor.u32 %v3131, %v3134
      %v3136 = vsel %vm3119, %v3127, %v3135
      %v3138 = vshrl.u32 %v2765, 16
      %v3140 = vrot.slane %v3138, 2
      %v3141 = vshll.u32 %v2765, 16
      %v3143 = vrot.slane %v3141, 3
      %v3144 = vor.u32 %v3140, %v3143
      %v3145 = vsel %vm3119, %v3135, %v3144
      %v3147 = vshrl.u32 %v2766, 16
      %v3149 = vrot.slane %v3147, 2
      %v3150 = vshll.u32 %v2766, 16
      %v3152 = vrot.slane %v3150, 3
      %v3153 = vor.u32 %v3149, %v3152
      %v3154 = vsel %vm3119, %v3144, %v3153
      %v3156 = vshrl.u32 %v2767, 16
      %v3158 = vrot.slane %v3156, 2
      %v3159 = vshll.u32 %v2767, 16
      %v3161 = vrot.slane %v3159, 3
      %v3162 = vor.u32 %v3158, %v3161
      %v3163 = vsel %vm3119, %v3153, %v3162
      %v3165 = vshrl.u32 %v2768, 16
      %v3167 = vrot.slane %v3165, 2
      %v3168 = vshll.u32 %v2768, 16
      %v3170 = vrot.slane %v3168, 3
      %v3171 = vor.u32 %v3167, %v3170
      %v3172 = vsel %vm3119, %v3162, %v3171
      %v3174 = vshrl.u32 %v2769, 16
      %v3176 = vrot.slane %v3174, 2
      %v3177 = vshll.u32 %v2769, 16
      %v3179 = vrot.slane %v3177, 3
      %v3180 = vor.u32 %v3176, %v3179
      %v3181 = vsel %vm3119, %v3171, %v3180
      %v3183 = vshrl.u32 %v2770, 16
      %v3185 = vrot.slane %v3183, 2
      %v3186 = vshll.u32 %v2770, 16
      %v3188 = vrot.slane %v3186, 3
      %v3189 = vor.u32 %v3185, %v3188
      %v3190 = vsel %vm3119, %v3180, %v3189
      %v3192 = vshrl.u32 %v2771, 16
      %v3194 = vrot.slane %v3192, 2
      %v3195 = vshll.u32 %v2771, 16
      %v3197 = vrot.slane %v3195, 3
      %v3198 = vor.u32 %v3194, %v3197
      %v3199 = vsel %vm3119, %v3189, %v3198
      %v3201 = vshrl.u32 %v2772, 16
      %v3203 = vrot.slane %v3201, 2
      %v3204 = vshll.u32 %v2772, 16
      %v3206 = vrot.slane %v3204, 3
      %v3207 = vor.u32 %v3203, %v3206
      %v3208 = vsel %vm3119, %v3198, %v3207
      %v3210 = vshrl.u32 %v2773, 16
      %v3212 = vrot.slane %v3210, 2
      %v3213 = vshll.u32 %v2773, 16
      %v3215 = vrot.slane %v3213, 3
      %v3216 = vor.u32 %v3212, %v3215
      %v3217 = vsel %vm3119, %v3207, %v3216
      %v3219 = vshrl.u32 %v2774, 16
      %v3221 = vrot.slane %v3219, 2
      %v3222 = vshll.u32 %v2774, 16
      %v3224 = vrot.slane %v3222, 3
      %v3225 = vor.u32 %v3221, %v3224
      %v3226 = vsel %vm3119, %v3216, %v3225
      %v3228 = vshrl.u32 %v2775, 16
      %v3230 = vrot.slane %v3228, 2
      %v3231 = vshll.u32 %v2775, 16
      %v3233 = vrot.slane %v3231, 3
      %v3234 = vor.u32 %v3230, %v3233
      %v3235 = vsel %vm3119, %v3225, %v3234
      %v3237 = vshrl.u32 %v2776, 16
      %v3239 = vrot.slane %v3237, 2
      %v3240 = vshll.u32 %v2776, 16
      %v3242 = vrot.slane %v3240, 3
      %v3243 = vor.u32 %v3239, %v3242
      %v3244 = vsel %vm3119, %v3234, %v3243
      %v3246 = vshrl.u32 %v2777, 16
      %v3248 = vrot.slane %v3246, 2
      %v3249 = vshll.u32 %v2777, 16
      %v3251 = vrot.slane %v3249, 3
      %v3252 = vor.u32 %v3248, %v3251
      %v3253 = vsel %vm3119, %v3243, %v3252
      %v3255 = vshrl.u32 %v2778, 16
      %v3257 = vrot.slane %v3255, 2
      %v3258 = vshll.u32 %v2778, 16
      %v3260 = vrot.slane %v3258, 3
      %v3261 = vor.u32 %v3257, %v3260
      %v3262 = vsel %vm3119, %v3252, %v3261
      %v3264 = vshrl.u32 %v2779, 16
      %v3266 = vrot.slane %v3264, 2
      %v3267 = vshll.u32 %v2779, 16
      %v3269 = vrot.slane %v3267, 3
      %v3270 = vor.u32 %v3266, %v3269
      %v3271 = vsel %vm3119, %v3261, %v3270
      %v3273 = vshrl.u32 %v2780, 16
      %v3275 = vrot.slane %v3273, 2
      %v3276 = vshll.u32 %v2780, 16
      %v3278 = vrot.slane %v3276, 3
      %v3279 = vor.u32 %v3275, %v3278
      %v3280 = vsel %vm3119, %v3270, %v3279
      %v3282 = vshrl.u32 %v3118, 16
      %v3284 = vrot.slane %v3282, 2
      %v3285 = vshll.u32 %v3118, 16
      %v3287 = vrot.slane %v3285, 3
      %v3288 = vor.u32 %v3284, %v3287
      %v3289 = vsel %vm3119, %v3279, %v3288
      %v3324 = vunpack.c.l.b16 %v3100
      %v3325 = vunpack.c.l.b16 %v3101
      %v3326 = vunpack.c.l.b16 %v3102
      %v3327 = vunpack.c.l.b16 %v3103
      %v3328 = vunpack.c.l.b16 %v3104
      %v3329 = vunpack.c.l.b16 %v3105
      %v3330 = vunpack.c.l.b16 %v3106
      %v3331 = vunpack.c.l.b16 %v3107
      %v3332 = vunpack.c.l.b16 %v3108
      %v3333 = vunpack.c.l.b16 %v3109
      %v3334 = vunpack.c.l.b16 %v3110
      %v3335 = vunpack.c.l.b16 %v3111
      %v3336 = vunpack.c.l.b16 %v3112
      %v3337 = vunpack.c.l.b16 %v3113
      %v3338 = vunpack.c.l.b16 %v3114
      %v3339 = vunpack.c.l.b16 %v3115
      %v3340 = vpack.c.b16 %v3325, %v3324
      %v3341 = vpack.c.b16 %v3327, %v3326
      %v3342 = vpack.c.b16 %v3329, %v3328
      %v3343 = vpack.c.b16 %v3331, %v3330
      %v3344 = vpack.c.b16 %v3333, %v3332
      %v3345 = vpack.c.b16 %v3335, %v3334
      %v3346 = vpack.c.b16 %v3337, %v3336
      %v3347 = vpack.c.b16 %v3339, %v3338
      %3356 = vmatprep.subr.bf16.mxu0 0
      %3357 = vmatpush1.bf16.msra.mxu0 %v3340
      %3358 = vmatprep.subr.bf16.mxu0 0
      %3359 = vmatpush1.bf16.msra.mxu0 %v3341
      %3360 = vmatprep.subr.bf16.mxu0 0
      %3361 = vmatpush1.bf16.msra.mxu0 %v3342
      %3362 = vmatprep.subr.bf16.mxu0 0
      %3363 = vmatpush1.bf16.msra.mxu0 %v3343
      %3364 = vmatprep.subr.bf16.mxu0 0
      %3365 = vmatpush1.bf16.msra.mxu0 %v3344
      %3366 = vmatprep.subr.bf16.mxu0 0
      %3367 = vmatpush1.bf16.msra.mxu0 %v3345
      %3368 = vmatprep.subr.bf16.mxu0 0
      %3369 = vmatpush1.bf16.msra.mxu0 %v3346
      %3370 = vmatprep.subr.bf16.mxu0 0
      %3371 = vmatpush1.bf16.msra.mxu0 %v3347
      %3372 = vmatprep.subr.bf16.mxu0 0
      %3373 = vmatpush1.bf16.msra.mxu0 0
      %3374 = vmatprep.subr.bf16.mxu0 0
      %3375 = vmatpush1.bf16.msra.mxu0 0
      %3376 = vmatprep.subr.bf16.mxu0 0
      %3377 = vmatpush1.bf16.msra.mxu0 0
      %3378 = vmatprep.subr.bf16.mxu0 0
      %3379 = vmatpush1.bf16.msra.mxu0 0
      %3380 = vmatprep.subr.bf16.mxu0 0
      %3381 = vmatpush1.bf16.msra.mxu0 0
      %3382 = vmatprep.subr.bf16.mxu0 0
      %3383 = vmatpush1.bf16.msra.mxu0 0
      %3384 = vmatprep.subr.bf16.mxu0 0
      %3385 = vmatpush1.bf16.msra.mxu0 0
      %3386 = vmatprep.subr.bf16.mxu0 0
      %3387 = vmatpush1.bf16.msra.mxu0 0
      %3388 = vmatprep.mubr.bf16.mxu0 0
      %3389 = vmatmul.mubr.bf16.gmra.mrb[0].mxu0 %v3136
      %v3390 = vpop.f32.mrb[0].mxu0
      %v3391 = vadd.f32 0.0, %v3390
      %v3392 = vpop.f32.mrb[0].mxu0
      %v3393 = vpop.f32.mrb[0].mxu0
      %v3394 = vadd.f32 0.0, %v3393
      %v3395 = vpop.f32.mrb[0].mxu0
      %3396 = vmatprep.mubr.bf16.mxu0 0
      %3397 = vmatmul.mubr.bf16.gmra.mrb[0].mxu0 %v3145
      %v3398 = vpop.f32.mrb[0].mxu0
      %v3399 = vadd.f32 0.0, %v3398
      %v3400 = vpop.f32.mrb[0].mxu0
      %v3401 = vpop.f32.mrb[0].mxu0
      %v3402 = vadd.f32 0.0, %v3401
      %v3403 = vpop.f32.mrb[0].mxu0
      %3404 = vmatprep.mubr.bf16.mxu0 0
      %3405 = vmatmul.mubr.bf16.gmra.mrb[0].mxu0 %v3154
      %v3406 = vpop.f32.mrb[0].mxu0
      %v3407 = vadd.f32 0.0, %v3406
      %v3408 = vpop.f32.mrb[0].mxu0
      %v3409 = vpop.f32.mrb[0].mxu0
      %v3410 = vadd.f32 0.0, %v3409
      %v3411 = vpop.f32.mrb[0].mxu0
      %3412 = vmatprep.mubr.bf16.mxu0 0
      %3413 = vmatmul.mubr.bf16.gmra.mrb[0].mxu0 %v3163
      %v3414 = vpop.f32.mrb[0].mxu0
      %v3415 = vadd.f32 0.0, %v3414
      %v3416 = vpop.f32.mrb[0].mxu0
      %v3417 = vpop.f32.mrb[0].mxu0
      %v3418 = vadd.f32 0.0, %v3417
      %v3419 = vpop.f32.mrb[0].mxu0
      %3420 = vmatprep.mubr.bf16.mxu0 0
      %3421 = vmatmul.mubr.bf16.gmra.mrb[0].mxu0 %v3172
      %v3422 = vpop.f32.mrb[0].mxu0
      %v3423 = vadd.f32 0.0, %v3422
      %v3424 = vpop.f32.mrb[0].mxu0
      %v3425 = vpop.f32.mrb[0].mxu0
      %v3426 = vadd.f32 0.0, %v3425
      %v3427 = vpop.f32.mrb[0].mxu0
      %3428 = vmatprep.mubr.bf16.mxu0 0
      %3429 = vmatmul.mubr.bf16.gmra.mrb[0].mxu0 %v3181
      %v3430 = vpop.f32.mrb[0].mxu0
      %v3431 = vadd.f32 0.0, %v3430
      %v3432 = vpop.f32.mrb[0].mxu0
      %v3433 = vpop.f32.mrb[0].mxu0
      %v3434 = vadd.f32 0.0, %v3433
      %v3435 = vpop.f32.mrb[0].mxu0
      %3436 = vmatprep.mubr.bf16.mxu0 0
      %3437 = vmatmul.mubr.bf16.gmra.mrb[0].mxu0 %v3190
      %v3438 = vpop.f32.mrb[0].mxu0
      %v3439 = vadd.f32 0.0, %v3438
      %v3440 = vpop.f32.mrb[0].mxu0
      %v3441 = vpop.f32.mrb[0].mxu0
      %v3442 = vadd.f32 0.0, %v3441
      %v3443 = vpop.f32.mrb[0].mxu0
      %3444 = vmatprep.mubr.bf16.mxu0 0
      %3445 = vmatmul.mubr.bf16.gmra.mrb[0].mxu0 %v3199
      %v3446 = vpop.f32.mrb[0].mxu0
      %v3447 = vadd.f32 0.0, %v3446
      %v3448 = vpop.f32.mrb[0].mxu0
      %v3449 = vpop.f32.mrb[0].mxu0
      %v3450 = vadd.f32 0.0, %v3449
      %v3451 = vpop.f32.mrb[0].mxu0
      %3452 = vmatprep.mubr.bf16.mxu0 0
      %3453 = vmatmul.mubr.bf16.gmra.mrb[0].mxu0 %v3208
      %v3454 = vpop.f32.mrb[0].mxu0
      %v3455 = vadd.f32 0.0, %v3454
      %v3456 = vpop.f32.mrb[0].mxu0
      %v3457 = vpop.f32.mrb[0].mxu0
      %v3458 = vadd.f32 0.0, %v3457
      %v3459 = vpop.f32.mrb[0].mxu0
      %3460 = vmatprep.mubr.bf16.mxu0 0
      %3461 = vmatmul.mubr.bf16.gmra.mrb[0].mxu0 %v3217
      %v3462 = vpop.f32.mrb[0].mxu0
      %v3463 = vadd.f32 0.0, %v3462
      %v3464 = vpop.f32.mrb[0].mxu0
      %v3465 = vpop.f32.mrb[0].mxu0
      %v3466 = vadd.f32 0.0, %v3465
      %v3467 = vpop.f32.mrb[0].mxu0
      %3468 = vmatprep.mubr.bf16.mxu0 0
      %3469 = vmatmul.mubr.bf16.gmra.mrb[0].mxu0 %v3226
      %v3470 = vpop.f32.mrb[0].mxu0
      %v3471 = vadd.f32 0.0, %v3470
      %v3472 = vpop.f32.mrb[0].mxu0
      %v3473 = vpop.f32.mrb[0].mxu0
      %v3474 = vadd.f32 0.0, %v3473
      %v3475 = vpop.f32.mrb[0].mxu0
      %3476 = vmatprep.mubr.bf16.mxu0 0
      %3477 = vmatmul.mubr.bf16.gmra.mrb[0].mxu0 %v3235
      %v3478 = vpop.f32.mrb[0].mxu0
      %v3479 = vadd.f32 0.0, %v3478
      %v3480 = vpop.f32.mrb[0].mxu0
      %v3481 = vpop.f32.mrb[0].mxu0
      %v3482 = vadd.f32 0.0, %v3481
      %v3483 = vpop.f32.mrb[0].mxu0
      %3484 = vmatprep.mubr.bf16.mxu0 0
      %3485 = vmatmul.mubr.bf16.gmra.mrb[0].mxu0 %v3244
      %v3486 = vpop.f32.mrb[0].mxu0
      %v3487 = vadd.f32 0.0, %v3486
      %v3488 = vpop.f32.mrb[0].mxu0
      %v3489 = vpop.f32.mrb[0].mxu0
      %v3490 = vadd.f32 0.0, %v3489
      %v3491 = vpop.f32.mrb[0].mxu0
      %3492 = vmatprep.mubr.bf16.mxu0 0
      %3493 = vmatmul.mubr.bf16.gmra.mrb[0].mxu0 %v3253
      %v3494 = vpop.f32.mrb[0].mxu0
      %v3495 = vadd.f32 0.0, %v3494
      %v3496 = vpop.f32.mrb[0].mxu0
      %v3497 = vpop.f32.mrb[0].mxu0
      %v3498 = vadd.f32 0.0, %v3497
      %v3499 = vpop.f32.mrb[0].mxu0
      %3500 = vmatprep.mubr.bf16.mxu0 0
      %3501 = vmatmul.mubr.bf16.gmra.mrb[0].mxu0 %v3262
      %v3502 = vpop.f32.mrb[0].mxu0
      %v3503 = vadd.f32 0.0, %v3502
      %v3504 = vpop.f32.mrb[0].mxu0
      %v3505 = vpop.f32.mrb[0].mxu0
      %v3506 = vadd.f32 0.0, %v3505
      %v3507 = vpop.f32.mrb[0].mxu0
      %3508 = vmatprep.mubr.bf16.mxu0 0
      %3509 = vmatmul.mubr.bf16.gmra.mrb[0].mxu0 %v3271
      %v3510 = vpop.f32.mrb[0].mxu0
      %v3511 = vadd.f32 0.0, %v3510
      %v3512 = vpop.f32.mrb[0].mxu0
      %v3513 = vpop.f32.mrb[0].mxu0
      %v3514 = vadd.f32 0.0, %v3513
      %v3515 = vpop.f32.mrb[0].mxu0
      %3516 = vmatprep.mubr.bf16.mxu0 0
      %3517 = vmatmul.mubr.bf16.gmra.mrb[0].mxu0 %v3280
      %v3518 = vpop.f32.mrb[0].mxu0
      %v3519 = vadd.f32 0.0, %v3518
      %v3520 = vpop.f32.mrb[0].mxu0
      %v3521 = vpop.f32.mrb[0].mxu0
      %v3522 = vadd.f32 0.0, %v3521
      %v3523 = vpop.f32.mrb[0].mxu0
      %3524 = vmatprep.mubr.bf16.mxu0 0
      %3525 = vmatmul.mubr.bf16.gmra.mrb[0].mxu0 %v3289
      %v3526 = vpop.f32.mrb[0].mxu0
      %v3527 = vadd.f32 0.0, %v3526
      %v3528 = vpop.f32.mrb[0].mxu0
      %v3529 = vpop.f32.mrb[0].mxu0
      %v3530 = vadd.f32 0.0, %v3529
      %v3531 = vpop.f32.mrb[0].mxu0
      %3532 = vdwg.mxu0
      %v3533 = vadd.f32 %v3062, %v3391
      %v3534 = vadd.f32 %v3063, %v3394
      %v3535 = vadd.f32 %v3064, %v3399
      %v3536 = vadd.f32 %v3065, %v3402
      %v3537 = vadd.f32 %v3066, %v3407
      %v3538 = vadd.f32 %v3067, %v3410
      %v3539 = vadd.f32 %v3068, %v3415
      %v3540 = vadd.f32 %v3069, %v3418
      %v3541 = vadd.f32 %v3070, %v3423
      %v3542 = vadd.f32 %v3071, %v3426
      %v3543 = vadd.f32 %v3072, %v3431
      %v3544 = vadd.f32 %v3073, %v3434
      %v3545 = vadd.f32 %v3074, %v3439
      %v3546 = vadd.f32 %v3075, %v3442
      %v3547 = vadd.f32 %v3076, %v3447
      %v3548 = vadd.f32 %v3077, %v3450
      %v3549 = vadd.f32 %v3078, %v3455
      %v3550 = vadd.f32 %v3079, %v3458
      %v3551 = vadd.f32 %v3080, %v3463
      %v3552 = vadd.f32 %v3081, %v3466
      %v3553 = vadd.f32 %v3082, %v3471
      %v3554 = vadd.f32 %v3083, %v3474
      %v3555 = vadd.f32 %v3084, %v3479
      %v3556 = vadd.f32 %v3085, %v3482
      %v3557 = vadd.f32 %v3086, %v3487
      %v3558 = vadd.f32 %v3087, %v3490
      %v3559 = vadd.f32 %v3088, %v3495
      %v3560 = vadd.f32 %v3089, %v3498
      %v3561 = vadd.f32 %v3090, %v3503
      %v3562 = vadd.f32 %v3091, %v3506
      %v3563 = vadd.f32 %v3092, %v3511
      %v3564 = vadd.f32 %v3093, %v3514
      %v3565 = vadd.f32 %v3094, %v3519
      %v3566 = vadd.f32 %v3095, %v3522
      %v3567 = vadd.f32 %v3096, %v3527
      %v3568 = vadd.f32 %v3097, %v3530
      %v3569 = vld [vmem:[%s219 + $0x10] sm:$0x8]
      %s3570 = scalar_lea.vmem %s1, 512
      %v3571 = vld [vmem:[%s3570] sm:$0xf]
      %v3572 = vld [vmem:[%s3570 + $0x4] sm:$0xf]
      %v3573 = vld [vmem:[%s3570 + $0x8] sm:$0xf]
      %v3574 = vld [vmem:[%s3570 + $0xc] sm:$0xf]
      %v3575 = vld [vmem:[%s3570 + $0x10] sm:$0xf]
      %v3576 = vld [vmem:[%s3570 + $0x14] sm:$0xf]
      %v3577 = vld [vmem:[%s3570 + $0x18] sm:$0xf]
      %v3578 = vld [vmem:[%s3570 + $0x1c] sm:$0xf]
      %v3579 = vld [vmem:[%s3570 + $0x20] sm:$0xf]
      %v3580 = vld [vmem:[%s3570 + $0x24] sm:$0xf]
      %v3581 = vld [vmem:[%s3570 + $0x28] sm:$0xf]
      %v3582 = vld [vmem:[%s3570 + $0x2c] sm:$0xf]
      %v3583 = vld [vmem:[%s3570 + $0x30] sm:$0xf]
      %v3584 = vld [vmem:[%s3570 + $0x34] sm:$0xf]
      %v3585 = vld [vmem:[%s3570 + $0x38] sm:$0xf]
      %v3586 = vld [vmem:[%s3570 + $0x3c] sm:$0xf]
      %v3588 = vunpack.c.l.b16 %v3569
      %v3589 = vpack.c.b16 %v2727, %v3588
      %vm3590 = vcmask 1044480
      %v3591 = vrot.slane %v3589, 3
      %v3592 = vrot.slane %v2764, 3
      %v3593 = vsel %vm3590, %v3591, %v3592
      %v3594 = vrot.slane %v2765, 3
      %v3595 = vsel %vm3590, %v3592, %v3594
      %v3596 = vrot.slane %v2766, 3
      %v3597 = vsel %vm3590, %v3594, %v3596
      %v3598 = vrot.slane %v2767, 3
      %v3599 = vsel %vm3590, %v3596, %v3598
      %v3600 = vrot.slane %v2768, 3
      %v3601 = vsel %vm3590, %v3598, %v3600
      %v3602 = vrot.slane %v2769, 3
      %v3603 = vsel %vm3590, %v3600, %v3602
      %v3604 = vrot.slane %v2770, 3
      %v3605 = vsel %vm3590, %v3602, %v3604
      %v3606 = vrot.slane %v2771, 3
      %v3607 = vsel %vm3590, %v3604, %v3606
      %v3608 = vrot.slane %v2772, 3
      %v3609 = vsel %vm3590, %v3606, %v3608
      %v3610 = vrot.slane %v2773, 3
      %v3611 = vsel %vm3590, %v3608, %v3610
      %v3612 = vrot.slane %v2774, 3
      %v3613 = vsel %vm3590, %v3610, %v3612
      %v3614 = vrot.slane %v2775, 3
      %v3615 = vsel %vm3590, %v3612, %v3614
      %v3616 = vrot.slane %v2776, 3
      %v3617 = vsel %vm3590, %v3614, %v3616
      %v3618 = vrot.slane %v2777, 3
      %v3619 = vsel %vm3590, %v3616, %v3618
      %v3620 = vrot.slane %v2778, 3
      %v3621 = vsel %vm3590, %v3618, %v3620
      %v3622 = vrot.slane %v2779, 3
      %v3623 = vsel %vm3590, %v3620, %v3622
      %v3624 = vrot.slane %v2780, 3
      %v3625 = vsel %vm3590, %v3622, %v3624
      %v3626 = vrot.slane %v3118, 3
      %v3627 = vsel %vm3590, %v3624, %v3626
      %v3662 = vunpack.c.l.b16 %v3571
      %v3663 = vunpack.c.l.b16 %v3572
      %v3664 = vunpack.c.l.b16 %v3573
      %v3665 = vunpack.c.l.b16 %v3574
      %v3666 = vunpack.c.l.b16 %v3575
      %v3667 = vunpack.c.l.b16 %v3576
      %v3668 = vunpack.c.l.b16 %v3577
      %v3669 = vunpack.c.l.b16 %v3578
      %v3670 = vunpack.c.l.b16 %v3579
      %v3671 = vunpack.c.l.b16 %v3580
      %v3672 = vunpack.c.l.b16 %v3581
      %v3673 = vunpack.c.l.b16 %v3582
      %v3674 = vunpack.c.l.b16 %v3583
      %v3675 = vunpack.c.l.b16 %v3584
      %v3676 = vunpack.c.l.b16 %v3585
      %v3677 = vunpack.c.l.b16 %v3586
      %v3678 = vpack.c.b16 %v3663, %v3662
      %v3679 = vpack.c.b16 %v3665, %v3664
      %v3680 = vpack.c.b16 %v3667, %v3666
      %v3681 = vpack.c.b16 %v3669, %v3668
      %v3682 = vpack.c.b16 %v3671, %v3670
      %v3683 = vpack.c.b16 %v3673, %v3672
      %v3684 = vpack.c.b16 %v3675, %v3674
      %v3685 = vpack.c.b16 %v3677, %v3676
      %3694 = vmatprep.subr.bf16.mxu0 0
      %3695 = vmatpush1.bf16.msra.mxu0 %v3678
      %3696 = vmatprep.subr.bf16.mxu0 0
      %3697 = vmatpush1.bf16.msra.mxu0 %v3679
      %3698 = vmatprep.subr.bf16.mxu0 0
      %3699 = vmatpush1.bf16.msra.mxu0 %v3680
      %3700 = vmatprep.subr.bf16.mxu0 0
      %3701 = vmatpush1.bf16.msra.mxu0 %v3681
      %3702 = vmatprep.subr.bf16.mxu0 0
      %3703 = vmatpush1.bf16.msra.mxu0 %v3682
      %3704 = vmatprep.subr.bf16.mxu0 0
      %3705 = vmatpush1.bf16.msra.mxu0 %v3683
      %3706 = vmatprep.subr.bf16.mxu0 0
      %3707 = vmatpush1.bf16.msra.mxu0 %v3684
      %3708 = vmatprep.subr.bf16.mxu0 0
      %3709 = vmatpush1.bf16.msra.mxu0 %v3685
      %3710 = vmatprep.subr.bf16.mxu0 0
      %3711 = vmatpush1.bf16.msra.mxu0 0
      %3712 = vmatprep.subr.bf16.mxu0 0
      %3713 = vmatpush1.bf16.msra.mxu0 0
      %3714 = vmatprep.subr.bf16.mxu0 0
      %3715 = vmatpush1.bf16.msra.mxu0 0
      %3716 = vmatprep.subr.bf16.mxu0 0
      %3717 = vmatpush1.bf16.msra.mxu0 0
      %3718 = vmatprep.subr.bf16.mxu0 0
      %3719 = vmatpush1.bf16.msra.mxu0 0
      %3720 = vmatprep.subr.bf16.mxu0 0
      %3721 = vmatpush1.bf16.msra.mxu0 0
      %3722 = vmatprep.subr.bf16.mxu0 0
      %3723 = vmatpush1.bf16.msra.mxu0 0
      %3724 = vmatprep.subr.bf16.mxu0 0
      %3725 = vmatpush1.bf16.msra.mxu0 0
      %3726 = vmatprep.mubr.bf16.mxu0 0
      %3727 = vmatmul.mubr.bf16.gmra.mrb[0].mxu0 %v3593
      %v3728 = vpop.f32.mrb[0].mxu0
      %v3729 = vadd.f32 0.0, %v3728
      %v3730 = vpop.f32.mrb[0].mxu0
      %v3731 = vpop.f32.mrb[0].mxu0
      %v3732 = vadd.f32 0.0, %v3731
      %v3733 = vpop.f32.mrb[0].mxu0
      %3734 = vmatprep.mubr.bf16.mxu0 0
      %3735 = vmatmul.mubr.bf16.gmra.mrb[0].mxu0 %v3595
      %v3736 = vpop.f32.mrb[0].mxu0
      %v3737 = vadd.f32 0.0, %v3736
      %v3738 = vpop.f32.mrb[0].mxu0
      %v3739 = vpop.f32.mrb[0].mxu0
      %v3740 = vadd.f32 0.0, %v3739
      %v3741 = vpop.f32.mrb[0].mxu0
      %3742 = vmatprep.mubr.bf16.mxu0 0
      %3743 = vmatmul.mubr.bf16.gmra.mrb[0].mxu0 %v3597
      %v3744 = vpop.f32.mrb[0].mxu0
      %v3745 = vadd.f32 0.0, %v3744
      %v3746 = vpop.f32.mrb[0].mxu0
      %v3747 = vpop.f32.mrb[0].mxu0
      %v3748 = vadd.f32 0.0, %v3747
      %v3749 = vpop.f32.mrb[0].mxu0
      %3750 = vmatprep.mubr.bf16.mxu0 0
      %3751 = vmatmul.mubr.bf16.gmra.mrb[0].mxu0 %v3599
      %v3752 = vpop.f32.mrb[0].mxu0
      %v3753 = vadd.f32 0.0, %v3752
      %v3754 = vpop.f32.mrb[0].mxu0
      %v3755 = vpop.f32.mrb[0].mxu0
      %v3756 = vadd.f32 0.0, %v3755
      %v3757 = vpop.f32.mrb[0].mxu0
      %3758 = vmatprep.mubr.bf16.mxu0 0
      %3759 = vmatmul.mubr.bf16.gmra.mrb[0].mxu0 %v3601
      %v3760 = vpop.f32.mrb[0].mxu0
      %v3761 = vadd.f32 0.0, %v3760
      %v3762 = vpop.f32.mrb[0].mxu0
      %v3763 = vpop.f32.mrb[0].mxu0
      %v3764 = vadd.f32 0.0, %v3763
      %v3765 = vpop.f32.mrb[0].mxu0
      %3766 = vmatprep.mubr.bf16.mxu0 0
      %3767 = vmatmul.mubr.bf16.gmra.mrb[0].mxu0 %v3603
      %v3768 = vpop.f32.mrb[0].mxu0
      %v3769 = vadd.f32 0.0, %v3768
      %v3770 = vpop.f32.mrb[0].mxu0
      %v3771 = vpop.f32.mrb[0].mxu0
      %v3772 = vadd.f32 0.0, %v3771
      %v3773 = vpop.f32.mrb[0].mxu0
      %3774 = vmatprep.mubr.bf16.mxu0 0
      %3775 = vmatmul.mubr.bf16.gmra.mrb[0].mxu0 %v3605
      %v3776 = vpop.f32.mrb[0].mxu0
      %v3777 = vadd.f32 0.0, %v3776
      %v3778 = vpop.f32.mrb[0].mxu0
      %v3779 = vpop.f32.mrb[0].mxu0
      %v3780 = vadd.f32 0.0, %v3779
      %v3781 = vpop.f32.mrb[0].mxu0
      %3782 = vmatprep.mubr.bf16.mxu0 0
      %3783 = vmatmul.mubr.bf16.gmra.mrb[0].mxu0 %v3607
      %v3784 = vpop.f32.mrb[0].mxu0
      %v3785 = vadd.f32 0.0, %v3784
      %v3786 = vpop.f32.mrb[0].mxu0
      %v3787 = vpop.f32.mrb[0].mxu0
      %v3788 = vadd.f32 0.0, %v3787
      %v3789 = vpop.f32.mrb[0].mxu0
      %3790 = vmatprep.mubr.bf16.mxu0 0
      %3791 = vmatmul.mubr.bf16.gmra.mrb[0].mxu0 %v3609
      %v3792 = vpop.f32.mrb[0].mxu0
      %v3793 = vadd.f32 0.0, %v3792
      %v3794 = vpop.f32.mrb[0].mxu0
      %v3795 = vpop.f32.mrb[0].mxu0
      %v3796 = vadd.f32 0.0, %v3795
      %v3797 = vpop.f32.mrb[0].mxu0
      %3798 = vmatprep.mubr.bf16.mxu0 0
      %3799 = vmatmul.mubr.bf16.gmra.mrb[0].mxu0 %v3611
      %v3800 = vpop.f32.mrb[0].mxu0
      %v3801 = vadd.f32 0.0, %v3800
      %v3802 = vpop.f32.mrb[0].mxu0
      %v3803 = vpop.f32.mrb[0].mxu0
      %v3804 = vadd.f32 0.0, %v3803
      %v3805 = vpop.f32.mrb[0].mxu0
      %3806 = vmatprep.mubr.bf16.mxu0 0
      %3807 = vmatmul.mubr.bf16.gmra.mrb[0].mxu0 %v3613
      %v3808 = vpop.f32.mrb[0].mxu0
      %v3809 = vadd.f32 0.0, %v3808
      %v3810 = vpop.f32.mrb[0].mxu0
      %v3811 = vpop.f32.mrb[0].mxu0
      %v3812 = vadd.f32 0.0, %v3811
      %v3813 = vpop.f32.mrb[0].mxu0
      %3814 = vmatprep.mubr.bf16.mxu0 0
      %3815 = vmatmul.mubr.bf16.gmra.mrb[0].mxu0 %v3615
      %v3816 = vpop.f32.mrb[0].mxu0
      %v3817 = vadd.f32 0.0, %v3816
      %v3818 = vpop.f32.mrb[0].mxu0
      %v3819 = vpop.f32.mrb[0].mxu0
      %v3820 = vadd.f32 0.0, %v3819
      %v3821 = vpop.f32.mrb[0].mxu0
      %3822 = vmatprep.mubr.bf16.mxu0 0
      %3823 = vmatmul.mubr.bf16.gmra.mrb[0].mxu0 %v3617
      %v3824 = vpop.f32.mrb[0].mxu0
      %v3825 = vadd.f32 0.0, %v3824
      %v3826 = vpop.f32.mrb[0].mxu0
      %v3827 = vpop.f32.mrb[0].mxu0
      %v3828 = vadd.f32 0.0, %v3827
      %v3829 = vpop.f32.mrb[0].mxu0
      %3830 = vmatprep.mubr.bf16.mxu0 0
      %3831 = vmatmul.mubr.bf16.gmra.mrb[0].mxu0 %v3619
      %v3832 = vpop.f32.mrb[0].mxu0
      %v3833 = vadd.f32 0.0, %v3832
      %v3834 = vpop.f32.mrb[0].mxu0
      %v3835 = vpop.f32.mrb[0].mxu0
      %v3836 = vadd.f32 0.0, %v3835
      %v3837 = vpop.f32.mrb[0].mxu0
      %3838 = vmatprep.mubr.bf16.mxu0 0
      %3839 = vmatmul.mubr.bf16.gmra.mrb[0].mxu0 %v3621
      %v3840 = vpop.f32.mrb[0].mxu0
      %v3841 = vadd.f32 0.0, %v3840
      %v3842 = vpop.f32.mrb[0].mxu0
      %v3843 = vpop.f32.mrb[0].mxu0
      %v3844 = vadd.f32 0.0, %v3843
      %v3845 = vpop.f32.mrb[0].mxu0
      %3846 = vmatprep.mubr.bf16.mxu0 0
      %3847 = vmatmul.mubr.bf16.gmra.mrb[0].mxu0 %v3623
      %v3848 = vpop.f32.mrb[0].mxu0
      %v3849 = vadd.f32 0.0, %v3848
      %v3850 = vpop.f32.mrb[0].mxu0
      %v3851 = vpop.f32.mrb[0].mxu0
      %v3852 = vadd.f32 0.0, %v3851
      %v3853 = vpop.f32.mrb[0].mxu0
      %3854 = vmatprep.mubr.bf16.mxu0 0
      %3855 = vmatmul.mubr.bf16.gmra.mrb[0].mxu0 %v3625
      %v3856 = vpop.f32.mrb[0].mxu0
      %v3857 = vadd.f32 0.0, %v3856
      %v3858 = vpop.f32.mrb[0].mxu0
      %v3859 = vpop.f32.mrb[0].mxu0
      %v3860 = vadd.f32 0.0, %v3859
      %v3861 = vpop.f32.mrb[0].mxu0
      %3862 = vmatprep.mubr.bf16.mxu0 0
      %3863 = vmatmul.mubr.bf16.gmra.mrb[0].mxu0 %v3627
      %v3864 = vpop.f32.mrb[0].mxu0
      %v3865 = vadd.f32 0.0, %v3864
      %v3866 = vpop.f32.mrb[0].mxu0
      %v3867 = vpop.f32.mrb[0].mxu0
      %v3868 = vadd.f32 0.0, %v3867
      %v3869 = vpop.f32.mrb[0].mxu0
      %3870 = vdwg.mxu0
      %v3871 = vadd.f32 %v3533, %v3729
      %v3872 = vadd.f32 %v3534, %v3732
      %v3873 = vadd.f32 %v3535, %v3737
      %v3874 = vadd.f32 %v3536, %v3740
      %v3875 = vadd.f32 %v3537, %v3745
      %v3876 = vadd.f32 %v3538, %v3748
      %v3877 = vadd.f32 %v3539, %v3753
      %v3878 = vadd.f32 %v3540, %v3756
      %v3879 = vadd.f32 %v3541, %v3761
      %v3880 = vadd.f32 %v3542, %v3764
      %v3881 = vadd.f32 %v3543, %v3769
      %v3882 = vadd.f32 %v3544, %v3772
      %v3883 = vadd.f32 %v3545, %v3777
      %v3884 = vadd.f32 %v3546, %v3780
      %v3885 = vadd.f32 %v3547, %v3785
      %v3886 = vadd.f32 %v3548, %v3788
      %v3887 = vadd.f32 %v3549, %v3793
      %v3888 = vadd.f32 %v3550, %v3796
      %v3889 = vadd.f32 %v3551, %v3801
      %v3890 = vadd.f32 %v3552, %v3804
      %v3891 = vadd.f32 %v3553, %v3809
      %v3892 = vadd.f32 %v3554, %v3812
      %v3893 = vadd.f32 %v3555, %v3817
      %v3894 = vadd.f32 %v3556, %v3820
      %v3895 = vadd.f32 %v3557, %v3825
      %v3896 = vadd.f32 %v3558, %v3828
      %v3897 = vadd.f32 %v3559, %v3833
      %v3898 = vadd.f32 %v3560, %v3836
      %v3899 = vadd.f32 %v3561, %v3841
      %v3900 = vadd.f32 %v3562, %v3844
      %v3901 = vadd.f32 %v3563, %v3849
      %v3902 = vadd.f32 %v3564, %v3852
      %v3903 = vadd.f32 %v3565, %v3857
      %v3904 = vadd.f32 %v3566, %v3860
      %v3905 = vadd.f32 %v3567, %v3865
      %v3906 = vadd.f32 %v3568, %v3868
      %v3907 = vlaneseq
      %v3908 = vshrl.u32 %v3907, 7
      %v3909 = vsub.s32 0, %v3908
      %v3910 = vrot.slane %v226, %v3909
      %v3911 = vmul.f32 %v3871, %v3910
      %v3912 = vmul.f32 %v3872, %v3910
      %v3913 = vmul.f32 %v3873, %v3910
      %v3914 = vmul.f32 %v3874, %v3910
      %v3915 = vmul.f32 %v3875, %v3910
      %v3916 = vmul.f32 %v3876, %v3910
      %v3917 = vmul.f32 %v3877, %v3910
      %v3918 = vmul.f32 %v3878, %v3910
      %v3919 = vmul.f32 %v3879, %v3910
      %v3920 = vmul.f32 %v3880, %v3910
      %v3921 = vmul.f32 %v3881, %v3910
      %v3922 = vmul.f32 %v3882, %v3910
      %v3923 = vmul.f32 %v3883, %v3910
      %v3924 = vmul.f32 %v3884, %v3910
      %v3925 = vmul.f32 %v3885, %v3910
      %v3926 = vmul.f32 %v3886, %v3910
      %v3927 = vmul.f32 %v3887, %v3910
      %v3928 = vmul.f32 %v3888, %v3910
      %v3929 = vmul.f32 %v3889, %v3910
      %v3930 = vmul.f32 %v3890, %v3910
      %v3931 = vmul.f32 %v3891, %v3910
      %v3932 = vmul.f32 %v3892, %v3910
      %v3933 = vmul.f32 %v3893, %v3910
      %v3934 = vmul.f32 %v3894, %v3910
      %v3935 = vmul.f32 %v3895, %v3910
      %v3936 = vmul.f32 %v3896, %v3910
      %v3937 = vmul.f32 %v3897, %v3910
      %v3938 = vmul.f32 %v3898, %v3910
      %v3939 = vmul.f32 %v3899, %v3910
      %v3940 = vmul.f32 %v3900, %v3910
      %v3941 = vmul.f32 %v3901, %v3910
      %v3942 = vmul.f32 %v3902, %v3910
      %v3943 = vmul.f32 %v3903, %v3910
      %v3944 = vmul.f32 %v3904, %v3910
      %v3945 = vmul.f32 %v3905, %v3910
      %v3946 = vmul.f32 %v3906, %v3910
      %v3947 = vlaneseq
      %v3948 = vshrl.u32 %v3947, 7
      %v3949 = vsub.s32 1, %v3948
      %v3950 = vrot.slane %v226, %v3949
      %v3951 = vadd.f32 %v3911, %v3950
      %v3952 = vadd.f32 %v3912, %v3950
      %v3953 = vadd.f32 %v3913, %v3950
      %v3954 = vadd.f32 %v3914, %v3950
      %v3955 = vadd.f32 %v3915, %v3950
      %v3956 = vadd.f32 %v3916, %v3950
      %v3957 = vadd.f32 %v3917, %v3950
      %v3958 = vadd.f32 %v3918, %v3950
      %v3959 = vadd.f32 %v3919, %v3950
      %v3960 = vadd.f32 %v3920, %v3950
      %v3961 = vadd.f32 %v3921, %v3950
      %v3962 = vadd.f32 %v3922, %v3950
      %v3963 = vadd.f32 %v3923, %v3950
      %v3964 = vadd.f32 %v3924, %v3950
      %v3965 = vadd.f32 %v3925, %v3950
      %v3966 = vadd.f32 %v3926, %v3950
      %v3967 = vadd.f32 %v3927, %v3950
      %v3968 = vadd.f32 %v3928, %v3950
      %v3969 = vadd.f32 %v3929, %v3950
      %v3970 = vadd.f32 %v3930, %v3950
      %v3971 = vadd.f32 %v3931, %v3950
      %v3972 = vadd.f32 %v3932, %v3950
      %v3973 = vadd.f32 %v3933, %v3950
      %v3974 = vadd.f32 %v3934, %v3950
      %v3975 = vadd.f32 %v3935, %v3950
      %v3976 = vadd.f32 %v3936, %v3950
      %v3977 = vadd.f32 %v3937, %v3950
      %v3978 = vadd.f32 %v3938, %v3950
      %v3979 = vadd.f32 %v3939, %v3950
      %v3980 = vadd.f32 %v3940, %v3950
      %v3981 = vadd.f32 %v3941, %v3950
      %v3982 = vadd.f32 %v3942, %v3950
      %v3983 = vadd.f32 %v3943, %v3950
      %v3984 = vadd.f32 %v3944, %v3950
      %v3985 = vadd.f32 %v3945, %v3950
      %v3986 = vadd.f32 %v3946, %v3950
      %v3987 = vmax.f32 %v3951, 0.0
      %v3988 = vmax.f32 %v3952, 0.0
      %v3989 = vmax.f32 %v3953, 0.0
      %v3990 = vmax.f32 %v3954, 0.0
      %v3991 = vmax.f32 %v3955, 0.0
      %v3992 = vmax.f32 %v3956, 0.0
      %v3993 = vmax.f32 %v3957, 0.0
      %v3994 = vmax.f32 %v3958, 0.0
      %v3995 = vmax.f32 %v3959, 0.0
      %v3996 = vmax.f32 %v3960, 0.0
      %v3997 = vmax.f32 %v3961, 0.0
      %v3998 = vmax.f32 %v3962, 0.0
      %v3999 = vmax.f32 %v3963, 0.0
      %v4000 = vmax.f32 %v3964, 0.0
      %v4001 = vmax.f32 %v3965, 0.0
      %v4002 = vmax.f32 %v3966, 0.0
      %v4003 = vmax.f32 %v3967, 0.0
      %v4004 = vmax.f32 %v3968, 0.0
      %v4005 = vmax.f32 %v3969, 0.0
      %v4006 = vmax.f32 %v3970, 0.0
      %v4007 = vmax.f32 %v3971, 0.0
      %v4008 = vmax.f32 %v3972, 0.0
      %v4009 = vmax.f32 %v3973, 0.0
      %v4010 = vmax.f32 %v3974, 0.0
      %v4011 = vmax.f32 %v3975, 0.0
      %v4012 = vmax.f32 %v3976, 0.0
      %v4013 = vmax.f32 %v3977, 0.0
      %v4014 = vmax.f32 %v3978, 0.0
      %v4015 = vmax.f32 %v3979, 0.0
      %v4016 = vmax.f32 %v3980, 0.0
      %v4017 = vmax.f32 %v3981, 0.0
      %v4018 = vmax.f32 %v3982, 0.0
      %v4019 = vmax.f32 %v3983, 0.0
      %v4020 = vmax.f32 %v3984, 0.0
      %v4021 = vmax.f32 %v3985, 0.0
      %v4022 = vmax.f32 %v3986, 0.0
      %v4023 = vld [vmem:[%s4] sm:$0xff]
      %v4024 = vld [vmem:[%s4 + $0x8] sm:$0xff]
      %v4025 = vld [vmem:[%s4 + $0x10] sm:$0xff]
      %v4026 = vld [vmem:[%s4 + $0x18] sm:$0xff]
      %v4027 = vld [vmem:[%s4 + $0x20] sm:$0xff]
      %v4028 = vld [vmem:[%s4 + $0x28] sm:$0xff]
      %v4029 = vld [vmem:[%s4 + $0x30] sm:$0xff]
      %v4030 = vld [vmem:[%s4 + $0x38] sm:$0xff]
      %v4031 = vld [vmem:[%s4 + $0x40] sm:$0xff]
      %v4032 = vld [vmem:[%s4 + $0x48] sm:$0xff]
      %v4033 = vld [vmem:[%s4 + $0x50] sm:$0xff]
      %v4034 = vld [vmem:[%s4 + $0x58] sm:$0xff]
      %v4035 = vld [vmem:[%s4 + $0x60] sm:$0xff]
      %v4036 = vld [vmem:[%s4 + $0x68] sm:$0xff]
      %v4037 = vld [vmem:[%s4 + $0x70] sm:$0xff]
      %v4038 = vld [vmem:[%s4 + $0x78] sm:$0xff]
      %v4039 = vld [vmem:[%s4 + $0x80] sm:$0xff]
      %v4040 = vld [vmem:[%s4 + $0x88] sm:$0xff]
      %v4041 = vld [vmem:[%s4 + $0x90] sm:$0xff]
      %v4042 = vld [vmem:[%s4 + $0x98] sm:$0xff]
      %v4043 = vld [vmem:[%s4 + $0xa0] sm:$0xff]
      %v4044 = vld [vmem:[%s4 + $0xa8] sm:$0xff]
      %v4045 = vld [vmem:[%s4 + $0xb0] sm:$0xff]
      %v4046 = vld [vmem:[%s4 + $0xb8] sm:$0xff]
      %v4047 = vld [vmem:[%s4 + $0xc0] sm:$0xff]
      %v4048 = vld [vmem:[%s4 + $0xc8] sm:$0xff]
      %v4049 = vld [vmem:[%s4 + $0xd0] sm:$0xff]
      %v4050 = vld [vmem:[%s4 + $0xd8] sm:$0xff]
      %v4051 = vld [vmem:[%s4 + $0xe0] sm:$0xff]
      %v4052 = vld [vmem:[%s4 + $0xe8] sm:$0xff]
      %v4053 = vld [vmem:[%s4 + $0xf0] sm:$0xff]
      %v4054 = vld [vmem:[%s4 + $0xf8] sm:$0xff]
      %v4055 = vld [vmem:[%s4 + $0x100] sm:$0xff]
      %v4056 = vld [vmem:[%s4 + $0x108] sm:$0xff]
      %v4057 = vld [vmem:[%s4 + $0x110] sm:$0xff]
      %v4058 = vld [vmem:[%s4 + $0x118] sm:$0xff]
      %4060 = vset.pattern.permute.xlu0 0
      %4061 = vperm.xlu0 %4060, %v4023
      %v4062 = vpop.permute.xlu0 %4061
      %4065 = vset.pattern.permute.xlu0 0
      %4066 = vperm.xlu0 %4065, %v4024
      %v4067 = vpop.permute.xlu0 %4066
      %4070 = vset.pattern.permute.xlu0 0
      %4071 = vperm.xlu0 %4070, %v4025
      %v4072 = vpop.permute.xlu0 %4071
      %4075 = vset.pattern.permute.xlu0 0
      %4076 = vperm.xlu0 %4075, %v4026
      %v4077 = vpop.permute.xlu0 %4076
      %4080 = vset.pattern.permute.xlu0 0
      %4081 = vperm.xlu0 %4080, %v4027
      %v4082 = vpop.permute.xlu0 %4081
      %4085 = vset.pattern.permute.xlu0 0
      %4086 = vperm.xlu0 %4085, %v4028
      %v4087 = vpop.permute.xlu0 %4086
      %4090 = vset.pattern.permute.xlu0 0
      %4091 = vperm.xlu0 %4090, %v4029
      %v4092 = vpop.permute.xlu0 %4091
      %4095 = vset.pattern.permute.xlu0 0
      %4096 = vperm.xlu0 %4095, %v4030
      %v4097 = vpop.permute.xlu0 %4096
      %4100 = vset.pattern.permute.xlu0 0
      %4101 = vperm.xlu0 %4100, %v4031
      %v4102 = vpop.permute.xlu0 %4101
      %4105 = vset.pattern.permute.xlu0 0
      %4106 = vperm.xlu0 %4105, %v4032
      %v4107 = vpop.permute.xlu0 %4106
      %4110 = vset.pattern.permute.xlu0 0
      %4111 = vperm.xlu0 %4110, %v4033
      %v4112 = vpop.permute.xlu0 %4111
      %4115 = vset.pattern.permute.xlu0 0
      %4116 = vperm.xlu0 %4115, %v4034
      %v4117 = vpop.permute.xlu0 %4116
      %4120 = vset.pattern.permute.xlu0 0
      %4121 = vperm.xlu0 %4120, %v4035
      %v4122 = vpop.permute.xlu0 %4121
      %4125 = vset.pattern.permute.xlu0 0
      %4126 = vperm.xlu0 %4125, %v4036
      %v4127 = vpop.permute.xlu0 %4126
      %4130 = vset.pattern.permute.xlu0 0
      %4131 = vperm.xlu0 %4130, %v4037
      %v4132 = vpop.permute.xlu0 %4131
      %4135 = vset.pattern.permute.xlu0 0
      %4136 = vperm.xlu0 %4135, %v4038
      %v4137 = vpop.permute.xlu0 %4136
      %4140 = vset.pattern.permute.xlu0 0
      %4141 = vperm.xlu0 %4140, %v4039
      %v4142 = vpop.permute.xlu0 %4141
      %4145 = vset.pattern.permute.xlu0 0
      %4146 = vperm.xlu0 %4145, %v4040
      %v4147 = vpop.permute.xlu0 %4146
      %4150 = vset.pattern.permute.xlu0 0
      %4151 = vperm.xlu0 %4150, %v4041
      %v4152 = vpop.permute.xlu0 %4151
      %4155 = vset.pattern.permute.xlu0 0
      %4156 = vperm.xlu0 %4155, %v4042
      %v4157 = vpop.permute.xlu0 %4156
      %4160 = vset.pattern.permute.xlu0 0
      %4161 = vperm.xlu0 %4160, %v4043
      %v4162 = vpop.permute.xlu0 %4161
      %4165 = vset.pattern.permute.xlu0 0
      %4166 = vperm.xlu0 %4165, %v4044
      %v4167 = vpop.permute.xlu0 %4166
      %4170 = vset.pattern.permute.xlu0 0
      %4171 = vperm.xlu0 %4170, %v4045
      %v4172 = vpop.permute.xlu0 %4171
      %4175 = vset.pattern.permute.xlu0 0
      %4176 = vperm.xlu0 %4175, %v4046
      %v4177 = vpop.permute.xlu0 %4176
      %4180 = vset.pattern.permute.xlu0 0
      %4181 = vperm.xlu0 %4180, %v4047
      %v4182 = vpop.permute.xlu0 %4181
      %4185 = vset.pattern.permute.xlu0 0
      %4186 = vperm.xlu0 %4185, %v4048
      %v4187 = vpop.permute.xlu0 %4186
      %4190 = vset.pattern.permute.xlu0 0
      %4191 = vperm.xlu0 %4190, %v4049
      %v4192 = vpop.permute.xlu0 %4191
      %4195 = vset.pattern.permute.xlu0 0
      %4196 = vperm.xlu0 %4195, %v4050
      %v4197 = vpop.permute.xlu0 %4196
      %4200 = vset.pattern.permute.xlu0 0
      %4201 = vperm.xlu0 %4200, %v4051
      %v4202 = vpop.permute.xlu0 %4201
      %4205 = vset.pattern.permute.xlu0 0
      %4206 = vperm.xlu0 %4205, %v4052
      %v4207 = vpop.permute.xlu0 %4206
      %4210 = vset.pattern.permute.xlu0 0
      %4211 = vperm.xlu0 %4210, %v4053
      %v4212 = vpop.permute.xlu0 %4211
      %4215 = vset.pattern.permute.xlu0 0
      %4216 = vperm.xlu0 %4215, %v4054
      %v4217 = vpop.permute.xlu0 %4216
      %4220 = vset.pattern.permute.xlu0 0
      %4221 = vperm.xlu0 %4220, %v4055
      %v4222 = vpop.permute.xlu0 %4221
      %4225 = vset.pattern.permute.xlu0 0
      %4226 = vperm.xlu0 %4225, %v4056
      %v4227 = vpop.permute.xlu0 %4226
      %4230 = vset.pattern.permute.xlu0 0
      %4231 = vperm.xlu0 %4230, %v4057
      %v4232 = vpop.permute.xlu0 %4231
      %4235 = vset.pattern.permute.xlu0 0
      %4236 = vperm.xlu0 %4235, %v4058
      %v4237 = vpop.permute.xlu0 %4236
      %v4239 = vmul.f32 %v3987, %v4062
      %v4240 = vmul.f32 %v3988, %v4067
      %v4241 = vmul.f32 %v3989, %v4072
      %v4242 = vmul.f32 %v3990, %v4077
      %v4243 = vmul.f32 %v3991, %v4082
      %v4244 = vmul.f32 %v3992, %v4087
      %v4245 = vmul.f32 %v3993, %v4092
      %v4246 = vmul.f32 %v3994, %v4097
      %v4247 = vmul.f32 %v3995, %v4102
      %v4248 = vmul.f32 %v3996, %v4107
      %v4249 = vmul.f32 %v3997, %v4112
      %v4250 = vmul.f32 %v3998, %v4117
      %v4251 = vmul.f32 %v3999, %v4122
      %v4252 = vmul.f32 %v4000, %v4127
      %v4253 = vmul.f32 %v4001, %v4132
      %v4254 = vmul.f32 %v4002, %v4137
      %v4255 = vmul.f32 %v4003, %v4142
      %v4256 = vmul.f32 %v4004, %v4147
      %v4257 = vmul.f32 %v4005, %v4152
      %v4258 = vmul.f32 %v4006, %v4157
      %v4259 = vmul.f32 %v4007, %v4162
      %v4260 = vmul.f32 %v4008, %v4167
      %v4261 = vmul.f32 %v4009, %v4172
      %v4262 = vmul.f32 %v4010, %v4177
      %v4263 = vmul.f32 %v4011, %v4182
      %v4264 = vmul.f32 %v4012, %v4187
      %v4265 = vmul.f32 %v4013, %v4192
      %v4266 = vmul.f32 %v4014, %v4197
      %v4267 = vmul.f32 %v4015, %v4202
      %v4268 = vmul.f32 %v4016, %v4207
      %v4269 = vmul.f32 %v4017, %v4212
      %v4270 = vmul.f32 %v4018, %v4217
      %v4271 = vmul.f32 %v4019, %v4222
      %v4272 = vmul.f32 %v4020, %v4227
      %v4273 = vmul.f32 %v4021, %v4232
      %v4274 = vmul.f32 %v4022, %v4237
      %4275 = vst [vmem:[#allocation2] sm:$0xff] 0
      %4276 = vst [vmem:[#allocation2 + $0x8] sm:$0xf] 0
      %4277 = vst [vmem:[#allocation2 + $0x98] sm:$0xf0] 0
      %4278 = vst [vmem:[#allocation2 + $0xa0] sm:$0xff] 0
      %v4279 = vpack.c.bf16 %v4240, %v4239
      %v4280 = vpack.c.bf16 %v4242, %v4241
      %v4281 = vpack.c.bf16 %v4244, %v4243
      %v4282 = vpack.c.bf16 %v4246, %v4245
      %v4283 = vpack.c.bf16 %v4248, %v4247
      %v4284 = vpack.c.bf16 %v4250, %v4249
      %v4285 = vpack.c.bf16 %v4252, %v4251
      %v4286 = vpack.c.bf16 %v4254, %v4253
      %v4287 = vpack.c.bf16 %v4256, %v4255
      %v4288 = vpack.c.bf16 %v4258, %v4257
      %v4289 = vpack.c.bf16 %v4260, %v4259
      %v4290 = vpack.c.bf16 %v4262, %v4261
      %v4291 = vpack.c.bf16 %v4264, %v4263
      %v4292 = vpack.c.bf16 %v4266, %v4265
      %v4293 = vpack.c.bf16 %v4268, %v4267
      %v4294 = vpack.c.bf16 %v4270, %v4269
      %v4295 = vpack.c.bf16 %v4272, %v4271
      %v4296 = vpack.c.bf16 %v4274, %v4273
      %vm4315 = vcmask 1043456
      %v4316 = vrot.slane %v4279, 4
      %v4317 = vrot.slane %v4280, 4
      %v4318 = vsel %vm4315, %v4316, %v4317
      %v4319 = vrot.slane %v4281, 4
      %v4320 = vsel %vm4315, %v4317, %v4319
      %v4321 = vrot.slane %v4282, 4
      %v4322 = vsel %vm4315, %v4319, %v4321
      %v4323 = vrot.slane %v4283, 4
      %v4324 = vsel %vm4315, %v4321, %v4323
      %v4325 = vrot.slane %v4284, 4
      %v4326 = vsel %vm4315, %v4323, %v4325
      %v4327 = vrot.slane %v4285, 4
      %v4328 = vsel %vm4315, %v4325, %v4327
      %v4329 = vrot.slane %v4286, 4
      %v4330 = vsel %vm4315, %v4327, %v4329
      %v4331 = vrot.slane %v4287, 4
      %v4332 = vsel %vm4315, %v4329, %v4331
      %v4333 = vrot.slane %v4288, 4
      %v4334 = vsel %vm4315, %v4331, %v4333
      %v4335 = vrot.slane %v4289, 4
      %v4336 = vsel %vm4315, %v4333, %v4335
      %v4337 = vrot.slane %v4290, 4
      %v4338 = vsel %vm4315, %v4335, %v4337
      %v4339 = vrot.slane %v4291, 4
      %v4340 = vsel %vm4315, %v4337, %v4339
      %v4341 = vrot.slane %v4292, 4
      %v4342 = vsel %vm4315, %v4339, %v4341
      %v4343 = vrot.slane %v4293, 4
      %v4344 = vsel %vm4315, %v4341, %v4343
      %v4345 = vrot.slane %v4294, 4
      %v4346 = vsel %vm4315, %v4343, %v4345
      %v4347 = vrot.slane %v4295, 4
      %v4348 = vsel %vm4315, %v4345, %v4347
      %v4349 = vrot.slane %v4296, 4
      %v4350 = vsel %vm4315, %v4347, %v4349
      %4370 = vst [vmem:[#allocation2 + $0x8] sm:$0xf0] %v4316
      %4371 = vst [vmem:[#allocation2 + $0x10] sm:$0xff] %v4318
      %4372 = vst [vmem:[#allocation2 + $0x18] sm:$0xff] %v4320
      %4373 = vst [vmem:[#allocation2 + $0x20] sm:$0xff] %v4322
      %4374 = vst [vmem:[#allocation2 + $0x28] sm:$0xff] %v4324
      %4375 = vst [vmem:[#allocation2 + $0x30] sm:$0xff] %v4326
      %4376 = vst [vmem:[#allocation2 + $0x38] sm:$0xff] %v4328
      %4377 = vst [vmem:[#allocation2 + $0x40] sm:$0xff] %v4330
      %4378 = vst [vmem:[#allocation2 + $0x48] sm:$0xff] %v4332
      %4379 = vst [vmem:[#allocation2 + $0x50] sm:$0xff] %v4334
      %4380 = vst [vmem:[#allocation2 + $0x58] sm:$0xff] %v4336
      %4381 = vst [vmem:[#allocation2 + $0x60] sm:$0xff] %v4338
      %4382 = vst [vmem:[#allocation2 + $0x68] sm:$0xff] %v4340
      %4383 = vst [vmem:[#allocation2 + $0x70] sm:$0xff] %v4342
      %4384 = vst [vmem:[#allocation2 + $0x78] sm:$0xff] %v4344
      %4385 = vst [vmem:[#allocation2 + $0x80] sm:$0xff] %v4346
      %4386 = vst [vmem:[#allocation2 + $0x88] sm:$0xff] %v4348
      %4387 = vst [vmem:[#allocation2 + $0x90] sm:$0xff] %v4350
      %4388 = vst [vmem:[#allocation2 + $0x98] sm:$0xf] %v4349
      %v4389 = vld [vmem:[#allocation2] sm:$0xfc]
      %v4390 = vld [vmem:[#allocation2 + $0x8] sm:$0xff]
      %v4391 = vld [vmem:[#allocation2 + $0x10] sm:$0xff]
      %v4392 = vld [vmem:[#allocation2 + $0x18] sm:$0xff]
      %v4393 = vld [vmem:[#allocation2 + $0x20] sm:$0xff]
      %v4394 = vld [vmem:[#allocation2 + $0x28] sm:$0xff]
      %v4395 = vld [vmem:[#allocation2 + $0x30] sm:$0xff]
      %v4396 = vld [vmem:[#allocation2 + $0x38] sm:$0xff]
      %v4397 = vld [vmem:[#allocation2 + $0x40] sm:$0xff]
      %v4398 = vld [vmem:[#allocation2 + $0x48] sm:$0xff]
      %v4399 = vld [vmem:[#allocation2 + $0x50] sm:$0xff]
      %v4400 = vld [vmem:[#allocation2 + $0x58] sm:$0xff]
      %v4401 = vld [vmem:[#allocation2 + $0x60] sm:$0xff]
      %v4402 = vld [vmem:[#allocation2 + $0x68] sm:$0xff]
      %v4403 = vld [vmem:[#allocation2 + $0x70] sm:$0xff]
      %v4404 = vld [vmem:[#allocation2 + $0x78] sm:$0xff]
      %v4405 = vld [vmem:[#allocation2 + $0x80] sm:$0xff]
      %v4406 = vld [vmem:[#allocation2 + $0x88] sm:$0xff]
      %v4407 = vld [vmem:[#allocation2 + $0x90] sm:$0x7]
      %v4408 = vld [vmem:[%s2] sm:$0xf]
      %v4409 = vld [vmem:[%s2 + $0x4] sm:$0xf]
      %v4410 = vld [vmem:[%s2 + $0x8] sm:$0xf]
      %v4411 = vld [vmem:[%s2 + $0xc] sm:$0xf]
      %v4412 = vld [vmem:[%s2 + $0x10] sm:$0xf]
      %v4413 = vld [vmem:[%s2 + $0x14] sm:$0xf]
      %v4414 = vld [vmem:[%s2 + $0x18] sm:$0xf]
      %v4415 = vld [vmem:[%s2 + $0x1c] sm:$0xf]
      %v4416 = vld [vmem:[%s2 + $0x20] sm:$0xf]
      %v4417 = vld [vmem:[%s2 + $0x24] sm:$0xf]
      %v4418 = vld [vmem:[%s2 + $0x28] sm:$0xf]
      %v4419 = vld [vmem:[%s2 + $0x2c] sm:$0xf]
      %v4420 = vld [vmem:[%s2 + $0x30] sm:$0xf]
      %v4421 = vld [vmem:[%s2 + $0x34] sm:$0xf]
      %v4422 = vld [vmem:[%s2 + $0x38] sm:$0xf]
      %v4423 = vld [vmem:[%s2 + $0x3c] sm:$0xf]
      %v4424 = vld [vmem:[#allocation2] sm:$0xf8]
      %s4425 = scalar_lea.vmem %s2, 64
      %v4426 = vld [vmem:[%s4425] sm:$0xf]
      %v4427 = vld [vmem:[%s4425 + $0x4] sm:$0xf]
      %v4428 = vld [vmem:[%s4425 + $0x8] sm:$0xf]
      %v4429 = vld [vmem:[%s4425 + $0xc] sm:$0xf]
      %v4430 = vld [vmem:[%s4425 + $0x10] sm:$0xf]
      %v4431 = vld [vmem:[%s4425 + $0x14] sm:$0xf]
      %v4432 = vld [vmem:[%s4425 + $0x18] sm:$0xf]
      %v4433 = vld [vmem:[%s4425 + $0x1c] sm:$0xf]
      %v4434 = vld [vmem:[%s4425 + $0x20] sm:$0xf]
      %v4435 = vld [vmem:[%s4425 + $0x24] sm:$0xf]
      %v4436 = vld [vmem:[%s4425 + $0x28] sm:$0xf]
      %v4437 = vld [vmem:[%s4425 + $0x2c] sm:$0xf]
      %v4438 = vld [vmem:[%s4425 + $0x30] sm:$0xf]
      %v4439 = vld [vmem:[%s4425 + $0x34] sm:$0xf]
      %v4440 = vld [vmem:[%s4425 + $0x38] sm:$0xf]
      %v4441 = vld [vmem:[%s4425 + $0x3c] sm:$0xf]
      %v4461 = vrot.slane %v4424, 3
      %v4462 = vrot.slane %v4390, 3
      %v4463 = vsel %vm3590, %v4461, %v4462
      %v4464 = vrot.slane %v4391, 3
      %v4465 = vsel %vm3590, %v4462, %v4464
      %v4466 = vrot.slane %v4392, 3
      %v4467 = vsel %vm3590, %v4464, %v4466
      %v4468 = vrot.slane %v4393, 3
      %v4469 = vsel %vm3590, %v4466, %v4468
      %v4470 = vrot.slane %v4394, 3
      %v4471 = vsel %vm3590, %v4468, %v4470
      %v4472 = vrot.slane %v4395, 3
      %v4473 = vsel %vm3590, %v4470, %v4472
      %v4474 = vrot.slane %v4396, 3
      %v4475 = vsel %vm3590, %v4472, %v4474
      %v4476 = vrot.slane %v4397, 3
      %v4477 = vsel %vm3590, %v4474, %v4476
      %v4478 = vrot.slane %v4398, 3
      %v4479 = vsel %vm3590, %v4476, %v4478
      %v4480 = vrot.slane %v4399, 3
      %v4481 = vsel %vm3590, %v4478, %v4480
      %v4482 = vrot.slane %v4400, 3
      %v4483 = vsel %vm3590, %v4480, %v4482
      %v4484 = vrot.slane %v4401, 3
      %v4485 = vsel %vm3590, %v4482, %v4484
      %v4486 = vrot.slane %v4402, 3
      %v4487 = vsel %vm3590, %v4484, %v4486
      %v4488 = vrot.slane %v4403, 3
      %v4489 = vsel %vm3590, %v4486, %v4488
      %v4490 = vrot.slane %v4404, 3
      %v4491 = vsel %vm3590, %v4488, %v4490
      %v4492 = vrot.slane %v4405, 3
      %v4493 = vsel %vm3590, %v4490, %v4492
      %v4494 = vrot.slane %v4406, 3
      %v4495 = vsel %vm3590, %v4492, %v4494
      %v4496 = vrot.slane %v4407, 3
      %v4497 = vsel %vm3590, %v4494, %v4496
      %v4532 = vunpack.c.l.b16 %v4426
      %v4533 = vunpack.c.l.b16 %v4427
      %v4534 = vunpack.c.l.b16 %v4428
      %v4535 = vunpack.c.l.b16 %v4429
      %v4536 = vunpack.c.l.b16 %v4430
      %v4537 = vunpack.c.l.b16 %v4431
      %v4538 = vunpack.c.l.b16 %v4432
      %v4539 = vunpack.c.l.b16 %v4433
      %v4540 = vunpack.c.l.b16 %v4434
      %v4541 = vunpack.c.l.b16 %v4435
      %v4542 = vunpack.c.l.b16 %v4436
      %v4543 = vunpack.c.l.b16 %v4437
      %v4544 = vunpack.c.l.b16 %v4438
      %v4545 = vunpack.c.l.b16 %v4439
      %v4546 = vunpack.c.l.b16 %v4440
      %v4547 = vunpack.c.l.b16 %v4441
      %v4548 = vpack.c.b16 %v4533, %v4532
      %v4549 = vpack.c.b16 %v4535, %v4534
      %v4550 = vpack.c.b16 %v4537, %v4536
      %v4551 = vpack.c.b16 %v4539, %v4538
      %v4552 = vpack.c.b16 %v4541, %v4540
      %v4553 = vpack.c.b16 %v4543, %v4542
      %v4554 = vpack.c.b16 %v4545, %v4544
      %v4555 = vpack.c.b16 %v4547, %v4546
      %4564 = vmatprep.subr.bf16.mxu0 0
      %4565 = vmatpush1.bf16.msra.mxu0 %v4548
      %4566 = vmatprep.subr.bf16.mxu0 0
      %4567 = vmatpush1.bf16.msra.mxu0 %v4549
      %4568 = vmatprep.subr.bf16.mxu0 0
      %4569 = vmatpush1.bf16.msra.mxu0 %v4550
      %4570 = vmatprep.subr.bf16.mxu0 0
      %4571 = vmatpush1.bf16.msra.mxu0 %v4551
      %4572 = vmatprep.subr.bf16.mxu0 0
      %4573 = vmatpush1.bf16.msra.mxu0 %v4552
      %4574 = vmatprep.subr.bf16.mxu0 0
      %4575 = vmatpush1.bf16.msra.mxu0 %v4553
      %4576 = vmatprep.subr.bf16.mxu0 0
      %4577 = vmatpush1.bf16.msra.mxu0 %v4554
      %4578 = vmatprep.subr.bf16.mxu0 0
      %4579 = vmatpush1.bf16.msra.mxu0 %v4555
      %4580 = vmatprep.subr.bf16.mxu0 0
      %4581 = vmatpush1.bf16.msra.mxu0 0
      %4582 = vmatprep.subr.bf16.mxu0 0
      %4583 = vmatpush1.bf16.msra.mxu0 0
      %4584 = vmatprep.subr.bf16.mxu0 0
      %4585 = vmatpush1.bf16.msra.mxu0 0
      %4586 = vmatprep.subr.bf16.mxu0 0
      %4587 = vmatpush1.bf16.msra.mxu0 0
      %4588 = vmatprep.subr.bf16.mxu0 0
      %4589 = vmatpush1.bf16.msra.mxu0 0
      %4590 = vmatprep.subr.bf16.mxu0 0
      %4591 = vmatpush1.bf16.msra.mxu0 0
      %4592 = vmatprep.subr.bf16.mxu0 0
      %4593 = vmatpush1.bf16.msra.mxu0 0
      %4594 = vmatprep.subr.bf16.mxu0 0
      %4595 = vmatpush1.bf16.msra.mxu0 0
      %4596 = vmatprep.mubr.bf16.mxu0 0
      %4597 = vmatmul.mubr.bf16.gmra.mrb[0].mxu0 %v4463
      %v4598 = vpop.f32.mrb[0].mxu0
      %v4599 = vadd.f32 0.0, %v4598
      %v4600 = vpop.f32.mrb[0].mxu0
      %v4601 = vpop.f32.mrb[0].mxu0
      %v4602 = vadd.f32 0.0, %v4601
      %v4603 = vpop.f32.mrb[0].mxu0
      %4604 = vmatprep.mubr.bf16.mxu0 0
      %4605 = vmatmul.mubr.bf16.gmra.mrb[0].mxu0 %v4465
      %v4606 = vpop.f32.mrb[0].mxu0
      %v4607 = vadd.f32 0.0, %v4606
      %v4608 = vpop.f32.mrb[0].mxu0
      %v4609 = vpop.f32.mrb[0].mxu0
      %v4610 = vadd.f32 0.0, %v4609
      %v4611 = vpop.f32.mrb[0].mxu0
      %4612 = vmatprep.mubr.bf16.mxu0 0
      %4613 = vmatmul.mubr.bf16.gmra.mrb[0].mxu0 %v4467
      %v4614 = vpop.f32.mrb[0].mxu0
      %v4615 = vadd.f32 0.0, %v4614
      %v4616 = vpop.f32.mrb[0].mxu0
      %v4617 = vpop.f32.mrb[0].mxu0
      %v4618 = vadd.f32 0.0, %v4617
      %v4619 = vpop.f32.mrb[0].mxu0
      %4620 = vmatprep.mubr.bf16.mxu0 0
      %4621 = vmatmul.mubr.bf16.gmra.mrb[0].mxu0 %v4469
      %v4622 = vpop.f32.mrb[0].mxu0
      %v4623 = vadd.f32 0.0, %v4622
      %v4624 = vpop.f32.mrb[0].mxu0
      %v4625 = vpop.f32.mrb[0].mxu0
      %v4626 = vadd.f32 0.0, %v4625
      %v4627 = vpop.f32.mrb[0].mxu0
      %4628 = vmatprep.mubr.bf16.mxu0 0
      %4629 = vmatmul.mubr.bf16.gmra.mrb[0].mxu0 %v4471
      %v4630 = vpop.f32.mrb[0].mxu0
      %v4631 = vadd.f32 0.0, %v4630
      %v4632 = vpop.f32.mrb[0].mxu0
      %v4633 = vpop.f32.mrb[0].mxu0
      %v4634 = vadd.f32 0.0, %v4633
      %v4635 = vpop.f32.mrb[0].mxu0
      %4636 = vmatprep.mubr.bf16.mxu0 0
      %4637 = vmatmul.mubr.bf16.gmra.mrb[0].mxu0 %v4473
      %v4638 = vpop.f32.mrb[0].mxu0
      %v4639 = vadd.f32 0.0, %v4638
      %v4640 = vpop.f32.mrb[0].mxu0
      %v4641 = vpop.f32.mrb[0].mxu0
      %v4642 = vadd.f32 0.0, %v4641
      %v4643 = vpop.f32.mrb[0].mxu0
      %4644 = vmatprep.mubr.bf16.mxu0 0
      %4645 = vmatmul.mubr.bf16.gmra.mrb[0].mxu0 %v4475
      %v4646 = vpop.f32.mrb[0].mxu0
      %v4647 = vadd.f32 0.0, %v4646
      %v4648 = vpop.f32.mrb[0].mxu0
      %v4649 = vpop.f32.mrb[0].mxu0
      %v4650 = vadd.f32 0.0, %v4649
      %v4651 = vpop.f32.mrb[0].mxu0
      %4652 = vmatprep.mubr.bf16.mxu0 0
      %4653 = vmatmul.mubr.bf16.gmra.mrb[0].mxu0 %v4477
      %v4654 = vpop.f32.mrb[0].mxu0
      %v4655 = vadd.f32 0.0, %v4654
      %v4656 = vpop.f32.mrb[0].mxu0
      %v4657 = vpop.f32.mrb[0].mxu0
      %v4658 = vadd.f32 0.0, %v4657
      %v4659 = vpop.f32.mrb[0].mxu0
      %4660 = vmatprep.mubr.bf16.mxu0 0
      %4661 = vmatmul.mubr.bf16.gmra.mrb[0].mxu0 %v4479
      %v4662 = vpop.f32.mrb[0].mxu0
      %v4663 = vadd.f32 0.0, %v4662
      %v4664 = vpop.f32.mrb[0].mxu0
      %v4665 = vpop.f32.mrb[0].mxu0
      %v4666 = vadd.f32 0.0, %v4665
      %v4667 = vpop.f32.mrb[0].mxu0
      %4668 = vmatprep.mubr.bf16.mxu0 0
      %4669 = vmatmul.mubr.bf16.gmra.mrb[0].mxu0 %v4481
      %v4670 = vpop.f32.mrb[0].mxu0
      %v4671 = vadd.f32 0.0, %v4670
      %v4672 = vpop.f32.mrb[0].mxu0
      %v4673 = vpop.f32.mrb[0].mxu0
      %v4674 = vadd.f32 0.0, %v4673
      %v4675 = vpop.f32.mrb[0].mxu0
      %4676 = vmatprep.mubr.bf16.mxu0 0
      %4677 = vmatmul.mubr.bf16.gmra.mrb[0].mxu0 %v4483
      %v4678 = vpop.f32.mrb[0].mxu0
      %v4679 = vadd.f32 0.0, %v4678
      %v4680 = vpop.f32.mrb[0].mxu0
      %v4681 = vpop.f32.mrb[0].mxu0
      %v4682 = vadd.f32 0.0, %v4681
      %v4683 = vpop.f32.mrb[0].mxu0
      %4684 = vmatprep.mubr.bf16.mxu0 0
      %4685 = vmatmul.mubr.bf16.gmra.mrb[0].mxu0 %v4485
      %v4686 = vpop.f32.mrb[0].mxu0
      %v4687 = vadd.f32 0.0, %v4686
      %v4688 = vpop.f32.mrb[0].mxu0
      %v4689 = vpop.f32.mrb[0].mxu0
      %v4690 = vadd.f32 0.0, %v4689
      %v4691 = vpop.f32.mrb[0].mxu0
      %4692 = vmatprep.mubr.bf16.mxu0 0
      %4693 = vmatmul.mubr.bf16.gmra.mrb[0].mxu0 %v4487
      %v4694 = vpop.f32.mrb[0].mxu0
      %v4695 = vadd.f32 0.0, %v4694
      %v4696 = vpop.f32.mrb[0].mxu0
      %v4697 = vpop.f32.mrb[0].mxu0
      %v4698 = vadd.f32 0.0, %v4697
      %v4699 = vpop.f32.mrb[0].mxu0
      %4700 = vmatprep.mubr.bf16.mxu0 0
      %4701 = vmatmul.mubr.bf16.gmra.mrb[0].mxu0 %v4489
      %v4702 = vpop.f32.mrb[0].mxu0
      %v4703 = vadd.f32 0.0, %v4702
      %v4704 = vpop.f32.mrb[0].mxu0
      %v4705 = vpop.f32.mrb[0].mxu0
      %v4706 = vadd.f32 0.0, %v4705
      %v4707 = vpop.f32.mrb[0].mxu0
      %4708 = vmatprep.mubr.bf16.mxu0 0
      %4709 = vmatmul.mubr.bf16.gmra.mrb[0].mxu0 %v4491
      %v4710 = vpop.f32.mrb[0].mxu0
      %v4711 = vadd.f32 0.0, %v4710
      %v4712 = vpop.f32.mrb[0].mxu0
      %v4713 = vpop.f32.mrb[0].mxu0
      %v4714 = vadd.f32 0.0, %v4713
      %v4715 = vpop.f32.mrb[0].mxu0
      %4716 = vmatprep.mubr.bf16.mxu0 0
      %4717 = vmatmul.mubr.bf16.gmra.mrb[0].mxu0 %v4493
      %v4718 = vpop.f32.mrb[0].mxu0
      %v4719 = vadd.f32 0.0, %v4718
      %v4720 = vpop.f32.mrb[0].mxu0
      %v4721 = vpop.f32.mrb[0].mxu0
      %v4722 = vadd.f32 0.0, %v4721
      %v4723 = vpop.f32.mrb[0].mxu0
      %4724 = vmatprep.mubr.bf16.mxu0 0
      %4725 = vmatmul.mubr.bf16.gmra.mrb[0].mxu0 %v4495
      %v4726 = vpop.f32.mrb[0].mxu0
      %v4727 = vadd.f32 0.0, %v4726
      %v4728 = vpop.f32.mrb[0].mxu0
      %v4729 = vpop.f32.mrb[0].mxu0
      %v4730 = vadd.f32 0.0, %v4729
      %v4731 = vpop.f32.mrb[0].mxu0
      %4732 = vmatprep.mubr.bf16.mxu0 0
      %4733 = vmatmul.mubr.bf16.gmra.mrb[0].mxu0 %v4497
      %v4734 = vpop.f32.mrb[0].mxu0
      %v4735 = vadd.f32 0.0, %v4734
      %v4736 = vpop.f32.mrb[0].mxu0
      %v4737 = vpop.f32.mrb[0].mxu0
      %v4738 = vadd.f32 0.0, %v4737
      %v4739 = vpop.f32.mrb[0].mxu0
      %4740 = vdwg.mxu0
      %v4742 = vshrl.u32 %v4389, 16
      %v4744 = vrot.slane %v4742, 2
      %v4745 = vshll.u32 %v4389, 16
      %v4747 = vrot.slane %v4745, 3
      %v4748 = vor.u32 %v4744, %v4747
      %v4750 = vshrl.u32 %v4390, 16
      %v4752 = vrot.slane %v4750, 2
      %v4753 = vshll.u32 %v4390, 16
      %v4755 = vrot.slane %v4753, 3
      %v4756 = vor.u32 %v4752, %v4755
      %v4757 = vsel %vm3119, %v4748, %v4756
      %v4759 = vshrl.u32 %v4391, 16
      %v4761 = vrot.slane %v4759, 2
      %v4762 = vshll.u32 %v4391, 16
      %v4764 = vrot.slane %v4762, 3
      %v4765 = vor.u32 %v4761, %v4764
      %v4766 = vsel %vm3119, %v4756, %v4765
      %v4768 = vshrl.u32 %v4392, 16
      %v4770 = vrot.slane %v4768, 2
      %v4771 = vshll.u32 %v4392, 16
      %v4773 = vrot.slane %v4771, 3
      %v4774 = vor.u32 %v4770, %v4773
      %v4775 = vsel %vm3119, %v4765, %v4774
      %v4777 = vshrl.u32 %v4393, 16
      %v4779 = vrot.slane %v4777, 2
      %v4780 = vshll.u32 %v4393, 16
      %v4782 = vrot.slane %v4780, 3
      %v4783 = vor.u32 %v4779, %v4782
      %v4784 = vsel %vm3119, %v4774, %v4783
      %v4786 = vshrl.u32 %v4394, 16
      %v4788 = vrot.slane %v4786, 2
      %v4789 = vshll.u32 %v4394, 16
      %v4791 = vrot.slane %v4789, 3
      %v4792 = vor.u32 %v4788, %v4791
      %v4793 = vsel %vm3119, %v4783, %v4792
      %v4795 = vshrl.u32 %v4395, 16
      %v4797 = vrot.slane %v4795, 2
      %v4798 = vshll.u32 %v4395, 16
      %v4800 = vrot.slane %v4798, 3
      %v4801 = vor.u32 %v4797, %v4800
      %v4802 = vsel %vm3119, %v4792, %v4801
      %v4804 = vshrl.u32 %v4396, 16
      %v4806 = vrot.slane %v4804, 2
      %v4807 = vshll.u32 %v4396, 16
      %v4809 = vrot.slane %v4807, 3
      %v4810 = vor.u32 %v4806, %v4809
      %v4811 = vsel %vm3119, %v4801, %v4810
      %v4813 = vshrl.u32 %v4397, 16
      %v4815 = vrot.slane %v4813, 2
      %v4816 = vshll.u32 %v4397, 16
      %v4818 = vrot.slane %v4816, 3
      %v4819 = vor.u32 %v4815, %v4818
      %v4820 = vsel %vm3119, %v4810, %v4819
      %v4822 = vshrl.u32 %v4398, 16
      %v4824 = vrot.slane %v4822, 2
      %v4825 = vshll.u32 %v4398, 16
      %v4827 = vrot.slane %v4825, 3
      %v4828 = vor.u32 %v4824, %v4827
      %v4829 = vsel %vm3119, %v4819, %v4828
      %v4831 = vshrl.u32 %v4399, 16
      %v4833 = vrot.slane %v4831, 2
      %v4834 = vshll.u32 %v4399, 16
      %v4836 = vrot.slane %v4834, 3
      %v4837 = vor.u32 %v4833, %v4836
      %v4838 = vsel %vm3119, %v4828, %v4837
      %v4840 = vshrl.u32 %v4400, 16
      %v4842 = vrot.slane %v4840, 2
      %v4843 = vshll.u32 %v4400, 16
      %v4845 = vrot.slane %v4843, 3
      %v4846 = vor.u32 %v4842, %v4845
      %v4847 = vsel %vm3119, %v4837, %v4846
      %v4849 = vshrl.u32 %v4401, 16
      %v4851 = vrot.slane %v4849, 2
      %v4852 = vshll.u32 %v4401, 16
      %v4854 = vrot.slane %v4852, 3
      %v4855 = vor.u32 %v4851, %v4854
      %v4856 = vsel %vm3119, %v4846, %v4855
      %v4858 = vshrl.u32 %v4402, 16
      %v4860 = vrot.slane %v4858, 2
      %v4861 = vshll.u32 %v4402, 16
      %v4863 = vrot.slane %v4861, 3
      %v4864 = vor.u32 %v4860, %v4863
      %v4865 = vsel %vm3119, %v4855, %v4864
      %v4867 = vshrl.u32 %v4403, 16
      %v4869 = vrot.slane %v4867, 2
      %v4870 = vshll.u32 %v4403, 16
      %v4872 = vrot.slane %v4870, 3
      %v4873 = vor.u32 %v4869, %v4872
      %v4874 = vsel %vm3119, %v4864, %v4873
      %v4876 = vshrl.u32 %v4404, 16
      %v4878 = vrot.slane %v4876, 2
      %v4879 = vshll.u32 %v4404, 16
      %v4881 = vrot.slane %v4879, 3
      %v4882 = vor.u32 %v4878, %v4881
      %v4883 = vsel %vm3119, %v4873, %v4882
      %v4885 = vshrl.u32 %v4405, 16
      %v4887 = vrot.slane %v4885, 2
      %v4888 = vshll.u32 %v4405, 16
      %v4890 = vrot.slane %v4888, 3
      %v4891 = vor.u32 %v4887, %v4890
      %v4892 = vsel %vm3119, %v4882, %v4891
      %v4894 = vshrl.u32 %v4406, 16
      %v4896 = vrot.slane %v4894, 2
      %v4897 = vshll.u32 %v4406, 16
      %v4899 = vrot.slane %v4897, 3
      %v4900 = vor.u32 %v4896, %v4899
      %v4901 = vsel %vm3119, %v4891, %v4900
      %v4903 = vshrl.u32 %v4407, 16
      %v4905 = vrot.slane %v4903, 2
      %v4906 = vshll.u32 %v4407, 16
      %v4908 = vrot.slane %v4906, 3
      %v4909 = vor.u32 %v4905, %v4908
      %v4910 = vsel %vm3119, %v4900, %v4909
      %v4945 = vunpack.c.l.b16 %v4408
      %v4946 = vunpack.c.l.b16 %v4409
      %v4947 = vunpack.c.l.b16 %v4410
      %v4948 = vunpack.c.l.b16 %v4411
      %v4949 = vunpack.c.l.b16 %v4412
      %v4950 = vunpack.c.l.b16 %v4413
      %v4951 = vunpack.c.l.b16 %v4414
      %v4952 = vunpack.c.l.b16 %v4415
      %v4953 = vunpack.c.l.b16 %v4416
      %v4954 = vunpack.c.l.b16 %v4417
      %v4955 = vunpack.c.l.b16 %v4418
      %v4956 = vunpack.c.l.b16 %v4419
      %v4957 = vunpack.c.l.b16 %v4420
      %v4958 = vunpack.c.l.b16 %v4421
      %v4959 = vunpack.c.l.b16 %v4422
      %v4960 = vunpack.c.l.b16 %v4423
      %v4961 = vpack.c.b16 %v4946, %v4945
      %v4962 = vpack.c.b16 %v4948, %v4947
      %v4963 = vpack.c.b16 %v4950, %v4949
      %v4964 = vpack.c.b16 %v4952, %v4951
      %v4965 = vpack.c.b16 %v4954, %v4953
      %v4966 = vpack.c.b16 %v4956, %v4955
      %v4967 = vpack.c.b16 %v4958, %v4957
      %v4968 = vpack.c.b16 %v4960, %v4959
      %4977 = vmatprep.subr.bf16.mxu0 0
      %4978 = vmatpush1.bf16.msra.mxu0 %v4961
      %4979 = vmatprep.subr.bf16.mxu0 0
      %4980 = vmatpush1.bf16.msra.mxu0 %v4962
      %4981 = vmatprep.subr.bf16.mxu0 0
      %4982 = vmatpush1.bf16.msra.mxu0 %v4963
      %4983 = vmatprep.subr.bf16.mxu0 0
      %4984 = vmatpush1.bf16.msra.mxu0 %v4964
      %4985 = vmatprep.subr.bf16.mxu0 0
      %4986 = vmatpush1.bf16.msra.mxu0 %v4965
      %4987 = vmatprep.subr.bf16.mxu0 0
      %4988 = vmatpush1.bf16.msra.mxu0 %v4966
      %4989 = vmatprep.subr.bf16.mxu0 0
      %4990 = vmatpush1.bf16.msra.mxu0 %v4967
      %4991 = vmatprep.subr.bf16.mxu0 0
      %4992 = vmatpush1.bf16.msra.mxu0 %v4968
      %4993 = vmatprep.subr.bf16.mxu0 0
      %4994 = vmatpush1.bf16.msra.mxu0 0
      %4995 = vmatprep.subr.bf16.mxu0 0
      %4996 = vmatpush1.bf16.msra.mxu0 0
      %4997 = vmatprep.subr.bf16.mxu0 0
      %4998 = vmatpush1.bf16.msra.mxu0 0
      %4999 = vmatprep.subr.bf16.mxu0 0
      %5000 = vmatpush1.bf16.msra.mxu0 0
      %5001 = vmatprep.subr.bf16.mxu0 0
      %5002 = vmatpush1.bf16.msra.mxu0 0
      %5003 = vmatprep.subr.bf16.mxu0 0
      %5004 = vmatpush1.bf16.msra.mxu0 0
      %5005 = vmatprep.subr.bf16.mxu0 0
      %5006 = vmatpush1.bf16.msra.mxu0 0
      %5007 = vmatprep.subr.bf16.mxu0 0
      %5008 = vmatpush1.bf16.msra.mxu0 0
      %5009 = vmatprep.mubr.bf16.mxu0 0
      %5010 = vmatmul.mubr.bf16.gmra.mrb[0].mxu0 %v4757
      %v5011 = vpop.f32.mrb[0].mxu0
      %v5012 = vadd.f32 %v4599, %v5011
      %v5013 = vpop.f32.mrb[0].mxu0
      %v5014 = vpop.f32.mrb[0].mxu0
      %v5015 = vadd.f32 %v4602, %v5014
      %v5016 = vpop.f32.mrb[0].mxu0
      %5017 = vmatprep.mubr.bf16.mxu0 0
      %5018 = vmatmul.mubr.bf16.gmra.mrb[0].mxu0 %v4766
      %v5019 = vpop.f32.mrb[0].mxu0
      %v5020 = vadd.f32 %v4607, %v5019
      %v5021 = vpop.f32.mrb[0].mxu0
      %v5022 = vpop.f32.mrb[0].mxu0
      %v5023 = vadd.f32 %v4610, %v5022
      %v5024 = vpop.f32.mrb[0].mxu0
      %5025 = vmatprep.mubr.bf16.mxu0 0
      %5026 = vmatmul.mubr.bf16.gmra.mrb[0].mxu0 %v4775
      %v5027 = vpop.f32.mrb[0].mxu0
      %v5028 = vadd.f32 %v4615, %v5027
      %v5029 = vpop.f32.mrb[0].mxu0
      %v5030 = vpop.f32.mrb[0].mxu0
      %v5031 = vadd.f32 %v4618, %v5030
      %v5032 = vpop.f32.mrb[0].mxu0
      %5033 = vmatprep.mubr.bf16.mxu0 0
      %5034 = vmatmul.mubr.bf16.gmra.mrb[0].mxu0 %v4784
      %v5035 = vpop.f32.mrb[0].mxu0
      %v5036 = vadd.f32 %v4623, %v5035
      %v5037 = vpop.f32.mrb[0].mxu0
      %v5038 = vpop.f32.mrb[0].mxu0
      %v5039 = vadd.f32 %v4626, %v5038
      %v5040 = vpop.f32.mrb[0].mxu0
      %5041 = vmatprep.mubr.bf16.mxu0 0
      %5042 = vmatmul.mubr.bf16.gmra.mrb[0].mxu0 %v4793
      %v5043 = vpop.f32.mrb[0].mxu0
      %v5044 = vadd.f32 %v4631, %v5043
      %v5045 = vpop.f32.mrb[0].mxu0
      %v5046 = vpop.f32.mrb[0].mxu0
      %v5047 = vadd.f32 %v4634, %v5046
      %v5048 = vpop.f32.mrb[0].mxu0
      %5049 = vmatprep.mubr.bf16.mxu0 0
      %5050 = vmatmul.mubr.bf16.gmra.mrb[0].mxu0 %v4802
      %v5051 = vpop.f32.mrb[0].mxu0
      %v5052 = vadd.f32 %v4639, %v5051
      %v5053 = vpop.f32.mrb[0].mxu0
      %v5054 = vpop.f32.mrb[0].mxu0
      %v5055 = vadd.f32 %v4642, %v5054
      %v5056 = vpop.f32.mrb[0].mxu0
      %5057 = vmatprep.mubr.bf16.mxu0 0
      %5058 = vmatmul.mubr.bf16.gmra.mrb[0].mxu0 %v4811
      %v5059 = vpop.f32.mrb[0].mxu0
      %v5060 = vadd.f32 %v4647, %v5059
      %v5061 = vpop.f32.mrb[0].mxu0
      %v5062 = vpop.f32.mrb[0].mxu0
      %v5063 = vadd.f32 %v4650, %v5062
      %v5064 = vpop.f32.mrb[0].mxu0
      %5065 = vmatprep.mubr.bf16.mxu0 0
      %5066 = vmatmul.mubr.bf16.gmra.mrb[0].mxu0 %v4820
      %v5067 = vpop.f32.mrb[0].mxu0
      %v5068 = vadd.f32 %v4655, %v5067
      %v5069 = vpop.f32.mrb[0].mxu0
      %v5070 = vpop.f32.mrb[0].mxu0
      %v5071 = vadd.f32 %v4658, %v5070
      %v5072 = vpop.f32.mrb[0].mxu0
      %5073 = vmatprep.mubr.bf16.mxu0 0
      %5074 = vmatmul.mubr.bf16.gmra.mrb[0].mxu0 %v4829
      %v5075 = vpop.f32.mrb[0].mxu0
      %v5076 = vadd.f32 %v4663, %v5075
      %v5077 = vpop.f32.mrb[0].mxu0
      %v5078 = vpop.f32.mrb[0].mxu0
      %v5079 = vadd.f32 %v4666, %v5078
      %v5080 = vpop.f32.mrb[0].mxu0
      %5081 = vmatprep.mubr.bf16.mxu0 0
      %5082 = vmatmul.mubr.bf16.gmra.mrb[0].mxu0 %v4838
      %v5083 = vpop.f32.mrb[0].mxu0
      %v5084 = vadd.f32 %v4671, %v5083
      %v5085 = vpop.f32.mrb[0].mxu0
      %v5086 = vpop.f32.mrb[0].mxu0
      %v5087 = vadd.f32 %v4674, %v5086
      %v5088 = vpop.f32.mrb[0].mxu0
      %5089 = vmatprep.mubr.bf16.mxu0 0
      %5090 = vmatmul.mubr.bf16.gmra.mrb[0].mxu0 %v4847
      %v5091 = vpop.f32.mrb[0].mxu0
      %v5092 = vadd.f32 %v4679, %v5091
      %v5093 = vpop.f32.mrb[0].mxu0
      %v5094 = vpop.f32.mrb[0].mxu0
      %v5095 = vadd.f32 %v4682, %v5094
      %v5096 = vpop.f32.mrb[0].mxu0
      %5097 = vmatprep.mubr.bf16.mxu0 0
      %5098 = vmatmul.mubr.bf16.gmra.mrb[0].mxu0 %v4856
      %v5099 = vpop.f32.mrb[0].mxu0
      %v5100 = vadd.f32 %v4687, %v5099
      %v5101 = vpop.f32.mrb[0].mxu0
      %v5102 = vpop.f32.mrb[0].mxu0
      %v5103 = vadd.f32 %v4690, %v5102
      %v5104 = vpop.f32.mrb[0].mxu0
      %5105 = vmatprep.mubr.bf16.mxu0 0
      %5106 = vmatmul.mubr.bf16.gmra.mrb[0].mxu0 %v4865
      %v5107 = vpop.f32.mrb[0].mxu0
      %v5108 = vadd.f32 %v4695, %v5107
      %v5109 = vpop.f32.mrb[0].mxu0
      %v5110 = vpop.f32.mrb[0].mxu0
      %v5111 = vadd.f32 %v4698, %v5110
      %v5112 = vpop.f32.mrb[0].mxu0
      %5113 = vmatprep.mubr.bf16.mxu0 0
      %5114 = vmatmul.mubr.bf16.gmra.mrb[0].mxu0 %v4874
      %v5115 = vpop.f32.mrb[0].mxu0
      %v5116 = vadd.f32 %v4703, %v5115
      %v5117 = vpop.f32.mrb[0].mxu0
      %v5118 = vpop.f32.mrb[0].mxu0
      %v5119 = vadd.f32 %v4706, %v5118
      %v5120 = vpop.f32.mrb[0].mxu0
      %5121 = vmatprep.mubr.bf16.mxu0 0
      %5122 = vmatmul.mubr.bf16.gmra.mrb[0].mxu0 %v4883
      %v5123 = vpop.f32.mrb[0].mxu0
      %v5124 = vadd.f32 %v4711, %v5123
      %v5125 = vpop.f32.mrb[0].mxu0
      %v5126 = vpop.f32.mrb[0].mxu0
      %v5127 = vadd.f32 %v4714, %v5126
      %v5128 = vpop.f32.mrb[0].mxu0
      %5129 = vmatprep.mubr.bf16.mxu0 0
      %5130 = vmatmul.mubr.bf16.gmra.mrb[0].mxu0 %v4892
      %v5131 = vpop.f32.mrb[0].mxu0
      %v5132 = vadd.f32 %v4719, %v5131
      %v5133 = vpop.f32.mrb[0].mxu0
      %v5134 = vpop.f32.mrb[0].mxu0
      %v5135 = vadd.f32 %v4722, %v5134
      %v5136 = vpop.f32.mrb[0].mxu0
      %5137 = vmatprep.mubr.bf16.mxu0 0
      %5138 = vmatmul.mubr.bf16.gmra.mrb[0].mxu0 %v4901
      %v5139 = vpop.f32.mrb[0].mxu0
      %v5140 = vadd.f32 %v4727, %v5139
      %v5141 = vpop.f32.mrb[0].mxu0
      %v5142 = vpop.f32.mrb[0].mxu0
      %v5143 = vadd.f32 %v4730, %v5142
      %v5144 = vpop.f32.mrb[0].mxu0
      %5145 = vmatprep.mubr.bf16.mxu0 0
      %5146 = vmatmul.mubr.bf16.gmra.mrb[0].mxu0 %v4910
      %v5147 = vpop.f32.mrb[0].mxu0
      %v5148 = vadd.f32 %v4735, %v5147
      %v5149 = vpop.f32.mrb[0].mxu0
      %v5150 = vpop.f32.mrb[0].mxu0
      %v5151 = vadd.f32 %v4738, %v5150
      %v5152 = vpop.f32.mrb[0].mxu0
      %5153 = vdwg.mxu0
      %v5154 = vld [vmem:[#allocation2 + $0x90] sm:$0xf]
      %s5155 = scalar_lea.vmem %s2, 128
      %v5156 = vld [vmem:[%s5155] sm:$0xf]
      %v5157 = vld [vmem:[%s5155 + $0x4] sm:$0xf]
      %v5158 = vld [vmem:[%s5155 + $0x8] sm:$0xf]
      %v5159 = vld [vmem:[%s5155 + $0xc] sm:$0xf]
      %v5160 = vld [vmem:[%s5155 + $0x10] sm:$0xf]
      %v5161 = vld [vmem:[%s5155 + $0x14] sm:$0xf]
      %v5162 = vld [vmem:[%s5155 + $0x18] sm:$0xf]
      %v5163 = vld [vmem:[%s5155 + $0x1c] sm:$0xf]
      %v5164 = vld [vmem:[%s5155 + $0x20] sm:$0xf]
      %v5165 = vld [vmem:[%s5155 + $0x24] sm:$0xf]
      %v5166 = vld [vmem:[%s5155 + $0x28] sm:$0xf]
      %v5167 = vld [vmem:[%s5155 + $0x2c] sm:$0xf]
      %v5168 = vld [vmem:[%s5155 + $0x30] sm:$0xf]
      %v5169 = vld [vmem:[%s5155 + $0x34] sm:$0xf]
      %v5170 = vld [vmem:[%s5155 + $0x38] sm:$0xf]
      %v5171 = vld [vmem:[%s5155 + $0x3c] sm:$0xf]
      %vm5172 = vsmask.f32 4352
      %v5174 = vshrl.u32 %v4424, 16
      %v5176 = vrot.slane %v5174, 3
      %v5177 = vshll.u32 %v4424, 16
      %v5179 = vrot.slane %v5177, 4
      %v5180 = vor.u32 %v5176, %v5179
      %v5181 = vrot.slane %v4750, 3
      %v5182 = vrot.slane %v4753, 4
      %v5183 = vor.u32 %v5181, %v5182
      %v5184 = vsel %vm5172, %v5180, %v5183
      %v5185 = vrot.slane %v4759, 3
      %v5186 = vrot.slane %v4762, 4
      %v5187 = vor.u32 %v5185, %v5186
      %v5188 = vsel %vm5172, %v5183, %v5187
      %v5189 = vrot.slane %v4768, 3
      %v5190 = vrot.slane %v4771, 4
      %v5191 = vor.u32 %v5189, %v5190
      %v5192 = vsel %vm5172, %v5187, %v5191
      %v5193 = vrot.slane %v4777, 3
      %v5194 = vrot.slane %v4780, 4
      %v5195 = vor.u32 %v5193, %v5194
      %v5196 = vsel %vm5172, %v5191, %v5195
      %v5197 = vrot.slane %v4786, 3
      %v5198 = vrot.slane %v4789, 4
      %v5199 = vor.u32 %v5197, %v5198
      %v5200 = vsel %vm5172, %v5195, %v5199
      %v5201 = vrot.slane %v4795, 3
      %v5202 = vrot.slane %v4798, 4
      %v5203 = vor.u32 %v5201, %v5202
      %v5204 = vsel %vm5172, %v5199, %v5203
      %v5205 = vrot.slane %v4804, 3
      %v5206 = vrot.slane %v4807, 4
      %v5207 = vor.u32 %v5205, %v5206
      %v5208 = vsel %vm5172, %v5203, %v5207
      %v5209 = vrot.slane %v4813, 3
      %v5210 = vrot.slane %v4816, 4
      %v5211 = vor.u32 %v5209, %v5210
      %v5212 = vsel %vm5172, %v5207, %v5211
      %v5213 = vrot.slane %v4822, 3
      %v5214 = vrot.slane %v4825, 4
      %v5215 = vor.u32 %v5213, %v5214
      %v5216 = vsel %vm5172, %v5211, %v5215
      %v5217 = vrot.slane %v4831, 3
      %v5218 = vrot.slane %v4834, 4
      %v5219 = vor.u32 %v5217, %v5218
      %v5220 = vsel %vm5172, %v5215, %v5219
      %v5221 = vrot.slane %v4840, 3
      %v5222 = vrot.slane %v4843, 4
      %v5223 = vor.u32 %v5221, %v5222
      %v5224 = vsel %vm5172, %v5219, %v5223
      %v5225 = vrot.slane %v4849, 3
      %v5226 = vrot.slane %v4852, 4
      %v5227 = vor.u32 %v5225, %v5226
      %v5228 = vsel %vm5172, %v5223, %v5227
      %v5229 = vrot.slane %v4858, 3
      %v5230 = vrot.slane %v4861, 4
      %v5231 = vor.u32 %v5229, %v5230
      %v5232 = vsel %vm5172, %v5227, %v5231
      %v5233 = vrot.slane %v4867, 3
      %v5234 = vrot.slane %v4870, 4
      %v5235 = vor.u32 %v5233, %v5234
      %v5236 = vsel %vm5172, %v5231, %v5235
      %v5237 = vrot.slane %v4876, 3
      %v5238 = vrot.slane %v4879, 4
      %v5239 = vor.u32 %v5237, %v5238
      %v5240 = vsel %vm5172, %v5235, %v5239
      %v5241 = vrot.slane %v4885, 3
      %v5242 = vrot.slane %v4888, 4
      %v5243 = vor.u32 %v5241, %v5242
      %v5244 = vsel %vm5172, %v5239, %v5243
      %v5245 = vrot.slane %v4894, 3
      %v5246 = vrot.slane %v4897, 4
      %v5247 = vor.u32 %v5245, %v5246
      %v5248 = vsel %vm5172, %v5243, %v5247
      %v5250 = vshrl.u32 %v5154, 16
      %v5252 = vrot.slane %v5250, 3
      %v5253 = vshll.u32 %v5154, 16
      %v5255 = vrot.slane %v5253, 4
      %v5256 = vor.u32 %v5252, %v5255
      %v5257 = vsel %vm5172, %v5247, %v5256
      %v5292 = vunpack.c.l.b16 %v5156
      %v5293 = vunpack.c.l.b16 %v5157
      %v5294 = vunpack.c.l.b16 %v5158
      %v5295 = vunpack.c.l.b16 %v5159
      %v5296 = vunpack.c.l.b16 %v5160
      %v5297 = vunpack.c.l.b16 %v5161
      %v5298 = vunpack.c.l.b16 %v5162
      %v5299 = vunpack.c.l.b16 %v5163
      %v5300 = vunpack.c.l.b16 %v5164
      %v5301 = vunpack.c.l.b16 %v5165
      %v5302 = vunpack.c.l.b16 %v5166
      %v5303 = vunpack.c.l.b16 %v5167
      %v5304 = vunpack.c.l.b16 %v5168
      %v5305 = vunpack.c.l.b16 %v5169
      %v5306 = vunpack.c.l.b16 %v5170
      %v5307 = vunpack.c.l.b16 %v5171
      %v5308 = vpack.c.b16 %v5293, %v5292
      %v5309 = vpack.c.b16 %v5295, %v5294
      %v5310 = vpack.c.b16 %v5297, %v5296
      %v5311 = vpack.c.b16 %v5299, %v5298
      %v5312 = vpack.c.b16 %v5301, %v5300
      %v5313 = vpack.c.b16 %v5303, %v5302
      %v5314 = vpack.c.b16 %v5305, %v5304
      %v5315 = vpack.c.b16 %v5307, %v5306
      %5324 = vmatprep.subr.bf16.mxu0 0
      %5325 = vmatpush1.bf16.msra.mxu0 %v5308
      %5326 = vmatprep.subr.bf16.mxu0 0
      %5327 = vmatpush1.bf16.msra.mxu0 %v5309
      %5328 = vmatprep.subr.bf16.mxu0 0
      %5329 = vmatpush1.bf16.msra.mxu0 %v5310
      %5330 = vmatprep.subr.bf16.mxu0 0
      %5331 = vmatpush1.bf16.msra.mxu0 %v5311
      %5332 = vmatprep.subr.bf16.mxu0 0
      %5333 = vmatpush1.bf16.msra.mxu0 %v5312
      %5334 = vmatprep.subr.bf16.mxu0 0
      %5335 = vmatpush1.bf16.msra.mxu0 %v5313
      %5336 = vmatprep.subr.bf16.mxu0 0
      %5337 = vmatpush1.bf16.msra.mxu0 %v5314
      %5338 = vmatprep.subr.bf16.mxu0 0
      %5339 = vmatpush1.bf16.msra.mxu0 %v5315
      %5340 = vmatprep.subr.bf16.mxu0 0
      %5341 = vmatpush1.bf16.msra.mxu0 0
      %5342 = vmatprep.subr.bf16.mxu0 0
      %5343 = vmatpush1.bf16.msra.mxu0 0
      %5344 = vmatprep.subr.bf16.mxu0 0
      %5345 = vmatpush1.bf16.msra.mxu0 0
      %5346 = vmatprep.subr.bf16.mxu0 0
      %5347 = vmatpush1.bf16.msra.mxu0 0
      %5348 = vmatprep.subr.bf16.mxu0 0
      %5349 = vmatpush1.bf16.msra.mxu0 0
      %5350 = vmatprep.subr.bf16.mxu0 0
      %5351 = vmatpush1.bf16.msra.mxu0 0
      %5352 = vmatprep.subr.bf16.mxu0 0
      %5353 = vmatpush1.bf16.msra.mxu0 0
      %5354 = vmatprep.subr.bf16.mxu0 0
      %5355 = vmatpush1.bf16.msra.mxu0 0
      %5356 = vmatprep.mubr.bf16.mxu0 0
      %5357 = vmatmul.mubr.bf16.gmra.mrb[0].mxu0 %v5184
      %v5358 = vpop.f32.mrb[0].mxu0
      %v5359 = vadd.f32 0.0, %v5358
      %v5360 = vpop.f32.mrb[0].mxu0
      %v5361 = vpop.f32.mrb[0].mxu0
      %v5362 = vadd.f32 0.0, %v5361
      %v5363 = vpop.f32.mrb[0].mxu0
      %5364 = vmatprep.mubr.bf16.mxu0 0
      %5365 = vmatmul.mubr.bf16.gmra.mrb[0].mxu0 %v5188
      %v5366 = vpop.f32.mrb[0].mxu0
      %v5367 = vadd.f32 0.0, %v5366
      %v5368 = vpop.f32.mrb[0].mxu0
      %v5369 = vpop.f32.mrb[0].mxu0
      %v5370 = vadd.f32 0.0, %v5369
      %v5371 = vpop.f32.mrb[0].mxu0
      %5372 = vmatprep.mubr.bf16.mxu0 0
      %5373 = vmatmul.mubr.bf16.gmra.mrb[0].mxu0 %v5192
      %v5374 = vpop.f32.mrb[0].mxu0
      %v5375 = vadd.f32 0.0, %v5374
      %v5376 = vpop.f32.mrb[0].mxu0
      %v5377 = vpop.f32.mrb[0].mxu0
      %v5378 = vadd.f32 0.0, %v5377
      %v5379 = vpop.f32.mrb[0].mxu0
      %5380 = vmatprep.mubr.bf16.mxu0 0
      %5381 = vmatmul.mubr.bf16.gmra.mrb[0].mxu0 %v5196
      %v5382 = vpop.f32.mrb[0].mxu0
      %v5383 = vadd.f32 0.0, %v5382
      %v5384 = vpop.f32.mrb[0].mxu0
      %v5385 = vpop.f32.mrb[0].mxu0
      %v5386 = vadd.f32 0.0, %v5385
      %v5387 = vpop.f32.mrb[0].mxu0
      %5388 = vmatprep.mubr.bf16.mxu0 0
      %5389 = vmatmul.mubr.bf16.gmra.mrb[0].mxu0 %v5200
      %v5390 = vpop.f32.mrb[0].mxu0
      %v5391 = vadd.f32 0.0, %v5390
      %v5392 = vpop.f32.mrb[0].mxu0
      %v5393 = vpop.f32.mrb[0].mxu0
      %v5394 = vadd.f32 0.0, %v5393
      %v5395 = vpop.f32.mrb[0].mxu0
      %5396 = vmatprep.mubr.bf16.mxu0 0
      %5397 = vmatmul.mubr.bf16.gmra.mrb[0].mxu0 %v5204
      %v5398 = vpop.f32.mrb[0].mxu0
      %v5399 = vadd.f32 0.0, %v5398
      %v5400 = vpop.f32.mrb[0].mxu0
      %v5401 = vpop.f32.mrb[0].mxu0
      %v5402 = vadd.f32 0.0, %v5401
      %v5403 = vpop.f32.mrb[0].mxu0
      %5404 = vmatprep.mubr.bf16.mxu0 0
      %5405 = vmatmul.mubr.bf16.gmra.mrb[0].mxu0 %v5208
      %v5406 = vpop.f32.mrb[0].mxu0
      %v5407 = vadd.f32 0.0, %v5406
      %v5408 = vpop.f32.mrb[0].mxu0
      %v5409 = vpop.f32.mrb[0].mxu0
      %v5410 = vadd.f32 0.0, %v5409
      %v5411 = vpop.f32.mrb[0].mxu0
      %5412 = vmatprep.mubr.bf16.mxu0 0
      %5413 = vmatmul.mubr.bf16.gmra.mrb[0].mxu0 %v5212
      %v5414 = vpop.f32.mrb[0].mxu0
      %v5415 = vadd.f32 0.0, %v5414
      %v5416 = vpop.f32.mrb[0].mxu0
      %v5417 = vpop.f32.mrb[0].mxu0
      %v5418 = vadd.f32 0.0, %v5417
      %v5419 = vpop.f32.mrb[0].mxu0
      %5420 = vmatprep.mubr.bf16.mxu0 0
      %5421 = vmatmul.mubr.bf16.gmra.mrb[0].mxu0 %v5216
      %v5422 = vpop.f32.mrb[0].mxu0
      %v5423 = vadd.f32 0.0, %v5422
      %v5424 = vpop.f32.mrb[0].mxu0
      %v5425 = vpop.f32.mrb[0].mxu0
      %v5426 = vadd.f32 0.0, %v5425
      %v5427 = vpop.f32.mrb[0].mxu0
      %5428 = vmatprep.mubr.bf16.mxu0 0
      %5429 = vmatmul.mubr.bf16.gmra.mrb[0].mxu0 %v5220
      %v5430 = vpop.f32.mrb[0].mxu0
      %v5431 = vadd.f32 0.0, %v5430
      %v5432 = vpop.f32.mrb[0].mxu0
      %v5433 = vpop.f32.mrb[0].mxu0
      %v5434 = vadd.f32 0.0, %v5433
      %v5435 = vpop.f32.mrb[0].mxu0
      %5436 = vmatprep.mubr.bf16.mxu0 0
      %5437 = vmatmul.mubr.bf16.gmra.mrb[0].mxu0 %v5224
      %v5438 = vpop.f32.mrb[0].mxu0
      %v5439 = vadd.f32 0.0, %v5438
      %v5440 = vpop.f32.mrb[0].mxu0
      %v5441 = vpop.f32.mrb[0].mxu0
      %v5442 = vadd.f32 0.0, %v5441
      %v5443 = vpop.f32.mrb[0].mxu0
      %5444 = vmatprep.mubr.bf16.mxu0 0
      %5445 = vmatmul.mubr.bf16.gmra.mrb[0].mxu0 %v5228
      %v5446 = vpop.f32.mrb[0].mxu0
      %v5447 = vadd.f32 0.0, %v5446
      %v5448 = vpop.f32.mrb[0].mxu0
      %v5449 = vpop.f32.mrb[0].mxu0
      %v5450 = vadd.f32 0.0, %v5449
      %v5451 = vpop.f32.mrb[0].mxu0
      %5452 = vmatprep.mubr.bf16.mxu0 0
      %5453 = vmatmul.mubr.bf16.gmra.mrb[0].mxu0 %v5232
      %v5454 = vpop.f32.mrb[0].mxu0
      %v5455 = vadd.f32 0.0, %v5454
      %v5456 = vpop.f32.mrb[0].mxu0
      %v5457 = vpop.f32.mrb[0].mxu0
      %v5458 = vadd.f32 0.0, %v5457
      %v5459 = vpop.f32.mrb[0].mxu0
      %5460 = vmatprep.mubr.bf16.mxu0 0
      %5461 = vmatmul.mubr.bf16.gmra.mrb[0].mxu0 %v5236
      %v5462 = vpop.f32.mrb[0].mxu0
      %v5463 = vadd.f32 0.0, %v5462
      %v5464 = vpop.f32.mrb[0].mxu0
      %v5465 = vpop.f32.mrb[0].mxu0
      %v5466 = vadd.f32 0.0, %v5465
      %v5467 = vpop.f32.mrb[0].mxu0
      %5468 = vmatprep.mubr.bf16.mxu0 0
      %5469 = vmatmul.mubr.bf16.gmra.mrb[0].mxu0 %v5240
      %v5470 = vpop.f32.mrb[0].mxu0
      %v5471 = vadd.f32 0.0, %v5470
      %v5472 = vpop.f32.mrb[0].mxu0
      %v5473 = vpop.f32.mrb[0].mxu0
      %v5474 = vadd.f32 0.0, %v5473
      %v5475 = vpop.f32.mrb[0].mxu0
      %5476 = vmatprep.mubr.bf16.mxu0 0
      %5477 = vmatmul.mubr.bf16.gmra.mrb[0].mxu0 %v5244
      %v5478 = vpop.f32.mrb[0].mxu0
      %v5479 = vadd.f32 0.0, %v5478
      %v5480 = vpop.f32.mrb[0].mxu0
      %v5481 = vpop.f32.mrb[0].mxu0
      %v5482 = vadd.f32 0.0, %v5481
      %v5483 = vpop.f32.mrb[0].mxu0
      %5484 = vmatprep.mubr.bf16.mxu0 0
      %5485 = vmatmul.mubr.bf16.gmra.mrb[0].mxu0 %v5248
      %v5486 = vpop.f32.mrb[0].mxu0
      %v5487 = vadd.f32 0.0, %v5486
      %v5488 = vpop.f32.mrb[0].mxu0
      %v5489 = vpop.f32.mrb[0].mxu0
      %v5490 = vadd.f32 0.0, %v5489
      %v5491 = vpop.f32.mrb[0].mxu0
      %5492 = vmatprep.mubr.bf16.mxu0 0
      %5493 = vmatmul.mubr.bf16.gmra.mrb[0].mxu0 %v5257
      %v5494 = vpop.f32.mrb[0].mxu0
      %v5495 = vadd.f32 0.0, %v5494
      %v5496 = vpop.f32.mrb[0].mxu0
      %v5497 = vpop.f32.mrb[0].mxu0
      %v5498 = vadd.f32 0.0, %v5497
      %v5499 = vpop.f32.mrb[0].mxu0
      %5500 = vdwg.mxu0
      %v5501 = vadd.f32 %v5012, %v5359
      %v5502 = vadd.f32 %v5015, %v5362
      %v5503 = vadd.f32 %v5020, %v5367
      %v5504 = vadd.f32 %v5023, %v5370
      %v5505 = vadd.f32 %v5028, %v5375
      %v5506 = vadd.f32 %v5031, %v5378
      %v5507 = vadd.f32 %v5036, %v5383
      %v5508 = vadd.f32 %v5039, %v5386
      %v5509 = vadd.f32 %v5044, %v5391
      %v5510 = vadd.f32 %v5047, %v5394
      %v5511 = vadd.f32 %v5052, %v5399
      %v5512 = vadd.f32 %v5055, %v5402
      %v5513 = vadd.f32 %v5060, %v5407
      %v5514 = vadd.f32 %v5063, %v5410
      %v5515 = vadd.f32 %v5068, %v5415
      %v5516 = vadd.f32 %v5071, %v5418
      %v5517 = vadd.f32 %v5076, %v5423
      %v5518 = vadd.f32 %v5079, %v5426
      %v5519 = vadd.f32 %v5084, %v5431
      %v5520 = vadd.f32 %v5087, %v5434
      %v5521 = vadd.f32 %v5092, %v5439
      %v5522 = vadd.f32 %v5095, %v5442
      %v5523 = vadd.f32 %v5100, %v5447
      %v5524 = vadd.f32 %v5103, %v5450
      %v5525 = vadd.f32 %v5108, %v5455
      %v5526 = vadd.f32 %v5111, %v5458
      %v5527 = vadd.f32 %v5116, %v5463
      %v5528 = vadd.f32 %v5119, %v5466
      %v5529 = vadd.f32 %v5124, %v5471
      %v5530 = vadd.f32 %v5127, %v5474
      %v5531 = vadd.f32 %v5132, %v5479
      %v5532 = vadd.f32 %v5135, %v5482
      %v5533 = vadd.f32 %v5140, %v5487
      %v5534 = vadd.f32 %v5143, %v5490
      %v5535 = vadd.f32 %v5148, %v5495
      %v5536 = vadd.f32 %v5151, %v5498
      %v5537 = vld [vmem:[#allocation2 + $0x8] sm:$0xf8]
      %v5538 = vld [vmem:[#allocation2 + $0x10] sm:$0xff]
      %v5539 = vld [vmem:[#allocation2 + $0x18] sm:$0xff]
      %v5540 = vld [vmem:[#allocation2 + $0x20] sm:$0xff]
      %v5541 = vld [vmem:[#allocation2 + $0x28] sm:$0xff]
      %v5542 = vld [vmem:[#allocation2 + $0x30] sm:$0xff]
      %v5543 = vld [vmem:[#allocation2 + $0x38] sm:$0xff]
      %v5544 = vld [vmem:[#allocation2 + $0x40] sm:$0xff]
      %v5545 = vld [vmem:[#allocation2 + $0x48] sm:$0xff]
      %v5546 = vld [vmem:[#allocation2 + $0x50] sm:$0xff]
      %v5547 = vld [vmem:[#allocation2 + $0x58] sm:$0xff]
      %v5548 = vld [vmem:[#allocation2 + $0x60] sm:$0xff]
      %v5549 = vld [vmem:[#allocation2 + $0x68] sm:$0xff]
      %v5550 = vld [vmem:[#allocation2 + $0x70] sm:$0xff]
      %v5551 = vld [vmem:[#allocation2 + $0x78] sm:$0xff]
      %v5552 = vld [vmem:[#allocation2 + $0x80] sm:$0xff]
      %v5553 = vld [vmem:[#allocation2 + $0x88] sm:$0xff]
      %v5554 = vld [vmem:[#allocation2 + $0x90] sm:$0xff]
      %v5555 = vld [vmem:[#allocation2 + $0x98] sm:$0xf]
      %s5556 = scalar_lea.vmem %s2, 192
      %v5557 = vld [vmem:[%s5556] sm:$0xf]
      %v5558 = vld [vmem:[%s5556 + $0x4] sm:$0xf]
      %v5559 = vld [vmem:[%s5556 + $0x8] sm:$0xf]
      %v5560 = vld [vmem:[%s5556 + $0xc] sm:$0xf]
      %v5561 = vld [vmem:[%s5556 + $0x10] sm:$0xf]
      %v5562 = vld [vmem:[%s5556 + $0x14] sm:$0xf]
      %v5563 = vld [vmem:[%s5556 + $0x18] sm:$0xf]
      %v5564 = vld [vmem:[%s5556 + $0x1c] sm:$0xf]
      %v5565 = vld [vmem:[%s5556 + $0x20] sm:$0xf]
      %v5566 = vld [vmem:[%s5556 + $0x24] sm:$0xf]
      %v5567 = vld [vmem:[%s5556 + $0x28] sm:$0xf]
      %v5568 = vld [vmem:[%s5556 + $0x2c] sm:$0xf]
      %v5569 = vld [vmem:[%s5556 + $0x30] sm:$0xf]
      %v5570 = vld [vmem:[%s5556 + $0x34] sm:$0xf]
      %v5571 = vld [vmem:[%s5556 + $0x38] sm:$0xf]
      %v5572 = vld [vmem:[%s5556 + $0x3c] sm:$0xf]
      %v5574 = vshrl.u32 %v5537, 16
      %v5576 = vrot.slane %v5574, 3
      %v5577 = vshll.u32 %v5537, 16
      %v5579 = vrot.slane %v5577, 4
      %v5580 = vor.u32 %v5576, %v5579
      %v5582 = vshrl.u32 %v5538, 16
      %v5584 = vrot.slane %v5582, 3
      %v5585 = vshll.u32 %v5538, 16
      %v5587 = vrot.slane %v5585, 4
      %v5588 = vor.u32 %v5584, %v5587
      %v5589 = vsel %vm5172, %v5580, %v5588
      %v5591 = vshrl.u32 %v5539, 16
      %v5593 = vrot.slane %v5591, 3
      %v5594 = vshll.u32 %v5539, 16
      %v5596 = vrot.slane %v5594, 4
      %v5597 = vor.u32 %v5593, %v5596
      %v5598 = vsel %vm5172, %v5588, %v5597
      %v5600 = vshrl.u32 %v5540, 16
      %v5602 = vrot.slane %v5600, 3
      %v5603 = vshll.u32 %v5540, 16
      %v5605 = vrot.slane %v5603, 4
      %v5606 = vor.u32 %v5602, %v5605
      %v5607 = vsel %vm5172, %v5597, %v5606
      %v5609 = vshrl.u32 %v5541, 16
      %v5611 = vrot.slane %v5609, 3
      %v5612 = vshll.u32 %v5541, 16
      %v5614 = vrot.slane %v5612, 4
      %v5615 = vor.u32 %v5611, %v5614
      %v5616 = vsel %vm5172, %v5606, %v5615
      %v5618 = vshrl.u32 %v5542, 16
      %v5620 = vrot.slane %v5618, 3
      %v5621 = vshll.u32 %v5542, 16
      %v5623 = vrot.slane %v5621, 4
      %v5624 = vor.u32 %v5620, %v5623
      %v5625 = vsel %vm5172, %v5615, %v5624
      %v5627 = vshrl.u32 %v5543, 16
      %v5629 = vrot.slane %v5627, 3
      %v5630 = vshll.u32 %v5543, 16
      %v5632 = vrot.slane %v5630, 4
      %v5633 = vor.u32 %v5629, %v5632
      %v5634 = vsel %vm5172, %v5624, %v5633
      %v5636 = vshrl.u32 %v5544, 16
      %v5638 = vrot.slane %v5636, 3
      %v5639 = vshll.u32 %v5544, 16
      %v5641 = vrot.slane %v5639, 4
      %v5642 = vor.u32 %v5638, %v5641
      %v5643 = vsel %vm5172, %v5633, %v5642
      %v5645 = vshrl.u32 %v5545, 16
      %v5647 = vrot.slane %v5645, 3
      %v5648 = vshll.u32 %v5545, 16
      %v5650 = vrot.slane %v5648, 4
      %v5651 = vor.u32 %v5647, %v5650
      %v5652 = vsel %vm5172, %v5642, %v5651
      %v5654 = vshrl.u32 %v5546, 16
      %v5656 = vrot.slane %v5654, 3
      %v5657 = vshll.u32 %v5546, 16
      %v5659 = vrot.slane %v5657, 4
      %v5660 = vor.u32 %v5656, %v5659
      %v5661 = vsel %vm5172, %v5651, %v5660
      %v5663 = vshrl.u32 %v5547, 16
      %v5665 = vrot.slane %v5663, 3
      %v5666 = vshll.u32 %v5547, 16
      %v5668 = vrot.slane %v5666, 4
      %v5669 = vor.u32 %v5665, %v5668
      %v5670 = vsel %vm5172, %v5660, %v5669
      %v5672 = vshrl.u32 %v5548, 16
      %v5674 = vrot.slane %v5672, 3
      %v5675 = vshll.u32 %v5548, 16
      %v5677 = vrot.slane %v5675, 4
      %v5678 = vor.u32 %v5674, %v5677
      %v5679 = vsel %vm5172, %v5669, %v5678
      %v5681 = vshrl.u32 %v5549, 16
      %v5683 = vrot.slane %v5681, 3
      %v5684 = vshll.u32 %v5549, 16
      %v5686 = vrot.slane %v5684, 4
      %v5687 = vor.u32 %v5683, %v5686
      %v5688 = vsel %vm5172, %v5678, %v5687
      %v5690 = vshrl.u32 %v5550, 16
      %v5692 = vrot.slane %v5690, 3
      %v5693 = vshll.u32 %v5550, 16
      %v5695 = vrot.slane %v5693, 4
      %v5696 = vor.u32 %v5692, %v5695
      %v5697 = vsel %vm5172, %v5687, %v5696
      %v5699 = vshrl.u32 %v5551, 16
      %v5701 = vrot.slane %v5699, 3
      %v5702 = vshll.u32 %v5551, 16
      %v5704 = vrot.slane %v5702, 4
      %v5705 = vor.u32 %v5701, %v5704
      %v5706 = vsel %vm5172, %v5696, %v5705
      %v5708 = vshrl.u32 %v5552, 16
      %v5710 = vrot.slane %v5708, 3
      %v5711 = vshll.u32 %v5552, 16
      %v5713 = vrot.slane %v5711, 4
      %v5714 = vor.u32 %v5710, %v5713
      %v5715 = vsel %vm5172, %v5705, %v5714
      %v5717 = vshrl.u32 %v5553, 16
      %v5719 = vrot.slane %v5717, 3
      %v5720 = vshll.u32 %v5553, 16
      %v5722 = vrot.slane %v5720, 4
      %v5723 = vor.u32 %v5719, %v5722
      %v5724 = vsel %vm5172, %v5714, %v5723
      %v5726 = vshrl.u32 %v5554, 16
      %v5728 = vrot.slane %v5726, 3
      %v5729 = vshll.u32 %v5554, 16
      %v5731 = vrot.slane %v5729, 4
      %v5732 = vor.u32 %v5728, %v5731
      %v5733 = vsel %vm5172, %v5723, %v5732
      %v5735 = vshrl.u32 %v5555, 16
      %v5737 = vrot.slane %v5735, 3
      %v5738 = vshll.u32 %v5555, 16
      %v5740 = vrot.slane %v5738, 4
      %v5741 = vor.u32 %v5737, %v5740
      %v5742 = vsel %vm5172, %v5732, %v5741
      %v5777 = vunpack.c.l.b16 %v5557
      %v5778 = vunpack.c.l.b16 %v5558
      %v5779 = vunpack.c.l.b16 %v5559
      %v5780 = vunpack.c.l.b16 %v5560
      %v5781 = vunpack.c.l.b16 %v5561
      %v5782 = vunpack.c.l.b16 %v5562
      %v5783 = vunpack.c.l.b16 %v5563
      %v5784 = vunpack.c.l.b16 %v5564
      %v5785 = vunpack.c.l.b16 %v5565
      %v5786 = vunpack.c.l.b16 %v5566
      %v5787 = vunpack.c.l.b16 %v5567
      %v5788 = vunpack.c.l.b16 %v5568
      %v5789 = vunpack.c.l.b16 %v5569
      %v5790 = vunpack.c.l.b16 %v5570
      %v5791 = vunpack.c.l.b16 %v5571
      %v5792 = vunpack.c.l.b16 %v5572
      %v5793 = vpack.c.b16 %v5778, %v5777
      %v5794 = vpack.c.b16 %v5780, %v5779
      %v5795 = vpack.c.b16 %v5782, %v5781
      %v5796 = vpack.c.b16 %v5784, %v5783
      %v5797 = vpack.c.b16 %v5786, %v5785
      %v5798 = vpack.c.b16 %v5788, %v5787
      %v5799 = vpack.c.b16 %v5790, %v5789
      %v5800 = vpack.c.b16 %v5792, %v5791
      %5809 = vmatprep.subr.bf16.mxu0 0
      %5810 = vmatpush1.bf16.msra.mxu0 %v5793
      %5811 = vmatprep.subr.bf16.mxu0 0
      %5812 = vmatpush1.bf16.msra.mxu0 %v5794
      %5813 = vmatprep.subr.bf16.mxu0 0
      %5814 = vmatpush1.bf16.msra.mxu0 %v5795
      %5815 = vmatprep.subr.bf16.mxu0 0
      %5816 = vmatpush1.bf16.msra.mxu0 %v5796
      %5817 = vmatprep.subr.bf16.mxu0 0
      %5818 = vmatpush1.bf16.msra.mxu0 %v5797
      %5819 = vmatprep.subr.bf16.mxu0 0
      %5820 = vmatpush1.bf16.msra.mxu0 %v5798
      %5821 = vmatprep.subr.bf16.mxu0 0
      %5822 = vmatpush1.bf16.msra.mxu0 %v5799
      %5823 = vmatprep.subr.bf16.mxu0 0
      %5824 = vmatpush1.bf16.msra.mxu0 %v5800
      %5825 = vmatprep.subr.bf16.mxu0 0
      %5826 = vmatpush1.bf16.msra.mxu0 0
      %5827 = vmatprep.subr.bf16.mxu0 0
      %5828 = vmatpush1.bf16.msra.mxu0 0
      %5829 = vmatprep.subr.bf16.mxu0 0
      %5830 = vmatpush1.bf16.msra.mxu0 0
      %5831 = vmatprep.subr.bf16.mxu0 0
      %5832 = vmatpush1.bf16.msra.mxu0 0
      %5833 = vmatprep.subr.bf16.mxu0 0
      %5834 = vmatpush1.bf16.msra.mxu0 0
      %5835 = vmatprep.subr.bf16.mxu0 0
      %5836 = vmatpush1.bf16.msra.mxu0 0
      %5837 = vmatprep.subr.bf16.mxu0 0
      %5838 = vmatpush1.bf16.msra.mxu0 0
      %5839 = vmatprep.subr.bf16.mxu0 0
      %5840 = vmatpush1.bf16.msra.mxu0 0
      %5841 = vmatprep.mubr.bf16.mxu0 0
      %5842 = vmatmul.mubr.bf16.gmra.mrb[0].mxu0 %v5589
      %v5843 = vpop.f32.mrb[0].mxu0
      %v5844 = vadd.f32 0.0, %v5843
      %v5845 = vpop.f32.mrb[0].mxu0
      %v5846 = vpop.f32.mrb[0].mxu0
      %v5847 = vadd.f32 0.0, %v5846
      %v5848 = vpop.f32.mrb[0].mxu0
      %5849 = vmatprep.mubr.bf16.mxu0 0
      %5850 = vmatmul.mubr.bf16.gmra.mrb[0].mxu0 %v5598
      %v5851 = vpop.f32.mrb[0].mxu0
      %v5852 = vadd.f32 0.0, %v5851
      %v5853 = vpop.f32.mrb[0].mxu0
      %v5854 = vpop.f32.mrb[0].mxu0
      %v5855 = vadd.f32 0.0, %v5854
      %v5856 = vpop.f32.mrb[0].mxu0
      %5857 = vmatprep.mubr.bf16.mxu0 0
      %5858 = vmatmul.mubr.bf16.gmra.mrb[0].mxu0 %v5607
      %v5859 = vpop.f32.mrb[0].mxu0
      %v5860 = vadd.f32 0.0, %v5859
      %v5861 = vpop.f32.mrb[0].mxu0
      %v5862 = vpop.f32.mrb[0].mxu0
      %v5863 = vadd.f32 0.0, %v5862
      %v5864 = vpop.f32.mrb[0].mxu0
      %5865 = vmatprep.mubr.bf16.mxu0 0
      %5866 = vmatmul.mubr.bf16.gmra.mrb[0].mxu0 %v5616
      %v5867 = vpop.f32.mrb[0].mxu0
      %v5868 = vadd.f32 0.0, %v5867
      %v5869 = vpop.f32.mrb[0].mxu0
      %v5870 = vpop.f32.mrb[0].mxu0
      %v5871 = vadd.f32 0.0, %v5870
      %v5872 = vpop.f32.mrb[0].mxu0
      %5873 = vmatprep.mubr.bf16.mxu0 0
      %5874 = vmatmul.mubr.bf16.gmra.mrb[0].mxu0 %v5625
      %v5875 = vpop.f32.mrb[0].mxu0
      %v5876 = vadd.f32 0.0, %v5875
      %v5877 = vpop.f32.mrb[0].mxu0
      %v5878 = vpop.f32.mrb[0].mxu0
      %v5879 = vadd.f32 0.0, %v5878
      %v5880 = vpop.f32.mrb[0].mxu0
      %5881 = vmatprep.mubr.bf16.mxu0 0
      %5882 = vmatmul.mubr.bf16.gmra.mrb[0].mxu0 %v5634
      %v5883 = vpop.f32.mrb[0].mxu0
      %v5884 = vadd.f32 0.0, %v5883
      %v5885 = vpop.f32.mrb[0].mxu0
      %v5886 = vpop.f32.mrb[0].mxu0
      %v5887 = vadd.f32 0.0, %v5886
      %v5888 = vpop.f32.mrb[0].mxu0
      %5889 = vmatprep.mubr.bf16.mxu0 0
      %5890 = vmatmul.mubr.bf16.gmra.mrb[0].mxu0 %v5643
      %v5891 = vpop.f32.mrb[0].mxu0
      %v5892 = vadd.f32 0.0, %v5891
      %v5893 = vpop.f32.mrb[0].mxu0
      %v5894 = vpop.f32.mrb[0].mxu0
      %v5895 = vadd.f32 0.0, %v5894
      %v5896 = vpop.f32.mrb[0].mxu0
      %5897 = vmatprep.mubr.bf16.mxu0 0
      %5898 = vmatmul.mubr.bf16.gmra.mrb[0].mxu0 %v5652
      %v5899 = vpop.f32.mrb[0].mxu0
      %v5900 = vadd.f32 0.0, %v5899
      %v5901 = vpop.f32.mrb[0].mxu0
      %v5902 = vpop.f32.mrb[0].mxu0
      %v5903 = vadd.f32 0.0, %v5902
      %v5904 = vpop.f32.mrb[0].mxu0
      %5905 = vmatprep.mubr.bf16.mxu0 0
      %5906 = vmatmul.mubr.bf16.gmra.mrb[0].mxu0 %v5661
      %v5907 = vpop.f32.mrb[0].mxu0
      %v5908 = vadd.f32 0.0, %v5907
      %v5909 = vpop.f32.mrb[0].mxu0
      %v5910 = vpop.f32.mrb[0].mxu0
      %v5911 = vadd.f32 0.0, %v5910
      %v5912 = vpop.f32.mrb[0].mxu0
      %5913 = vmatprep.mubr.bf16.mxu0 0
      %5914 = vmatmul.mubr.bf16.gmra.mrb[0].mxu0 %v5670
      %v5915 = vpop.f32.mrb[0].mxu0
      %v5916 = vadd.f32 0.0, %v5915
      %v5917 = vpop.f32.mrb[0].mxu0
      %v5918 = vpop.f32.mrb[0].mxu0
      %v5919 = vadd.f32 0.0, %v5918
      %v5920 = vpop.f32.mrb[0].mxu0
      %5921 = vmatprep.mubr.bf16.mxu0 0
      %5922 = vmatmul.mubr.bf16.gmra.mrb[0].mxu0 %v5679
      %v5923 = vpop.f32.mrb[0].mxu0
      %v5924 = vadd.f32 0.0, %v5923
      %v5925 = vpop.f32.mrb[0].mxu0
      %v5926 = vpop.f32.mrb[0].mxu0
      %v5927 = vadd.f32 0.0, %v5926
      %v5928 = vpop.f32.mrb[0].mxu0
      %5929 = vmatprep.mubr.bf16.mxu0 0
      %5930 = vmatmul.mubr.bf16.gmra.mrb[0].mxu0 %v5688
      %v5931 = vpop.f32.mrb[0].mxu0
      %v5932 = vadd.f32 0.0, %v5931
      %v5933 = vpop.f32.mrb[0].mxu0
      %v5934 = vpop.f32.mrb[0].mxu0
      %v5935 = vadd.f32 0.0, %v5934
      %v5936 = vpop.f32.mrb[0].mxu0
      %5937 = vmatprep.mubr.bf16.mxu0 0
      %5938 = vmatmul.mubr.bf16.gmra.mrb[0].mxu0 %v5697
      %v5939 = vpop.f32.mrb[0].mxu0
      %v5940 = vadd.f32 0.0, %v5939
      %v5941 = vpop.f32.mrb[0].mxu0
      %v5942 = vpop.f32.mrb[0].mxu0
      %v5943 = vadd.f32 0.0, %v5942
      %v5944 = vpop.f32.mrb[0].mxu0
      %5945 = vmatprep.mubr.bf16.mxu0 0
      %5946 = vmatmul.mubr.bf16.gmra.mrb[0].mxu0 %v5706
      %v5947 = vpop.f32.mrb[0].mxu0
      %v5948 = vadd.f32 0.0, %v5947
      %v5949 = vpop.f32.mrb[0].mxu0
      %v5950 = vpop.f32.mrb[0].mxu0
      %v5951 = vadd.f32 0.0, %v5950
      %v5952 = vpop.f32.mrb[0].mxu0
      %5953 = vmatprep.mubr.bf16.mxu0 0
      %5954 = vmatmul.mubr.bf16.gmra.mrb[0].mxu0 %v5715
      %v5955 = vpop.f32.mrb[0].mxu0
      %v5956 = vadd.f32 0.0, %v5955
      %v5957 = vpop.f32.mrb[0].mxu0
      %v5958 = vpop.f32.mrb[0].mxu0
      %v5959 = vadd.f32 0.0, %v5958
      %v5960 = vpop.f32.mrb[0].mxu0
      %5961 = vmatprep.mubr.bf16.mxu0 0
      %5962 = vmatmul.mubr.bf16.gmra.mrb[0].mxu0 %v5724
      %v5963 = vpop.f32.mrb[0].mxu0
      %v5964 = vadd.f32 0.0, %v5963
      %v5965 = vpop.f32.mrb[0].mxu0
      %v5966 = vpop.f32.mrb[0].mxu0
      %v5967 = vadd.f32 0.0, %v5966
      %v5968 = vpop.f32.mrb[0].mxu0
      %5969 = vmatprep.mubr.bf16.mxu0 0
      %5970 = vmatmul.mubr.bf16.gmra.mrb[0].mxu0 %v5733
      %v5971 = vpop.f32.mrb[0].mxu0
      %v5972 = vadd.f32 0.0, %v5971
      %v5973 = vpop.f32.mrb[0].mxu0
      %v5974 = vpop.f32.mrb[0].mxu0
      %v5975 = vadd.f32 0.0, %v5974
      %v5976 = vpop.f32.mrb[0].mxu0
      %5977 = vmatprep.mubr.bf16.mxu0 0
      %5978 = vmatmul.mubr.bf16.gmra.mrb[0].mxu0 %v5742
      %v5979 = vpop.f32.mrb[0].mxu0
      %v5980 = vadd.f32 0.0, %v5979
      %v5981 = vpop.f32.mrb[0].mxu0
      %v5982 = vpop.f32.mrb[0].mxu0
      %v5983 = vadd.f32 0.0, %v5982
      %v5984 = vpop.f32.mrb[0].mxu0
      %5985 = vdwg.mxu0
      %v5986 = vadd.f32 %v5501, %v5844
      %v5987 = vadd.f32 %v5502, %v5847
      %v5988 = vadd.f32 %v5503, %v5852
      %v5989 = vadd.f32 %v5504, %v5855
      %v5990 = vadd.f32 %v5505, %v5860
      %v5991 = vadd.f32 %v5506, %v5863
      %v5992 = vadd.f32 %v5507, %v5868
      %v5993 = vadd.f32 %v5508, %v5871
      %v5994 = vadd.f32 %v5509, %v5876
      %v5995 = vadd.f32 %v5510, %v5879
      %v5996 = vadd.f32 %v5511, %v5884
      %v5997 = vadd.f32 %v5512, %v5887
      %v5998 = vadd.f32 %v5513, %v5892
      %v5999 = vadd.f32 %v5514, %v5895
      %v6000 = vadd.f32 %v5515, %v5900
      %v6001 = vadd.f32 %v5516, %v5903
      %v6002 = vadd.f32 %v5517, %v5908
      %v6003 = vadd.f32 %v5518, %v5911
      %v6004 = vadd.f32 %v5519, %v5916
      %v6005 = vadd.f32 %v5520, %v5919
      %v6006 = vadd.f32 %v5521, %v5924
      %v6007 = vadd.f32 %v5522, %v5927
      %v6008 = vadd.f32 %v5523, %v5932
      %v6009 = vadd.f32 %v5524, %v5935
      %v6010 = vadd.f32 %v5525, %v5940
      %v6011 = vadd.f32 %v5526, %v5943
      %v6012 = vadd.f32 %v5527, %v5948
      %v6013 = vadd.f32 %v5528, %v5951
      %v6014 = vadd.f32 %v5529, %v5956
      %v6015 = vadd.f32 %v5530, %v5959
      %v6016 = vadd.f32 %v5531, %v5964
      %v6017 = vadd.f32 %v5532, %v5967
      %v6018 = vadd.f32 %v5533, %v5972
      %v6019 = vadd.f32 %v5534, %v5975
      %v6020 = vadd.f32 %v5535, %v5980
      %v6021 = vadd.f32 %v5536, %v5983
      %v6022 = vld [vmem:[#allocation2 + $0x8] sm:$0xf0]
      %s6023 = scalar_lea.vmem %s2, 256
      %v6024 = vld [vmem:[%s6023] sm:$0xf]
      %v6025 = vld [vmem:[%s6023 + $0x4] sm:$0xf]
      %v6026 = vld [vmem:[%s6023 + $0x8] sm:$0xf]
      %v6027 = vld [vmem:[%s6023 + $0xc] sm:$0xf]
      %v6028 = vld [vmem:[%s6023 + $0x10] sm:$0xf]
      %v6029 = vld [vmem:[%s6023 + $0x14] sm:$0xf]
      %v6030 = vld [vmem:[%s6023 + $0x18] sm:$0xf]
      %v6031 = vld [vmem:[%s6023 + $0x1c] sm:$0xf]
      %v6032 = vld [vmem:[%s6023 + $0x20] sm:$0xf]
      %v6033 = vld [vmem:[%s6023 + $0x24] sm:$0xf]
      %v6034 = vld [vmem:[%s6023 + $0x28] sm:$0xf]
      %v6035 = vld [vmem:[%s6023 + $0x2c] sm:$0xf]
      %v6036 = vld [vmem:[%s6023 + $0x30] sm:$0xf]
      %v6037 = vld [vmem:[%s6023 + $0x34] sm:$0xf]
      %v6038 = vld [vmem:[%s6023 + $0x38] sm:$0xf]
      %v6039 = vld [vmem:[%s6023 + $0x3c] sm:$0xf]
      %v6059 = vrot.slane %v6022, 4
      %v6060 = vrot.slane %v5538, 4
      %v6061 = vsel %vm4315, %v6059, %v6060
      %v6062 = vrot.slane %v5539, 4
      %v6063 = vsel %vm4315, %v6060, %v6062
      %v6064 = vrot.slane %v5540, 4
      %v6065 = vsel %vm4315, %v6062, %v6064
      %v6066 = vrot.slane %v5541, 4
      %v6067 = vsel %vm4315, %v6064, %v6066
      %v6068 = vrot.slane %v5542, 4
      %v6069 = vsel %vm4315, %v6066, %v6068
      %v6070 = vrot.slane %v5543, 4
      %v6071 = vsel %vm4315, %v6068, %v6070
      %v6072 = vrot.slane %v5544, 4
      %v6073 = vsel %vm4315, %v6070, %v6072
      %v6074 = vrot.slane %v5545, 4
      %v6075 = vsel %vm4315, %v6072, %v6074
      %v6076 = vrot.slane %v5546, 4
      %v6077 = vsel %vm4315, %v6074, %v6076
      %v6078 = vrot.slane %v5547, 4
      %v6079 = vsel %vm4315, %v6076, %v6078
      %v6080 = vrot.slane %v5548, 4
      %v6081 = vsel %vm4315, %v6078, %v6080
      %v6082 = vrot.slane %v5549, 4
      %v6083 = vsel %vm4315, %v6080, %v6082
      %v6084 = vrot.slane %v5550, 4
      %v6085 = vsel %vm4315, %v6082, %v6084
      %v6086 = vrot.slane %v5551, 4
      %v6087 = vsel %vm4315, %v6084, %v6086
      %v6088 = vrot.slane %v5552, 4
      %v6089 = vsel %vm4315, %v6086, %v6088
      %v6090 = vrot.slane %v5553, 4
      %v6091 = vsel %vm4315, %v6088, %v6090
      %v6092 = vrot.slane %v5554, 4
      %v6093 = vsel %vm4315, %v6090, %v6092
      %v6094 = vrot.slane %v5555, 4
      %v6095 = vsel %vm4315, %v6092, %v6094
      %v6130 = vunpack.c.l.b16 %v6024
      %v6131 = vunpack.c.l.b16 %v6025
      %v6132 = vunpack.c.l.b16 %v6026
      %v6133 = vunpack.c.l.b16 %v6027
      %v6134 = vunpack.c.l.b16 %v6028
      %v6135 = vunpack.c.l.b16 %v6029
      %v6136 = vunpack.c.l.b16 %v6030
      %v6137 = vunpack.c.l.b16 %v6031
      %v6138 = vunpack.c.l.b16 %v6032
      %v6139 = vunpack.c.l.b16 %v6033
      %v6140 = vunpack.c.l.b16 %v6034
      %v6141 = vunpack.c.l.b16 %v6035
      %v6142 = vunpack.c.l.b16 %v6036
      %v6143 = vunpack.c.l.b16 %v6037
      %v6144 = vunpack.c.l.b16 %v6038
      %v6145 = vunpack.c.l.b16 %v6039
      %v6146 = vpack.c.b16 %v6131, %v6130
      %v6147 = vpack.c.b16 %v6133, %v6132
      %v6148 = vpack.c.b16 %v6135, %v6134
      %v6149 = vpack.c.b16 %v6137, %v6136
      %v6150 = vpack.c.b16 %v6139, %v6138
      %v6151 = vpack.c.b16 %v6141, %v6140
      %v6152 = vpack.c.b16 %v6143, %v6142
      %v6153 = vpack.c.b16 %v6145, %v6144
      %6162 = vmatprep.subr.bf16.mxu0 0
      %6163 = vmatpush1.bf16.msra.mxu0 %v6146
      %6164 = vmatprep.subr.bf16.mxu0 0
      %6165 = vmatpush1.bf16.msra.mxu0 %v6147
      %6166 = vmatprep.subr.bf16.mxu0 0
      %6167 = vmatpush1.bf16.msra.mxu0 %v6148
      %6168 = vmatprep.subr.bf16.mxu0 0
      %6169 = vmatpush1.bf16.msra.mxu0 %v6149
      %6170 = vmatprep.subr.bf16.mxu0 0
      %6171 = vmatpush1.bf16.msra.mxu0 %v6150
      %6172 = vmatprep.subr.bf16.mxu0 0
      %6173 = vmatpush1.bf16.msra.mxu0 %v6151
      %6174 = vmatprep.subr.bf16.mxu0 0
      %6175 = vmatpush1.bf16.msra.mxu0 %v6152
      %6176 = vmatprep.subr.bf16.mxu0 0
      %6177 = vmatpush1.bf16.msra.mxu0 %v6153
      %6178 = vmatprep.subr.bf16.mxu0 0
      %6179 = vmatpush1.bf16.msra.mxu0 0
      %6180 = vmatprep.subr.bf16.mxu0 0
      %6181 = vmatpush1.bf16.msra.mxu0 0
      %6182 = vmatprep.subr.bf16.mxu0 0
      %6183 = vmatpush1.bf16.msra.mxu0 0
      %6184 = vmatprep.subr.bf16.mxu0 0
      %6185 = vmatpush1.bf16.msra.mxu0 0
      %6186 = vmatprep.subr.bf16.mxu0 0
      %6187 = vmatpush1.bf16.msra.mxu0 0
      %6188 = vmatprep.subr.bf16.mxu0 0
      %6189 = vmatpush1.bf16.msra.mxu0 0
      %6190 = vmatprep.subr.bf16.mxu0 0
      %6191 = vmatpush1.bf16.msra.mxu0 0
      %6192 = vmatprep.subr.bf16.mxu0 0
      %6193 = vmatpush1.bf16.msra.mxu0 0
      %6194 = vmatprep.mubr.bf16.mxu0 0
      %6195 = vmatmul.mubr.bf16.gmra.mrb[0].mxu0 %v6061
      %v6196 = vpop.f32.mrb[0].mxu0
      %v6197 = vadd.f32 0.0, %v6196
      %v6198 = vpop.f32.mrb[0].mxu0
      %v6199 = vpop.f32.mrb[0].mxu0
      %v6200 = vadd.f32 0.0, %v6199
      %v6201 = vpop.f32.mrb[0].mxu0
      %6202 = vmatprep.mubr.bf16.mxu0 0
      %6203 = vmatmul.mubr.bf16.gmra.mrb[0].mxu0 %v6063
      %v6204 = vpop.f32.mrb[0].mxu0
      %v6205 = vadd.f32 0.0, %v6204
      %v6206 = vpop.f32.mrb[0].mxu0
      %v6207 = vpop.f32.mrb[0].mxu0
      %v6208 = vadd.f32 0.0, %v6207
      %v6209 = vpop.f32.mrb[0].mxu0
      %6210 = vmatprep.mubr.bf16.mxu0 0
      %6211 = vmatmul.mubr.bf16.gmra.mrb[0].mxu0 %v6065
      %v6212 = vpop.f32.mrb[0].mxu0
      %v6213 = vadd.f32 0.0, %v6212
      %v6214 = vpop.f32.mrb[0].mxu0
      %v6215 = vpop.f32.mrb[0].mxu0
      %v6216 = vadd.f32 0.0, %v6215
      %v6217 = vpop.f32.mrb[0].mxu0
      %6218 = vmatprep.mubr.bf16.mxu0 0
      %6219 = vmatmul.mubr.bf16.gmra.mrb[0].mxu0 %v6067
      %v6220 = vpop.f32.mrb[0].mxu0
      %v6221 = vadd.f32 0.0, %v6220
      %v6222 = vpop.f32.mrb[0].mxu0
      %v6223 = vpop.f32.mrb[0].mxu0
      %v6224 = vadd.f32 0.0, %v6223
      %v6225 = vpop.f32.mrb[0].mxu0
      %6226 = vmatprep.mubr.bf16.mxu0 0
      %6227 = vmatmul.mubr.bf16.gmra.mrb[0].mxu0 %v6069
      %v6228 = vpop.f32.mrb[0].mxu0
      %v6229 = vadd.f32 0.0, %v6228
      %v6230 = vpop.f32.mrb[0].mxu0
      %v6231 = vpop.f32.mrb[0].mxu0
      %v6232 = vadd.f32 0.0, %v6231
      %v6233 = vpop.f32.mrb[0].mxu0
      %6234 = vmatprep.mubr.bf16.mxu0 0
      %6235 = vmatmul.mubr.bf16.gmra.mrb[0].mxu0 %v6071
      %v6236 = vpop.f32.mrb[0].mxu0
      %v6237 = vadd.f32 0.0, %v6236
      %v6238 = vpop.f32.mrb[0].mxu0
      %v6239 = vpop.f32.mrb[0].mxu0
      %v6240 = vadd.f32 0.0, %v6239
      %v6241 = vpop.f32.mrb[0].mxu0
      %6242 = vmatprep.mubr.bf16.mxu0 0
      %6243 = vmatmul.mubr.bf16.gmra.mrb[0].mxu0 %v6073
      %v6244 = vpop.f32.mrb[0].mxu0
      %v6245 = vadd.f32 0.0, %v6244
      %v6246 = vpop.f32.mrb[0].mxu0
      %v6247 = vpop.f32.mrb[0].mxu0
      %v6248 = vadd.f32 0.0, %v6247
      %v6249 = vpop.f32.mrb[0].mxu0
      %6250 = vmatprep.mubr.bf16.mxu0 0
      %6251 = vmatmul.mubr.bf16.gmra.mrb[0].mxu0 %v6075
      %v6252 = vpop.f32.mrb[0].mxu0
      %v6253 = vadd.f32 0.0, %v6252
      %v6254 = vpop.f32.mrb[0].mxu0
      %v6255 = vpop.f32.mrb[0].mxu0
      %v6256 = vadd.f32 0.0, %v6255
      %v6257 = vpop.f32.mrb[0].mxu0
      %6258 = vmatprep.mubr.bf16.mxu0 0
      %6259 = vmatmul.mubr.bf16.gmra.mrb[0].mxu0 %v6077
      %v6260 = vpop.f32.mrb[0].mxu0
      %v6261 = vadd.f32 0.0, %v6260
      %v6262 = vpop.f32.mrb[0].mxu0
      %v6263 = vpop.f32.mrb[0].mxu0
      %v6264 = vadd.f32 0.0, %v6263
      %v6265 = vpop.f32.mrb[0].mxu0
      %6266 = vmatprep.mubr.bf16.mxu0 0
      %6267 = vmatmul.mubr.bf16.gmra.mrb[0].mxu0 %v6079
      %v6268 = vpop.f32.mrb[0].mxu0
      %v6269 = vadd.f32 0.0, %v6268
      %v6270 = vpop.f32.mrb[0].mxu0
      %v6271 = vpop.f32.mrb[0].mxu0
      %v6272 = vadd.f32 0.0, %v6271
      %v6273 = vpop.f32.mrb[0].mxu0
      %6274 = vmatprep.mubr.bf16.mxu0 0
      %6275 = vmatmul.mubr.bf16.gmra.mrb[0].mxu0 %v6081
      %v6276 = vpop.f32.mrb[0].mxu0
      %v6277 = vadd.f32 0.0, %v6276
      %v6278 = vpop.f32.mrb[0].mxu0
      %v6279 = vpop.f32.mrb[0].mxu0
      %v6280 = vadd.f32 0.0, %v6279
      %v6281 = vpop.f32.mrb[0].mxu0
      %6282 = vmatprep.mubr.bf16.mxu0 0
      %6283 = vmatmul.mubr.bf16.gmra.mrb[0].mxu0 %v6083
      %v6284 = vpop.f32.mrb[0].mxu0
      %v6285 = vadd.f32 0.0, %v6284
      %v6286 = vpop.f32.mrb[0].mxu0
      %v6287 = vpop.f32.mrb[0].mxu0
      %v6288 = vadd.f32 0.0, %v6287
      %v6289 = vpop.f32.mrb[0].mxu0
      %6290 = vmatprep.mubr.bf16.mxu0 0
      %6291 = vmatmul.mubr.bf16.gmra.mrb[0].mxu0 %v6085
      %v6292 = vpop.f32.mrb[0].mxu0
      %v6293 = vadd.f32 0.0, %v6292
      %v6294 = vpop.f32.mrb[0].mxu0
      %v6295 = vpop.f32.mrb[0].mxu0
      %v6296 = vadd.f32 0.0, %v6295
      %v6297 = vpop.f32.mrb[0].mxu0
      %6298 = vmatprep.mubr.bf16.mxu0 0
      %6299 = vmatmul.mubr.bf16.gmra.mrb[0].mxu0 %v6087
      %v6300 = vpop.f32.mrb[0].mxu0
      %v6301 = vadd.f32 0.0, %v6300
      %v6302 = vpop.f32.mrb[0].mxu0
      %v6303 = vpop.f32.mrb[0].mxu0
      %v6304 = vadd.f32 0.0, %v6303
      %v6305 = vpop.f32.mrb[0].mxu0
      %6306 = vmatprep.mubr.bf16.mxu0 0
      %6307 = vmatmul.mubr.bf16.gmra.mrb[0].mxu0 %v6089
      %v6308 = vpop.f32.mrb[0].mxu0
      %v6309 = vadd.f32 0.0, %v6308
      %v6310 = vpop.f32.mrb[0].mxu0
      %v6311 = vpop.f32.mrb[0].mxu0
      %v6312 = vadd.f32 0.0, %v6311
      %v6313 = vpop.f32.mrb[0].mxu0
      %6314 = vmatprep.mubr.bf16.mxu0 0
      %6315 = vmatmul.mubr.bf16.gmra.mrb[0].mxu0 %v6091
      %v6316 = vpop.f32.mrb[0].mxu0
      %v6317 = vadd.f32 0.0, %v6316
      %v6318 = vpop.f32.mrb[0].mxu0
      %v6319 = vpop.f32.mrb[0].mxu0
      %v6320 = vadd.f32 0.0, %v6319
      %v6321 = vpop.f32.mrb[0].mxu0
      %6322 = vmatprep.mubr.bf16.mxu0 0
      %6323 = vmatmul.mubr.bf16.gmra.mrb[0].mxu0 %v6093
      %v6324 = vpop.f32.mrb[0].mxu0
      %v6325 = vadd.f32 0.0, %v6324
      %v6326 = vpop.f32.mrb[0].mxu0
      %v6327 = vpop.f32.mrb[0].mxu0
      %v6328 = vadd.f32 0.0, %v6327
      %v6329 = vpop.f32.mrb[0].mxu0
      %6330 = vmatprep.mubr.bf16.mxu0 0
      %6331 = vmatmul.mubr.bf16.gmra.mrb[0].mxu0 %v6095
      %v6332 = vpop.f32.mrb[0].mxu0
      %v6333 = vadd.f32 0.0, %v6332
      %v6334 = vpop.f32.mrb[0].mxu0
      %v6335 = vpop.f32.mrb[0].mxu0
      %v6336 = vadd.f32 0.0, %v6335
      %v6337 = vpop.f32.mrb[0].mxu0
      %6338 = vdwg.mxu0
      %v6339 = vadd.f32 %v5986, %v6197
      %v6340 = vadd.f32 %v5987, %v6200
      %v6341 = vadd.f32 %v5988, %v6205
      %v6342 = vadd.f32 %v5989, %v6208
      %v6343 = vadd.f32 %v5990, %v6213
      %v6344 = vadd.f32 %v5991, %v6216
      %v6345 = vadd.f32 %v5992, %v6221
      %v6346 = vadd.f32 %v5993, %v6224
      %v6347 = vadd.f32 %v5994, %v6229
      %v6348 = vadd.f32 %v5995, %v6232
      %v6349 = vadd.f32 %v5996, %v6237
      %v6350 = vadd.f32 %v5997, %v6240
      %v6351 = vadd.f32 %v5998, %v6245
      %v6352 = vadd.f32 %v5999, %v6248
      %v6353 = vadd.f32 %v6000, %v6253
      %v6354 = vadd.f32 %v6001, %v6256
      %v6355 = vadd.f32 %v6002, %v6261
      %v6356 = vadd.f32 %v6003, %v6264
      %v6357 = vadd.f32 %v6004, %v6269
      %v6358 = vadd.f32 %v6005, %v6272
      %v6359 = vadd.f32 %v6006, %v6277
      %v6360 = vadd.f32 %v6007, %v6280
      %v6361 = vadd.f32 %v6008, %v6285
      %v6362 = vadd.f32 %v6009, %v6288
      %v6363 = vadd.f32 %v6010, %v6293
      %v6364 = vadd.f32 %v6011, %v6296
      %v6365 = vadd.f32 %v6012, %v6301
      %v6366 = vadd.f32 %v6013, %v6304
      %v6367 = vadd.f32 %v6014, %v6309
      %v6368 = vadd.f32 %v6015, %v6312
      %v6369 = vadd.f32 %v6016, %v6317
      %v6370 = vadd.f32 %v6017, %v6320
      %v6371 = vadd.f32 %v6018, %v6325
      %v6372 = vadd.f32 %v6019, %v6328
      %v6373 = vadd.f32 %v6020, %v6333
      %v6374 = vadd.f32 %v6021, %v6336
      %v6375 = vld [vmem:[#allocation2 + $0x98] sm:$0x1f]
      %s6376 = scalar_lea.vmem %s2, 320
      %v6377 = vld [vmem:[%s6376] sm:$0xf]
      %v6378 = vld [vmem:[%s6376 + $0x4] sm:$0xf]
      %v6379 = vld [vmem:[%s6376 + $0x8] sm:$0xf]
      %v6380 = vld [vmem:[%s6376 + $0xc] sm:$0xf]
      %v6381 = vld [vmem:[%s6376 + $0x10] sm:$0xf]
      %v6382 = vld [vmem:[%s6376 + $0x14] sm:$0xf]
      %v6383 = vld [vmem:[%s6376 + $0x18] sm:$0xf]
      %v6384 = vld [vmem:[%s6376 + $0x1c] sm:$0xf]
      %v6385 = vld [vmem:[%s6376 + $0x20] sm:$0xf]
      %v6386 = vld [vmem:[%s6376 + $0x24] sm:$0xf]
      %v6387 = vld [vmem:[%s6376 + $0x28] sm:$0xf]
      %v6388 = vld [vmem:[%s6376 + $0x2c] sm:$0xf]
      %v6389 = vld [vmem:[%s6376 + $0x30] sm:$0xf]
      %v6390 = vld [vmem:[%s6376 + $0x34] sm:$0xf]
      %v6391 = vld [vmem:[%s6376 + $0x38] sm:$0xf]
      %v6392 = vld [vmem:[%s6376 + $0x3c] sm:$0xf]
      %vm6393 = vsmask.f32 3328
      %v6395 = vshrl.u32 %v6022, 16
      %v6397 = vrot.slane %v6395, 4
      %v6398 = vshll.u32 %v6022, 16
      %v6400 = vrot.slane %v6398, 5
      %v6401 = vor.u32 %v6397, %v6400
      %v6402 = vrot.slane %v5582, 4
      %v6403 = vrot.slane %v5585, 5
      %v6404 = vor.u32 %v6402, %v6403
      %v6405 = vsel %vm6393, %v6401, %v6404
      %v6406 = vrot.slane %v5591, 4
      %v6407 = vrot.slane %v5594, 5
      %v6408 = vor.u32 %v6406, %v6407
      %v6409 = vsel %vm6393, %v6404, %v6408
      %v6410 = vrot.slane %v5600, 4
      %v6411 = vrot.slane %v5603, 5
      %v6412 = vor.u32 %v6410, %v6411
      %v6413 = vsel %vm6393, %v6408, %v6412
      %v6414 = vrot.slane %v5609, 4
      %v6415 = vrot.slane %v5612, 5
      %v6416 = vor.u32 %v6414, %v6415
      %v6417 = vsel %vm6393, %v6412, %v6416
      %v6418 = vrot.slane %v5618, 4
      %v6419 = vrot.slane %v5621, 5
      %v6420 = vor.u32 %v6418, %v6419
      %v6421 = vsel %vm6393, %v6416, %v6420
      %v6422 = vrot.slane %v5627, 4
      %v6423 = vrot.slane %v5630, 5
      %v6424 = vor.u32 %v6422, %v6423
      %v6425 = vsel %vm6393, %v6420, %v6424
      %v6426 = vrot.slane %v5636, 4
      %v6427 = vrot.slane %v5639, 5
      %v6428 = vor.u32 %v6426, %v6427
      %v6429 = vsel %vm6393, %v6424, %v6428
      %v6430 = vrot.slane %v5645, 4
      %v6431 = vrot.slane %v5648, 5
      %v6432 = vor.u32 %v6430, %v6431
      %v6433 = vsel %vm6393, %v6428, %v6432
      %v6434 = vrot.slane %v5654, 4
      %v6435 = vrot.slane %v5657, 5
      %v6436 = vor.u32 %v6434, %v6435
      %v6437 = vsel %vm6393, %v6432, %v6436
      %v6438 = vrot.slane %v5663, 4
      %v6439 = vrot.slane %v5666, 5
      %v6440 = vor.u32 %v6438, %v6439
      %v6441 = vsel %vm6393, %v6436, %v6440
      %v6442 = vrot.slane %v5672, 4
      %v6443 = vrot.slane %v5675, 5
      %v6444 = vor.u32 %v6442, %v6443
      %v6445 = vsel %vm6393, %v6440, %v6444
      %v6446 = vrot.slane %v5681, 4
      %v6447 = vrot.slane %v5684, 5
      %v6448 = vor.u32 %v6446, %v6447
      %v6449 = vsel %vm6393, %v6444, %v6448
      %v6450 = vrot.slane %v5690, 4
      %v6451 = vrot.slane %v5693, 5
      %v6452 = vor.u32 %v6450, %v6451
      %v6453 = vsel %vm6393, %v6448, %v6452
      %v6454 = vrot.slane %v5699, 4
      %v6455 = vrot.slane %v5702, 5
      %v6456 = vor.u32 %v6454, %v6455
      %v6457 = vsel %vm6393, %v6452, %v6456
      %v6458 = vrot.slane %v5708, 4
      %v6459 = vrot.slane %v5711, 5
      %v6460 = vor.u32 %v6458, %v6459
      %v6461 = vsel %vm6393, %v6456, %v6460
      %v6462 = vrot.slane %v5717, 4
      %v6463 = vrot.slane %v5720, 5
      %v6464 = vor.u32 %v6462, %v6463
      %v6465 = vsel %vm6393, %v6460, %v6464
      %v6466 = vrot.slane %v5726, 4
      %v6467 = vrot.slane %v5729, 5
      %v6468 = vor.u32 %v6466, %v6467
      %v6469 = vsel %vm6393, %v6464, %v6468
      %v6471 = vshrl.u32 %v6375, 16
      %v6473 = vrot.slane %v6471, 4
      %v6474 = vshll.u32 %v6375, 16
      %v6476 = vrot.slane %v6474, 5
      %v6477 = vor.u32 %v6473, %v6476
      %v6478 = vsel %vm6393, %v6468, %v6477
      %v6513 = vunpack.c.l.b16 %v6377
      %v6514 = vunpack.c.l.b16 %v6378
      %v6515 = vunpack.c.l.b16 %v6379
      %v6516 = vunpack.c.l.b16 %v6380
      %v6517 = vunpack.c.l.b16 %v6381
      %v6518 = vunpack.c.l.b16 %v6382
      %v6519 = vunpack.c.l.b16 %v6383
      %v6520 = vunpack.c.l.b16 %v6384
      %v6521 = vunpack.c.l.b16 %v6385
      %v6522 = vunpack.c.l.b16 %v6386
      %v6523 = vunpack.c.l.b16 %v6387
      %v6524 = vunpack.c.l.b16 %v6388
      %v6525 = vunpack.c.l.b16 %v6389
      %v6526 = vunpack.c.l.b16 %v6390
      %v6527 = vunpack.c.l.b16 %v6391
      %v6528 = vunpack.c.l.b16 %v6392
      %v6529 = vpack.c.b16 %v6514, %v6513
      %v6530 = vpack.c.b16 %v6516, %v6515
      %v6531 = vpack.c.b16 %v6518, %v6517
      %v6532 = vpack.c.b16 %v6520, %v6519
      %v6533 = vpack.c.b16 %v6522, %v6521
      %v6534 = vpack.c.b16 %v6524, %v6523
      %v6535 = vpack.c.b16 %v6526, %v6525
      %v6536 = vpack.c.b16 %v6528, %v6527
      %6545 = vmatprep.subr.bf16.mxu0 0
      %6546 = vmatpush1.bf16.msra.mxu0 %v6529
      %6547 = vmatprep.subr.bf16.mxu0 0
      %6548 = vmatpush1.bf16.msra.mxu0 %v6530
      %6549 = vmatprep.subr.bf16.mxu0 0
      %6550 = vmatpush1.bf16.msra.mxu0 %v6531
      %6551 = vmatprep.subr.bf16.mxu0 0
      %6552 = vmatpush1.bf16.msra.mxu0 %v6532
      %6553 = vmatprep.subr.bf16.mxu0 0
      %6554 = vmatpush1.bf16.msra.mxu0 %v6533
      %6555 = vmatprep.subr.bf16.mxu0 0
      %6556 = vmatpush1.bf16.msra.mxu0 %v6534
      %6557 = vmatprep.subr.bf16.mxu0 0
      %6558 = vmatpush1.bf16.msra.mxu0 %v6535
      %6559 = vmatprep.subr.bf16.mxu0 0
      %6560 = vmatpush1.bf16.msra.mxu0 %v6536
      %6561 = vmatprep.subr.bf16.mxu0 0
      %6562 = vmatpush1.bf16.msra.mxu0 0
      %6563 = vmatprep.subr.bf16.mxu0 0
      %6564 = vmatpush1.bf16.msra.mxu0 0
      %6565 = vmatprep.subr.bf16.mxu0 0
      %6566 = vmatpush1.bf16.msra.mxu0 0
      %6567 = vmatprep.subr.bf16.mxu0 0
      %6568 = vmatpush1.bf16.msra.mxu0 0
      %6569 = vmatprep.subr.bf16.mxu0 0
      %6570 = vmatpush1.bf16.msra.mxu0 0
      %6571 = vmatprep.subr.bf16.mxu0 0
      %6572 = vmatpush1.bf16.msra.mxu0 0
      %6573 = vmatprep.subr.bf16.mxu0 0
      %6574 = vmatpush1.bf16.msra.mxu0 0
      %6575 = vmatprep.subr.bf16.mxu0 0
      %6576 = vmatpush1.bf16.msra.mxu0 0
      %6577 = vmatprep.mubr.bf16.mxu0 0
      %6578 = vmatmul.mubr.bf16.gmra.mrb[0].mxu0 %v6405
      %v6579 = vpop.f32.mrb[0].mxu0
      %v6580 = vadd.f32 0.0, %v6579
      %v6581 = vpop.f32.mrb[0].mxu0
      %v6582 = vpop.f32.mrb[0].mxu0
      %v6583 = vadd.f32 0.0, %v6582
      %v6584 = vpop.f32.mrb[0].mxu0
      %6585 = vmatprep.mubr.bf16.mxu0 0
      %6586 = vmatmul.mubr.bf16.gmra.mrb[0].mxu0 %v6409
      %v6587 = vpop.f32.mrb[0].mxu0
      %v6588 = vadd.f32 0.0, %v6587
      %v6589 = vpop.f32.mrb[0].mxu0
      %v6590 = vpop.f32.mrb[0].mxu0
      %v6591 = vadd.f32 0.0, %v6590
      %v6592 = vpop.f32.mrb[0].mxu0
      %6593 = vmatprep.mubr.bf16.mxu0 0
      %6594 = vmatmul.mubr.bf16.gmra.mrb[0].mxu0 %v6413
      %v6595 = vpop.f32.mrb[0].mxu0
      %v6596 = vadd.f32 0.0, %v6595
      %v6597 = vpop.f32.mrb[0].mxu0
      %v6598 = vpop.f32.mrb[0].mxu0
      %v6599 = vadd.f32 0.0, %v6598
      %v6600 = vpop.f32.mrb[0].mxu0
      %6601 = vmatprep.mubr.bf16.mxu0 0
      %6602 = vmatmul.mubr.bf16.gmra.mrb[0].mxu0 %v6417
      %v6603 = vpop.f32.mrb[0].mxu0
      %v6604 = vadd.f32 0.0, %v6603
      %v6605 = vpop.f32.mrb[0].mxu0
      %v6606 = vpop.f32.mrb[0].mxu0
      %v6607 = vadd.f32 0.0, %v6606
      %v6608 = vpop.f32.mrb[0].mxu0
      %6609 = vmatprep.mubr.bf16.mxu0 0
      %6610 = vmatmul.mubr.bf16.gmra.mrb[0].mxu0 %v6421
      %v6611 = vpop.f32.mrb[0].mxu0
      %v6612 = vadd.f32 0.0, %v6611
      %v6613 = vpop.f32.mrb[0].mxu0
      %v6614 = vpop.f32.mrb[0].mxu0
      %v6615 = vadd.f32 0.0, %v6614
      %v6616 = vpop.f32.mrb[0].mxu0
      %6617 = vmatprep.mubr.bf16.mxu0 0
      %6618 = vmatmul.mubr.bf16.gmra.mrb[0].mxu0 %v6425
      %v6619 = vpop.f32.mrb[0].mxu0
      %v6620 = vadd.f32 0.0, %v6619
      %v6621 = vpop.f32.mrb[0].mxu0
      %v6622 = vpop.f32.mrb[0].mxu0
      %v6623 = vadd.f32 0.0, %v6622
      %v6624 = vpop.f32.mrb[0].mxu0
      %6625 = vmatprep.mubr.bf16.mxu0 0
      %6626 = vmatmul.mubr.bf16.gmra.mrb[0].mxu0 %v6429
      %v6627 = vpop.f32.mrb[0].mxu0
      %v6628 = vadd.f32 0.0, %v6627
      %v6629 = vpop.f32.mrb[0].mxu0
      %v6630 = vpop.f32.mrb[0].mxu0
      %v6631 = vadd.f32 0.0, %v6630
      %v6632 = vpop.f32.mrb[0].mxu0
      %6633 = vmatprep.mubr.bf16.mxu0 0
      %6634 = vmatmul.mubr.bf16.gmra.mrb[0].mxu0 %v6433
      %v6635 = vpop.f32.mrb[0].mxu0
      %v6636 = vadd.f32 0.0, %v6635
      %v6637 = vpop.f32.mrb[0].mxu0
      %v6638 = vpop.f32.mrb[0].mxu0
      %v6639 = vadd.f32 0.0, %v6638
      %v6640 = vpop.f32.mrb[0].mxu0
      %6641 = vmatprep.mubr.bf16.mxu0 0
      %6642 = vmatmul.mubr.bf16.gmra.mrb[0].mxu0 %v6437
      %v6643 = vpop.f32.mrb[0].mxu0
      %v6644 = vadd.f32 0.0, %v6643
      %v6645 = vpop.f32.mrb[0].mxu0
      %v6646 = vpop.f32.mrb[0].mxu0
      %v6647 = vadd.f32 0.0, %v6646
      %v6648 = vpop.f32.mrb[0].mxu0
      %6649 = vmatprep.mubr.bf16.mxu0 0
      %6650 = vmatmul.mubr.bf16.gmra.mrb[0].mxu0 %v6441
      %v6651 = vpop.f32.mrb[0].mxu0
      %v6652 = vadd.f32 0.0, %v6651
      %v6653 = vpop.f32.mrb[0].mxu0
      %v6654 = vpop.f32.mrb[0].mxu0
      %v6655 = vadd.f32 0.0, %v6654
      %v6656 = vpop.f32.mrb[0].mxu0
      %6657 = vmatprep.mubr.bf16.mxu0 0
      %6658 = vmatmul.mubr.bf16.gmra.mrb[0].mxu0 %v6445
      %v6659 = vpop.f32.mrb[0].mxu0
      %v6660 = vadd.f32 0.0, %v6659
      %v6661 = vpop.f32.mrb[0].mxu0
      %v6662 = vpop.f32.mrb[0].mxu0
      %v6663 = vadd.f32 0.0, %v6662
      %v6664 = vpop.f32.mrb[0].mxu0
      %6665 = vmatprep.mubr.bf16.mxu0 0
      %6666 = vmatmul.mubr.bf16.gmra.mrb[0].mxu0 %v6449
      %v6667 = vpop.f32.mrb[0].mxu0
      %v6668 = vadd.f32 0.0, %v6667
      %v6669 = vpop.f32.mrb[0].mxu0
      %v6670 = vpop.f32.mrb[0].mxu0
      %v6671 = vadd.f32 0.0, %v6670
      %v6672 = vpop.f32.mrb[0].mxu0
      %6673 = vmatprep.mubr.bf16.mxu0 0
      %6674 = vmatmul.mubr.bf16.gmra.mrb[0].mxu0 %v6453
      %v6675 = vpop.f32.mrb[0].mxu0
      %v6676 = vadd.f32 0.0, %v6675
      %v6677 = vpop.f32.mrb[0].mxu0
      %v6678 = vpop.f32.mrb[0].mxu0
      %v6679 = vadd.f32 0.0, %v6678
      %v6680 = vpop.f32.mrb[0].mxu0
      %6681 = vmatprep.mubr.bf16.mxu0 0
      %6682 = vmatmul.mubr.bf16.gmra.mrb[0].mxu0 %v6457
      %v6683 = vpop.f32.mrb[0].mxu0
      %v6684 = vadd.f32 0.0, %v6683
      %v6685 = vpop.f32.mrb[0].mxu0
      %v6686 = vpop.f32.mrb[0].mxu0
      %v6687 = vadd.f32 0.0, %v6686
      %v6688 = vpop.f32.mrb[0].mxu0
      %6689 = vmatprep.mubr.bf16.mxu0 0
      %6690 = vmatmul.mubr.bf16.gmra.mrb[0].mxu0 %v6461
      %v6691 = vpop.f32.mrb[0].mxu0
      %v6692 = vadd.f32 0.0, %v6691
      %v6693 = vpop.f32.mrb[0].mxu0
      %v6694 = vpop.f32.mrb[0].mxu0
      %v6695 = vadd.f32 0.0, %v6694
      %v6696 = vpop.f32.mrb[0].mxu0
      %6697 = vmatprep.mubr.bf16.mxu0 0
      %6698 = vmatmul.mubr.bf16.gmra.mrb[0].mxu0 %v6465
      %v6699 = vpop.f32.mrb[0].mxu0
      %v6700 = vadd.f32 0.0, %v6699
      %v6701 = vpop.f32.mrb[0].mxu0
      %v6702 = vpop.f32.mrb[0].mxu0
      %v6703 = vadd.f32 0.0, %v6702
      %v6704 = vpop.f32.mrb[0].mxu0
      %6705 = vmatprep.mubr.bf16.mxu0 0
      %6706 = vmatmul.mubr.bf16.gmra.mrb[0].mxu0 %v6469
      %v6707 = vpop.f32.mrb[0].mxu0
      %v6708 = vadd.f32 0.0, %v6707
      %v6709 = vpop.f32.mrb[0].mxu0
      %v6710 = vpop.f32.mrb[0].mxu0
      %v6711 = vadd.f32 0.0, %v6710
      %v6712 = vpop.f32.mrb[0].mxu0
      %6713 = vmatprep.mubr.bf16.mxu0 0
      %6714 = vmatmul.mubr.bf16.gmra.mrb[0].mxu0 %v6478
      %v6715 = vpop.f32.mrb[0].mxu0
      %v6716 = vadd.f32 0.0, %v6715
      %v6717 = vpop.f32.mrb[0].mxu0
      %v6718 = vpop.f32.mrb[0].mxu0
      %v6719 = vadd.f32 0.0, %v6718
      %v6720 = vpop.f32.mrb[0].mxu0
      %6721 = vdwg.mxu0
      %v6722 = vadd.f32 %v6339, %v6580
      %v6723 = vadd.f32 %v6340, %v6583
      %v6724 = vadd.f32 %v6341, %v6588
      %v6725 = vadd.f32 %v6342, %v6591
      %v6726 = vadd.f32 %v6343, %v6596
      %v6727 = vadd.f32 %v6344, %v6599
      %v6728 = vadd.f32 %v6345, %v6604
      %v6729 = vadd.f32 %v6346, %v6607
      %v6730 = vadd.f32 %v6347, %v6612
      %v6731 = vadd.f32 %v6348, %v6615
      %v6732 = vadd.f32 %v6349, %v6620
      %v6733 = vadd.f32 %v6350, %v6623
      %v6734 = vadd.f32 %v6351, %v6628
      %v6735 = vadd.f32 %v6352, %v6631
      %v6736 = vadd.f32 %v6353, %v6636
      %v6737 = vadd.f32 %v6354, %v6639
      %v6738 = vadd.f32 %v6355, %v6644
      %v6739 = vadd.f32 %v6356, %v6647
      %v6740 = vadd.f32 %v6357, %v6652
      %v6741 = vadd.f32 %v6358, %v6655
      %v6742 = vadd.f32 %v6359, %v6660
      %v6743 = vadd.f32 %v6360, %v6663
      %v6744 = vadd.f32 %v6361, %v6668
      %v6745 = vadd.f32 %v6362, %v6671
      %v6746 = vadd.f32 %v6363, %v6676
      %v6747 = vadd.f32 %v6364, %v6679
      %v6748 = vadd.f32 %v6365, %v6684
      %v6749 = vadd.f32 %v6366, %v6687
      %v6750 = vadd.f32 %v6367, %v6692
      %v6751 = vadd.f32 %v6368, %v6695
      %v6752 = vadd.f32 %v6369, %v6700
      %v6753 = vadd.f32 %v6370, %v6703
      %v6754 = vadd.f32 %v6371, %v6708
      %v6755 = vadd.f32 %v6372, %v6711
      %v6756 = vadd.f32 %v6373, %v6716
      %v6757 = vadd.f32 %v6374, %v6719
      %v6758 = vld [vmem:[#allocation2 + $0x10] sm:$0xf0]
      %v6759 = vld [vmem:[#allocation2 + $0x18] sm:$0xff]
      %v6760 = vld [vmem:[#allocation2 + $0x20] sm:$0xff]
      %v6761 = vld [vmem:[#allocation2 + $0x28] sm:$0xff]
      %v6762 = vld [vmem:[#allocation2 + $0x30] sm:$0xff]
      %v6763 = vld [vmem:[#allocation2 + $0x38] sm:$0xff]
      %v6764 = vld [vmem:[#allocation2 + $0x40] sm:$0xff]
      %v6765 = vld [vmem:[#allocation2 + $0x48] sm:$0xff]
      %v6766 = vld [vmem:[#allocation2 + $0x50] sm:$0xff]
      %v6767 = vld [vmem:[#allocation2 + $0x58] sm:$0xff]
      %v6768 = vld [vmem:[#allocation2 + $0x60] sm:$0xff]
      %v6769 = vld [vmem:[#allocation2 + $0x68] sm:$0xff]
      %v6770 = vld [vmem:[#allocation2 + $0x70] sm:$0xff]
      %v6771 = vld [vmem:[#allocation2 + $0x78] sm:$0xff]
      %v6772 = vld [vmem:[#allocation2 + $0x80] sm:$0xff]
      %v6773 = vld [vmem:[#allocation2 + $0x88] sm:$0xff]
      %v6774 = vld [vmem:[#allocation2 + $0x90] sm:$0xff]
      %v6775 = vld [vmem:[#allocation2 + $0x98] sm:$0xff]
      %v6776 = vld [vmem:[#allocation2 + $0xa0] sm:$0x1f]
      %s6777 = scalar_lea.vmem %s2, 384
      %v6778 = vld [vmem:[%s6777] sm:$0xf]
      %v6779 = vld [vmem:[%s6777 + $0x4] sm:$0xf]
      %v6780 = vld [vmem:[%s6777 + $0x8] sm:$0xf]
      %v6781 = vld [vmem:[%s6777 + $0xc] sm:$0xf]
      %v6782 = vld [vmem:[%s6777 + $0x10] sm:$0xf]
      %v6783 = vld [vmem:[%s6777 + $0x14] sm:$0xf]
      %v6784 = vld [vmem:[%s6777 + $0x18] sm:$0xf]
      %v6785 = vld [vmem:[%s6777 + $0x1c] sm:$0xf]
      %v6786 = vld [vmem:[%s6777 + $0x20] sm:$0xf]
      %v6787 = vld [vmem:[%s6777 + $0x24] sm:$0xf]
      %v6788 = vld [vmem:[%s6777 + $0x28] sm:$0xf]
      %v6789 = vld [vmem:[%s6777 + $0x2c] sm:$0xf]
      %v6790 = vld [vmem:[%s6777 + $0x30] sm:$0xf]
      %v6791 = vld [vmem:[%s6777 + $0x34] sm:$0xf]
      %v6792 = vld [vmem:[%s6777 + $0x38] sm:$0xf]
      %v6793 = vld [vmem:[%s6777 + $0x3c] sm:$0xf]
      %v6795 = vshrl.u32 %v6758, 16
      %v6797 = vrot.slane %v6795, 4
      %v6798 = vshll.u32 %v6758, 16
      %v6800 = vrot.slane %v6798, 5
      %v6801 = vor.u32 %v6797, %v6800
      %v6803 = vshrl.u32 %v6759, 16
      %v6805 = vrot.slane %v6803, 4
      %v6806 = vshll.u32 %v6759, 16
      %v6808 = vrot.slane %v6806, 5
      %v6809 = vor.u32 %v6805, %v6808
      %v6810 = vsel %vm6393, %v6801, %v6809
      %v6812 = vshrl.u32 %v6760, 16
      %v6814 = vrot.slane %v6812, 4
      %v6815 = vshll.u32 %v6760, 16
      %v6817 = vrot.slane %v6815, 5
      %v6818 = vor.u32 %v6814, %v6817
      %v6819 = vsel %vm6393, %v6809, %v6818
      %v6821 = vshrl.u32 %v6761, 16
      %v6823 = vrot.slane %v6821, 4
      %v6824 = vshll.u32 %v6761, 16
      %v6826 = vrot.slane %v6824, 5
      %v6827 = vor.u32 %v6823, %v6826
      %v6828 = vsel %vm6393, %v6818, %v6827
      %v6830 = vshrl.u32 %v6762, 16
      %v6832 = vrot.slane %v6830, 4
      %v6833 = vshll.u32 %v6762, 16
      %v6835 = vrot.slane %v6833, 5
      %v6836 = vor.u32 %v6832, %v6835
      %v6837 = vsel %vm6393, %v6827, %v6836
      %v6839 = vshrl.u32 %v6763, 16
      %v6841 = vrot.slane %v6839, 4
      %v6842 = vshll.u32 %v6763, 16
      %v6844 = vrot.slane %v6842, 5
      %v6845 = vor.u32 %v6841, %v6844
      %v6846 = vsel %vm6393, %v6836, %v6845
      %v6848 = vshrl.u32 %v6764, 16
      %v6850 = vrot.slane %v6848, 4
      %v6851 = vshll.u32 %v6764, 16
      %v6853 = vrot.slane %v6851, 5
      %v6854 = vor.u32 %v6850, %v6853
      %v6855 = vsel %vm6393, %v6845, %v6854
      %v6857 = vshrl.u32 %v6765, 16
      %v6859 = vrot.slane %v6857, 4
      %v6860 = vshll.u32 %v6765, 16
      %v6862 = vrot.slane %v6860, 5
      %v6863 = vor.u32 %v6859, %v6862
      %v6864 = vsel %vm6393, %v6854, %v6863
      %v6866 = vshrl.u32 %v6766, 16
      %v6868 = vrot.slane %v6866, 4
      %v6869 = vshll.u32 %v6766, 16
      %v6871 = vrot.slane %v6869, 5
      %v6872 = vor.u32 %v6868, %v6871
      %v6873 = vsel %vm6393, %v6863, %v6872
      %v6875 = vshrl.u32 %v6767, 16
      %v6877 = vrot.slane %v6875, 4
      %v6878 = vshll.u32 %v6767, 16
      %v6880 = vrot.slane %v6878, 5
      %v6881 = vor.u32 %v6877, %v6880
      %v6882 = vsel %vm6393, %v6872, %v6881
      %v6884 = vshrl.u32 %v6768, 16
      %v6886 = vrot.slane %v6884, 4
      %v6887 = vshll.u32 %v6768, 16
      %v6889 = vrot.slane %v6887, 5
      %v6890 = vor.u32 %v6886, %v6889
      %v6891 = vsel %vm6393, %v6881, %v6890
      %v6893 = vshrl.u32 %v6769, 16
      %v6895 = vrot.slane %v6893, 4
      %v6896 = vshll.u32 %v6769, 16
      %v6898 = vrot.slane %v6896, 5
      %v6899 = vor.u32 %v6895, %v6898
      %v6900 = vsel %vm6393, %v6890, %v6899
      %v6902 = vshrl.u32 %v6770, 16
      %v6904 = vrot.slane %v6902, 4
      %v6905 = vshll.u32 %v6770, 16
      %v6907 = vrot.slane %v6905, 5
      %v6908 = vor.u32 %v6904, %v6907
      %v6909 = vsel %vm6393, %v6899, %v6908
      %v6911 = vshrl.u32 %v6771, 16
      %v6913 = vrot.slane %v6911, 4
      %v6914 = vshll.u32 %v6771, 16
      %v6916 = vrot.slane %v6914, 5
      %v6917 = vor.u32 %v6913, %v6916
      %v6918 = vsel %vm6393, %v6908, %v6917
      %v6920 = vshrl.u32 %v6772, 16
      %v6922 = vrot.slane %v6920, 4
      %v6923 = vshll.u32 %v6772, 16
      %v6925 = vrot.slane %v6923, 5
      %v6926 = vor.u32 %v6922, %v6925
      %v6927 = vsel %vm6393, %v6917, %v6926
      %v6929 = vshrl.u32 %v6773, 16
      %v6931 = vrot.slane %v6929, 4
      %v6932 = vshll.u32 %v6773, 16
      %v6934 = vrot.slane %v6932, 5
      %v6935 = vor.u32 %v6931, %v6934
      %v6936 = vsel %vm6393, %v6926, %v6935
      %v6938 = vshrl.u32 %v6774, 16
      %v6940 = vrot.slane %v6938, 4
      %v6941 = vshll.u32 %v6774, 16
      %v6943 = vrot.slane %v6941, 5
      %v6944 = vor.u32 %v6940, %v6943
      %v6945 = vsel %vm6393, %v6935, %v6944
      %v6947 = vshrl.u32 %v6775, 16
      %v6949 = vrot.slane %v6947, 4
      %v6950 = vshll.u32 %v6775, 16
      %v6952 = vrot.slane %v6950, 5
      %v6953 = vor.u32 %v6949, %v6952
      %v6954 = vsel %vm6393, %v6944, %v6953
      %v6956 = vshrl.u32 %v6776, 16
      %v6958 = vrot.slane %v6956, 4
      %v6959 = vshll.u32 %v6776, 16
      %v6961 = vrot.slane %v6959, 5
      %v6962 = vor.u32 %v6958, %v6961
      %v6963 = vsel %vm6393, %v6953, %v6962
      %v6998 = vunpack.c.l.b16 %v6778
      %v6999 = vunpack.c.l.b16 %v6779
      %v7000 = vunpack.c.l.b16 %v6780
      %v7001 = vunpack.c.l.b16 %v6781
      %v7002 = vunpack.c.l.b16 %v6782
      %v7003 = vunpack.c.l.b16 %v6783
      %v7004 = vunpack.c.l.b16 %v6784
      %v7005 = vunpack.c.l.b16 %v6785
      %v7006 = vunpack.c.l.b16 %v6786
      %v7007 = vunpack.c.l.b16 %v6787
      %v7008 = vunpack.c.l.b16 %v6788
      %v7009 = vunpack.c.l.b16 %v6789
      %v7010 = vunpack.c.l.b16 %v6790
      %v7011 = vunpack.c.l.b16 %v6791
      %v7012 = vunpack.c.l.b16 %v6792
      %v7013 = vunpack.c.l.b16 %v6793
      %v7014 = vpack.c.b16 %v6999, %v6998
      %v7015 = vpack.c.b16 %v7001, %v7000
      %v7016 = vpack.c.b16 %v7003, %v7002
      %v7017 = vpack.c.b16 %v7005, %v7004
      %v7018 = vpack.c.b16 %v7007, %v7006
      %v7019 = vpack.c.b16 %v7009, %v7008
      %v7020 = vpack.c.b16 %v7011, %v7010
      %v7021 = vpack.c.b16 %v7013, %v7012
      %7030 = vmatprep.subr.bf16.mxu0 0
      %7031 = vmatpush1.bf16.msra.mxu0 %v7014
      %7032 = vmatprep.subr.bf16.mxu0 0
      %7033 = vmatpush1.bf16.msra.mxu0 %v7015
      %7034 = vmatprep.subr.bf16.mxu0 0
      %7035 = vmatpush1.bf16.msra.mxu0 %v7016
      %7036 = vmatprep.subr.bf16.mxu0 0
      %7037 = vmatpush1.bf16.msra.mxu0 %v7017
      %7038 = vmatprep.subr.bf16.mxu0 0
      %7039 = vmatpush1.bf16.msra.mxu0 %v7018
      %7040 = vmatprep.subr.bf16.mxu0 0
      %7041 = vmatpush1.bf16.msra.mxu0 %v7019
      %7042 = vmatprep.subr.bf16.mxu0 0
      %7043 = vmatpush1.bf16.msra.mxu0 %v7020
      %7044 = vmatprep.subr.bf16.mxu0 0
      %7045 = vmatpush1.bf16.msra.mxu0 %v7021
      %7046 = vmatprep.subr.bf16.mxu0 0
      %7047 = vmatpush1.bf16.msra.mxu0 0
      %7048 = vmatprep.subr.bf16.mxu0 0
      %7049 = vmatpush1.bf16.msra.mxu0 0
      %7050 = vmatprep.subr.bf16.mxu0 0
      %7051 = vmatpush1.bf16.msra.mxu0 0
      %7052 = vmatprep.subr.bf16.mxu0 0
      %7053 = vmatpush1.bf16.msra.mxu0 0
      %7054 = vmatprep.subr.bf16.mxu0 0
      %7055 = vmatpush1.bf16.msra.mxu0 0
      %7056 = vmatprep.subr.bf16.mxu0 0
      %7057 = vmatpush1.bf16.msra.mxu0 0
      %7058 = vmatprep.subr.bf16.mxu0 0
      %7059 = vmatpush1.bf16.msra.mxu0 0
      %7060 = vmatprep.subr.bf16.mxu0 0
      %7061 = vmatpush1.bf16.msra.mxu0 0
      %7062 = vmatprep.mubr.bf16.mxu0 0
      %7063 = vmatmul.mubr.bf16.gmra.mrb[0].mxu0 %v6810
      %v7064 = vpop.f32.mrb[0].mxu0
      %v7065 = vadd.f32 0.0, %v7064
      %v7066 = vpop.f32.mrb[0].mxu0
      %v7067 = vpop.f32.mrb[0].mxu0
      %v7068 = vadd.f32 0.0, %v7067
      %v7069 = vpop.f32.mrb[0].mxu0
      %7070 = vmatprep.mubr.bf16.mxu0 0
      %7071 = vmatmul.mubr.bf16.gmra.mrb[0].mxu0 %v6819
      %v7072 = vpop.f32.mrb[0].mxu0
      %v7073 = vadd.f32 0.0, %v7072
      %v7074 = vpop.f32.mrb[0].mxu0
      %v7075 = vpop.f32.mrb[0].mxu0
      %v7076 = vadd.f32 0.0, %v7075
      %v7077 = vpop.f32.mrb[0].mxu0
      %7078 = vmatprep.mubr.bf16.mxu0 0
      %7079 = vmatmul.mubr.bf16.gmra.mrb[0].mxu0 %v6828
      %v7080 = vpop.f32.mrb[0].mxu0
      %v7081 = vadd.f32 0.0, %v7080
      %v7082 = vpop.f32.mrb[0].mxu0
      %v7083 = vpop.f32.mrb[0].mxu0
      %v7084 = vadd.f32 0.0, %v7083
      %v7085 = vpop.f32.mrb[0].mxu0
      %7086 = vmatprep.mubr.bf16.mxu0 0
      %7087 = vmatmul.mubr.bf16.gmra.mrb[0].mxu0 %v6837
      %v7088 = vpop.f32.mrb[0].mxu0
      %v7089 = vadd.f32 0.0, %v7088
      %v7090 = vpop.f32.mrb[0].mxu0
      %v7091 = vpop.f32.mrb[0].mxu0
      %v7092 = vadd.f32 0.0, %v7091
      %v7093 = vpop.f32.mrb[0].mxu0
      %7094 = vmatprep.mubr.bf16.mxu0 0
      %7095 = vmatmul.mubr.bf16.gmra.mrb[0].mxu0 %v6846
      %v7096 = vpop.f32.mrb[0].mxu0
      %v7097 = vadd.f32 0.0, %v7096
      %v7098 = vpop.f32.mrb[0].mxu0
      %v7099 = vpop.f32.mrb[0].mxu0
      %v7100 = vadd.f32 0.0, %v7099
      %v7101 = vpop.f32.mrb[0].mxu0
      %7102 = vmatprep.mubr.bf16.mxu0 0
      %7103 = vmatmul.mubr.bf16.gmra.mrb[0].mxu0 %v6855
      %v7104 = vpop.f32.mrb[0].mxu0
      %v7105 = vadd.f32 0.0, %v7104
      %v7106 = vpop.f32.mrb[0].mxu0
      %v7107 = vpop.f32.mrb[0].mxu0
      %v7108 = vadd.f32 0.0, %v7107
      %v7109 = vpop.f32.mrb[0].mxu0
      %7110 = vmatprep.mubr.bf16.mxu0 0
      %7111 = vmatmul.mubr.bf16.gmra.mrb[0].mxu0 %v6864
      %v7112 = vpop.f32.mrb[0].mxu0
      %v7113 = vadd.f32 0.0, %v7112
      %v7114 = vpop.f32.mrb[0].mxu0
      %v7115 = vpop.f32.mrb[0].mxu0
      %v7116 = vadd.f32 0.0, %v7115
      %v7117 = vpop.f32.mrb[0].mxu0
      %7118 = vmatprep.mubr.bf16.mxu0 0
      %7119 = vmatmul.mubr.bf16.gmra.mrb[0].mxu0 %v6873
      %v7120 = vpop.f32.mrb[0].mxu0
      %v7121 = vadd.f32 0.0, %v7120
      %v7122 = vpop.f32.mrb[0].mxu0
      %v7123 = vpop.f32.mrb[0].mxu0
      %v7124 = vadd.f32 0.0, %v7123
      %v7125 = vpop.f32.mrb[0].mxu0
      %7126 = vmatprep.mubr.bf16.mxu0 0
      %7127 = vmatmul.mubr.bf16.gmra.mrb[0].mxu0 %v6882
      %v7128 = vpop.f32.mrb[0].mxu0
      %v7129 = vadd.f32 0.0, %v7128
      %v7130 = vpop.f32.mrb[0].mxu0
      %v7131 = vpop.f32.mrb[0].mxu0
      %v7132 = vadd.f32 0.0, %v7131
      %v7133 = vpop.f32.mrb[0].mxu0
      %7134 = vmatprep.mubr.bf16.mxu0 0
      %7135 = vmatmul.mubr.bf16.gmra.mrb[0].mxu0 %v6891
      %v7136 = vpop.f32.mrb[0].mxu0
      %v7137 = vadd.f32 0.0, %v7136
      %v7138 = vpop.f32.mrb[0].mxu0
      %v7139 = vpop.f32.mrb[0].mxu0
      %v7140 = vadd.f32 0.0, %v7139
      %v7141 = vpop.f32.mrb[0].mxu0
      %7142 = vmatprep.mubr.bf16.mxu0 0
      %7143 = vmatmul.mubr.bf16.gmra.mrb[0].mxu0 %v6900
      %v7144 = vpop.f32.mrb[0].mxu0
      %v7145 = vadd.f32 0.0, %v7144
      %v7146 = vpop.f32.mrb[0].mxu0
      %v7147 = vpop.f32.mrb[0].mxu0
      %v7148 = vadd.f32 0.0, %v7147
      %v7149 = vpop.f32.mrb[0].mxu0
      %7150 = vmatprep.mubr.bf16.mxu0 0
      %7151 = vmatmul.mubr.bf16.gmra.mrb[0].mxu0 %v6909
      %v7152 = vpop.f32.mrb[0].mxu0
      %v7153 = vadd.f32 0.0, %v7152
      %v7154 = vpop.f32.mrb[0].mxu0
      %v7155 = vpop.f32.mrb[0].mxu0
      %v7156 = vadd.f32 0.0, %v7155
      %v7157 = vpop.f32.mrb[0].mxu0
      %7158 = vmatprep.mubr.bf16.mxu0 0
      %7159 = vmatmul.mubr.bf16.gmra.mrb[0].mxu0 %v6918
      %v7160 = vpop.f32.mrb[0].mxu0
      %v7161 = vadd.f32 0.0, %v7160
      %v7162 = vpop.f32.mrb[0].mxu0
      %v7163 = vpop.f32.mrb[0].mxu0
      %v7164 = vadd.f32 0.0, %v7163
      %v7165 = vpop.f32.mrb[0].mxu0
      %7166 = vmatprep.mubr.bf16.mxu0 0
      %7167 = vmatmul.mubr.bf16.gmra.mrb[0].mxu0 %v6927
      %v7168 = vpop.f32.mrb[0].mxu0
      %v7169 = vadd.f32 0.0, %v7168
      %v7170 = vpop.f32.mrb[0].mxu0
      %v7171 = vpop.f32.mrb[0].mxu0
      %v7172 = vadd.f32 0.0, %v7171
      %v7173 = vpop.f32.mrb[0].mxu0
      %7174 = vmatprep.mubr.bf16.mxu0 0
      %7175 = vmatmul.mubr.bf16.gmra.mrb[0].mxu0 %v6936
      %v7176 = vpop.f32.mrb[0].mxu0
      %v7177 = vadd.f32 0.0, %v7176
      %v7178 = vpop.f32.mrb[0].mxu0
      %v7179 = vpop.f32.mrb[0].mxu0
      %v7180 = vadd.f32 0.0, %v7179
      %v7181 = vpop.f32.mrb[0].mxu0
      %7182 = vmatprep.mubr.bf16.mxu0 0
      %7183 = vmatmul.mubr.bf16.gmra.mrb[0].mxu0 %v6945
      %v7184 = vpop.f32.mrb[0].mxu0
      %v7185 = vadd.f32 0.0, %v7184
      %v7186 = vpop.f32.mrb[0].mxu0
      %v7187 = vpop.f32.mrb[0].mxu0
      %v7188 = vadd.f32 0.0, %v7187
      %v7189 = vpop.f32.mrb[0].mxu0
      %7190 = vmatprep.mubr.bf16.mxu0 0
      %7191 = vmatmul.mubr.bf16.gmra.mrb[0].mxu0 %v6954
      %v7192 = vpop.f32.mrb[0].mxu0
      %v7193 = vadd.f32 0.0, %v7192
      %v7194 = vpop.f32.mrb[0].mxu0
      %v7195 = vpop.f32.mrb[0].mxu0
      %v7196 = vadd.f32 0.0, %v7195
      %v7197 = vpop.f32.mrb[0].mxu0
      %7198 = vmatprep.mubr.bf16.mxu0 0
      %7199 = vmatmul.mubr.bf16.gmra.mrb[0].mxu0 %v6963
      %v7200 = vpop.f32.mrb[0].mxu0
      %v7201 = vadd.f32 0.0, %v7200
      %v7202 = vpop.f32.mrb[0].mxu0
      %v7203 = vpop.f32.mrb[0].mxu0
      %v7204 = vadd.f32 0.0, %v7203
      %v7205 = vpop.f32.mrb[0].mxu0
      %7206 = vdwg.mxu0
      %v7207 = vadd.f32 %v6722, %v7065
      %v7208 = vadd.f32 %v6723, %v7068
      %v7209 = vadd.f32 %v6724, %v7073
      %v7210 = vadd.f32 %v6725, %v7076
      %v7211 = vadd.f32 %v6726, %v7081
      %v7212 = vadd.f32 %v6727, %v7084
      %v7213 = vadd.f32 %v6728, %v7089
      %v7214 = vadd.f32 %v6729, %v7092
      %v7215 = vadd.f32 %v6730, %v7097
      %v7216 = vadd.f32 %v6731, %v7100
      %v7217 = vadd.f32 %v6732, %v7105
      %v7218 = vadd.f32 %v6733, %v7108
      %v7219 = vadd.f32 %v6734, %v7113
      %v7220 = vadd.f32 %v6735, %v7116
      %v7221 = vadd.f32 %v6736, %v7121
      %v7222 = vadd.f32 %v6737, %v7124
      %v7223 = vadd.f32 %v6738, %v7129
      %v7224 = vadd.f32 %v6739, %v7132
      %v7225 = vadd.f32 %v6740, %v7137
      %v7226 = vadd.f32 %v6741, %v7140
      %v7227 = vadd.f32 %v6742, %v7145
      %v7228 = vadd.f32 %v6743, %v7148
      %v7229 = vadd.f32 %v6744, %v7153
      %v7230 = vadd.f32 %v6745, %v7156
      %v7231 = vadd.f32 %v6746, %v7161
      %v7232 = vadd.f32 %v6747, %v7164
      %v7233 = vadd.f32 %v6748, %v7169
      %v7234 = vadd.f32 %v6749, %v7172
      %v7235 = vadd.f32 %v6750, %v7177
      %v7236 = vadd.f32 %v6751, %v7180
      %v7237 = vadd.f32 %v6752, %v7185
      %v7238 = vadd.f32 %v6753, %v7188
      %v7239 = vadd.f32 %v6754, %v7193
      %v7240 = vadd.f32 %v6755, %v7196
      %v7241 = vadd.f32 %v6756, %v7201
      %v7242 = vadd.f32 %v6757, %v7204
      %v7243 = vld [vmem:[#allocation2 + $0x10] sm:$0xe0]
      %s7244 = scalar_lea.vmem %s2, 448
      %v7245 = vld [vmem:[%s7244] sm:$0xf]
      %v7246 = vld [vmem:[%s7244 + $0x4] sm:$0xf]
      %v7247 = vld [vmem:[%s7244 + $0x8] sm:$0xf]
      %v7248 = vld [vmem:[%s7244 + $0xc] sm:$0xf]
      %v7249 = vld [vmem:[%s7244 + $0x10] sm:$0xf]
      %v7250 = vld [vmem:[%s7244 + $0x14] sm:$0xf]
      %v7251 = vld [vmem:[%s7244 + $0x18] sm:$0xf]
      %v7252 = vld [vmem:[%s7244 + $0x1c] sm:$0xf]
      %v7253 = vld [vmem:[%s7244 + $0x20] sm:$0xf]
      %v7254 = vld [vmem:[%s7244 + $0x24] sm:$0xf]
      %v7255 = vld [vmem:[%s7244 + $0x28] sm:$0xf]
      %v7256 = vld [vmem:[%s7244 + $0x2c] sm:$0xf]
      %v7257 = vld [vmem:[%s7244 + $0x30] sm:$0xf]
      %v7258 = vld [vmem:[%s7244 + $0x34] sm:$0xf]
      %v7259 = vld [vmem:[%s7244 + $0x38] sm:$0xf]
      %v7260 = vld [vmem:[%s7244 + $0x3c] sm:$0xf]
      %vm7280 = vcmask 1042432
      %v7281 = vrot.slane %v7243, 5
      %v7282 = vrot.slane %v6759, 5
      %v7283 = vsel %vm7280, %v7281, %v7282
      %v7284 = vrot.slane %v6760, 5
      %v7285 = vsel %vm7280, %v7282, %v7284
      %v7286 = vrot.slane %v6761, 5
      %v7287 = vsel %vm7280, %v7284, %v7286
      %v7288 = vrot.slane %v6762, 5
      %v7289 = vsel %vm7280, %v7286, %v7288
      %v7290 = vrot.slane %v6763, 5
      %v7291 = vsel %vm7280, %v7288, %v7290
      %v7292 = vrot.slane %v6764, 5
      %v7293 = vsel %vm7280, %v7290, %v7292
      %v7294 = vrot.slane %v6765, 5
      %v7295 = vsel %vm7280, %v7292, %v7294
      %v7296 = vrot.slane %v6766, 5
      %v7297 = vsel %vm7280, %v7294, %v7296
      %v7298 = vrot.slane %v6767, 5
      %v7299 = vsel %vm7280, %v7296, %v7298
      %v7300 = vrot.slane %v6768, 5
      %v7301 = vsel %vm7280, %v7298, %v7300
      %v7302 = vrot.slane %v6769, 5
      %v7303 = vsel %vm7280, %v7300, %v7302
      %v7304 = vrot.slane %v6770, 5
      %v7305 = vsel %vm7280, %v7302, %v7304
      %v7306 = vrot.slane %v6771, 5
      %v7307 = vsel %vm7280, %v7304, %v7306
      %v7308 = vrot.slane %v6772, 5
      %v7309 = vsel %vm7280, %v7306, %v7308
      %v7310 = vrot.slane %v6773, 5
      %v7311 = vsel %vm7280, %v7308, %v7310
      %v7312 = vrot.slane %v6774, 5
      %v7313 = vsel %vm7280, %v7310, %v7312
      %v7314 = vrot.slane %v6775, 5
      %v7315 = vsel %vm7280, %v7312, %v7314
      %v7316 = vrot.slane %v6776, 5
      %v7317 = vsel %vm7280, %v7314, %v7316
      %v7352 = vunpack.c.l.b16 %v7245
      %v7353 = vunpack.c.l.b16 %v7246
      %v7354 = vunpack.c.l.b16 %v7247
      %v7355 = vunpack.c.l.b16 %v7248
      %v7356 = vunpack.c.l.b16 %v7249
      %v7357 = vunpack.c.l.b16 %v7250
      %v7358 = vunpack.c.l.b16 %v7251
      %v7359 = vunpack.c.l.b16 %v7252
      %v7360 = vunpack.c.l.b16 %v7253
      %v7361 = vunpack.c.l.b16 %v7254
      %v7362 = vunpack.c.l.b16 %v7255
      %v7363 = vunpack.c.l.b16 %v7256
      %v7364 = vunpack.c.l.b16 %v7257
      %v7365 = vunpack.c.l.b16 %v7258
      %v7366 = vunpack.c.l.b16 %v7259
      %v7367 = vunpack.c.l.b16 %v7260
      %v7368 = vpack.c.b16 %v7353, %v7352
      %v7369 = vpack.c.b16 %v7355, %v7354
      %v7370 = vpack.c.b16 %v7357, %v7356
      %v7371 = vpack.c.b16 %v7359, %v7358
      %v7372 = vpack.c.b16 %v7361, %v7360
      %v7373 = vpack.c.b16 %v7363, %v7362
      %v7374 = vpack.c.b16 %v7365, %v7364
      %v7375 = vpack.c.b16 %v7367, %v7366
      %7384 = vmatprep.subr.bf16.mxu0 0
      %7385 = vmatpush1.bf16.msra.mxu0 %v7368
      %7386 = vmatprep.subr.bf16.mxu0 0
      %7387 = vmatpush1.bf16.msra.mxu0 %v7369
      %7388 = vmatprep.subr.bf16.mxu0 0
      %7389 = vmatpush1.bf16.msra.mxu0 %v7370
      %7390 = vmatprep.subr.bf16.mxu0 0
      %7391 = vmatpush1.bf16.msra.mxu0 %v7371
      %7392 = vmatprep.subr.bf16.mxu0 0
      %7393 = vmatpush1.bf16.msra.mxu0 %v7372
      %7394 = vmatprep.subr.bf16.mxu0 0
      %7395 = vmatpush1.bf16.msra.mxu0 %v7373
      %7396 = vmatprep.subr.bf16.mxu0 0
      %7397 = vmatpush1.bf16.msra.mxu0 %v7374
      %7398 = vmatprep.subr.bf16.mxu0 0
      %7399 = vmatpush1.bf16.msra.mxu0 %v7375
      %7400 = vmatprep.subr.bf16.mxu0 0
      %7401 = vmatpush1.bf16.msra.mxu0 0
      %7402 = vmatprep.subr.bf16.mxu0 0
      %7403 = vmatpush1.bf16.msra.mxu0 0
      %7404 = vmatprep.subr.bf16.mxu0 0
      %7405 = vmatpush1.bf16.msra.mxu0 0
      %7406 = vmatprep.subr.bf16.mxu0 0
      %7407 = vmatpush1.bf16.msra.mxu0 0
      %7408 = vmatprep.subr.bf16.mxu0 0
      %7409 = vmatpush1.bf16.msra.mxu0 0
      %7410 = vmatprep.subr.bf16.mxu0 0
      %7411 = vmatpush1.bf16.msra.mxu0 0
      %7412 = vmatprep.subr.bf16.mxu0 0
      %7413 = vmatpush1.bf16.msra.mxu0 0
      %7414 = vmatprep.subr.bf16.mxu0 0
      %7415 = vmatpush1.bf16.msra.mxu0 0
      %7416 = vmatprep.mubr.bf16.mxu0 0
      %7417 = vmatmul.mubr.bf16.gmra.mrb[0].mxu0 %v7283
      %v7418 = vpop.f32.mrb[0].mxu0
      %v7419 = vadd.f32 0.0, %v7418
      %v7420 = vpop.f32.mrb[0].mxu0
      %v7421 = vpop.f32.mrb[0].mxu0
      %v7422 = vadd.f32 0.0, %v7421
      %v7423 = vpop.f32.mrb[0].mxu0
      %7424 = vmatprep.mubr.bf16.mxu0 0
      %7425 = vmatmul.mubr.bf16.gmra.mrb[0].mxu0 %v7285
      %v7426 = vpop.f32.mrb[0].mxu0
      %v7427 = vadd.f32 0.0, %v7426
      %v7428 = vpop.f32.mrb[0].mxu0
      %v7429 = vpop.f32.mrb[0].mxu0
      %v7430 = vadd.f32 0.0, %v7429
      %v7431 = vpop.f32.mrb[0].mxu0
      %7432 = vmatprep.mubr.bf16.mxu0 0
      %7433 = vmatmul.mubr.bf16.gmra.mrb[0].mxu0 %v7287
      %v7434 = vpop.f32.mrb[0].mxu0
      %v7435 = vadd.f32 0.0, %v7434
      %v7436 = vpop.f32.mrb[0].mxu0
      %v7437 = vpop.f32.mrb[0].mxu0
      %v7438 = vadd.f32 0.0, %v7437
      %v7439 = vpop.f32.mrb[0].mxu0
      %7440 = vmatprep.mubr.bf16.mxu0 0
      %7441 = vmatmul.mubr.bf16.gmra.mrb[0].mxu0 %v7289
      %v7442 = vpop.f32.mrb[0].mxu0
      %v7443 = vadd.f32 0.0, %v7442
      %v7444 = vpop.f32.mrb[0].mxu0
      %v7445 = vpop.f32.mrb[0].mxu0
      %v7446 = vadd.f32 0.0, %v7445
      %v7447 = vpop.f32.mrb[0].mxu0
      %7448 = vmatprep.mubr.bf16.mxu0 0
      %7449 = vmatmul.mubr.bf16.gmra.mrb[0].mxu0 %v7291
      %v7450 = vpop.f32.mrb[0].mxu0
      %v7451 = vadd.f32 0.0, %v7450
      %v7452 = vpop.f32.mrb[0].mxu0
      %v7453 = vpop.f32.mrb[0].mxu0
      %v7454 = vadd.f32 0.0, %v7453
      %v7455 = vpop.f32.mrb[0].mxu0
      %7456 = vmatprep.mubr.bf16.mxu0 0
      %7457 = vmatmul.mubr.bf16.gmra.mrb[0].mxu0 %v7293
      %v7458 = vpop.f32.mrb[0].mxu0
      %v7459 = vadd.f32 0.0, %v7458
      %v7460 = vpop.f32.mrb[0].mxu0
      %v7461 = vpop.f32.mrb[0].mxu0
      %v7462 = vadd.f32 0.0, %v7461
      %v7463 = vpop.f32.mrb[0].mxu0
      %7464 = vmatprep.mubr.bf16.mxu0 0
      %7465 = vmatmul.mubr.bf16.gmra.mrb[0].mxu0 %v7295
      %v7466 = vpop.f32.mrb[0].mxu0
      %v7467 = vadd.f32 0.0, %v7466
      %v7468 = vpop.f32.mrb[0].mxu0
      %v7469 = vpop.f32.mrb[0].mxu0
      %v7470 = vadd.f32 0.0, %v7469
      %v7471 = vpop.f32.mrb[0].mxu0
      %7472 = vmatprep.mubr.bf16.mxu0 0
      %7473 = vmatmul.mubr.bf16.gmra.mrb[0].mxu0 %v7297
      %v7474 = vpop.f32.mrb[0].mxu0
      %v7475 = vadd.f32 0.0, %v7474
      %v7476 = vpop.f32.mrb[0].mxu0
      %v7477 = vpop.f32.mrb[0].mxu0
      %v7478 = vadd.f32 0.0, %v7477
      %v7479 = vpop.f32.mrb[0].mxu0
      %7480 = vmatprep.mubr.bf16.mxu0 0
      %7481 = vmatmul.mubr.bf16.gmra.mrb[0].mxu0 %v7299
      %v7482 = vpop.f32.mrb[0].mxu0
      %v7483 = vadd.f32 0.0, %v7482
      %v7484 = vpop.f32.mrb[0].mxu0
      %v7485 = vpop.f32.mrb[0].mxu0
      %v7486 = vadd.f32 0.0, %v7485
      %v7487 = vpop.f32.mrb[0].mxu0
      %7488 = vmatprep.mubr.bf16.mxu0 0
      %7489 = vmatmul.mubr.bf16.gmra.mrb[0].mxu0 %v7301
      %v7490 = vpop.f32.mrb[0].mxu0
      %v7491 = vadd.f32 0.0, %v7490
      %v7492 = vpop.f32.mrb[0].mxu0
      %v7493 = vpop.f32.mrb[0].mxu0
      %v7494 = vadd.f32 0.0, %v7493
      %v7495 = vpop.f32.mrb[0].mxu0
      %7496 = vmatprep.mubr.bf16.mxu0 0
      %7497 = vmatmul.mubr.bf16.gmra.mrb[0].mxu0 %v7303
      %v7498 = vpop.f32.mrb[0].mxu0
      %v7499 = vadd.f32 0.0, %v7498
      %v7500 = vpop.f32.mrb[0].mxu0
      %v7501 = vpop.f32.mrb[0].mxu0
      %v7502 = vadd.f32 0.0, %v7501
      %v7503 = vpop.f32.mrb[0].mxu0
      %7504 = vmatprep.mubr.bf16.mxu0 0
      %7505 = vmatmul.mubr.bf16.gmra.mrb[0].mxu0 %v7305
      %v7506 = vpop.f32.mrb[0].mxu0
      %v7507 = vadd.f32 0.0, %v7506
      %v7508 = vpop.f32.mrb[0].mxu0
      %v7509 = vpop.f32.mrb[0].mxu0
      %v7510 = vadd.f32 0.0, %v7509
      %v7511 = vpop.f32.mrb[0].mxu0
      %7512 = vmatprep.mubr.bf16.mxu0 0
      %7513 = vmatmul.mubr.bf16.gmra.mrb[0].mxu0 %v7307
      %v7514 = vpop.f32.mrb[0].mxu0
      %v7515 = vadd.f32 0.0, %v7514
      %v7516 = vpop.f32.mrb[0].mxu0
      %v7517 = vpop.f32.mrb[0].mxu0
      %v7518 = vadd.f32 0.0, %v7517
      %v7519 = vpop.f32.mrb[0].mxu0
      %7520 = vmatprep.mubr.bf16.mxu0 0
      %7521 = vmatmul.mubr.bf16.gmra.mrb[0].mxu0 %v7309
      %v7522 = vpop.f32.mrb[0].mxu0
      %v7523 = vadd.f32 0.0, %v7522
      %v7524 = vpop.f32.mrb[0].mxu0
      %v7525 = vpop.f32.mrb[0].mxu0
      %v7526 = vadd.f32 0.0, %v7525
      %v7527 = vpop.f32.mrb[0].mxu0
      %7528 = vmatprep.mubr.bf16.mxu0 0
      %7529 = vmatmul.mubr.bf16.gmra.mrb[0].mxu0 %v7311
      %v7530 = vpop.f32.mrb[0].mxu0
      %v7531 = vadd.f32 0.0, %v7530
      %v7532 = vpop.f32.mrb[0].mxu0
      %v7533 = vpop.f32.mrb[0].mxu0
      %v7534 = vadd.f32 0.0, %v7533
      %v7535 = vpop.f32.mrb[0].mxu0
      %7536 = vmatprep.mubr.bf16.mxu0 0
      %7537 = vmatmul.mubr.bf16.gmra.mrb[0].mxu0 %v7313
      %v7538 = vpop.f32.mrb[0].mxu0
      %v7539 = vadd.f32 0.0, %v7538
      %v7540 = vpop.f32.mrb[0].mxu0
      %v7541 = vpop.f32.mrb[0].mxu0
      %v7542 = vadd.f32 0.0, %v7541
      %v7543 = vpop.f32.mrb[0].mxu0
      %7544 = vmatprep.mubr.bf16.mxu0 0
      %7545 = vmatmul.mubr.bf16.gmra.mrb[0].mxu0 %v7315
      %v7546 = vpop.f32.mrb[0].mxu0
      %v7547 = vadd.f32 0.0, %v7546
      %v7548 = vpop.f32.mrb[0].mxu0
      %v7549 = vpop.f32.mrb[0].mxu0
      %v7550 = vadd.f32 0.0, %v7549
      %v7551 = vpop.f32.mrb[0].mxu0
      %7552 = vmatprep.mubr.bf16.mxu0 0
      %7553 = vmatmul.mubr.bf16.gmra.mrb[0].mxu0 %v7317
      %v7554 = vpop.f32.mrb[0].mxu0
      %v7555 = vadd.f32 0.0, %v7554
      %v7556 = vpop.f32.mrb[0].mxu0
      %v7557 = vpop.f32.mrb[0].mxu0
      %v7558 = vadd.f32 0.0, %v7557
      %v7559 = vpop.f32.mrb[0].mxu0
      %7560 = vdwg.mxu0
      %v7561 = vadd.f32 %v7207, %v7419
      %v7562 = vadd.f32 %v7208, %v7422
      %v7563 = vadd.f32 %v7209, %v7427
      %v7564 = vadd.f32 %v7210, %v7430
      %v7565 = vadd.f32 %v7211, %v7435
      %v7566 = vadd.f32 %v7212, %v7438
      %v7567 = vadd.f32 %v7213, %v7443
      %v7568 = vadd.f32 %v7214, %v7446
      %v7569 = vadd.f32 %v7215, %v7451
      %v7570 = vadd.f32 %v7216, %v7454
      %v7571 = vadd.f32 %v7217, %v7459
      %v7572 = vadd.f32 %v7218, %v7462
      %v7573 = vadd.f32 %v7219, %v7467
      %v7574 = vadd.f32 %v7220, %v7470
      %v7575 = vadd.f32 %v7221, %v7475
      %v7576 = vadd.f32 %v7222, %v7478
      %v7577 = vadd.f32 %v7223, %v7483
      %v7578 = vadd.f32 %v7224, %v7486
      %v7579 = vadd.f32 %v7225, %v7491
      %v7580 = vadd.f32 %v7226, %v7494
      %v7581 = vadd.f32 %v7227, %v7499
      %v7582 = vadd.f32 %v7228, %v7502
      %v7583 = vadd.f32 %v7229, %v7507
      %v7584 = vadd.f32 %v7230, %v7510
      %v7585 = vadd.f32 %v7231, %v7515
      %v7586 = vadd.f32 %v7232, %v7518
      %v7587 = vadd.f32 %v7233, %v7523
      %v7588 = vadd.f32 %v7234, %v7526
      %v7589 = vadd.f32 %v7235, %v7531
      %v7590 = vadd.f32 %v7236, %v7534
      %v7591 = vadd.f32 %v7237, %v7539
      %v7592 = vadd.f32 %v7238, %v7542
      %v7593 = vadd.f32 %v7239, %v7547
      %v7594 = vadd.f32 %v7240, %v7550
      %v7595 = vadd.f32 %v7241, %v7555
      %v7596 = vadd.f32 %v7242, %v7558
      %v7597 = vld [vmem:[#allocation2 + $0xa0] sm:$0x3f]
      %s7598 = scalar_lea.vmem %s2, 512
      %v7599 = vld [vmem:[%s7598] sm:$0xf]
      %v7600 = vld [vmem:[%s7598 + $0x4] sm:$0xf]
      %v7601 = vld [vmem:[%s7598 + $0x8] sm:$0xf]
      %v7602 = vld [vmem:[%s7598 + $0xc] sm:$0xf]
      %v7603 = vld [vmem:[%s7598 + $0x10] sm:$0xf]
      %v7604 = vld [vmem:[%s7598 + $0x14] sm:$0xf]
      %v7605 = vld [vmem:[%s7598 + $0x18] sm:$0xf]
      %v7606 = vld [vmem:[%s7598 + $0x1c] sm:$0xf]
      %v7607 = vld [vmem:[%s7598 + $0x20] sm:$0xf]
      %v7608 = vld [vmem:[%s7598 + $0x24] sm:$0xf]
      %v7609 = vld [vmem:[%s7598 + $0x28] sm:$0xf]
      %v7610 = vld [vmem:[%s7598 + $0x2c] sm:$0xf]
      %v7611 = vld [vmem:[%s7598 + $0x30] sm:$0xf]
      %v7612 = vld [vmem:[%s7598 + $0x34] sm:$0xf]
      %v7613 = vld [vmem:[%s7598 + $0x38] sm:$0xf]
      %v7614 = vld [vmem:[%s7598 + $0x3c] sm:$0xf]
      %vm7615 = vsmask.f32 2304
      %v7617 = vshrl.u32 %v7243, 16
      %v7619 = vrot.slane %v7617, 5
      %v7620 = vshll.u32 %v7243, 16
      %v7622 = vrot.slane %v7620, 6
      %v7623 = vor.u32 %v7619, %v7622
      %v7624 = vrot.slane %v6803, 5
      %v7625 = vrot.slane %v6806, 6
      %v7626 = vor.u32 %v7624, %v7625
      %v7627 = vsel %vm7615, %v7623, %v7626
      %v7628 = vrot.slane %v6812, 5
      %v7629 = vrot.slane %v6815, 6
      %v7630 = vor.u32 %v7628, %v7629
      %v7631 = vsel %vm7615, %v7626, %v7630
      %v7632 = vrot.slane %v6821, 5
      %v7633 = vrot.slane %v6824, 6
      %v7634 = vor.u32 %v7632, %v7633
      %v7635 = vsel %vm7615, %v7630, %v7634
      %v7636 = vrot.slane %v6830, 5
      %v7637 = vrot.slane %v6833, 6
      %v7638 = vor.u32 %v7636, %v7637
      %v7639 = vsel %vm7615, %v7634, %v7638
      %v7640 = vrot.slane %v6839, 5
      %v7641 = vrot.slane %v6842, 6
      %v7642 = vor.u32 %v7640, %v7641
      %v7643 = vsel %vm7615, %v7638, %v7642
      %v7644 = vrot.slane %v6848, 5
      %v7645 = vrot.slane %v6851, 6
      %v7646 = vor.u32 %v7644, %v7645
      %v7647 = vsel %vm7615, %v7642, %v7646
      %v7648 = vrot.slane %v6857, 5
      %v7649 = vrot.slane %v6860, 6
      %v7650 = vor.u32 %v7648, %v7649
      %v7651 = vsel %vm7615, %v7646, %v7650
      %v7652 = vrot.slane %v6866, 5
      %v7653 = vrot.slane %v6869, 6
      %v7654 = vor.u32 %v7652, %v7653
      %v7655 = vsel %vm7615, %v7650, %v7654
      %v7656 = vrot.slane %v6875, 5
      %v7657 = vrot.slane %v6878, 6
      %v7658 = vor.u32 %v7656, %v7657
      %v7659 = vsel %vm7615, %v7654, %v7658
      %v7660 = vrot.slane %v6884, 5
      %v7661 = vrot.slane %v6887, 6
      %v7662 = vor.u32 %v7660, %v7661
      %v7663 = vsel %vm7615, %v7658, %v7662
      %v7664 = vrot.slane %v6893, 5
      %v7665 = vrot.slane %v6896, 6
      %v7666 = vor.u32 %v7664, %v7665
      %v7667 = vsel %vm7615, %v7662, %v7666
      %v7668 = vrot.slane %v6902, 5
      %v7669 = vrot.slane %v6905, 6
      %v7670 = vor.u32 %v7668, %v7669
      %v7671 = vsel %vm7615, %v7666, %v7670
      %v7672 = vrot.slane %v6911, 5
      %v7673 = vrot.slane %v6914, 6
      %v7674 = vor.u32 %v7672, %v7673
      %v7675 = vsel %vm7615, %v7670, %v7674
      %v7676 = vrot.slane %v6920, 5
      %v7677 = vrot.slane %v6923, 6
      %v7678 = vor.u32 %v7676, %v7677
      %v7679 = vsel %vm7615, %v7674, %v7678
      %v7680 = vrot.slane %v6929, 5
      %v7681 = vrot.slane %v6932, 6
      %v7682 = vor.u32 %v7680, %v7681
      %v7683 = vsel %vm7615, %v7678, %v7682
      %v7684 = vrot.slane %v6938, 5
      %v7685 = vrot.slane %v6941, 6
      %v7686 = vor.u32 %v7684, %v7685
      %v7687 = vsel %vm7615, %v7682, %v7686
      %v7688 = vrot.slane %v6947, 5
      %v7689 = vrot.slane %v6950, 6
      %v7690 = vor.u32 %v7688, %v7689
      %v7691 = vsel %vm7615, %v7686, %v7690
      %v7693 = vshrl.u32 %v7597, 16
      %v7695 = vrot.slane %v7693, 5
      %v7696 = vshll.u32 %v7597, 16
      %v7698 = vrot.slane %v7696, 6
      %v7699 = vor.u32 %v7695, %v7698
      %v7700 = vsel %vm7615, %v7690, %v7699
      %v7735 = vunpack.c.l.b16 %v7599
      %v7736 = vunpack.c.l.b16 %v7600
      %v7737 = vunpack.c.l.b16 %v7601
      %v7738 = vunpack.c.l.b16 %v7602
      %v7739 = vunpack.c.l.b16 %v7603
      %v7740 = vunpack.c.l.b16 %v7604
      %v7741 = vunpack.c.l.b16 %v7605
      %v7742 = vunpack.c.l.b16 %v7606
      %v7743 = vunpack.c.l.b16 %v7607
      %v7744 = vunpack.c.l.b16 %v7608
      %v7745 = vunpack.c.l.b16 %v7609
      %v7746 = vunpack.c.l.b16 %v7610
      %v7747 = vunpack.c.l.b16 %v7611
      %v7748 = vunpack.c.l.b16 %v7612
      %v7749 = vunpack.c.l.b16 %v7613
      %v7750 = vunpack.c.l.b16 %v7614
      %v7751 = vpack.c.b16 %v7736, %v7735
      %v7752 = vpack.c.b16 %v7738, %v7737
      %v7753 = vpack.c.b16 %v7740, %v7739
      %v7754 = vpack.c.b16 %v7742, %v7741
      %v7755 = vpack.c.b16 %v7744, %v7743
      %v7756 = vpack.c.b16 %v7746, %v7745
      %v7757 = vpack.c.b16 %v7748, %v7747
      %v7758 = vpack.c.b16 %v7750, %v7749
      %7767 = vmatprep.subr.bf16.mxu0 0
      %7768 = vmatpush1.bf16.msra.mxu0 %v7751
      %7769 = vmatprep.subr.bf16.mxu0 0
      %7770 = vmatpush1.bf16.msra.mxu0 %v7752
      %7771 = vmatprep.subr.bf16.mxu0 0
      %7772 = vmatpush1.bf16.msra.mxu0 %v7753
      %7773 = vmatprep.subr.bf16.mxu0 0
      %7774 = vmatpush1.bf16.msra.mxu0 %v7754
      %7775 = vmatprep.subr.bf16.mxu0 0
      %7776 = vmatpush1.bf16.msra.mxu0 %v7755
      %7777 = vmatprep.subr.bf16.mxu0 0
      %7778 = vmatpush1.bf16.msra.mxu0 %v7756
      %7779 = vmatprep.subr.bf16.mxu0 0
      %7780 = vmatpush1.bf16.msra.mxu0 %v7757
      %7781 = vmatprep.subr.bf16.mxu0 0
      %7782 = vmatpush1.bf16.msra.mxu0 %v7758
      %7783 = vmatprep.subr.bf16.mxu0 0
      %7784 = vmatpush1.bf16.msra.mxu0 0
      %7785 = vmatprep.subr.bf16.mxu0 0
      %7786 = vmatpush1.bf16.msra.mxu0 0
      %7787 = vmatprep.subr.bf16.mxu0 0
      %7788 = vmatpush1.bf16.msra.mxu0 0
      %7789 = vmatprep.subr.bf16.mxu0 0
      %7790 = vmatpush1.bf16.msra.mxu0 0
      %7791 = vmatprep.subr.bf16.mxu0 0
      %7792 = vmatpush1.bf16.msra.mxu0 0
      %7793 = vmatprep.subr.bf16.mxu0 0
      %7794 = vmatpush1.bf16.msra.mxu0 0
      %7795 = vmatprep.subr.bf16.mxu0 0
      %7796 = vmatpush1.bf16.msra.mxu0 0
      %7797 = vmatprep.subr.bf16.mxu0 0
      %7798 = vmatpush1.bf16.msra.mxu0 0
      %7799 = vmatprep.mubr.bf16.mxu0 0
      %7800 = vmatmul.mubr.bf16.gmra.mrb[0].mxu0 %v7627
      %v7801 = vpop.f32.mrb[0].mxu0
      %v7802 = vadd.f32 0.0, %v7801
      %v7803 = vpop.f32.mrb[0].mxu0
      %v7804 = vpop.f32.mrb[0].mxu0
      %v7805 = vadd.f32 0.0, %v7804
      %v7806 = vpop.f32.mrb[0].mxu0
      %7807 = vmatprep.mubr.bf16.mxu0 0
      %7808 = vmatmul.mubr.bf16.gmra.mrb[0].mxu0 %v7631
      %v7809 = vpop.f32.mrb[0].mxu0
      %v7810 = vadd.f32 0.0, %v7809
      %v7811 = vpop.f32.mrb[0].mxu0
      %v7812 = vpop.f32.mrb[0].mxu0
      %v7813 = vadd.f32 0.0, %v7812
      %v7814 = vpop.f32.mrb[0].mxu0
      %7815 = vmatprep.mubr.bf16.mxu0 0
      %7816 = vmatmul.mubr.bf16.gmra.mrb[0].mxu0 %v7635
      %v7817 = vpop.f32.mrb[0].mxu0
      %v7818 = vadd.f32 0.0, %v7817
      %v7819 = vpop.f32.mrb[0].mxu0
      %v7820 = vpop.f32.mrb[0].mxu0
      %v7821 = vadd.f32 0.0, %v7820
      %v7822 = vpop.f32.mrb[0].mxu0
      %7823 = vmatprep.mubr.bf16.mxu0 0
      %7824 = vmatmul.mubr.bf16.gmra.mrb[0].mxu0 %v7639
      %v7825 = vpop.f32.mrb[0].mxu0
      %v7826 = vadd.f32 0.0, %v7825
      %v7827 = vpop.f32.mrb[0].mxu0
      %v7828 = vpop.f32.mrb[0].mxu0
      %v7829 = vadd.f32 0.0, %v7828
      %v7830 = vpop.f32.mrb[0].mxu0
      %7831 = vmatprep.mubr.bf16.mxu0 0
      %7832 = vmatmul.mubr.bf16.gmra.mrb[0].mxu0 %v7643
      %v7833 = vpop.f32.mrb[0].mxu0
      %v7834 = vadd.f32 0.0, %v7833
      %v7835 = vpop.f32.mrb[0].mxu0
      %v7836 = vpop.f32.mrb[0].mxu0
      %v7837 = vadd.f32 0.0, %v7836
      %v7838 = vpop.f32.mrb[0].mxu0
      %7839 = vmatprep.mubr.bf16.mxu0 0
      %7840 = vmatmul.mubr.bf16.gmra.mrb[0].mxu0 %v7647
      %v7841 = vpop.f32.mrb[0].mxu0
      %v7842 = vadd.f32 0.0, %v7841
      %v7843 = vpop.f32.mrb[0].mxu0
      %v7844 = vpop.f32.mrb[0].mxu0
      %v7845 = vadd.f32 0.0, %v7844
      %v7846 = vpop.f32.mrb[0].mxu0
      %7847 = vmatprep.mubr.bf16.mxu0 0
      %7848 = vmatmul.mubr.bf16.gmra.mrb[0].mxu0 %v7651
      %v7849 = vpop.f32.mrb[0].mxu0
      %v7850 = vadd.f32 0.0, %v7849
      %v7851 = vpop.f32.mrb[0].mxu0
      %v7852 = vpop.f32.mrb[0].mxu0
      %v7853 = vadd.f32 0.0, %v7852
      %v7854 = vpop.f32.mrb[0].mxu0
      %7855 = vmatprep.mubr.bf16.mxu0 0
      %7856 = vmatmul.mubr.bf16.gmra.mrb[0].mxu0 %v7655
      %v7857 = vpop.f32.mrb[0].mxu0
      %v7858 = vadd.f32 0.0, %v7857
      %v7859 = vpop.f32.mrb[0].mxu0
      %v7860 = vpop.f32.mrb[0].mxu0
      %v7861 = vadd.f32 0.0, %v7860
      %v7862 = vpop.f32.mrb[0].mxu0
      %7863 = vmatprep.mubr.bf16.mxu0 0
      %7864 = vmatmul.mubr.bf16.gmra.mrb[0].mxu0 %v7659
      %v7865 = vpop.f32.mrb[0].mxu0
      %v7866 = vadd.f32 0.0, %v7865
      %v7867 = vpop.f32.mrb[0].mxu0
      %v7868 = vpop.f32.mrb[0].mxu0
      %v7869 = vadd.f32 0.0, %v7868
      %v7870 = vpop.f32.mrb[0].mxu0
      %7871 = vmatprep.mubr.bf16.mxu0 0
      %7872 = vmatmul.mubr.bf16.gmra.mrb[0].mxu0 %v7663
      %v7873 = vpop.f32.mrb[0].mxu0
      %v7874 = vadd.f32 0.0, %v7873
      %v7875 = vpop.f32.mrb[0].mxu0
      %v7876 = vpop.f32.mrb[0].mxu0
      %v7877 = vadd.f32 0.0, %v7876
      %v7878 = vpop.f32.mrb[0].mxu0
      %7879 = vmatprep.mubr.bf16.mxu0 0
      %7880 = vmatmul.mubr.bf16.gmra.mrb[0].mxu0 %v7667
      %v7881 = vpop.f32.mrb[0].mxu0
      %v7882 = vadd.f32 0.0, %v7881
      %v7883 = vpop.f32.mrb[0].mxu0
      %v7884 = vpop.f32.mrb[0].mxu0
      %v7885 = vadd.f32 0.0, %v7884
      %v7886 = vpop.f32.mrb[0].mxu0
      %7887 = vmatprep.mubr.bf16.mxu0 0
      %7888 = vmatmul.mubr.bf16.gmra.mrb[0].mxu0 %v7671
      %v7889 = vpop.f32.mrb[0].mxu0
      %v7890 = vadd.f32 0.0, %v7889
      %v7891 = vpop.f32.mrb[0].mxu0
      %v7892 = vpop.f32.mrb[0].mxu0
      %v7893 = vadd.f32 0.0, %v7892
      %v7894 = vpop.f32.mrb[0].mxu0
      %7895 = vmatprep.mubr.bf16.mxu0 0
      %7896 = vmatmul.mubr.bf16.gmra.mrb[0].mxu0 %v7675
      %v7897 = vpop.f32.mrb[0].mxu0
      %v7898 = vadd.f32 0.0, %v7897
      %v7899 = vpop.f32.mrb[0].mxu0
      %v7900 = vpop.f32.mrb[0].mxu0
      %v7901 = vadd.f32 0.0, %v7900
      %v7902 = vpop.f32.mrb[0].mxu0
      %7903 = vmatprep.mubr.bf16.mxu0 0
      %7904 = vmatmul.mubr.bf16.gmra.mrb[0].mxu0 %v7679
      %v7905 = vpop.f32.mrb[0].mxu0
      %v7906 = vadd.f32 0.0, %v7905
      %v7907 = vpop.f32.mrb[0].mxu0
      %v7908 = vpop.f32.mrb[0].mxu0
      %v7909 = vadd.f32 0.0, %v7908
      %v7910 = vpop.f32.mrb[0].mxu0
      %7911 = vmatprep.mubr.bf16.mxu0 0
      %7912 = vmatmul.mubr.bf16.gmra.mrb[0].mxu0 %v7683
      %v7913 = vpop.f32.mrb[0].mxu0
      %v7914 = vadd.f32 0.0, %v7913
      %v7915 = vpop.f32.mrb[0].mxu0
      %v7916 = vpop.f32.mrb[0].mxu0
      %v7917 = vadd.f32 0.0, %v7916
      %v7918 = vpop.f32.mrb[0].mxu0
      %7919 = vmatprep.mubr.bf16.mxu0 0
      %7920 = vmatmul.mubr.bf16.gmra.mrb[0].mxu0 %v7687
      %v7921 = vpop.f32.mrb[0].mxu0
      %v7922 = vadd.f32 0.0, %v7921
      %v7923 = vpop.f32.mrb[0].mxu0
      %v7924 = vpop.f32.mrb[0].mxu0
      %v7925 = vadd.f32 0.0, %v7924
      %v7926 = vpop.f32.mrb[0].mxu0
      %7927 = vmatprep.mubr.bf16.mxu0 0
      %7928 = vmatmul.mubr.bf16.gmra.mrb[0].mxu0 %v7691
      %v7929 = vpop.f32.mrb[0].mxu0
      %v7930 = vadd.f32 0.0, %v7929
      %v7931 = vpop.f32.mrb[0].mxu0
      %v7932 = vpop.f32.mrb[0].mxu0
      %v7933 = vadd.f32 0.0, %v7932
      %v7934 = vpop.f32.mrb[0].mxu0
      %7935 = vmatprep.mubr.bf16.mxu0 0
      %7936 = vmatmul.mubr.bf16.gmra.mrb[0].mxu0 %v7700
      %v7937 = vpop.f32.mrb[0].mxu0
      %v7938 = vadd.f32 0.0, %v7937
      %v7939 = vpop.f32.mrb[0].mxu0
      %v7940 = vpop.f32.mrb[0].mxu0
      %v7941 = vadd.f32 0.0, %v7940
      %v7942 = vpop.f32.mrb[0].mxu0
      %7943 = vdwg.mxu0
      %v7944 = vadd.f32 %v7561, %v7802
      %v7945 = vadd.f32 %v7562, %v7805
      %v7946 = vadd.f32 %v7563, %v7810
      %v7947 = vadd.f32 %v7564, %v7813
      %v7948 = vadd.f32 %v7565, %v7818
      %v7949 = vadd.f32 %v7566, %v7821
      %v7950 = vadd.f32 %v7567, %v7826
      %v7951 = vadd.f32 %v7568, %v7829
      %v7952 = vadd.f32 %v7569, %v7834
      %v7953 = vadd.f32 %v7570, %v7837
      %v7954 = vadd.f32 %v7571, %v7842
      %v7955 = vadd.f32 %v7572, %v7845
      %v7956 = vadd.f32 %v7573, %v7850
      %v7957 = vadd.f32 %v7574, %v7853
      %v7958 = vadd.f32 %v7575, %v7858
      %v7959 = vadd.f32 %v7576, %v7861
      %v7960 = vadd.f32 %v7577, %v7866
      %v7961 = vadd.f32 %v7578, %v7869
      %v7962 = vadd.f32 %v7579, %v7874
      %v7963 = vadd.f32 %v7580, %v7877
      %v7964 = vadd.f32 %v7581, %v7882
      %v7965 = vadd.f32 %v7582, %v7885
      %v7966 = vadd.f32 %v7583, %v7890
      %v7967 = vadd.f32 %v7584, %v7893
      %v7968 = vadd.f32 %v7585, %v7898
      %v7969 = vadd.f32 %v7586, %v7901
      %v7970 = vadd.f32 %v7587, %v7906
      %v7971 = vadd.f32 %v7588, %v7909
      %v7972 = vadd.f32 %v7589, %v7914
      %v7973 = vadd.f32 %v7590, %v7917
      %v7974 = vadd.f32 %v7591, %v7922
      %v7975 = vadd.f32 %v7592, %v7925
      %v7976 = vadd.f32 %v7593, %v7930
      %v7977 = vadd.f32 %v7594, %v7933
      %v7978 = vadd.f32 %v7595, %v7938
      %v7979 = vadd.f32 %v7596, %v7941
      %v7980 = vld [vmem:[%s219 + $0x8] sm:$0xe]
      %v7981 = vld [vmem:[%s219 + $0xc] sm:$0xf]
      %v7982 = vld [vmem:[%s219 + $0x10] sm:$0xf]
      %v7983 = vld [vmem:[%s219 + $0x14] sm:$0xf]
      %v7984 = vld [vmem:[%s219 + $0x18] sm:$0xf]
      %v7985 = vld [vmem:[%s219 + $0x1c] sm:$0xf]
      %v7986 = vld [vmem:[%s219 + $0x20] sm:$0xf]
      %v7987 = vld [vmem:[%s219 + $0x24] sm:$0xf]
      %v7988 = vld [vmem:[%s219 + $0x28] sm:$0xf]
      %v7989 = vld [vmem:[%s219 + $0x2c] sm:$0xf]
      %v7990 = vld [vmem:[%s219 + $0x30] sm:$0xf]
      %v7991 = vld [vmem:[%s219 + $0x34] sm:$0xf]
      %v7992 = vld [vmem:[%s219 + $0x38] sm:$0xf]
      %v7993 = vld [vmem:[%s219 + $0x3c] sm:$0xf]
      %v7994 = vld [vmem:[%s219 + $0x40] sm:$0xf]
      %v7995 = vld [vmem:[%s219 + $0x44] sm:$0xf]
      %v7996 = vld [vmem:[%s219 + $0x48] sm:$0xf]
      %v7997 = vld [vmem:[%s219 + $0x4c] sm:$0xf]
      %v7998 = vld [vmem:[%s219 + $0x50] sm:$0xf]
      %v7999 = vld [vmem:[%s219 + $0x54] sm:$0xf]
      %v8000 = vld [vmem:[%s219 + $0x58] sm:$0xf]
      %v8001 = vld [vmem:[%s219 + $0x5c] sm:$0xf]
      %v8002 = vld [vmem:[%s219 + $0x60] sm:$0xf]
      %v8003 = vld [vmem:[%s219 + $0x64] sm:$0xf]
      %v8004 = vld [vmem:[%s219 + $0x68] sm:$0xf]
      %v8005 = vld [vmem:[%s219 + $0x6c] sm:$0xf]
      %v8006 = vld [vmem:[%s219 + $0x70] sm:$0xf]
      %v8007 = vld [vmem:[%s219 + $0x74] sm:$0xf]
      %v8008 = vld [vmem:[%s219 + $0x78] sm:$0xf]
      %v8009 = vld [vmem:[%s219 + $0x7c] sm:$0xf]
      %v8010 = vld [vmem:[%s219 + $0x80] sm:$0xf]
      %v8011 = vld [vmem:[%s219 + $0x84] sm:$0xf]
      %v8012 = vld [vmem:[%s219 + $0x88] sm:$0xf]
      %v8013 = vld [vmem:[%s219 + $0x8c] sm:$0xf]
      %v8014 = vld [vmem:[%s219 + $0x90] sm:$0xf]
      %v8015 = vld [vmem:[%s219 + $0x94] sm:$0xf]
      %v8016 = vld [vmem:[%s219 + $0x98] sm:$0x3]
      %v8017 = vunpack.c.l.bf16 %v7980
      %v8018 = vunpack.c.l.bf16 %v7981
      %v8019 = vunpack.c.l.bf16 %v7982
      %v8020 = vunpack.c.l.bf16 %v7983
      %v8021 = vunpack.c.l.bf16 %v7984
      %v8022 = vunpack.c.l.bf16 %v7985
      %v8023 = vunpack.c.l.bf16 %v7986
      %v8024 = vunpack.c.l.bf16 %v7987
      %v8025 = vunpack.c.l.bf16 %v7988
      %v8026 = vunpack.c.l.bf16 %v7989
      %v8027 = vunpack.c.l.bf16 %v7990
      %v8028 = vunpack.c.l.bf16 %v7991
      %v8029 = vunpack.c.l.bf16 %v7992
      %v8030 = vunpack.c.l.bf16 %v7993
      %v8031 = vunpack.c.l.bf16 %v7994
      %v8032 = vunpack.c.l.bf16 %v7995
      %v8033 = vunpack.c.l.bf16 %v7996
      %v8034 = vunpack.c.l.bf16 %v7997
      %v8035 = vunpack.c.l.bf16 %v7998
      %v8036 = vunpack.c.l.bf16 %v7999
      %v8037 = vunpack.c.l.bf16 %v8000
      %v8038 = vunpack.c.l.bf16 %v8001
      %v8039 = vunpack.c.l.bf16 %v8002
      %v8040 = vunpack.c.l.bf16 %v8003
      %v8041 = vunpack.c.l.bf16 %v8004
      %v8042 = vunpack.c.l.bf16 %v8005
      %v8043 = vunpack.c.l.bf16 %v8006
      %v8044 = vunpack.c.l.bf16 %v8007
      %v8045 = vunpack.c.l.bf16 %v8008
      %v8046 = vunpack.c.l.bf16 %v8009
      %v8047 = vunpack.c.l.bf16 %v8010
      %v8048 = vunpack.c.l.bf16 %v8011
      %v8049 = vunpack.c.l.bf16 %v8012
      %v8050 = vunpack.c.l.bf16 %v8013
      %v8051 = vunpack.c.l.bf16 %v8014
      %v8052 = vunpack.c.l.bf16 %v8015
      %v8053 = vunpack.c.l.bf16 %v8016
      %v8054 = vlaneseq
      %v8055 = vshrl.u32 %v8054, 7
      %v8056 = vsub.s32 2, %v8055
      %v8057 = vrot.slane %v226, %v8056
      %v8058 = vmul.f32 %v7944, %v8057
      %v8059 = vmul.f32 %v7945, %v8057
      %v8060 = vmul.f32 %v7946, %v8057
      %v8061 = vmul.f32 %v7947, %v8057
      %v8062 = vmul.f32 %v7948, %v8057
      %v8063 = vmul.f32 %v7949, %v8057
      %v8064 = vmul.f32 %v7950, %v8057
      %v8065 = vmul.f32 %v7951, %v8057
      %v8066 = vmul.f32 %v7952, %v8057
      %v8067 = vmul.f32 %v7953, %v8057
      %v8068 = vmul.f32 %v7954, %v8057
      %v8069 = vmul.f32 %v7955, %v8057
      %v8070 = vmul.f32 %v7956, %v8057
      %v8071 = vmul.f32 %v7957, %v8057
      %v8072 = vmul.f32 %v7958, %v8057
      %v8073 = vmul.f32 %v7959, %v8057
      %v8074 = vmul.f32 %v7960, %v8057
      %v8075 = vmul.f32 %v7961, %v8057
      %v8076 = vmul.f32 %v7962, %v8057
      %v8077 = vmul.f32 %v7963, %v8057
      %v8078 = vmul.f32 %v7964, %v8057
      %v8079 = vmul.f32 %v7965, %v8057
      %v8080 = vmul.f32 %v7966, %v8057
      %v8081 = vmul.f32 %v7967, %v8057
      %v8082 = vmul.f32 %v7968, %v8057
      %v8083 = vmul.f32 %v7969, %v8057
      %v8084 = vmul.f32 %v7970, %v8057
      %v8085 = vmul.f32 %v7971, %v8057
      %v8086 = vmul.f32 %v7972, %v8057
      %v8087 = vmul.f32 %v7973, %v8057
      %v8088 = vmul.f32 %v7974, %v8057
      %v8089 = vmul.f32 %v7975, %v8057
      %v8090 = vmul.f32 %v7976, %v8057
      %v8091 = vmul.f32 %v7977, %v8057
      %v8092 = vmul.f32 %v7978, %v8057
      %v8093 = vmul.f32 %v7979, %v8057
      %v8094 = vlaneseq
      %v8095 = vshrl.u32 %v8094, 7
      %v8096 = vsub.s32 3, %v8095
      %v8097 = vrot.slane %v226, %v8096
      %v8098 = vadd.f32 %v8058, %v8097
      %v8099 = vadd.f32 %v8059, %v8097
      %v8100 = vadd.f32 %v8060, %v8097
      %v8101 = vadd.f32 %v8061, %v8097
      %v8102 = vadd.f32 %v8062, %v8097
      %v8103 = vadd.f32 %v8063, %v8097
      %v8104 = vadd.f32 %v8064, %v8097
      %v8105 = vadd.f32 %v8065, %v8097
      %v8106 = vadd.f32 %v8066, %v8097
      %v8107 = vadd.f32 %v8067, %v8097
      %v8108 = vadd.f32 %v8068, %v8097
      %v8109 = vadd.f32 %v8069, %v8097
      %v8110 = vadd.f32 %v8070, %v8097
      %v8111 = vadd.f32 %v8071, %v8097
      %v8112 = vadd.f32 %v8072, %v8097
      %v8113 = vadd.f32 %v8073, %v8097
      %v8114 = vadd.f32 %v8074, %v8097
      %v8115 = vadd.f32 %v8075, %v8097
      %v8116 = vadd.f32 %v8076, %v8097
      %v8117 = vadd.f32 %v8077, %v8097
      %v8118 = vadd.f32 %v8078, %v8097
      %v8119 = vadd.f32 %v8079, %v8097
      %v8120 = vadd.f32 %v8080, %v8097
      %v8121 = vadd.f32 %v8081, %v8097
      %v8122 = vadd.f32 %v8082, %v8097
      %v8123 = vadd.f32 %v8083, %v8097
      %v8124 = vadd.f32 %v8084, %v8097
      %v8125 = vadd.f32 %v8085, %v8097
      %v8126 = vadd.f32 %v8086, %v8097
      %v8127 = vadd.f32 %v8087, %v8097
      %v8128 = vadd.f32 %v8088, %v8097
      %v8129 = vadd.f32 %v8089, %v8097
      %v8130 = vadd.f32 %v8090, %v8097
      %v8131 = vadd.f32 %v8091, %v8097
      %v8132 = vadd.f32 %v8092, %v8097
      %v8133 = vadd.f32 %v8093, %v8097
      %vm8171 = vcmask 1044480
      %v8172 = vrot.slane %v8017, 3
      %v8173 = vrot.slane %v8018, 3
      %v8174 = vsel %vm8171, %v8172, %v8173
      %v8175 = vrot.slane %v8019, 3
      %v8176 = vsel %vm8171, %v8173, %v8175
      %v8177 = vrot.slane %v8020, 3
      %v8178 = vsel %vm8171, %v8175, %v8177
      %v8179 = vrot.slane %v8021, 3
      %v8180 = vsel %vm8171, %v8177, %v8179
      %v8181 = vrot.slane %v8022, 3
      %v8182 = vsel %vm8171, %v8179, %v8181
      %v8183 = vrot.slane %v8023, 3
      %v8184 = vsel %vm8171, %v8181, %v8183
      %v8185 = vrot.slane %v8024, 3
      %v8186 = vsel %vm8171, %v8183, %v8185
      %v8187 = vrot.slane %v8025, 3
      %v8188 = vsel %vm8171, %v8185, %v8187
      %v8189 = vrot.slane %v8026, 3
      %v8190 = vsel %vm8171, %v8187, %v8189
      %v8191 = vrot.slane %v8027, 3
      %v8192 = vsel %vm8171, %v8189, %v8191
      %v8193 = vrot.slane %v8028, 3
      %v8194 = vsel %vm8171, %v8191, %v8193
      %v8195 = vrot.slane %v8029, 3
      %v8196 = vsel %vm8171, %v8193, %v8195
      %v8197 = vrot.slane %v8030, 3
      %v8198 = vsel %vm8171, %v8195, %v8197
      %v8199 = vrot.slane %v8031, 3
      %v8200 = vsel %vm8171, %v8197, %v8199
      %v8201 = vrot.slane %v8032, 3
      %v8202 = vsel %vm8171, %v8199, %v8201
      %v8203 = vrot.slane %v8033, 3
      %v8204 = vsel %vm8171, %v8201, %v8203
      %v8205 = vrot.slane %v8034, 3
      %v8206 = vsel %vm8171, %v8203, %v8205
      %v8207 = vrot.slane %v8035, 3
      %v8208 = vsel %vm8171, %v8205, %v8207
      %v8209 = vrot.slane %v8036, 3
      %v8210 = vsel %vm8171, %v8207, %v8209
      %v8211 = vrot.slane %v8037, 3
      %v8212 = vsel %vm8171, %v8209, %v8211
      %v8213 = vrot.slane %v8038, 3
      %v8214 = vsel %vm8171, %v8211, %v8213
      %v8215 = vrot.slane %v8039, 3
      %v8216 = vsel %vm8171, %v8213, %v8215
      %v8217 = vrot.slane %v8040, 3
      %v8218 = vsel %vm8171, %v8215, %v8217
      %v8219 = vrot.slane %v8041, 3
      %v8220 = vsel %vm8171, %v8217, %v8219
      %v8221 = vrot.slane %v8042, 3
      %v8222 = vsel %vm8171, %v8219, %v8221
      %v8223 = vrot.slane %v8043, 3
      %v8224 = vsel %vm8171, %v8221, %v8223
      %v8225 = vrot.slane %v8044, 3
      %v8226 = vsel %vm8171, %v8223, %v8225
      %v8227 = vrot.slane %v8045, 3
      %v8228 = vsel %vm8171, %v8225, %v8227
      %v8229 = vrot.slane %v8046, 3
      %v8230 = vsel %vm8171, %v8227, %v8229
      %v8231 = vrot.slane %v8047, 3
      %v8232 = vsel %vm8171, %v8229, %v8231
      %v8233 = vrot.slane %v8048, 3
      %v8234 = vsel %vm8171, %v8231, %v8233
      %v8235 = vrot.slane %v8049, 3
      %v8236 = vsel %vm8171, %v8233, %v8235
      %v8237 = vrot.slane %v8050, 3
      %v8238 = vsel %vm8171, %v8235, %v8237
      %v8239 = vrot.slane %v8051, 3
      %v8240 = vsel %vm8171, %v8237, %v8239
      %v8241 = vrot.slane %v8052, 3
      %v8242 = vsel %vm8171, %v8239, %v8241
      %v8243 = vrot.slane %v8053, 3
      %v8244 = vsel %vm8171, %v8241, %v8243
      %v8281 = vadd.f32 %v8098, %v8174
      %v8282 = vadd.f32 %v8099, %v8176
      %v8283 = vadd.f32 %v8100, %v8178
      %v8284 = vadd.f32 %v8101, %v8180
      %v8285 = vadd.f32 %v8102, %v8182
      %v8286 = vadd.f32 %v8103, %v8184
      %v8287 = vadd.f32 %v8104, %v8186
      %v8288 = vadd.f32 %v8105, %v8188
      %v8289 = vadd.f32 %v8106, %v8190
      %v8290 = vadd.f32 %v8107, %v8192
      %v8291 = vadd.f32 %v8108, %v8194
      %v8292 = vadd.f32 %v8109, %v8196
      %v8293 = vadd.f32 %v8110, %v8198
      %v8294 = vadd.f32 %v8111, %v8200
      %v8295 = vadd.f32 %v8112, %v8202
      %v8296 = vadd.f32 %v8113, %v8204
      %v8297 = vadd.f32 %v8114, %v8206
      %v8298 = vadd.f32 %v8115, %v8208
      %v8299 = vadd.f32 %v8116, %v8210
      %v8300 = vadd.f32 %v8117, %v8212
      %v8301 = vadd.f32 %v8118, %v8214
      %v8302 = vadd.f32 %v8119, %v8216
      %v8303 = vadd.f32 %v8120, %v8218
      %v8304 = vadd.f32 %v8121, %v8220
      %v8305 = vadd.f32 %v8122, %v8222
      %v8306 = vadd.f32 %v8123, %v8224
      %v8307 = vadd.f32 %v8124, %v8226
      %v8308 = vadd.f32 %v8125, %v8228
      %v8309 = vadd.f32 %v8126, %v8230
      %v8310 = vadd.f32 %v8127, %v8232
      %v8311 = vadd.f32 %v8128, %v8234
      %v8312 = vadd.f32 %v8129, %v8236
      %v8313 = vadd.f32 %v8130, %v8238
      %v8314 = vadd.f32 %v8131, %v8240
      %v8315 = vadd.f32 %v8132, %v8242
      %v8316 = vadd.f32 %v8133, %v8244
      %v8317 = vmax.f32 %v8281, 0.0
      %v8318 = vmax.f32 %v8282, 0.0
      %v8319 = vmax.f32 %v8283, 0.0
      %v8320 = vmax.f32 %v8284, 0.0
      %v8321 = vmax.f32 %v8285, 0.0
      %v8322 = vmax.f32 %v8286, 0.0
      %v8323 = vmax.f32 %v8287, 0.0
      %v8324 = vmax.f32 %v8288, 0.0
      %v8325 = vmax.f32 %v8289, 0.0
      %v8326 = vmax.f32 %v8290, 0.0
      %v8327 = vmax.f32 %v8291, 0.0
      %v8328 = vmax.f32 %v8292, 0.0
      %v8329 = vmax.f32 %v8293, 0.0
      %v8330 = vmax.f32 %v8294, 0.0
      %v8331 = vmax.f32 %v8295, 0.0
      %v8332 = vmax.f32 %v8296, 0.0
      %v8333 = vmax.f32 %v8297, 0.0
      %v8334 = vmax.f32 %v8298, 0.0
      %v8335 = vmax.f32 %v8299, 0.0
      %v8336 = vmax.f32 %v8300, 0.0
      %v8337 = vmax.f32 %v8301, 0.0
      %v8338 = vmax.f32 %v8302, 0.0
      %v8339 = vmax.f32 %v8303, 0.0
      %v8340 = vmax.f32 %v8304, 0.0
      %v8341 = vmax.f32 %v8305, 0.0
      %v8342 = vmax.f32 %v8306, 0.0
      %v8343 = vmax.f32 %v8307, 0.0
      %v8344 = vmax.f32 %v8308, 0.0
      %v8345 = vmax.f32 %v8309, 0.0
      %v8346 = vmax.f32 %v8310, 0.0
      %v8347 = vmax.f32 %v8311, 0.0
      %v8348 = vmax.f32 %v8312, 0.0
      %v8349 = vmax.f32 %v8313, 0.0
      %v8350 = vmax.f32 %v8314, 0.0
      %v8351 = vmax.f32 %v8315, 0.0
      %v8352 = vmax.f32 %v8316, 0.0
      %8353 = vst [vmem:[%s224] sm:$0xff] %v8317
      %8354 = vst [vmem:[%s224 + $0x8] sm:$0xff] %v8318
      %8355 = vst [vmem:[%s224 + $0x10] sm:$0xff] %v8319
      %8356 = vst [vmem:[%s224 + $0x18] sm:$0xff] %v8320
      %8357 = vst [vmem:[%s224 + $0x20] sm:$0xff] %v8321
      %8358 = vst [vmem:[%s224 + $0x28] sm:$0xff] %v8322
      %8359 = vst [vmem:[%s224 + $0x30] sm:$0xff] %v8323
      %8360 = vst [vmem:[%s224 + $0x38] sm:$0xff] %v8324
      %8361 = vst [vmem:[%s224 + $0x40] sm:$0xff] %v8325
      %8362 = vst [vmem:[%s224 + $0x48] sm:$0xff] %v8326
      %8363 = vst [vmem:[%s224 + $0x50] sm:$0xff] %v8327
      %8364 = vst [vmem:[%s224 + $0x58] sm:$0xff] %v8328
      %8365 = vst [vmem:[%s224 + $0x60] sm:$0xff] %v8329
      %8366 = vst [vmem:[%s224 + $0x68] sm:$0xff] %v8330
      %8367 = vst [vmem:[%s224 + $0x70] sm:$0xff] %v8331
      %8368 = vst [vmem:[%s224 + $0x78] sm:$0xff] %v8332
      %8369 = vst [vmem:[%s224 + $0x80] sm:$0xff] %v8333
      %8370 = vst [vmem:[%s224 + $0x88] sm:$0xff] %v8334
      %8371 = vst [vmem:[%s224 + $0x90] sm:$0xff] %v8335
      %8372 = vst [vmem:[%s224 + $0x98] sm:$0xff] %v8336
      %8373 = vst [vmem:[%s224 + $0xa0] sm:$0xff] %v8337
      %8374 = vst [vmem:[%s224 + $0xa8] sm:$0xff] %v8338
      %8375 = vst [vmem:[%s224 + $0xb0] sm:$0xff] %v8339
      %8376 = vst [vmem:[%s224 + $0xb8] sm:$0xff] %v8340
      %8377 = vst [vmem:[%s224 + $0xc0] sm:$0xff] %v8341
      %8378 = vst [vmem:[%s224 + $0xc8] sm:$0xff] %v8342
      %8379 = vst [vmem:[%s224 + $0xd0] sm:$0xff] %v8343
      %8380 = vst [vmem:[%s224 + $0xd8] sm:$0xff] %v8344
      %8381 = vst [vmem:[%s224 + $0xe0] sm:$0xff] %v8345
      %8382 = vst [vmem:[%s224 + $0xe8] sm:$0xff] %v8346
      %8383 = vst [vmem:[%s224 + $0xf0] sm:$0xff] %v8347
      %8384 = vst [vmem:[%s224 + $0xf8] sm:$0xff] %v8348
      %8385 = vst [vmem:[%s224 + $0x100] sm:$0xff] %v8349
      %8386 = vst [vmem:[%s224 + $0x108] sm:$0xff] %v8350
      %8387 = vst [vmem:[%s224 + $0x110] sm:$0xff] %v8351
      %8388 = vst [vmem:[%s224 + $0x118] sm:$0xff] %v8352
      %p8389 = scmp.lt.s32.totalorder %s16, 1
      %s8390 = scalar_select %p8389, %s16, 1
      %s8391 = smul.addr %s8390, 36
      %s8392 = smul.addr %s8391, 8
      %s8393 = scalar_lea.vmem %s5, %s8392
      // Predicated region
      $region41: #{basic_block_forward.1} parent=39 // pred_check
        %p8394 = pneg %p144
      $region42: #{basic_block_forward.1} parent=39 // pred_check_branch
        %8396 = sbr.rel (%p8394) target = $region44
      $region43: #{basic_block_forward.1} parent=39 // pred_region
        _
      $region44: #{basic_block_forward.1} parent=39 // pred_fallthru
        _
    $region40: #{basic_block_forward.1} parent=5 // pred_fallthru
      _
    %p8397 = scmp.le.s32.totalorder 2, %s11
    // Predicated region
    $region45: #{basic_block_forward.1} parent=5 // pred_check
      %p8398 = pneg %p8397
    $region46: #{basic_block_forward.1} parent=5 // pred_check_branch
      %8400 = sbr.rel (%p8398) target = $region48
    $region47: #{basic_block_forward.1} parent=5 // pred_region
      %s8401 = ssub.s32 %s11, 2
      // Predicated region
      $region49: #{basic_block_forward.1} parent=47 // pred_check
        %p8402 = pneg %p150
      $region50: #{basic_block_forward.1} parent=47 // pred_check_branch
        %8404 = sbr.rel (%p8402) target = $region52
      $region51: #{basic_block_forward.1} parent=47 // pred_region
        %p8405 = scmp.lt.s32.totalorder %s17, 1
        %s8406 = scalar_select %p8405, %s17, 1
        %s8407 = smul.addr %s8406, 36
        %s8408 = smul.addr %s8407, 8
        %s8409 = scalar_lea.vmem %s5, %s8408
      $region52: #{basic_block_forward.1} parent=47 // pred_fallthru
        _
    $region48: #{basic_block_forward.1} parent=5 // pred_fallthru
      _
  $region6: #{basic_block_forward.1} parent=0 // loop_footer
    %s15 = sadd.s32 1, %s11
  $region7: #{basic_block_forward.1} parent=0 // loop_footer_branch
    %10 = sbr.rel target = $region3
  $region8: #{basic_block_forward.1} parent=0 // loop_exit
    _

</llo_original>
